<compile_context>
chip_gen: v7x
topology: tpu7x:2x2x1
jax: 0.10.0
libtpu: 0.0.40
codegen_flags: <defaults>
</compile_context>

<pallas_src>
import functools

import jax
import jax.numpy as jnp
from jax import lax
from jax.experimental import pallas as pl
from jax.experimental.pallas import tpu as pltpu


COMPUTE_DTYPE = jnp.bfloat16       # MXU operand dtype (f32 accumulation everywhere)

# Flipped off by _run_forward() if this Pallas build rejects pipeline_mode.
_SINGLE_BUFFER_WEIGHTS = True


# -----------------------------------------------------------------------------
# Generation-aware resource model
# -----------------------------------------------------------------------------
def _tpu_info():
    """Return (tensorcores_per_chip, physical VMEM bytes per core)."""
    try:
        kind = jax.devices()[0].device_kind.lower()
    except Exception:
        kind = ""
    if "v7" in kind or "tpu7" in kind:
        return 2, 64 * 1024 * 1024
    if "v5p" in kind or "v4" in kind:
        return 2, 128 * 1024 * 1024          # megacore: parallel axes shard across TCs
    if "v5" in kind or "v6" in kind:         # v5e ("v5 lite") / v6e: single TC
        return 1, 128 * 1024 * 1024
    return 1, 64 * 1024 * 1024               # unknown: stay conservative


def _vmem_budget(vmem_bytes):
    # ~48 MiB on 64-MiB parts (v7x), ~96 MiB on 128-MiB parts (v5e/v6e/v5p).
    return min(int(vmem_bytes * 3 // 4), 96 * 1024 * 1024)


def _divisor_ladder(dim, candidates):
    """Descending tile candidates that evenly divide `dim`; falls back to the
    full extent (always a legal block shape) when none divide."""
    # TODO(synk): pad the array to a tile multiple instead of the full-extent
    # fallback for very large, non-aligned dims.
    ladder = [c for c in candidates if dim % c == 0]
    return ladder if ladder else [dim]


def _fit_to_budget(ladders, use_bytes, budget):
    """Pick one tile per (descending) ladder; greedily shrink the largest
    current tile until the estimated VMEM use fits the budget."""
    idx = [0] * len(ladders)

    def cur():
        return [l[i] for l, i in zip(ladders, idx)]

    while use_bytes(*cur()) > budget:
        order = sorted(range(len(ladders)), key=lambda j: -ladders[j][idx[j]])
        for j in order:
            if idx[j] + 1 < len(ladders[j]):
                idx[j] += 1
                break
        else:
            break
    return cur()


# -----------------------------------------------------------------------------
# Tiled matmul + bias kernel (hoisted input-gate projections)
# -----------------------------------------------------------------------------
def matmul_bias_kernel(x_ref, w_ref, b_ref, o_ref, acc_ref):
    k = pl.program_id(2)

    @pl.when(k == 0)
    def _():
        acc_ref[...] = jnp.zeros_like(acc_ref)

    acc_ref[...] += jnp.dot(x_ref[...], w_ref[...],
                            preferred_element_type=jnp.float32)

    @pl.when(k == pl.num_programs(2) - 1)
    def _():
        o_ref[...] = (acc_ref[...] + b_ref[...].astype(jnp.float32)
                      ).astype(o_ref.dtype)


def matmul_bias(x, w, b, vmem_budget, out_dtype=jnp.float32):
    """x: [M, K] @ w: [K, N] + b: [1, N] -> [M, N] (f32 accumulation)."""
    M, K = x.shape
    _, N = w.shape
    xb, wb = x.dtype.itemsize, w.dtype.itemsize
    ob = jnp.dtype(out_dtype).itemsize

    # Prefer 256-multiple tiles for the 256x256 MXUs on v6e/v7x.
    tm_l = _divisor_ladder(M, (512, 256, 128, 64, 32, 16, 8))
    tn_l = _divisor_ladder(N, (512, 256, 128))
    tk_l = _divisor_ladder(K, (512, 256, 128))

    def use(tm, tn, tk):
        return (2 * tm * tk * xb + 2 * tk * tn * wb + 2 * tn * 4
                + 2 * tm * tn * ob + tm * tn * 4)

    tm, tn, tk = _fit_to_budget([tm_l, tn_l, tk_l], use, vmem_budget)
    grid = (M // tm, N // tn, K // tk)
    return pl.pallas_call(
        matmul_bias_kernel,
        out_shape=jax.ShapeDtypeStruct((M, N), out_dtype),
        grid_spec=pltpu.PrefetchScalarGridSpec(
            num_scalar_prefetch=0,
            grid=grid,
            in_specs=[
                pl.BlockSpec((tm, tk), lambda i, j, k: (i, k)),
                pl.BlockSpec((tk, tn), lambda i, j, k: (k, j)),
                pl.BlockSpec((1, tn), lambda i, j, k: (0, j)),
            ],
            out_specs=pl.BlockSpec((tm, tn), lambda i, j, k: (i, j)),
            scratch_shapes=[pltpu.VMEM((tm, tn), jnp.float32)],
        ),
        compiler_params=pltpu.CompilerParams(
            dimension_semantics=("parallel", "parallel", "arbitrary"),
            vmem_limit_bytes=vmem_budget),
    )(x, w, b)


# -----------------------------------------------------------------------------
# GRU recurrence kernel: only h @ Whh_fused stays inside the time loop.
# -----------------------------------------------------------------------------
def gru_recurrence_kernel(*refs, has_rowb, unroll):
    """Grid = (batch_blocks [parallel], time_blocks [arbitrary]).

    i_ref   : (T, Bb, 3H) f32   hoisted input gates (bih + bhh_{r,z} folded in)
    h0_ref  : (Bb, H)     f32   initial hidden state for this batch block
    rowb_ref: (Bb, 3H)    f32   per-row gate bias (layer 0 only: ctx @ Wih_ctx)
    whh_ref : (H, 3H)     bf16  fused recurrent weights (gate order r, z, n)
    bhhn_ref: (1, H)      f32   recurrent bias of the n gate
    y_ref   : (T, Bb, H)  bf16  per-timestep outputs
    hfin_ref: (Bb, H)     f32   final hidden state (written on last time block)
    h_scratch: VMEM (Bb, H) f32 carried hidden state across time blocks
    """
    if has_rowb:
        (i_ref, h0_ref, rowb_ref, whh_ref, bhhn_ref,
         y_ref, hfin_ref, h_scratch) = refs
    else:
        (i_ref, h0_ref, whh_ref, bhhn_ref,
         y_ref, hfin_ref, h_scratch) = refs
        rowb_ref = None

    t = pl.program_id(1)

    @pl.when(t == 0)
    def _():
        h_scratch[...] = h0_ref[...]

    Bb, H = h_scratch.shape
    T = i_ref.shape[0]

    # Hoist loop-invariant values (JAX does not CSE broadcasts inside loops).
    rowb = rowb_ref[...] if has_rowb else None
    bhh_n = jnp.broadcast_to(bhhn_ref[...], (Bb, H))

    def step(tt, h):
        gi = i_ref[tt]
        if has_rowb:
            gi = gi + rowb
        gh = jnp.dot(h.astype(whh_ref.dtype), whh_ref[...],
                     preferred_element_type=jnp.float32)          # [Bb, 3H] f32
        r = jax.nn.sigmoid(gi[:, 0:H] + gh[:, 0:H])
        z = jax.nn.sigmoid(gi[:, H:2 * H] + gh[:, H:2 * H])
        n = jnp.tanh(gi[:, 2 * H:3 * H] + r * (gh[:, 2 * H:3 * H] + bhh_n))
        h_new = (1.0 - z) * n + z * h
        y_ref[tt] = h_new.astype(y_ref.dtype)
        return h_new

    h = lax.fori_loop(0, T, step, h_scratch[...], unroll=unroll)
    h_scratch[...] = h

    @pl.when(t == pl.num_programs(1) - 1)
    def _():
        hfin_ref[...] = h.astype(hfin_ref.dtype)


def _gru_t_block(S, b_blk, H, budget, single_buffer):
    """Largest time block that keeps the pipelined GRU blocks within budget."""
    per_t = 2 * b_blk * 3 * H * 4 + 2 * b_blk * H * 2     # i (f32) + y (bf16), x2 buf
    wbuf = 1 if single_buffer else 2
    fixed = wbuf * H * 3 * H * 2                           # whh bf16
    fixed += wbuf * (b_blk * 3 * H * 4 + b_blk * H * 4 + H * 4)   # rowb + h0 + bhh_n
    fixed += 2 * b_blk * H * 4 + b_blk * H * 4             # hfin out + h scratch
    avail = max(int(budget * 0.6) - fixed, per_t)
    for cand in (32, 16, 8, 4, 2, 1):
        if S % cand == 0 and cand * per_t <= avail:
            return cand
    return 1


def gru_layer(i_seq, h0, rowb, whh, bhh_n, *, b_blocks, vmem_budget, single_buffer):
    """i_seq: [S, B, 3H] f32 hoisted gates. Returns (y: [S,B,H] bf16, h_final: [B,H] f32)."""
    S, B, G = i_seq.shape
    H = h0.shape[-1]
    assert B % b_blocks == 0
    b_blk = B // b_blocks
    has_rowb = rowb is not None

    t_block = _gru_t_block(S, b_blk, H, vmem_budget, single_buffer)
    grid = (b_blocks, S // t_block)

    def const_spec(shape, index_map):
        # Constant-in-time operands: single buffering halves their residency.
        if single_buffer and hasattr(pl, "Buffered"):
            return pl.BlockSpec(shape, index_map, pipeline_mode=pl.Buffered(1))
        return pl.BlockSpec(shape, index_map)

    in_specs = [
        pl.BlockSpec((t_block, b_blk, G), lambda b, t: (t, b, 0)),
        const_spec((b_blk, H), lambda b, t: (b, 0)),
    ]
    if has_rowb:
        in_specs.append(const_spec((b_blk, G), lambda b, t: (b, 0)))
    in_specs += [
        const_spec((H, G), lambda b, t: (0, 0)),
        const_spec((1, H), lambda b, t: (0, 0)),
    ]

    # Full unroll only while the carried hidden tile is small enough to avoid
    # pushing the kernel into a spill-bound regime.
    unroll = (b_blk * H) <= 32 * 1024

    kernel = functools.partial(gru_recurrence_kernel,
                               has_rowb=has_rowb, unroll=unroll)
    operands = (i_seq, h0) + ((rowb,) if has_rowb else ()) + (whh, bhh_n)

    return pl.pallas_call(
        kernel,
        out_shape=(jax.ShapeDtypeStruct((S, B, H), jnp.bfloat16),
                   jax.ShapeDtypeStruct((B, H), jnp.float32)),
        grid_spec=pltpu.PrefetchScalarGridSpec(
            num_scalar_prefetch=0,
            grid=grid,
            in_specs=in_specs,
            out_specs=[
                pl.BlockSpec((t_block, b_blk, H), lambda b, t: (t, b, 0)),
                pl.BlockSpec((b_blk, H), lambda b, t: (b, 0)),
            ],
            scratch_shapes=[pltpu.VMEM((b_blk, H), jnp.float32)],
        ),
        compiler_params=pltpu.CompilerParams(
            dimension_semantics=("parallel", "arbitrary"),
            vmem_limit_bytes=vmem_budget),
    )(*operands)


# -----------------------------------------------------------------------------
# Dense vocab head with the [S,B,V] -> [B,S,V] relayout fused into the store.
# -----------------------------------------------------------------------------
def dense_head_kernel(x_ref, w_ref, b_ref, o_ref, acc_ref):
    """x_ref: (ts*B, tk) bf16 (time-major rows), w_ref: (tk, tv), b_ref: (1, tv),
    o_ref: (B, ts, tv) f32 batch-major output block, acc_ref: (ts*B, tv) f32."""
    k = pl.program_id(2)

    @pl.when(k == 0)
    def _():
        acc_ref[...] = jnp.zeros_like(acc_ref)

    acc_ref[...] += jnp.dot(x_ref[...], w_ref[...],
                            preferred_element_type=jnp.float32)

    @pl.when(k == pl.num_programs(2) - 1)
    def _():
        logits = acc_ref[...] + b_ref[...].astype(jnp.float32)    # (ts*B, tv), s-major
        n_b = o_ref.shape[0]
        ts = o_ref.shape[1]
        for si in range(ts):            # static relayout: write row-groups batch-major
            o_ref[:, si, :] = logits[si * n_b:(si + 1) * n_b, :].astype(o_ref.dtype)


def dense_head(y_tm, w, b, vmem_budget):
    """y_tm: [S, B, H] bf16, w: [H, V] bf16, b: [1, V] f32 -> logits [B, S, V] f32."""
    S, B, H = y_tm.shape
    V = w.shape[1]
    yb, wb = y_tm.dtype.itemsize, w.dtype.itemsize

    ts_l = _divisor_ladder(S, (64, 32, 16, 8))
    tv_l = _divisor_ladder(V, (512, 256, 128))
    tk_l = _divisor_ladder(H, (512, 256, 128))

    def use(ts, tv, tk):
        return (2 * ts * B * tk * yb + 2 * tk * tv * wb + 2 * tv * 4
                + 2 * B * ts * tv * 4 + ts * B * tv * 4)

    ts, tv, tk = _fit_to_budget([ts_l, tv_l, tk_l], use, vmem_budget)
    grid = (S // ts, V // tv, H // tk)
    y_flat = y_tm.reshape(S * B, H)     # layout-compatible flatten, no HBM traffic

    return pl.pallas_call(
        dense_head_kernel,
        out_shape=jax.ShapeDtypeStruct((B, S, V), jnp.float32),
        grid_spec=pltpu.PrefetchScalarGridSpec(
            num_scalar_prefetch=0,
            grid=grid,
            in_specs=[
                pl.BlockSpec((ts * B, tk), lambda s, v, k: (s, k)),
                pl.BlockSpec((tk, tv), lambda s, v, k: (k, v)),
                pl.BlockSpec((1, tv), lambda s, v, k: (0, v)),
            ],
            out_specs=pl.BlockSpec((B, ts, tv), lambda s, v, k: (0, s, v)),
            scratch_shapes=[pltpu.VMEM((ts * B, tv), jnp.float32)],
        ),
        compiler_params=pltpu.CompilerParams(
            dimension_semantics=("parallel", "parallel", "arbitrary"),
            vmem_limit_bytes=vmem_budget),
    )(y_flat, w, b)


# -----------------------------------------------------------------------------
# Parameter construction (fused-gate layout; gate order r, z, n like PyTorch)
# -----------------------------------------------------------------------------
def init_params(key, vocab_size, embed_size, num_hiddens, num_layers):
    ks = jax.random.split(key, 2 + num_layers)
    params = {"embedding": 0.1 * jax.random.normal(
        ks[0], (vocab_size, embed_size), jnp.float32)}

    gru = []
    for layer in range(num_layers):
        in_size = embed_size + num_hiddens if layer == 0 else num_hiddens
        lk = jax.random.split(ks[1 + layer], 4)
        gru.append(dict(
            wih=0.1 * jax.random.normal(lk[0], (in_size, 3 * num_hiddens), jnp.float32),
            whh=0.1 * jax.random.normal(lk[1], (num_hiddens, 3 * num_hiddens), jnp.float32),
            bih=0.1 * jax.random.normal(lk[2], (1, 3 * num_hiddens), jnp.float32),
            bhh=0.1 * jax.random.normal(lk[3], (1, 3 * num_hiddens), jnp.float32),
        ))
    params["gru"] = gru

    dk = jax.random.split(ks[-1], 2)
    params["dense_w"] = 0.1 * jax.random.normal(
        dk[0], (num_hiddens, vocab_size), jnp.float32)
    params["dense_b"] = 0.1 * jax.random.normal(dk[1], (1, vocab_size), jnp.float32)
    return params


# -----------------------------------------------------------------------------
# Full forward (mirrors Seq2SeqDecoder.forward)
# -----------------------------------------------------------------------------
def seq2seq_decoder_forward(params, X, state):
    """X: [B, S] int32 token ids; state: [num_layers, B, H].
    Returns (output: [B, S, vocab] f32, new_state: [num_layers, B, H] f32)."""
    B, S = X.shape
    num_layers, _, H = state.shape
    E = params["embedding"].shape[1]
    cdt = COMPUTE_DTYPE

    n_tc, vmem_bytes = _tpu_info()
    budget = _vmem_budget(vmem_bytes)
    single_buffer = _SINGLE_BUFFER_WEIGHTS
    # Split the batch across TensorCores only on 2-TC chips (v7x / megacore) and
    # only when each half keeps >= 16 sublane rows (bf16 pack).
    b_blocks = 2 if (n_tc >= 2 and B % 32 == 0) else 1

    # TODO(synk): embedding gather stays in plain JAX (data-dependent gather);
    # it could be fused into the layer-0 projection with scalar-prefetched ids.
    emb_tm = jnp.take(params["embedding"].astype(cdt), X.T, axis=0)   # [S, B, E] bf16

    # The reference module uses `state[1]` verbatim (equal to the last layer's
    # hidden state for its implied 2-layer configuration); mirror it exactly.
    ctx = state[1]                                                    # [B, H]

    y_tm = None
    new_states = []
    for layer in range(num_layers):
        p = params["gru"][layer]
        H3 = 3 * H
        # Fold bih (all gates) + bhh_{r,z} into the hoisted projection bias;
        # bhh_n must stay inside the recurrence (it is scaled by r).
        gate_bias = p["bih"] + p["bhh"].at[:, 2 * H:].set(0.0)        # [1, 3H]
        bhh_n = p["bhh"][:, 2 * H:]                                   # [1, H]

        if layer == 0:
            w_emb = p["wih"][:E].astype(cdt)                          # [E, 3H]
            w_ctx = p["wih"][E:].astype(cdt)                          # [H, 3H]
            i_flat = matmul_bias(emb_tm.reshape(S * B, E), w_emb, gate_bias, budget)
            # Time-invariant context projection (per-row gate bias), computed once.
            rowb = jnp.dot(ctx.astype(cdt), w_ctx,
                           preferred_element_type=jnp.float32)        # [B, 3H]
        else:
            # y_tm is already bf16 -> fed straight to the MXU, no extra cast pass.
            i_flat = matmul_bias(y_tm.reshape(S * B, H), p["wih"].astype(cdt),
                                 gate_bias, budget)
            rowb = None                 # skip the dead zero-rowb add/DMA entirely

        i_seq = i_flat.reshape(S, B, H3)
        # TODO(synk): the input projection could be fused into the GRU kernel
        # (inner emit_pipeline over K) to drop the i_seq HBM round trip.
        y_tm, h_fin = gru_layer(i_seq, state[layer], rowb, p["whh"].astype(cdt),
                                bhh_n, b_blocks=b_blocks, vmem_budget=budget,
                                single_buffer=single_buffer)
        new_states.append(h_fin)

    new_state = jnp.stack(new_states, axis=0)                         # [L, B, H]

    # Dense vocab head: relayout to batch-first is fused into the kernel store.
    logits = dense_head(y_tm, params["dense_w"].astype(cdt),
                        params["dense_b"], budget)                    # [B, S, V]
    return logits, new_state


def _run_forward(params, X, state):
    global _SINGLE_BUFFER_WEIGHTS
    try:
        fwd = jax.jit(seq2seq_decoder_forward)
        return jax.block_until_ready(fwd(params, X, state))
    except Exception:
        # Fallback for Pallas builds without BlockSpec(pipeline_mode=Buffered(1)):
        # retrace with default double buffering.
        _SINGLE_BUFFER_WEIGHTS = False
        fwd = jax.jit(seq2seq_decoder_forward)
        return jax.block_until_ready(fwd(params, X, state))


# -----------------------------------------------------------------------------
# Pure-JAX reference (same math, same bf16 operand / f32 accumulate convention)
# -----------------------------------------------------------------------------
def gru_layer_ref(x_seq, h0, wih, whh, bih, bhh):
    H = h0.shape[-1]
    cdt = COMPUTE_DTYPE
    wih_c = wih.astype(cdt)
    whh_c = whh.astype(cdt)

    def step(h, x):
        gi = jnp.dot(x.astype(cdt), wih_c, preferred_element_type=jnp.float32) + bih
        gh = jnp.dot(h.astype(cdt), whh_c, preferred_element_type=jnp.float32) + bhh
        r = jax.nn.sigmoid(gi[:, :H] + gh[:, :H])
        z = jax.nn.sigmoid(gi[:, H:2 * H] + gh[:, H:2 * H])
        n = jnp.tanh(gi[:, 2 * H:] + r * gh[:, 2 * H:])
        h_new = (1.0 - z) * n + z * h
        return h_new, h_new

    h_fin, ys = lax.scan(step, h0, x_seq)
    return ys, h_fin


def seq2seq_decoder_ref(params, X, state):
    B, S = X.shape
    L, _, H = state.shape
    cdt = COMPUTE_DTYPE
    emb = jnp.take(params["embedding"], X, axis=0)               # [B, S, E]
    ctx = jnp.broadcast_to(state[1][:, None, :], (B, S, H))
    layer_in = jnp.transpose(jnp.concatenate([emb, ctx], axis=2), (1, 0, 2))
    new_states = []
    for layer in range(L):
        p = params["gru"][layer]
        layer_in, h_fin = gru_layer_ref(layer_in, state[layer],
                                        p["wih"], p["whh"], p["bih"], p["bhh"])
        new_states.append(h_fin)
    out_bf = jnp.transpose(layer_in, (1, 0, 2))                  # [B, S, H]
    logits = (jnp.dot(out_bf.reshape(B * S, H).astype(cdt),
                      params["dense_w"].astype(cdt),
                      preferred_element_type=jnp.float32)
              + params["dense_b"])
    return logits.reshape(B, S, -1), jnp.stack(new_states, axis=0)


# -----------------------------------------------------------------------------
if __name__ == "__main__":
    # Small but lane-aligned shapes (H = V = 128, B = 8) so the lane-dense gate
    # slices and the fused batch-major logits store are actually exercised.
    vocab_size, embed_size, num_hiddens, num_layers = 128, 32, 128, 2
    batch, seq_len = 8, 8

    key = jax.random.PRNGKey(0)
    pkey, xkey, skey = jax.random.split(key, 3)

    params = init_params(pkey, vocab_size, embed_size, num_hiddens, num_layers)
    X = jax.random.randint(xkey, (batch, seq_len), 0, vocab_size, jnp.int32)
    state = 0.1 * jax.random.normal(skey, (num_layers, batch, num_hiddens),
                                    jnp.float32)

    out, new_state = _run_forward(params, X, state)
    out_ref, state_ref = seq2seq_decoder_ref(params, X, state)

    assert out.shape == (batch, seq_len, vocab_size)
    assert new_state.shape == (num_layers, batch, num_hiddens)
    assert jnp.allclose(out, out_ref, rtol=2e-3, atol=2e-3), \
        float(jnp.max(jnp.abs(out - out_ref)))
    assert jnp.allclose(new_state, state_ref, rtol=2e-3, atol=2e-3), \
        float(jnp.max(jnp.abs(new_state - state_ref)))

    print("KERNEL_OK")
</pallas_src>

<mosaic_0001>
module attributes {stable_mosaic.version = 11 : i64} {
  func.func @gru_recurrence_kernel(%arg0: i32, %arg1: i32, %arg2: memref<8x8x384xf32, #tpu.memory_space<vmem>>, %arg3: memref<8x128xf32, #tpu.memory_space<vmem>>, %arg4: memref<128x384xbf16, #tpu.memory_space<vmem>>, %arg5: memref<1x128xf32, #tpu.memory_space<vmem>>, %arg6: memref<8x8x128xbf16, #tpu.memory_space<vmem>>, %arg7: memref<8x128xf32, #tpu.memory_space<vmem>>, %arg8: memref<8x128xf32, #tpu.memory_space<vmem>>) attributes {dimension_semantics = [#tpu.dimension_semantics<parallel>, #tpu.dimension_semantics<arbitrary>], iteration_bounds = array<i64: 1, 1>, scalar_prefetch = 0 : i64, scratch_operands = 1 : i64, tpu.core_type = #tpu.core_type<tc>, window_params = [{transform_indices = @transform_0, window_bounds = array<i64: 8, 8, 384>}, {pipeline_mode = #tpu.pipeline_mode<synchronous>, transform_indices = @transform_1, window_bounds = array<i64: 8, 128>}, {pipeline_mode = #tpu.pipeline_mode<synchronous>, transform_indices = @transform_2, window_bounds = array<i64: 128, 384>}, {pipeline_mode = #tpu.pipeline_mode<synchronous>, transform_indices = @transform_3, window_bounds = array<i64: 1, 128>}, {transform_indices = @transform_4, window_bounds = array<i64: 8, 8, 128>}, {transform_indices = @transform_5, window_bounds = array<i64: 8, 128>}]} {
    %c0_i32 = arith.constant 0 : i32
    %0 = arith.cmpi eq, %arg1, %c0_i32 : i32
    %1 = arith.extui %0 : i1 to i32
    %c0_i32_0 = arith.constant 0 : i32
    %2 = arith.cmpi ne, %1, %c0_i32_0 : i32
    scf.if %2 {
      %c0_88 = arith.constant 0 : index
      %c0_89 = arith.constant 0 : index
      %315 = vector.load %arg3[%c0_88, %c0_89] : memref<8x128xf32, #tpu.memory_space<vmem>>, vector<8x128xf32>
      %c0_90 = arith.constant 0 : index
      %c0_91 = arith.constant 0 : index
      %316 = vector.load %arg8[%c0_90, %c0_91] : memref<8x128xf32, #tpu.memory_space<vmem>>, vector<8x128xf32>
      tpu.vector_store %arg8[%c0_90, %c0_91], %315 {strides = array<i32>} : memref<8x128xf32, #tpu.memory_space<vmem>>, vector<8x128xf32>,
    } else {
    }
    %c0 = arith.constant 0 : index
    %c0_1 = arith.constant 0 : index
    %3 = vector.load %arg5[%c0, %c0_1] : memref<1x128xf32, #tpu.memory_space<vmem>>, vector<1x128xf32>
    %4 = vector.shape_cast %3 : vector<1x128xf32> to vector<1x128xf32>
    %5 = vector.broadcast %4 : vector<1x128xf32> to vector<8x128xf32>
    %c0_2 = arith.constant 0 : index
    %c0_3 = arith.constant 0 : index
    %6 = vector.load %arg8[%c0_2, %c0_3] : memref<8x128xf32, #tpu.memory_space<vmem>>, vector<8x128xf32>
    %c0_i32_4 = arith.constant 0 : i32
    %7 = arith.index_cast %c0_i32_4 : i32 to index
    %c0_5 = arith.constant 0 : index
    %c0_6 = arith.constant 0 : index
    %8 = vector.load %arg2[%7, %c0_5, %c0_6] : memref<8x8x384xf32, #tpu.memory_space<vmem>>, vector<1x8x384xf32>
    %9 = vector.shape_cast %8 : vector<1x8x384xf32> to vector<8x384xf32>
    %10 = arith.truncf %6 : vector<8x128xf32> to vector<8x128xbf16>
    %c0_7 = arith.constant 0 : index
    %c0_8 = arith.constant 0 : index
    %11 = vector.load %arg4[%c0_7, %c0_8] : memref<128x384xbf16, #tpu.memory_space<vmem>>, vector<128x384xbf16>
    %cst = arith.constant dense<0.000000e+00> : vector<8x384xf32>
    %12 = tpu.matmul %10, %11, %cst {dimension_numbers = #tpu.dot_dimension_numbers<[1], [0], [0], [1], [0, 0, 1, 1], [], []>} : vector<8x128xbf16>, vector<128x384xbf16>, vector<8x384xf32> -> vector<8x384xf32>
    %13 = vector.extract_strided_slice %9 {offsets = [0, 0], sizes = [8, 128], strides = [1, 1]} : vector<8x384xf32> to vector<8x128xf32>
    %14 = vector.extract_strided_slice %12 {offsets = [0, 0], sizes = [8, 128], strides = [1, 1]} : vector<8x384xf32> to vector<8x128xf32>
    %15 = arith.addf %13, %14 : vector<8x128xf32>
    %16 = arith.negf %15 : vector<8x128xf32>
    %17 = math.exp %16 : vector<8x128xf32>
    %cst_9 = arith.constant 1.000000e+00 : f32
    %18 = vector.broadcast %cst_9 : f32 to vector<8x128xf32>
    %19 = arith.addf %18, %17 : vector<8x128xf32>
    %20 = arith.divf %18, %19 : vector<8x128xf32>
    %21 = vector.extract_strided_slice %9 {offsets = [0, 128], sizes = [8, 128], strides = [1, 1]} : vector<8x384xf32> to vector<8x128xf32>
    %22 = vector.extract_strided_slice %12 {offsets = [0, 128], sizes = [8, 128], strides = [1, 1]} : vector<8x384xf32> to vector<8x128xf32>
    %23 = arith.addf %21, %22 : vector<8x128xf32>
    %24 = arith.negf %23 : vector<8x128xf32>
    %25 = math.exp %24 : vector<8x128xf32>
    %cst_10 = arith.constant 1.000000e+00 : f32
    %26 = vector.broadcast %cst_10 : f32 to vector<8x128xf32>
    %27 = arith.addf %26, %25 : vector<8x128xf32>
    %28 = arith.divf %26, %27 : vector<8x128xf32>
    %29 = vector.extract_strided_slice %9 {offsets = [0, 256], sizes = [8, 128], strides = [1, 1]} : vector<8x384xf32> to vector<8x128xf32>
    %30 = vector.extract_strided_slice %12 {offsets = [0, 256], sizes = [8, 128], strides = [1, 1]} : vector<8x384xf32> to vector<8x128xf32>
    %31 = arith.addf %30, %5 : vector<8x128xf32>
    %32 = arith.mulf %20, %31 : vector<8x128xf32>
    %33 = arith.addf %29, %32 : vector<8x128xf32>
    %34 = math.tanh %33 : vector<8x128xf32>
    %cst_11 = arith.constant 1.000000e+00 : f32
    %35 = vector.broadcast %cst_11 : f32 to vector<8x128xf32>
    %36 = arith.subf %35, %28 : vector<8x128xf32>
    %37 = arith.mulf %36, %34 : vector<8x128xf32>
    %38 = arith.mulf %28, %6 : vector<8x128xf32>
    %39 = arith.addf %37, %38 : vector<8x128xf32>
    %40 = arith.truncf %39 : vector<8x128xf32> to vector<8x128xbf16>
    %41 = arith.index_cast %c0_i32_4 : i32 to index
    %c0_12 = arith.constant 0 : index
    %c0_13 = arith.constant 0 : index
    %42 = vector.load %arg6[%41, %c0_12, %c0_13] : memref<8x8x128xbf16, #tpu.memory_space<vmem>>, vector<1x8x128xbf16>
    %43 = vector.shape_cast %42 : vector<1x8x128xbf16> to vector<8x128xbf16>
    %44 = vector.shape_cast %40 : vector<8x128xbf16> to vector<1x8x128xbf16>
    tpu.vector_store %arg6[%41, %c0_12, %c0_13], %44 {strides = array<i32>} : memref<8x8x128xbf16, #tpu.memory_space<vmem>>, vector<1x8x128xbf16>,
    %c1_i32 = arith.constant 1 : i32
    %45 = arith.index_cast %c1_i32 : i32 to index
    %c0_14 = arith.constant 0 : index
    %c0_15 = arith.constant 0 : index
    %46 = vector.load %arg2[%45, %c0_14, %c0_15] : memref<8x8x384xf32, #tpu.memory_space<vmem>>, vector<1x8x384xf32>
    %47 = vector.shape_cast %46 : vector<1x8x384xf32> to vector<8x384xf32>
    %48 = arith.truncf %39 : vector<8x128xf32> to vector<8x128xbf16>
    %c0_16 = arith.constant 0 : index
    %c0_17 = arith.constant 0 : index
    %49 = vector.load %arg4[%c0_16, %c0_17] : memref<128x384xbf16, #tpu.memory_space<vmem>>, vector<128x384xbf16>
    %cst_18 = arith.constant dense<0.000000e+00> : vector<8x384xf32>
    %50 = tpu.matmul %48, %49, %cst_18 {dimension_numbers = #tpu.dot_dimension_numbers<[1], [0], [0], [1], [0, 0, 1, 1], [], []>} : vector<8x128xbf16>, vector<128x384xbf16>, vector<8x384xf32> -> vector<8x384xf32>
    %51 = vector.extract_strided_slice %47 {offsets = [0, 0], sizes = [8, 128], strides = [1, 1]} : vector<8x384xf32> to vector<8x128xf32>
    %52 = vector.extract_strided_slice %50 {offsets = [0, 0], sizes = [8, 128], strides = [1, 1]} : vector<8x384xf32> to vector<8x128xf32>
    %53 = arith.addf %51, %52 : vector<8x128xf32>
    %54 = arith.negf %53 : vector<8x128xf32>
    %55 = math.exp %54 : vector<8x128xf32>
    %cst_19 = arith.constant 1.000000e+00 : f32
    %56 = vector.broadcast %cst_19 : f32 to vector<8x128xf32>
    %57 = arith.addf %56, %55 : vector<8x128xf32>
    %58 = arith.divf %56, %57 : vector<8x128xf32>
    %59 = vector.extract_strided_slice %47 {offsets = [0, 128], sizes = [8, 128], strides = [1, 1]} : vector<8x384xf32> to vector<8x128xf32>
    %60 = vector.extract_strided_slice %50 {offsets = [0, 128], sizes = [8, 128], strides = [1, 1]} : vector<8x384xf32> to vector<8x128xf32>
    %61 = arith.addf %59, %60 : vector<8x128xf32>
    %62 = arith.negf %61 : vector<8x128xf32>
    %63 = math.exp %62 : vector<8x128xf32>
    %cst_20 = arith.constant 1.000000e+00 : f32
    %64 = vector.broadcast %cst_20 : f32 to vector<8x128xf32>
    %65 = arith.addf %64, %63 : vector<8x128xf32>
    %66 = arith.divf %64, %65 : vector<8x128xf32>
    %67 = vector.extract_strided_slice %47 {offsets = [0, 256], sizes = [8, 128], strides = [1, 1]} : vector<8x384xf32> to vector<8x128xf32>
    %68 = vector.extract_strided_slice %50 {offsets = [0, 256], sizes = [8, 128], strides = [1, 1]} : vector<8x384xf32> to vector<8x128xf32>
    %69 = arith.addf %68, %5 : vector<8x128xf32>
    %70 = arith.mulf %58, %69 : vector<8x128xf32>
    %71 = arith.addf %67, %70 : vector<8x128xf32>
    %72 = math.tanh %71 : vector<8x128xf32>
    %cst_21 = arith.constant 1.000000e+00 : f32
    %73 = vector.broadcast %cst_21 : f32 to vector<8x128xf32>
    %74 = arith.subf %73, %66 : vector<8x128xf32>
    %75 = arith.mulf %74, %72 : vector<8x128xf32>
    %76 = arith.mulf %66, %39 : vector<8x128xf32>
    %77 = arith.addf %75, %76 : vector<8x128xf32>
    %78 = arith.truncf %77 : vector<8x128xf32> to vector<8x128xbf16>
    %79 = arith.index_cast %c1_i32 : i32 to index
    %c0_22 = arith.constant 0 : index
    %c0_23 = arith.constant 0 : index
    %80 = vector.load %arg6[%79, %c0_22, %c0_23] : memref<8x8x128xbf16, #tpu.memory_space<vmem>>, vector<1x8x128xbf16>
    %81 = vector.shape_cast %80 : vector<1x8x128xbf16> to vector<8x128xbf16>
    %82 = vector.shape_cast %78 : vector<8x128xbf16> to vector<1x8x128xbf16>
    tpu.vector_store %arg6[%79, %c0_22, %c0_23], %82 {strides = array<i32>} : memref<8x8x128xbf16, #tpu.memory_space<vmem>>, vector<1x8x128xbf16>,
    %c2_i32 = arith.constant 2 : i32
    %83 = arith.index_cast %c2_i32 : i32 to index
    %c0_24 = arith.constant 0 : index
    %c0_25 = arith.constant 0 : index
    %84 = vector.load %arg2[%83, %c0_24, %c0_25] : memref<8x8x384xf32, #tpu.memory_space<vmem>>, vector<1x8x384xf32>
    %85 = vector.shape_cast %84 : vector<1x8x384xf32> to vector<8x384xf32>
    %86 = arith.truncf %77 : vector<8x128xf32> to vector<8x128xbf16>
    %c0_26 = arith.constant 0 : index
    %c0_27 = arith.constant 0 : index
    %87 = vector.load %arg4[%c0_26, %c0_27] : memref<128x384xbf16, #tpu.memory_space<vmem>>, vector<128x384xbf16>
    %cst_28 = arith.constant dense<0.000000e+00> : vector<8x384xf32>
    %88 = tpu.matmul %86, %87, %cst_28 {dimension_numbers = #tpu.dot_dimension_numbers<[1], [0], [0], [1], [0, 0, 1, 1], [], []>} : vector<8x128xbf16>, vector<128x384xbf16>, vector<8x384xf32> -> vector<8x384xf32>
    %89 = vector.extract_strided_slice %85 {offsets = [0, 0], sizes = [8, 128], strides = [1, 1]} : vector<8x384xf32> to vector<8x128xf32>
    %90 = vector.extract_strided_slice %88 {offsets = [0, 0], sizes = [8, 128], strides = [1, 1]} : vector<8x384xf32> to vector<8x128xf32>
    %91 = arith.addf %89, %90 : vector<8x128xf32>
    %92 = arith.negf %91 : vector<8x128xf32>
    %93 = math.exp %92 : vector<8x128xf32>
    %cst_29 = arith.constant 1.000000e+00 : f32
    %94 = vector.broadcast %cst_29 : f32 to vector<8x128xf32>
    %95 = arith.addf %94, %93 : vector<8x128xf32>
    %96 = arith.divf %94, %95 : vector<8x128xf32>
    %97 = vector.extract_strided_slice %85 {offsets = [0, 128], sizes = [8, 128], strides = [1, 1]} : vector<8x384xf32> to vector<8x128xf32>
    %98 = vector.extract_strided_slice %88 {offsets = [0, 128], sizes = [8, 128], strides = [1, 1]} : vector<8x384xf32> to vector<8x128xf32>
    %99 = arith.addf %97, %98 : vector<8x128xf32>
    %100 = arith.negf %99 : vector<8x128xf32>
    %101 = math.exp %100 : vector<8x128xf32>
    %cst_30 = arith.constant 1.000000e+00 : f32
    %102 = vector.broadcast %cst_30 : f32 to vector<8x128xf32>
    %103 = arith.addf %102, %101 : vector<8x128xf32>
    %104 = arith.divf %102, %103 : vector<8x128xf32>
    %105 = vector.extract_strided_slice %85 {offsets = [0, 256], sizes = [8, 128], strides = [1, 1]} : vector<8x384xf32> to vector<8x128xf32>
    %106 = vector.extract_strided_slice %88 {offsets = [0, 256], sizes = [8, 128], strides = [1, 1]} : vector<8x384xf32> to vector<8x128xf32>
    %107 = arith.addf %106, %5 : vector<8x128xf32>
    %108 = arith.mulf %96, %107 : vector<8x128xf32>
    %109 = arith.addf %105, %108 : vector<8x128xf32>
    %110 = math.tanh %109 : vector<8x128xf32>
    %cst_31 = arith.constant 1.000000e+00 : f32
    %111 = vector.broadcast %cst_31 : f32 to vector<8x128xf32>
    %112 = arith.subf %111, %104 : vector<8x128xf32>
    %113 = arith.mulf %112, %110 : vector<8x128xf32>
    %114 = arith.mulf %104, %77 : vector<8x128xf32>
    %115 = arith.addf %113, %114 : vector<8x128xf32>
    %116 = arith.truncf %115 : vector<8x128xf32> to vector<8x128xbf16>
    %117 = arith.index_cast %c2_i32 : i32 to index
    %c0_32 = arith.constant 0 : index
    %c0_33 = arith.constant 0 : index
    %118 = vector.load %arg6[%117, %c0_32, %c0_33] : memref<8x8x128xbf16, #tpu.memory_space<vmem>>, vector<1x8x128xbf16>
    %119 = vector.shape_cast %118 : vector<1x8x128xbf16> to vector<8x128xbf16>
    %120 = vector.shape_cast %116 : vector<8x128xbf16> to vector<1x8x128xbf16>
    tpu.vector_store %arg6[%117, %c0_32, %c0_33], %120 {strides = array<i32>} : memref<8x8x128xbf16, #tpu.memory_space<vmem>>, vector<1x8x128xbf16>,
    %c3_i32 = arith.constant 3 : i32
    %121 = arith.index_cast %c3_i32 : i32 to index
    %c0_34 = arith.constant 0 : index
    %c0_35 = arith.constant 0 : index
    %122 = vector.load %arg2[%121, %c0_34, %c0_35] : memref<8x8x384xf32, #tpu.memory_space<vmem>>, vector<1x8x384xf32>
    %123 = vector.shape_cast %122 : vector<1x8x384xf32> to vector<8x384xf32>
    %124 = arith.truncf %115 : vector<8x128xf32> to vector<8x128xbf16>
    %c0_36 = arith.constant 0 : index
    %c0_37 = arith.constant 0 : index
    %125 = vector.load %arg4[%c0_36, %c0_37] : memref<128x384xbf16, #tpu.memory_space<vmem>>, vector<128x384xbf16>
    %cst_38 = arith.constant dense<0.000000e+00> : vector<8x384xf32>
    %126 = tpu.matmul %124, %125, %cst_38 {dimension_numbers = #tpu.dot_dimension_numbers<[1], [0], [0], [1], [0, 0, 1, 1], [], []>} : vector<8x128xbf16>, vector<128x384xbf16>, vector<8x384xf32> -> vector<8x384xf32>
    %127 = vector.extract_strided_slice %123 {offsets = [0, 0], sizes = [8, 128], strides = [1, 1]} : vector<8x384xf32> to vector<8x128xf32>
    %128 = vector.extract_strided_slice %126 {offsets = [0, 0], sizes = [8, 128], strides = [1, 1]} : vector<8x384xf32> to vector<8x128xf32>
    %129 = arith.addf %127, %128 : vector<8x128xf32>
    %130 = arith.negf %129 : vector<8x128xf32>
    %131 = math.exp %130 : vector<8x128xf32>
    %cst_39 = arith.constant 1.000000e+00 : f32
    %132 = vector.broadcast %cst_39 : f32 to vector<8x128xf32>
    %133 = arith.addf %132, %131 : vector<8x128xf32>
    %134 = arith.divf %132, %133 : vector<8x128xf32>
    %135 = vector.extract_strided_slice %123 {offsets = [0, 128], sizes = [8, 128], strides = [1, 1]} : vector<8x384xf32> to vector<8x128xf32>
    %136 = vector.extract_strided_slice %126 {offsets = [0, 128], sizes = [8, 128], strides = [1, 1]} : vector<8x384xf32> to vector<8x128xf32>
    %137 = arith.addf %135, %136 : vector<8x128xf32>
    %138 = arith.negf %137 : vector<8x128xf32>
    %139 = math.exp %138 : vector<8x128xf32>
    %cst_40 = arith.constant 1.000000e+00 : f32
    %140 = vector.broadcast %cst_40 : f32 to vector<8x128xf32>
    %141 = arith.addf %140, %139 : vector<8x128xf32>
    %142 = arith.divf %140, %141 : vector<8x128xf32>
    %143 = vector.extract_strided_slice %123 {offsets = [0, 256], sizes = [8, 128], strides = [1, 1]} : vector<8x384xf32> to vector<8x128xf32>
    %144 = vector.extract_strided_slice %126 {offsets = [0, 256], sizes = [8, 128], strides = [1, 1]} : vector<8x384xf32> to vector<8x128xf32>
    %145 = arith.addf %144, %5 : vector<8x128xf32>
    %146 = arith.mulf %134, %145 : vector<8x128xf32>
    %147 = arith.addf %143, %146 : vector<8x128xf32>
    %148 = math.tanh %147 : vector<8x128xf32>
    %cst_41 = arith.constant 1.000000e+00 : f32
    %149 = vector.broadcast %cst_41 : f32 to vector<8x128xf32>
    %150 = arith.subf %149, %142 : vector<8x128xf32>
    %151 = arith.mulf %150, %148 : vector<8x128xf32>
    %152 = arith.mulf %142, %115 : vector<8x128xf32>
    %153 = arith.addf %151, %152 : vector<8x128xf32>
    %154 = arith.truncf %153 : vector<8x128xf32> to vector<8x128xbf16>
    %155 = arith.index_cast %c3_i32 : i32 to index
    %c0_42 = arith.constant 0 : index
    %c0_43 = arith.constant 0 : index
    %156 = vector.load %arg6[%155, %c0_42, %c0_43] : memref<8x8x128xbf16, #tpu.memory_space<vmem>>, vector<1x8x128xbf16>
    %157 = vector.shape_cast %156 : vector<1x8x128xbf16> to vector<8x128xbf16>
    %158 = vector.shape_cast %154 : vector<8x128xbf16> to vector<1x8x128xbf16>
    tpu.vector_store %arg6[%155, %c0_42, %c0_43], %158 {strides = array<i32>} : memref<8x8x128xbf16, #tpu.memory_space<vmem>>, vector<1x8x128xbf16>,
    %c4_i32 = arith.constant 4 : i32
    %159 = arith.index_cast %c4_i32 : i32 to index
    %c0_44 = arith.constant 0 : index
    %c0_45 = arith.constant 0 : index
    %160 = vector.load %arg2[%159, %c0_44, %c0_45] : memref<8x8x384xf32, #tpu.memory_space<vmem>>, vector<1x8x384xf32>
    %161 = vector.shape_cast %160 : vector<1x8x384xf32> to vector<8x384xf32>
    %162 = arith.truncf %153 : vector<8x128xf32> to vector<8x128xbf16>
    %c0_46 = arith.constant 0 : index
    %c0_47 = arith.constant 0 : index
    %163 = vector.load %arg4[%c0_46, %c0_47] : memref<128x384xbf16, #tpu.memory_space<vmem>>, vector<128x384xbf16>
    %cst_48 = arith.constant dense<0.000000e+00> : vector<8x384xf32>
    %164 = tpu.matmul %162, %163, %cst_48 {dimension_numbers = #tpu.dot_dimension_numbers<[1], [0], [0], [1], [0, 0, 1, 1], [], []>} : vector<8x128xbf16>, vector<128x384xbf16>, vector<8x384xf32> -> vector<8x384xf32>
    %165 = vector.extract_strided_slice %161 {offsets = [0, 0], sizes = [8, 128], strides = [1, 1]} : vector<8x384xf32> to vector<8x128xf32>
    %166 = vector.extract_strided_slice %164 {offsets = [0, 0], sizes = [8, 128], strides = [1, 1]} : vector<8x384xf32> to vector<8x128xf32>
    %167 = arith.addf %165, %166 : vector<8x128xf32>
    %168 = arith.negf %167 : vector<8x128xf32>
    %169 = math.exp %168 : vector<8x128xf32>
    %cst_49 = arith.constant 1.000000e+00 : f32
    %170 = vector.broadcast %cst_49 : f32 to vector<8x128xf32>
    %171 = arith.addf %170, %169 : vector<8x128xf32>
    %172 = arith.divf %170, %171 : vector<8x128xf32>
    %173 = vector.extract_strided_slice %161 {offsets = [0, 128], sizes = [8, 128], strides = [1, 1]} : vector<8x384xf32> to vector<8x128xf32>
    %174 = vector.extract_strided_slice %164 {offsets = [0, 128], sizes = [8, 128], strides = [1, 1]} : vector<8x384xf32> to vector<8x128xf32>
    %175 = arith.addf %173, %174 : vector<8x128xf32>
    %176 = arith.negf %175 : vector<8x128xf32>
    %177 = math.exp %176 : vector<8x128xf32>
    %cst_50 = arith.constant 1.000000e+00 : f32
    %178 = vector.broadcast %cst_50 : f32 to vector<8x128xf32>
    %179 = arith.addf %178, %177 : vector<8x128xf32>
    %180 = arith.divf %178, %179 : vector<8x128xf32>
    %181 = vector.extract_strided_slice %161 {offsets = [0, 256], sizes = [8, 128], strides = [1, 1]} : vector<8x384xf32> to vector<8x128xf32>
    %182 = vector.extract_strided_slice %164 {offsets = [0, 256], sizes = [8, 128], strides = [1, 1]} : vector<8x384xf32> to vector<8x128xf32>
    %183 = arith.addf %182, %5 : vector<8x128xf32>
    %184 = arith.mulf %172, %183 : vector<8x128xf32>
    %185 = arith.addf %181, %184 : vector<8x128xf32>
    %186 = math.tanh %185 : vector<8x128xf32>
    %cst_51 = arith.constant 1.000000e+00 : f32
    %187 = vector.broadcast %cst_51 : f32 to vector<8x128xf32>
    %188 = arith.subf %187, %180 : vector<8x128xf32>
    %189 = arith.mulf %188, %186 : vector<8x128xf32>
    %190 = arith.mulf %180, %153 : vector<8x128xf32>
    %191 = arith.addf %189, %190 : vector<8x128xf32>
    %192 = arith.truncf %191 : vector<8x128xf32> to vector<8x128xbf16>
    %193 = arith.index_cast %c4_i32 : i32 to index
    %c0_52 = arith.constant 0 : index
    %c0_53 = arith.constant 0 : index
    %194 = vector.load %arg6[%193, %c0_52, %c0_53] : memref<8x8x128xbf16, #tpu.memory_space<vmem>>, vector<1x8x128xbf16>
    %195 = vector.shape_cast %194 : vector<1x8x128xbf16> to vector<8x128xbf16>
    %196 = vector.shape_cast %192 : vector<8x128xbf16> to vector<1x8x128xbf16>
    tpu.vector_store %arg6[%193, %c0_52, %c0_53], %196 {strides = array<i32>} : memref<8x8x128xbf16, #tpu.memory_space<vmem>>, vector<1x8x128xbf16>,
    %c5_i32 = arith.constant 5 : i32
    %197 = arith.index_cast %c5_i32 : i32 to index
    %c0_54 = arith.constant 0 : index
    %c0_55 = arith.constant 0 : index
    %198 = vector.load %arg2[%197, %c0_54, %c0_55] : memref<8x8x384xf32, #tpu.memory_space<vmem>>, vector<1x8x384xf32>
    %199 = vector.shape_cast %198 : vector<1x8x384xf32> to vector<8x384xf32>
    %200 = arith.truncf %191 : vector<8x128xf32> to vector<8x128xbf16>
    %c0_56 = arith.constant 0 : index
    %c0_57 = arith.constant 0 : index
    %201 = vector.load %arg4[%c0_56, %c0_57] : memref<128x384xbf16, #tpu.memory_space<vmem>>, vector<128x384xbf16>
    %cst_58 = arith.constant dense<0.000000e+00> : vector<8x384xf32>
    %202 = tpu.matmul %200, %201, %cst_58 {dimension_numbers = #tpu.dot_dimension_numbers<[1], [0], [0], [1], [0, 0, 1, 1], [], []>} : vector<8x128xbf16>, vector<128x384xbf16>, vector<8x384xf32> -> vector<8x384xf32>
    %203 = vector.extract_strided_slice %199 {offsets = [0, 0], sizes = [8, 128], strides = [1, 1]} : vector<8x384xf32> to vector<8x128xf32>
    %204 = vector.extract_strided_slice %202 {offsets = [0, 0], sizes = [8, 128], strides = [1, 1]} : vector<8x384xf32> to vector<8x128xf32>
    %205 = arith.addf %203, %204 : vector<8x128xf32>
    %206 = arith.negf %205 : vector<8x128xf32>
    %207 = math.exp %206 : vector<8x128xf32>
    %cst_59 = arith.constant 1.000000e+00 : f32
    %208 = vector.broadcast %cst_59 : f32 to vector<8x128xf32>
    %209 = arith.addf %208, %207 : vector<8x128xf32>
    %210 = arith.divf %208, %209 : vector<8x128xf32>
    %211 = vector.extract_strided_slice %199 {offsets = [0, 128], sizes = [8, 128], strides = [1, 1]} : vector<8x384xf32> to vector<8x128xf32>
    %212 = vector.extract_strided_slice %202 {offsets = [0, 128], sizes = [8, 128], strides = [1, 1]} : vector<8x384xf32> to vector<8x128xf32>
    %213 = arith.addf %211, %212 : vector<8x128xf32>
    %214 = arith.negf %213 : vector<8x128xf32>
    %215 = math.exp %214 : vector<8x128xf32>
    %cst_60 = arith.constant 1.000000e+00 : f32
    %216 = vector.broadcast %cst_60 : f32 to vector<8x128xf32>
    %217 = arith.addf %216, %215 : vector<8x128xf32>
    %218 = arith.divf %216, %217 : vector<8x128xf32>
    %219 = vector.extract_strided_slice %199 {offsets = [0, 256], sizes = [8, 128], strides = [1, 1]} : vector<8x384xf32> to vector<8x128xf32>
    %220 = vector.extract_strided_slice %202 {offsets = [0, 256], sizes = [8, 128], strides = [1, 1]} : vector<8x384xf32> to vector<8x128xf32>
    %221 = arith.addf %220, %5 : vector<8x128xf32>
    %222 = arith.mulf %210, %221 : vector<8x128xf32>
    %223 = arith.addf %219, %222 : vector<8x128xf32>
    %224 = math.tanh %223 : vector<8x128xf32>
    %cst_61 = arith.constant 1.000000e+00 : f32
    %225 = vector.broadcast %cst_61 : f32 to vector<8x128xf32>
    %226 = arith.subf %225, %218 : vector<8x128xf32>
    %227 = arith.mulf %226, %224 : vector<8x128xf32>
    %228 = arith.mulf %218, %191 : vector<8x128xf32>
    %229 = arith.addf %227, %228 : vector<8x128xf32>
    %230 = arith.truncf %229 : vector<8x128xf32> to vector<8x128xbf16>
    %231 = arith.index_cast %c5_i32 : i32 to index
    %c0_62 = arith.constant 0 : index
    %c0_63 = arith.constant 0 : index
    %232 = vector.load %arg6[%231, %c0_62, %c0_63] : memref<8x8x128xbf16, #tpu.memory_space<vmem>>, vector<1x8x128xbf16>
    %233 = vector.shape_cast %232 : vector<1x8x128xbf16> to vector<8x128xbf16>
    %234 = vector.shape_cast %230 : vector<8x128xbf16> to vector<1x8x128xbf16>
    tpu.vector_store %arg6[%231, %c0_62, %c0_63], %234 {strides = array<i32>} : memref<8x8x128xbf16, #tpu.memory_space<vmem>>, vector<1x8x128xbf16>,
    %c6_i32 = arith.constant 6 : i32
    %235 = arith.index_cast %c6_i32 : i32 to index
    %c0_64 = arith.constant 0 : index
    %c0_65 = arith.constant 0 : index
    %236 = vector.load %arg2[%235, %c0_64, %c0_65] : memref<8x8x384xf32, #tpu.memory_space<vmem>>, vector<1x8x384xf32>
    %237 = vector.shape_cast %236 : vector<1x8x384xf32> to vector<8x384xf32>
    %238 = arith.truncf %229 : vector<8x128xf32> to vector<8x128xbf16>
    %c0_66 = arith.constant 0 : index
    %c0_67 = arith.constant 0 : index
    %239 = vector.load %arg4[%c0_66, %c0_67] : memref<128x384xbf16, #tpu.memory_space<vmem>>, vector<128x384xbf16>
    %cst_68 = arith.constant dense<0.000000e+00> : vector<8x384xf32>
    %240 = tpu.matmul %238, %239, %cst_68 {dimension_numbers = #tpu.dot_dimension_numbers<[1], [0], [0], [1], [0, 0, 1, 1], [], []>} : vector<8x128xbf16>, vector<128x384xbf16>, vector<8x384xf32> -> vector<8x384xf32>
    %241 = vector.extract_strided_slice %237 {offsets = [0, 0], sizes = [8, 128], strides = [1, 1]} : vector<8x384xf32> to vector<8x128xf32>
    %242 = vector.extract_strided_slice %240 {offsets = [0, 0], sizes = [8, 128], strides = [1, 1]} : vector<8x384xf32> to vector<8x128xf32>
    %243 = arith.addf %241, %242 : vector<8x128xf32>
    %244 = arith.negf %243 : vector<8x128xf32>
    %245 = math.exp %244 : vector<8x128xf32>
    %cst_69 = arith.constant 1.000000e+00 : f32
    %246 = vector.broadcast %cst_69 : f32 to vector<8x128xf32>
    %247 = arith.addf %246, %245 : vector<8x128xf32>
    %248 = arith.divf %246, %247 : vector<8x128xf32>
    %249 = vector.extract_strided_slice %237 {offsets = [0, 128], sizes = [8, 128], strides = [1, 1]} : vector<8x384xf32> to vector<8x128xf32>
    %250 = vector.extract_strided_slice %240 {offsets = [0, 128], sizes = [8, 128], strides = [1, 1]} : vector<8x384xf32> to vector<8x128xf32>
    %251 = arith.addf %249, %250 : vector<8x128xf32>
    %252 = arith.negf %251 : vector<8x128xf32>
    %253 = math.exp %252 : vector<8x128xf32>
    %cst_70 = arith.constant 1.000000e+00 : f32
    %254 = vector.broadcast %cst_70 : f32 to vector<8x128xf32>
    %255 = arith.addf %254, %253 : vector<8x128xf32>
    %256 = arith.divf %254, %255 : vector<8x128xf32>
    %257 = vector.extract_strided_slice %237 {offsets = [0, 256], sizes = [8, 128], strides = [1, 1]} : vector<8x384xf32> to vector<8x128xf32>
    %258 = vector.extract_strided_slice %240 {offsets = [0, 256], sizes = [8, 128], strides = [1, 1]} : vector<8x384xf32> to vector<8x128xf32>
    %259 = arith.addf %258, %5 : vector<8x128xf32>
    %260 = arith.mulf %248, %259 : vector<8x128xf32>
    %261 = arith.addf %257, %260 : vector<8x128xf32>
    %262 = math.tanh %261 : vector<8x128xf32>
    %cst_71 = arith.constant 1.000000e+00 : f32
    %263 = vector.broadcast %cst_71 : f32 to vector<8x128xf32>
    %264 = arith.subf %263, %256 : vector<8x128xf32>
    %265 = arith.mulf %264, %262 : vector<8x128xf32>
    %266 = arith.mulf %256, %229 : vector<8x128xf32>
    %267 = arith.addf %265, %266 : vector<8x128xf32>
    %268 = arith.truncf %267 : vector<8x128xf32> to vector<8x128xbf16>
    %269 = arith.index_cast %c6_i32 : i32 to index
    %c0_72 = arith.constant 0 : index
    %c0_73 = arith.constant 0 : index
    %270 = vector.load %arg6[%269, %c0_72, %c0_73] : memref<8x8x128xbf16, #tpu.memory_space<vmem>>, vector<1x8x128xbf16>
    %271 = vector.shape_cast %270 : vector<1x8x128xbf16> to vector<8x128xbf16>
    %272 = vector.shape_cast %268 : vector<8x128xbf16> to vector<1x8x128xbf16>
    tpu.vector_store %arg6[%269, %c0_72, %c0_73], %272 {strides = array<i32>} : memref<8x8x128xbf16, #tpu.memory_space<vmem>>, vector<1x8x128xbf16>,
    %c7_i32 = arith.constant 7 : i32
    %273 = arith.index_cast %c7_i32 : i32 to index
    %c0_74 = arith.constant 0 : index
    %c0_75 = arith.constant 0 : index
    %274 = vector.load %arg2[%273, %c0_74, %c0_75] : memref<8x8x384xf32, #tpu.memory_space<vmem>>, vector<1x8x384xf32>
    %275 = vector.shape_cast %274 : vector<1x8x384xf32> to vector<8x384xf32>
    %276 = arith.truncf %267 : vector<8x128xf32> to vector<8x128xbf16>
    %c0_76 = arith.constant 0 : index
    %c0_77 = arith.constant 0 : index
    %277 = vector.load %arg4[%c0_76, %c0_77] : memref<128x384xbf16, #tpu.memory_space<vmem>>, vector<128x384xbf16>
    %cst_78 = arith.constant dense<0.000000e+00> : vector<8x384xf32>
    %278 = tpu.matmul %276, %277, %cst_78 {dimension_numbers = #tpu.dot_dimension_numbers<[1], [0], [0], [1], [0, 0, 1, 1], [], []>} : vector<8x128xbf16>, vector<128x384xbf16>, vector<8x384xf32> -> vector<8x384xf32>
    %279 = vector.extract_strided_slice %275 {offsets = [0, 0], sizes = [8, 128], strides = [1, 1]} : vector<8x384xf32> to vector<8x128xf32>
    %280 = vector.extract_strided_slice %278 {offsets = [0, 0], sizes = [8, 128], strides = [1, 1]} : vector<8x384xf32> to vector<8x128xf32>
    %281 = arith.addf %279, %280 : vector<8x128xf32>
    %282 = arith.negf %281 : vector<8x128xf32>
    %283 = math.exp %282 : vector<8x128xf32>
    %cst_79 = arith.constant 1.000000e+00 : f32
    %284 = vector.broadcast %cst_79 : f32 to vector<8x128xf32>
    %285 = arith.addf %284, %283 : vector<8x128xf32>
    %286 = arith.divf %284, %285 : vector<8x128xf32>
    %287 = vector.extract_strided_slice %275 {offsets = [0, 128], sizes = [8, 128], strides = [1, 1]} : vector<8x384xf32> to vector<8x128xf32>
    %288 = vector.extract_strided_slice %278 {offsets = [0, 128], sizes = [8, 128], strides = [1, 1]} : vector<8x384xf32> to vector<8x128xf32>
    %289 = arith.addf %287, %288 : vector<8x128xf32>
    %290 = arith.negf %289 : vector<8x128xf32>
    %291 = math.exp %290 : vector<8x128xf32>
    %cst_80 = arith.constant 1.000000e+00 : f32
    %292 = vector.broadcast %cst_80 : f32 to vector<8x128xf32>
    %293 = arith.addf %292, %291 : vector<8x128xf32>
    %294 = arith.divf %292, %293 : vector<8x128xf32>
    %295 = vector.extract_strided_slice %275 {offsets = [0, 256], sizes = [8, 128], strides = [1, 1]} : vector<8x384xf32> to vector<8x128xf32>
    %296 = vector.extract_strided_slice %278 {offsets = [0, 256], sizes = [8, 128], strides = [1, 1]} : vector<8x384xf32> to vector<8x128xf32>
    %297 = arith.addf %296, %5 : vector<8x128xf32>
    %298 = arith.mulf %286, %297 : vector<8x128xf32>
    %299 = arith.addf %295, %298 : vector<8x128xf32>
    %300 = math.tanh %299 : vector<8x128xf32>
    %cst_81 = arith.constant 1.000000e+00 : f32
    %301 = vector.broadcast %cst_81 : f32 to vector<8x128xf32>
    %302 = arith.subf %301, %294 : vector<8x128xf32>
    %303 = arith.mulf %302, %300 : vector<8x128xf32>
    %304 = arith.mulf %294, %267 : vector<8x128xf32>
    %305 = arith.addf %303, %304 : vector<8x128xf32>
    %306 = arith.truncf %305 : vector<8x128xf32> to vector<8x128xbf16>
    %307 = arith.index_cast %c7_i32 : i32 to index
    %c0_82 = arith.constant 0 : index
    %c0_83 = arith.constant 0 : index
    %308 = vector.load %arg6[%307, %c0_82, %c0_83] : memref<8x8x128xbf16, #tpu.memory_space<vmem>>, vector<1x8x128xbf16>
    %309 = vector.shape_cast %308 : vector<1x8x128xbf16> to vector<8x128xbf16>
    %310 = vector.shape_cast %306 : vector<8x128xbf16> to vector<1x8x128xbf16>
    tpu.vector_store %arg6[%307, %c0_82, %c0_83], %310 {strides = array<i32>} : memref<8x8x128xbf16, #tpu.memory_space<vmem>>, vector<1x8x128xbf16>,
    %c8_i32 = arith.constant 8 : i32
    %c0_84 = arith.constant 0 : index
    %c0_85 = arith.constant 0 : index
    %311 = vector.load %arg8[%c0_84, %c0_85] : memref<8x128xf32, #tpu.memory_space<vmem>>, vector<8x128xf32>
    tpu.vector_store %arg8[%c0_84, %c0_85], %305 {strides = array<i32>} : memref<8x128xf32, #tpu.memory_space<vmem>>, vector<8x128xf32>,
    %c0_i32_86 = arith.constant 0 : i32
    %312 = arith.cmpi eq, %arg1, %c0_i32_86 : i32
    %313 = arith.extui %312 : i1 to i32
    %c0_i32_87 = arith.constant 0 : i32
    %314 = arith.cmpi ne, %313, %c0_i32_87 : i32
    scf.if %314 {
      %c0_88 = arith.constant 0 : index
      %c0_89 = arith.constant 0 : index
      %315 = vector.load %arg7[%c0_88, %c0_89] : memref<8x128xf32, #tpu.memory_space<vmem>>, vector<8x128xf32>
      tpu.vector_store %arg7[%c0_88, %c0_89], %305 {strides = array<i32>} : memref<8x128xf32, #tpu.memory_space<vmem>>, vector<8x128xf32>,
    } else {
    }
    return
  }
  func.func @transform_0(%arg0: i32, %arg1: i32) -> (i32, i32, i32) {
    %c0_i32 = arith.constant 0 : i32
    %c0_i32_0 = arith.constant 0 : i32
    return %arg1, %arg0, %c0_i32 : i32, i32, i32
  }
  func.func @transform_1(%arg0: i32, %arg1: i32) -> (i32, i32) {
    %c0_i32 = arith.constant 0 : i32
    %c0_i32_0 = arith.constant 0 : i32
    return %arg0, %c0_i32 : i32, i32
  }
  func.func @transform_2(%arg0: i32, %arg1: i32) -> (i32, i32) {
    %c0_i32 = arith.constant 0 : i32
    %c0_i32_0 = arith.constant 0 : i32
    %c0_i32_1 = arith.constant 0 : i32
    return %c0_i32, %c0_i32_0 : i32, i32
  }
  func.func @transform_3(%arg0: i32, %arg1: i32) -> (i32, i32) {
    %c0_i32 = arith.constant 0 : i32
    %c0_i32_0 = arith.constant 0 : i32
    %c0_i32_1 = arith.constant 0 : i32
    return %c0_i32, %c0_i32_0 : i32, i32
  }
  func.func @transform_4(%arg0: i32, %arg1: i32) -> (i32, i32, i32) {
    %c0_i32 = arith.constant 0 : i32
    %c0_i32_0 = arith.constant 0 : i32
    return %arg1, %arg0, %c0_i32 : i32, i32, i32
  }
  func.func @transform_5(%arg0: i32, %arg1: i32) -> (i32, i32) {
    %c0_i32 = arith.constant 0 : i32
    %c0_i32_0 = arith.constant 0 : i32
    return %arg0, %c0_i32 : i32, i32
  }
}

module attributes {stable_mosaic.version = 11 : i64} {
  func.func @matmul_bias_kernel(%arg0: i32, %arg1: i32, %arg2: i32, %arg3: memref<64x32xbf16, #tpu.memory_space<vmem>>, %arg4: memref<32x128xbf16, #tpu.memory_space<vmem>>, %arg5: memref<1x128xf32, #tpu.memory_space<vmem>>, %arg6: memref<64x128xf32, #tpu.memory_space<vmem>>, %arg7: memref<64x128xf32, #tpu.memory_space<vmem>>) attributes {dimension_semantics = [#tpu.dimension_semantics<parallel>, #tpu.dimension_semantics<parallel>, #tpu.dimension_semantics<arbitrary>], iteration_bounds = array<i64: 1, 3, 1>, scalar_prefetch = 0 : i64, scratch_operands = 1 : i64, tpu.core_type = #tpu.core_type<tc>, window_params = [{transform_indices = @transform_0, window_bounds = array<i64: 64, 32>}, {transform_indices = @transform_1, window_bounds = array<i64: 32, 128>}, {transform_indices = @transform_2, window_bounds = array<i64: 1, 128>}, {transform_indices = @transform_3, window_bounds = array<i64: 64, 128>}]} {
    %c0_i32 = arith.constant 0 : i32
    %0 = arith.cmpi eq, %arg2, %c0_i32 : i32
    %1 = arith.extui %0 : i1 to i32
    %c0_i32_0 = arith.constant 0 : i32
    %2 = arith.cmpi ne, %1, %c0_i32_0 : i32
    scf.if %2 {
      %cst_10 = arith.constant 0.000000e+00 : f32
      %12 = vector.broadcast %cst_10 : f32 to vector<64x128xf32>
      %c0_11 = arith.constant 0 : index
      %c0_12 = arith.constant 0 : index
      %13 = vector.load %arg7[%c0_11, %c0_12] : memref<64x128xf32, #tpu.memory_space<vmem>>, vector<64x128xf32>
      tpu.vector_store %arg7[%c0_11, %c0_12], %12 {strides = array<i32>} : memref<64x128xf32, #tpu.memory_space<vmem>>, vector<64x128xf32>,
    } else {
    }
    %c0 = arith.constant 0 : index
    %c0_1 = arith.constant 0 : index
    %3 = vector.load %arg7[%c0, %c0_1] : memref<64x128xf32, #tpu.memory_space<vmem>>, vector<64x128xf32>
    %c0_2 = arith.constant 0 : index
    %c0_3 = arith.constant 0 : index
    %4 = vector.load %arg3[%c0_2, %c0_3] : memref<64x32xbf16, #tpu.memory_space<vmem>>, vector<64x32xbf16>
    %c0_4 = arith.constant 0 : index
    %c0_5 = arith.constant 0 : index
    %5 = vector.load %arg4[%c0_4, %c0_5] : memref<32x128xbf16, #tpu.memory_space<vmem>>, vector<32x128xbf16>
    %cst = arith.constant dense<0.000000e+00> : vector<64x128xf32>
    %6 = tpu.matmul %4, %5, %cst {dimension_numbers = #tpu.dot_dimension_numbers<[1], [0], [0], [1], [0, 0, 1, 1], [], []>} : vector<64x32xbf16>, vector<32x128xbf16>, vector<64x128xf32> -> vector<64x128xf32>
    %7 = arith.addf %3, %6 : vector<64x128xf32>
    %c0_6 = arith.constant 0 : index
    %c0_7 = arith.constant 0 : index
    %8 = vector.load %arg7[%c0_6, %c0_7] : memref<64x128xf32, #tpu.memory_space<vmem>>, vector<64x128xf32>
    tpu.vector_store %arg7[%c0_6, %c0_7], %7 {strides = array<i32>} : memref<64x128xf32, #tpu.memory_space<vmem>>, vector<64x128xf32>,
    %c0_i32_8 = arith.constant 0 : i32
    %9 = arith.cmpi eq, %arg2, %c0_i32_8 : i32
    %10 = arith.extui %9 : i1 to i32
    %c0_i32_9 = arith.constant 0 : i32
    %11 = arith.cmpi ne, %10, %c0_i32_9 : i32
    scf.if %11 {
      %c0_10 = arith.constant 0 : index
      %c0_11 = arith.constant 0 : index
      %12 = vector.load %arg7[%c0_10, %c0_11] : memref<64x128xf32, #tpu.memory_space<vmem>>, vector<64x128xf32>
      %c0_12 = arith.constant 0 : index
      %c0_13 = arith.constant 0 : index
      %13 = vector.load %arg5[%c0_12, %c0_13] : memref<1x128xf32, #tpu.memory_space<vmem>>, vector<1x128xf32>
      %14 = vector.broadcast %13 : vector<1x128xf32> to vector<64x128xf32>
      %15 = arith.addf %12, %14 : vector<64x128xf32>
      %c0_14 = arith.constant 0 : index
      %c0_15 = arith.constant 0 : index
      %16 = vector.load %arg6[%c0_14, %c0_15] : memref<64x128xf32, #tpu.memory_space<vmem>>, vector<64x128xf32>
      tpu.vector_store %arg6[%c0_14, %c0_15], %15 {strides = array<i32>} : memref<64x128xf32, #tpu.memory_space<vmem>>, vector<64x128xf32>,
    } else {
    }
    return
  }
  func.func @transform_0(%arg0: i32, %arg1: i32, %arg2: i32) -> (i32, i32) {
    %c0_i32 = arith.constant 0 : i32
    return %arg0, %arg2 : i32, i32
  }
  func.func @transform_1(%arg0: i32, %arg1: i32, %arg2: i32) -> (i32, i32) {
    %c0_i32 = arith.constant 0 : i32
    return %arg2, %arg1 : i32, i32
  }
  func.func @transform_2(%arg0: i32, %arg1: i32, %arg2: i32) -> (i32, i32) {
    %c0_i32 = arith.constant 0 : i32
    %c0_i32_0 = arith.constant 0 : i32
    return %c0_i32, %arg1 : i32, i32
  }
  func.func @transform_3(%arg0: i32, %arg1: i32, %arg2: i32) -> (i32, i32) {
    %c0_i32 = arith.constant 0 : i32
    return %arg0, %arg1 : i32, i32
  }
}

module attributes {stable_mosaic.version = 11 : i64} {
  func.func @gru_recurrence_kernel(%arg0: i32, %arg1: i32, %arg2: memref<8x8x384xf32, #tpu.memory_space<vmem>>, %arg3: memref<8x128xf32, #tpu.memory_space<vmem>>, %arg4: memref<8x384xf32, #tpu.memory_space<vmem>>, %arg5: memref<128x384xbf16, #tpu.memory_space<vmem>>, %arg6: memref<1x128xf32, #tpu.memory_space<vmem>>, %arg7: memref<8x8x128xbf16, #tpu.memory_space<vmem>>, %arg8: memref<8x128xf32, #tpu.memory_space<vmem>>, %arg9: memref<8x128xf32, #tpu.memory_space<vmem>>) attributes {dimension_semantics = [#tpu.dimension_semantics<parallel>, #tpu.dimension_semantics<arbitrary>], iteration_bounds = array<i64: 1, 1>, scalar_prefetch = 0 : i64, scratch_operands = 1 : i64, tpu.core_type = #tpu.core_type<tc>, window_params = [{transform_indices = @transform_0, window_bounds = array<i64: 8, 8, 384>}, {pipeline_mode = #tpu.pipeline_mode<synchronous>, transform_indices = @transform_1, window_bounds = array<i64: 8, 128>}, {pipeline_mode = #tpu.pipeline_mode<synchronous>, transform_indices = @transform_2, window_bounds = array<i64: 8, 384>}, {pipeline_mode = #tpu.pipeline_mode<synchronous>, transform_indices = @transform_3, window_bounds = array<i64: 128, 384>}, {pipeline_mode = #tpu.pipeline_mode<synchronous>, transform_indices = @transform_4, window_bounds = array<i64: 1, 128>}, {transform_indices = @transform_5, window_bounds = array<i64: 8, 8, 128>}, {transform_indices = @transform_6, window_bounds = array<i64: 8, 128>}]} {
    %c0_i32 = arith.constant 0 : i32
    %0 = arith.cmpi eq, %arg1, %c0_i32 : i32
    %1 = arith.extui %0 : i1 to i32
    %c0_i32_0 = arith.constant 0 : i32
    %2 = arith.cmpi ne, %1, %c0_i32_0 : i32
    scf.if %2 {
      %c0_90 = arith.constant 0 : index
      %c0_91 = arith.constant 0 : index
      %324 = vector.load %arg3[%c0_90, %c0_91] : memref<8x128xf32, #tpu.memory_space<vmem>>, vector<8x128xf32>
      %c0_92 = arith.constant 0 : index
      %c0_93 = arith.constant 0 : index
      %325 = vector.load %arg9[%c0_92, %c0_93] : memref<8x128xf32, #tpu.memory_space<vmem>>, vector<8x128xf32>
      tpu.vector_store %arg9[%c0_92, %c0_93], %324 {strides = array<i32>} : memref<8x128xf32, #tpu.memory_space<vmem>>, vector<8x128xf32>,
    } else {
    }
    %c0 = arith.constant 0 : index
    %c0_1 = arith.constant 0 : index
    %3 = vector.load %arg4[%c0, %c0_1] : memref<8x384xf32, #tpu.memory_space<vmem>>, vector<8x384xf32>
    %c0_2 = arith.constant 0 : index
    %c0_3 = arith.constant 0 : index
    %4 = vector.load %arg6[%c0_2, %c0_3] : memref<1x128xf32, #tpu.memory_space<vmem>>, vector<1x128xf32>
    %5 = vector.shape_cast %4 : vector<1x128xf32> to vector<1x128xf32>
    %6 = vector.broadcast %5 : vector<1x128xf32> to vector<8x128xf32>
    %c0_4 = arith.constant 0 : index
    %c0_5 = arith.constant 0 : index
    %7 = vector.load %arg9[%c0_4, %c0_5] : memref<8x128xf32, #tpu.memory_space<vmem>>, vector<8x128xf32>
    %c0_i32_6 = arith.constant 0 : i32
    %8 = arith.index_cast %c0_i32_6 : i32 to index
    %c0_7 = arith.constant 0 : index
    %c0_8 = arith.constant 0 : index
    %9 = vector.load %arg2[%8, %c0_7, %c0_8] : memref<8x8x384xf32, #tpu.memory_space<vmem>>, vector<1x8x384xf32>
    %10 = vector.shape_cast %9 : vector<1x8x384xf32> to vector<8x384xf32>
    %11 = arith.addf %10, %3 : vector<8x384xf32>
    %12 = arith.truncf %7 : vector<8x128xf32> to vector<8x128xbf16>
    %c0_9 = arith.constant 0 : index
    %c0_10 = arith.constant 0 : index
    %13 = vector.load %arg5[%c0_9, %c0_10] : memref<128x384xbf16, #tpu.memory_space<vmem>>, vector<128x384xbf16>
    %cst = arith.constant dense<0.000000e+00> : vector<8x384xf32>
    %14 = tpu.matmul %12, %13, %cst {dimension_numbers = #tpu.dot_dimension_numbers<[1], [0], [0], [1], [0, 0, 1, 1], [], []>} : vector<8x128xbf16>, vector<128x384xbf16>, vector<8x384xf32> -> vector<8x384xf32>
    %15 = vector.extract_strided_slice %11 {offsets = [0, 0], sizes = [8, 128], strides = [1, 1]} : vector<8x384xf32> to vector<8x128xf32>
    %16 = vector.extract_strided_slice %14 {offsets = [0, 0], sizes = [8, 128], strides = [1, 1]} : vector<8x384xf32> to vector<8x128xf32>
    %17 = arith.addf %15, %16 : vector<8x128xf32>
    %18 = arith.negf %17 : vector<8x128xf32>
    %19 = math.exp %18 : vector<8x128xf32>
    %cst_11 = arith.constant 1.000000e+00 : f32
    %20 = vector.broadcast %cst_11 : f32 to vector<8x128xf32>
    %21 = arith.addf %20, %19 : vector<8x128xf32>
    %22 = arith.divf %20, %21 : vector<8x128xf32>
    %23 = vector.extract_strided_slice %11 {offsets = [0, 128], sizes = [8, 128], strides = [1, 1]} : vector<8x384xf32> to vector<8x128xf32>
    %24 = vector.extract_strided_slice %14 {offsets = [0, 128], sizes = [8, 128], strides = [1, 1]} : vector<8x384xf32> to vector<8x128xf32>
    %25 = arith.addf %23, %24 : vector<8x128xf32>
    %26 = arith.negf %25 : vector<8x128xf32>
    %27 = math.exp %26 : vector<8x128xf32>
    %cst_12 = arith.constant 1.000000e+00 : f32
    %28 = vector.broadcast %cst_12 : f32 to vector<8x128xf32>
    %29 = arith.addf %28, %27 : vector<8x128xf32>
    %30 = arith.divf %28, %29 : vector<8x128xf32>
    %31 = vector.extract_strided_slice %11 {offsets = [0, 256], sizes = [8, 128], strides = [1, 1]} : vector<8x384xf32> to vector<8x128xf32>
    %32 = vector.extract_strided_slice %14 {offsets = [0, 256], sizes = [8, 128], strides = [1, 1]} : vector<8x384xf32> to vector<8x128xf32>
    %33 = arith.addf %32, %6 : vector<8x128xf32>
    %34 = arith.mulf %22, %33 : vector<8x128xf32>
    %35 = arith.addf %31, %34 : vector<8x128xf32>
    %36 = math.tanh %35 : vector<8x128xf32>
    %cst_13 = arith.constant 1.000000e+00 : f32
    %37 = vector.broadcast %cst_13 : f32 to vector<8x128xf32>
    %38 = arith.subf %37, %30 : vector<8x128xf32>
    %39 = arith.mulf %38, %36 : vector<8x128xf32>
    %40 = arith.mulf %30, %7 : vector<8x128xf32>
    %41 = arith.addf %39, %40 : vector<8x128xf32>
    %42 = arith.truncf %41 : vector<8x128xf32> to vector<8x128xbf16>
    %43 = arith.index_cast %c0_i32_6 : i32 to index
    %c0_14 = arith.constant 0 : index
    %c0_15 = arith.constant 0 : index
    %44 = vector.load %arg7[%43, %c0_14, %c0_15] : memref<8x8x128xbf16, #tpu.memory_space<vmem>>, vector<1x8x128xbf16>
    %45 = vector.shape_cast %44 : vector<1x8x128xbf16> to vector<8x128xbf16>
    %46 = vector.shape_cast %42 : vector<8x128xbf16> to vector<1x8x128xbf16>
    tpu.vector_store %arg7[%43, %c0_14, %c0_15], %46 {strides = array<i32>} : memref<8x8x128xbf16, #tpu.memory_space<vmem>>, vector<1x8x128xbf16>,
    %c1_i32 = arith.constant 1 : i32
    %47 = arith.index_cast %c1_i32 : i32 to index
    %c0_16 = arith.constant 0 : index
    %c0_17 = arith.constant 0 : index
    %48 = vector.load %arg2[%47, %c0_16, %c0_17] : memref<8x8x384xf32, #tpu.memory_space<vmem>>, vector<1x8x384xf32>
    %49 = vector.shape_cast %48 : vector<1x8x384xf32> to vector<8x384xf32>
    %50 = arith.addf %49, %3 : vector<8x384xf32>
    %51 = arith.truncf %41 : vector<8x128xf32> to vector<8x128xbf16>
    %c0_18 = arith.constant 0 : index
    %c0_19 = arith.constant 0 : index
    %52 = vector.load %arg5[%c0_18, %c0_19] : memref<128x384xbf16, #tpu.memory_space<vmem>>, vector<128x384xbf16>
    %cst_20 = arith.constant dense<0.000000e+00> : vector<8x384xf32>
    %53 = tpu.matmul %51, %52, %cst_20 {dimension_numbers = #tpu.dot_dimension_numbers<[1], [0], [0], [1], [0, 0, 1, 1], [], []>} : vector<8x128xbf16>, vector<128x384xbf16>, vector<8x384xf32> -> vector<8x384xf32>
    %54 = vector.extract_strided_slice %50 {offsets = [0, 0], sizes = [8, 128], strides = [1, 1]} : vector<8x384xf32> to vector<8x128xf32>
    %55 = vector.extract_strided_slice %53 {offsets = [0, 0], sizes = [8, 128], strides = [1, 1]} : vector<8x384xf32> to vector<8x128xf32>
    %56 = arith.addf %54, %55 : vector<8x128xf32>
    %57 = arith.negf %56 : vector<8x128xf32>
    %58 = math.exp %57 : vector<8x128xf32>
    %cst_21 = arith.constant 1.000000e+00 : f32
    %59 = vector.broadcast %cst_21 : f32 to vector<8x128xf32>
    %60 = arith.addf %59, %58 : vector<8x128xf32>
    %61 = arith.divf %59, %60 : vector<8x128xf32>
    %62 = vector.extract_strided_slice %50 {offsets = [0, 128], sizes = [8, 128], strides = [1, 1]} : vector<8x384xf32> to vector<8x128xf32>
    %63 = vector.extract_strided_slice %53 {offsets = [0, 128], sizes = [8, 128], strides = [1, 1]} : vector<8x384xf32> to vector<8x128xf32>
    %64 = arith.addf %62, %63 : vector<8x128xf32>
    %65 = arith.negf %64 : vector<8x128xf32>
    %66 = math.exp %65 : vector<8x128xf32>
    %cst_22 = arith.constant 1.000000e+00 : f32
    %67 = vector.broadcast %cst_22 : f32 to vector<8x128xf32>
    %68 = arith.addf %67, %66 : vector<8x128xf32>
    %69 = arith.divf %67, %68 : vector<8x128xf32>
    %70 = vector.extract_strided_slice %50 {offsets = [0, 256], sizes = [8, 128], strides = [1, 1]} : vector<8x384xf32> to vector<8x128xf32>
    %71 = vector.extract_strided_slice %53 {offsets = [0, 256], sizes = [8, 128], strides = [1, 1]} : vector<8x384xf32> to vector<8x128xf32>
    %72 = arith.addf %71, %6 : vector<8x128xf32>
    %73 = arith.mulf %61, %72 : vector<8x128xf32>
    %74 = arith.addf %70, %73 : vector<8x128xf32>
    %75 = math.tanh %74 : vector<8x128xf32>
    %cst_23 = arith.constant 1.000000e+00 : f32
    %76 = vector.broadcast %cst_23 : f32 to vector<8x128xf32>
    %77 = arith.subf %76, %69 : vector<8x128xf32>
    %78 = arith.mulf %77, %75 : vector<8x128xf32>
    %79 = arith.mulf %69, %41 : vector<8x128xf32>
    %80 = arith.addf %78, %79 : vector<8x128xf32>
    %81 = arith.truncf %80 : vector<8x128xf32> to vector<8x128xbf16>
    %82 = arith.index_cast %c1_i32 : i32 to index
    %c0_24 = arith.constant 0 : index
    %c0_25 = arith.constant 0 : index
    %83 = vector.load %arg7[%82, %c0_24, %c0_25] : memref<8x8x128xbf16, #tpu.memory_space<vmem>>, vector<1x8x128xbf16>
    %84 = vector.shape_cast %83 : vector<1x8x128xbf16> to vector<8x128xbf16>
    %85 = vector.shape_cast %81 : vector<8x128xbf16> to vector<1x8x128xbf16>
    tpu.vector_store %arg7[%82, %c0_24, %c0_25], %85 {strides = array<i32>} : memref<8x8x128xbf16, #tpu.memory_space<vmem>>, vector<1x8x128xbf16>,
    %c2_i32 = arith.constant 2 : i32
    %86 = arith.index_cast %c2_i32 : i32 to index
    %c0_26 = arith.constant 0 : index
    %c0_27 = arith.constant 0 : index
    %87 = vector.load %arg2[%86, %c0_26, %c0_27] : memref<8x8x384xf32, #tpu.memory_space<vmem>>, vector<1x8x384xf32>
    %88 = vector.shape_cast %87 : vector<1x8x384xf32> to vector<8x384xf32>
    %89 = arith.addf %88, %3 : vector<8x384xf32>
    %90 = arith.truncf %80 : vector<8x128xf32> to vector<8x128xbf16>
    %c0_28 = arith.constant 0 : index
    %c0_29 = arith.constant 0 : index
    %91 = vector.load %arg5[%c0_28, %c0_29] : memref<128x384xbf16, #tpu.memory_space<vmem>>, vector<128x384xbf16>
    %cst_30 = arith.constant dense<0.000000e+00> : vector<8x384xf32>
    %92 = tpu.matmul %90, %91, %cst_30 {dimension_numbers = #tpu.dot_dimension_numbers<[1], [0], [0], [1], [0, 0, 1, 1], [], []>} : vector<8x128xbf16>, vector<128x384xbf16>, vector<8x384xf32> -> vector<8x384xf32>
    %93 = vector.extract_strided_slice %89 {offsets = [0, 0], sizes = [8, 128], strides = [1, 1]} : vector<8x384xf32> to vector<8x128xf32>
    %94 = vector.extract_strided_slice %92 {offsets = [0, 0], sizes = [8, 128], strides = [1, 1]} : vector<8x384xf32> to vector<8x128xf32>
    %95 = arith.addf %93, %94 : vector<8x128xf32>
    %96 = arith.negf %95 : vector<8x128xf32>
    %97 = math.exp %96 : vector<8x128xf32>
    %cst_31 = arith.constant 1.000000e+00 : f32
    %98 = vector.broadcast %cst_31 : f32 to vector<8x128xf32>
    %99 = arith.addf %98, %97 : vector<8x128xf32>
    %100 = arith.divf %98, %99 : vector<8x128xf32>
    %101 = vector.extract_strided_slice %89 {offsets = [0, 128], sizes = [8, 128], strides = [1, 1]} : vector<8x384xf32> to vector<8x128xf32>
    %102 = vector.extract_strided_slice %92 {offsets = [0, 128], sizes = [8, 128], strides = [1, 1]} : vector<8x384xf32> to vector<8x128xf32>
    %103 = arith.addf %101, %102 : vector<8x128xf32>
    %104 = arith.negf %103 : vector<8x128xf32>
    %105 = math.exp %104 : vector<8x128xf32>
    %cst_32 = arith.constant 1.000000e+00 : f32
    %106 = vector.broadcast %cst_32 : f32 to vector<8x128xf32>
    %107 = arith.addf %106, %105 : vector<8x128xf32>
    %108 = arith.divf %106, %107 : vector<8x128xf32>
    %109 = vector.extract_strided_slice %89 {offsets = [0, 256], sizes = [8, 128], strides = [1, 1]} : vector<8x384xf32> to vector<8x128xf32>
    %110 = vector.extract_strided_slice %92 {offsets = [0, 256], sizes = [8, 128], strides = [1, 1]} : vector<8x384xf32> to vector<8x128xf32>
    %111 = arith.addf %110, %6 : vector<8x128xf32>
    %112 = arith.mulf %100, %111 : vector<8x128xf32>
    %113 = arith.addf %109, %112 : vector<8x128xf32>
    %114 = math.tanh %113 : vector<8x128xf32>
    %cst_33 = arith.constant 1.000000e+00 : f32
    %115 = vector.broadcast %cst_33 : f32 to vector<8x128xf32>
    %116 = arith.subf %115, %108 : vector<8x128xf32>
    %117 = arith.mulf %116, %114 : vector<8x128xf32>
    %118 = arith.mulf %108, %80 : vector<8x128xf32>
    %119 = arith.addf %117, %118 : vector<8x128xf32>
    %120 = arith.truncf %119 : vector<8x128xf32> to vector<8x128xbf16>
    %121 = arith.index_cast %c2_i32 : i32 to index
    %c0_34 = arith.constant 0 : index
    %c0_35 = arith.constant 0 : index
    %122 = vector.load %arg7[%121, %c0_34, %c0_35] : memref<8x8x128xbf16, #tpu.memory_space<vmem>>, vector<1x8x128xbf16>
    %123 = vector.shape_cast %122 : vector<1x8x128xbf16> to vector<8x128xbf16>
    %124 = vector.shape_cast %120 : vector<8x128xbf16> to vector<1x8x128xbf16>
    tpu.vector_store %arg7[%121, %c0_34, %c0_35], %124 {strides = array<i32>} : memref<8x8x128xbf16, #tpu.memory_space<vmem>>, vector<1x8x128xbf16>,
    %c3_i32 = arith.constant 3 : i32
    %125 = arith.index_cast %c3_i32 : i32 to index
    %c0_36 = arith.constant 0 : index
    %c0_37 = arith.constant 0 : index
    %126 = vector.load %arg2[%125, %c0_36, %c0_37] : memref<8x8x384xf32, #tpu.memory_space<vmem>>, vector<1x8x384xf32>
    %127 = vector.shape_cast %126 : vector<1x8x384xf32> to vector<8x384xf32>
    %128 = arith.addf %127, %3 : vector<8x384xf32>
    %129 = arith.truncf %119 : vector<8x128xf32> to vector<8x128xbf16>
    %c0_38 = arith.constant 0 : index
    %c0_39 = arith.constant 0 : index
    %130 = vector.load %arg5[%c0_38, %c0_39] : memref<128x384xbf16, #tpu.memory_space<vmem>>, vector<128x384xbf16>
    %cst_40 = arith.constant dense<0.000000e+00> : vector<8x384xf32>
    %131 = tpu.matmul %129, %130, %cst_40 {dimension_numbers = #tpu.dot_dimension_numbers<[1], [0], [0], [1], [0, 0, 1, 1], [], []>} : vector<8x128xbf16>, vector<128x384xbf16>, vector<8x384xf32> -> vector<8x384xf32>
    %132 = vector.extract_strided_slice %128 {offsets = [0, 0], sizes = [8, 128], strides = [1, 1]} : vector<8x384xf32> to vector<8x128xf32>
    %133 = vector.extract_strided_slice %131 {offsets = [0, 0], sizes = [8, 128], strides = [1, 1]} : vector<8x384xf32> to vector<8x128xf32>
    %134 = arith.addf %132, %133 : vector<8x128xf32>
    %135 = arith.negf %134 : vector<8x128xf32>
    %136 = math.exp %135 : vector<8x128xf32>
    %cst_41 = arith.constant 1.000000e+00 : f32
    %137 = vector.broadcast %cst_41 : f32 to vector<8x128xf32>
    %138 = arith.addf %137, %136 : vector<8x128xf32>
    %139 = arith.divf %137, %138 : vector<8x128xf32>
    %140 = vector.extract_strided_slice %128 {offsets = [0, 128], sizes = [8, 128], strides = [1, 1]} : vector<8x384xf32> to vector<8x128xf32>
    %141 = vector.extract_strided_slice %131 {offsets = [0, 128], sizes = [8, 128], strides = [1, 1]} : vector<8x384xf32> to vector<8x128xf32>
    %142 = arith.addf %140, %141 : vector<8x128xf32>
    %143 = arith.negf %142 : vector<8x128xf32>
    %144 = math.exp %143 : vector<8x128xf32>
    %cst_42 = arith.constant 1.000000e+00 : f32
    %145 = vector.broadcast %cst_42 : f32 to vector<8x128xf32>
    %146 = arith.addf %145, %144 : vector<8x128xf32>
    %147 = arith.divf %145, %146 : vector<8x128xf32>
    %148 = vector.extract_strided_slice %128 {offsets = [0, 256], sizes = [8, 128], strides = [1, 1]} : vector<8x384xf32> to vector<8x128xf32>
    %149 = vector.extract_strided_slice %131 {offsets = [0, 256], sizes = [8, 128], strides = [1, 1]} : vector<8x384xf32> to vector<8x128xf32>
    %150 = arith.addf %149, %6 : vector<8x128xf32>
    %151 = arith.mulf %139, %150 : vector<8x128xf32>
    %152 = arith.addf %148, %151 : vector<8x128xf32>
    %153 = math.tanh %152 : vector<8x128xf32>
    %cst_43 = arith.constant 1.000000e+00 : f32
    %154 = vector.broadcast %cst_43 : f32 to vector<8x128xf32>
    %155 = arith.subf %154, %147 : vector<8x128xf32>
    %156 = arith.mulf %155, %153 : vector<8x128xf32>
    %157 = arith.mulf %147, %119 : vector<8x128xf32>
    %158 = arith.addf %156, %157 : vector<8x128xf32>
    %159 = arith.truncf %158 : vector<8x128xf32> to vector<8x128xbf16>
    %160 = arith.index_cast %c3_i32 : i32 to index
    %c0_44 = arith.constant 0 : index
    %c0_45 = arith.constant 0 : index
    %161 = vector.load %arg7[%160, %c0_44, %c0_45] : memref<8x8x128xbf16, #tpu.memory_space<vmem>>, vector<1x8x128xbf16>
    %162 = vector.shape_cast %161 : vector<1x8x128xbf16> to vector<8x128xbf16>
    %163 = vector.shape_cast %159 : vector<8x128xbf16> to vector<1x8x128xbf16>
    tpu.vector_store %arg7[%160, %c0_44, %c0_45], %163 {strides = array<i32>} : memref<8x8x128xbf16, #tpu.memory_space<vmem>>, vector<1x8x128xbf16>,
    %c4_i32 = arith.constant 4 : i32
    %164 = arith.index_cast %c4_i32 : i32 to index
    %c0_46 = arith.constant 0 : index
    %c0_47 = arith.constant 0 : index
    %165 = vector.load %arg2[%164, %c0_46, %c0_47] : memref<8x8x384xf32, #tpu.memory_space<vmem>>, vector<1x8x384xf32>
    %166 = vector.shape_cast %165 : vector<1x8x384xf32> to vector<8x384xf32>
    %167 = arith.addf %166, %3 : vector<8x384xf32>
    %168 = arith.truncf %158 : vector<8x128xf32> to vector<8x128xbf16>
    %c0_48 = arith.constant 0 : index
    %c0_49 = arith.constant 0 : index
    %169 = vector.load %arg5[%c0_48, %c0_49] : memref<128x384xbf16, #tpu.memory_space<vmem>>, vector<128x384xbf16>
    %cst_50 = arith.constant dense<0.000000e+00> : vector<8x384xf32>
    %170 = tpu.matmul %168, %169, %cst_50 {dimension_numbers = #tpu.dot_dimension_numbers<[1], [0], [0], [1], [0, 0, 1, 1], [], []>} : vector<8x128xbf16>, vector<128x384xbf16>, vector<8x384xf32> -> vector<8x384xf32>
    %171 = vector.extract_strided_slice %167 {offsets = [0, 0], sizes = [8, 128], strides = [1, 1]} : vector<8x384xf32> to vector<8x128xf32>
    %172 = vector.extract_strided_slice %170 {offsets = [0, 0], sizes = [8, 128], strides = [1, 1]} : vector<8x384xf32> to vector<8x128xf32>
    %173 = arith.addf %171, %172 : vector<8x128xf32>
    %174 = arith.negf %173 : vector<8x128xf32>
    %175 = math.exp %174 : vector<8x128xf32>
    %cst_51 = arith.constant 1.000000e+00 : f32
    %176 = vector.broadcast %cst_51 : f32 to vector<8x128xf32>
    %177 = arith.addf %176, %175 : vector<8x128xf32>
    %178 = arith.divf %176, %177 : vector<8x128xf32>
    %179 = vector.extract_strided_slice %167 {offsets = [0, 128], sizes = [8, 128], strides = [1, 1]} : vector<8x384xf32> to vector<8x128xf32>
    %180 = vector.extract_strided_slice %170 {offsets = [0, 128], sizes = [8, 128], strides = [1, 1]} : vector<8x384xf32> to vector<8x128xf32>
    %181 = arith.addf %179, %180 : vector<8x128xf32>
    %182 = arith.negf %181 : vector<8x128xf32>
    %183 = math.exp %182 : vector<8x128xf32>
    %cst_52 = arith.constant 1.000000e+00 : f32
    %184 = vector.broadcast %cst_52 : f32 to vector<8x128xf32>
    %185 = arith.addf %184, %183 : vector<8x128xf32>
    %186 = arith.divf %184, %185 : vector<8x128xf32>
    %187 = vector.extract_strided_slice %167 {offsets = [0, 256], sizes = [8, 128], strides = [1, 1]} : vector<8x384xf32> to vector<8x128xf32>
    %188 = vector.extract_strided_slice %170 {offsets = [0, 256], sizes = [8, 128], strides = [1, 1]} : vector<8x384xf32> to vector<8x128xf32>
    %189 = arith.addf %188, %6 : vector<8x128xf32>
    %190 = arith.mulf %178, %189 : vector<8x128xf32>
    %191 = arith.addf %187, %190 : vector<8x128xf32>
    %192 = math.tanh %191 : vector<8x128xf32>
    %cst_53 = arith.constant 1.000000e+00 : f32
    %193 = vector.broadcast %cst_53 : f32 to vector<8x128xf32>
    %194 = arith.subf %193, %186 : vector<8x128xf32>
    %195 = arith.mulf %194, %192 : vector<8x128xf32>
    %196 = arith.mulf %186, %158 : vector<8x128xf32>
    %197 = arith.addf %195, %196 : vector<8x128xf32>
    %198 = arith.truncf %197 : vector<8x128xf32> to vector<8x128xbf16>
    %199 = arith.index_cast %c4_i32 : i32 to index
    %c0_54 = arith.constant 0 : index
    %c0_55 = arith.constant 0 : index
    %200 = vector.load %arg7[%199, %c0_54, %c0_55] : memref<8x8x128xbf16, #tpu.memory_space<vmem>>, vector<1x8x128xbf16>
    %201 = vector.shape_cast %200 : vector<1x8x128xbf16> to vector<8x128xbf16>
    %202 = vector.shape_cast %198 : vector<8x128xbf16> to vector<1x8x128xbf16>
    tpu.vector_store %arg7[%199, %c0_54, %c0_55], %202 {strides = array<i32>} : memref<8x8x128xbf16, #tpu.memory_space<vmem>>, vector<1x8x128xbf16>,
    %c5_i32 = arith.constant 5 : i32
    %203 = arith.index_cast %c5_i32 : i32 to index
    %c0_56 = arith.constant 0 : index
    %c0_57 = arith.constant 0 : index
    %204 = vector.load %arg2[%203, %c0_56, %c0_57] : memref<8x8x384xf32, #tpu.memory_space<vmem>>, vector<1x8x384xf32>
    %205 = vector.shape_cast %204 : vector<1x8x384xf32> to vector<8x384xf32>
    %206 = arith.addf %205, %3 : vector<8x384xf32>
    %207 = arith.truncf %197 : vector<8x128xf32> to vector<8x128xbf16>
    %c0_58 = arith.constant 0 : index
    %c0_59 = arith.constant 0 : index
    %208 = vector.load %arg5[%c0_58, %c0_59] : memref<128x384xbf16, #tpu.memory_space<vmem>>, vector<128x384xbf16>
    %cst_60 = arith.constant dense<0.000000e+00> : vector<8x384xf32>
    %209 = tpu.matmul %207, %208, %cst_60 {dimension_numbers = #tpu.dot_dimension_numbers<[1], [0], [0], [1], [0, 0, 1, 1], [], []>} : vector<8x128xbf16>, vector<128x384xbf16>, vector<8x384xf32> -> vector<8x384xf32>
    %210 = vector.extract_strided_slice %206 {offsets = [0, 0], sizes = [8, 128], strides = [1, 1]} : vector<8x384xf32> to vector<8x128xf32>
    %211 = vector.extract_strided_slice %209 {offsets = [0, 0], sizes = [8, 128], strides = [1, 1]} : vector<8x384xf32> to vector<8x128xf32>
    %212 = arith.addf %210, %211 : vector<8x128xf32>
    %213 = arith.negf %212 : vector<8x128xf32>
    %214 = math.exp %213 : vector<8x128xf32>
    %cst_61 = arith.constant 1.000000e+00 : f32
    %215 = vector.broadcast %cst_61 : f32 to vector<8x128xf32>
    %216 = arith.addf %215, %214 : vector<8x128xf32>
    %217 = arith.divf %215, %216 : vector<8x128xf32>
    %218 = vector.extract_strided_slice %206 {offsets = [0, 128], sizes = [8, 128], strides = [1, 1]} : vector<8x384xf32> to vector<8x128xf32>
    %219 = vector.extract_strided_slice %209 {offsets = [0, 128], sizes = [8, 128], strides = [1, 1]} : vector<8x384xf32> to vector<8x128xf32>
    %220 = arith.addf %218, %219 : vector<8x128xf32>
    %221 = arith.negf %220 : vector<8x128xf32>
    %222 = math.exp %221 : vector<8x128xf32>
    %cst_62 = arith.constant 1.000000e+00 : f32
    %223 = vector.broadcast %cst_62 : f32 to vector<8x128xf32>
    %224 = arith.addf %223, %222 : vector<8x128xf32>
    %225 = arith.divf %223, %224 : vector<8x128xf32>
    %226 = vector.extract_strided_slice %206 {offsets = [0, 256], sizes = [8, 128], strides = [1, 1]} : vector<8x384xf32> to vector<8x128xf32>
    %227 = vector.extract_strided_slice %209 {offsets = [0, 256], sizes = [8, 128], strides = [1, 1]} : vector<8x384xf32> to vector<8x128xf32>
    %228 = arith.addf %227, %6 : vector<8x128xf32>
    %229 = arith.mulf %217, %228 : vector<8x128xf32>
    %230 = arith.addf %226, %229 : vector<8x128xf32>
    %231 = math.tanh %230 : vector<8x128xf32>
    %cst_63 = arith.constant 1.000000e+00 : f32
    %232 = vector.broadcast %cst_63 : f32 to vector<8x128xf32>
    %233 = arith.subf %232, %225 : vector<8x128xf32>
    %234 = arith.mulf %233, %231 : vector<8x128xf32>
    %235 = arith.mulf %225, %197 : vector<8x128xf32>
    %236 = arith.addf %234, %235 : vector<8x128xf32>
    %237 = arith.truncf %236 : vector<8x128xf32> to vector<8x128xbf16>
    %238 = arith.index_cast %c5_i32 : i32 to index
    %c0_64 = arith.constant 0 : index
    %c0_65 = arith.constant 0 : index
    %239 = vector.load %arg7[%238, %c0_64, %c0_65] : memref<8x8x128xbf16, #tpu.memory_space<vmem>>, vector<1x8x128xbf16>
    %240 = vector.shape_cast %239 : vector<1x8x128xbf16> to vector<8x128xbf16>
    %241 = vector.shape_cast %237 : vector<8x128xbf16> to vector<1x8x128xbf16>
    tpu.vector_store %arg7[%238, %c0_64, %c0_65], %241 {strides = array<i32>} : memref<8x8x128xbf16, #tpu.memory_space<vmem>>, vector<1x8x128xbf16>,
    %c6_i32 = arith.constant 6 : i32
    %242 = arith.index_cast %c6_i32 : i32 to index
    %c0_66 = arith.constant 0 : index
    %c0_67 = arith.constant 0 : index
    %243 = vector.load %arg2[%242, %c0_66, %c0_67] : memref<8x8x384xf32, #tpu.memory_space<vmem>>, vector<1x8x384xf32>
    %244 = vector.shape_cast %243 : vector<1x8x384xf32> to vector<8x384xf32>
    %245 = arith.addf %244, %3 : vector<8x384xf32>
    %246 = arith.truncf %236 : vector<8x128xf32> to vector<8x128xbf16>
    %c0_68 = arith.constant 0 : index
    %c0_69 = arith.constant 0 : index
    %247 = vector.load %arg5[%c0_68, %c0_69] : memref<128x384xbf16, #tpu.memory_space<vmem>>, vector<128x384xbf16>
    %cst_70 = arith.constant dense<0.000000e+00> : vector<8x384xf32>
    %248 = tpu.matmul %246, %247, %cst_70 {dimension_numbers = #tpu.dot_dimension_numbers<[1], [0], [0], [1], [0, 0, 1, 1], [], []>} : vector<8x128xbf16>, vector<128x384xbf16>, vector<8x384xf32> -> vector<8x384xf32>
    %249 = vector.extract_strided_slice %245 {offsets = [0, 0], sizes = [8, 128], strides = [1, 1]} : vector<8x384xf32> to vector<8x128xf32>
    %250 = vector.extract_strided_slice %248 {offsets = [0, 0], sizes = [8, 128], strides = [1, 1]} : vector<8x384xf32> to vector<8x128xf32>
    %251 = arith.addf %249, %250 : vector<8x128xf32>
    %252 = arith.negf %251 : vector<8x128xf32>
    %253 = math.exp %252 : vector<8x128xf32>
    %cst_71 = arith.constant 1.000000e+00 : f32
    %254 = vector.broadcast %cst_71 : f32 to vector<8x128xf32>
    %255 = arith.addf %254, %253 : vector<8x128xf32>
    %256 = arith.divf %254, %255 : vector<8x128xf32>
    %257 = vector.extract_strided_slice %245 {offsets = [0, 128], sizes = [8, 128], strides = [1, 1]} : vector<8x384xf32> to vector<8x128xf32>
    %258 = vector.extract_strided_slice %248 {offsets = [0, 128], sizes = [8, 128], strides = [1, 1]} : vector<8x384xf32> to vector<8x128xf32>
    %259 = arith.addf %257, %258 : vector<8x128xf32>
    %260 = arith.negf %259 : vector<8x128xf32>
    %261 = math.exp %260 : vector<8x128xf32>
    %cst_72 = arith.constant 1.000000e+00 : f32
    %262 = vector.broadcast %cst_72 : f32 to vector<8x128xf32>
    %263 = arith.addf %262, %261 : vector<8x128xf32>
    %264 = arith.divf %262, %263 : vector<8x128xf32>
    %265 = vector.extract_strided_slice %245 {offsets = [0, 256], sizes = [8, 128], strides = [1, 1]} : vector<8x384xf32> to vector<8x128xf32>
    %266 = vector.extract_strided_slice %248 {offsets = [0, 256], sizes = [8, 128], strides = [1, 1]} : vector<8x384xf32> to vector<8x128xf32>
    %267 = arith.addf %266, %6 : vector<8x128xf32>
    %268 = arith.mulf %256, %267 : vector<8x128xf32>
    %269 = arith.addf %265, %268 : vector<8x128xf32>
    %270 = math.tanh %269 : vector<8x128xf32>
    %cst_73 = arith.constant 1.000000e+00 : f32
    %271 = vector.broadcast %cst_73 : f32 to vector<8x128xf32>
    %272 = arith.subf %271, %264 : vector<8x128xf32>
    %273 = arith.mulf %272, %270 : vector<8x128xf32>
    %274 = arith.mulf %264, %236 : vector<8x128xf32>
    %275 = arith.addf %273, %274 : vector<8x128xf32>
    %276 = arith.truncf %275 : vector<8x128xf32> to vector<8x128xbf16>
    %277 = arith.index_cast %c6_i32 : i32 to index
    %c0_74 = arith.constant 0 : index
    %c0_75 = arith.constant 0 : index
    %278 = vector.load %arg7[%277, %c0_74, %c0_75] : memref<8x8x128xbf16, #tpu.memory_space<vmem>>, vector<1x8x128xbf16>
    %279 = vector.shape_cast %278 : vector<1x8x128xbf16> to vector<8x128xbf16>
    %280 = vector.shape_cast %276 : vector<8x128xbf16> to vector<1x8x128xbf16>
    tpu.vector_store %arg7[%277, %c0_74, %c0_75], %280 {strides = array<i32>} : memref<8x8x128xbf16, #tpu.memory_space<vmem>>, vector<1x8x128xbf16>,
    %c7_i32 = arith.constant 7 : i32
    %281 = arith.index_cast %c7_i32 : i32 to index
    %c0_76 = arith.constant 0 : index
    %c0_77 = arith.constant 0 : index
    %282 = vector.load %arg2[%281, %c0_76, %c0_77] : memref<8x8x384xf32, #tpu.memory_space<vmem>>, vector<1x8x384xf32>
    %283 = vector.shape_cast %282 : vector<1x8x384xf32> to vector<8x384xf32>
    %284 = arith.addf %283, %3 : vector<8x384xf32>
    %285 = arith.truncf %275 : vector<8x128xf32> to vector<8x128xbf16>
    %c0_78 = arith.constant 0 : index
    %c0_79 = arith.constant 0 : index
    %286 = vector.load %arg5[%c0_78, %c0_79] : memref<128x384xbf16, #tpu.memory_space<vmem>>, vector<128x384xbf16>
    %cst_80 = arith.constant dense<0.000000e+00> : vector<8x384xf32>
    %287 = tpu.matmul %285, %286, %cst_80 {dimension_numbers = #tpu.dot_dimension_numbers<[1], [0], [0], [1], [0, 0, 1, 1], [], []>} : vector<8x128xbf16>, vector<128x384xbf16>, vector<8x384xf32> -> vector<8x384xf32>
    %288 = vector.extract_strided_slice %284 {offsets = [0, 0], sizes = [8, 128], strides = [1, 1]} : vector<8x384xf32> to vector<8x128xf32>
    %289 = vector.extract_strided_slice %287 {offsets = [0, 0], sizes = [8, 128], strides = [1, 1]} : vector<8x384xf32> to vector<8x128xf32>
    %290 = arith.addf %288, %289 : vector<8x128xf32>
    %291 = arith.negf %290 : vector<8x128xf32>
    %292 = math.exp %291 : vector<8x128xf32>
    %cst_81 = arith.constant 1.000000e+00 : f32
    %293 = vector.broadcast %cst_81 : f32 to vector<8x128xf32>
    %294 = arith.addf %293, %292 : vector<8x128xf32>
    %295 = arith.divf %293, %294 : vector<8x128xf32>
    %296 = vector.extract_strided_slice %284 {offsets = [0, 128], sizes = [8, 128], strides = [1, 1]} : vector<8x384xf32> to vector<8x128xf32>
    %297 = vector.extract_strided_slice %287 {offsets = [0, 128], sizes = [8, 128], strides = [1, 1]} : vector<8x384xf32> to vector<8x128xf32>
    %298 = arith.addf %296, %297 : vector<8x128xf32>
    %299 = arith.negf %298 : vector<8x128xf32>
    %300 = math.exp %299 : vector<8x128xf32>
    %cst_82 = arith.constant 1.000000e+00 : f32
    %301 = vector.broadcast %cst_82 : f32 to vector<8x128xf32>
    %302 = arith.addf %301, %300 : vector<8x128xf32>
    %303 = arith.divf %301, %302 : vector<8x128xf32>
    %304 = vector.extract_strided_slice %284 {offsets = [0, 256], sizes = [8, 128], strides = [1, 1]} : vector<8x384xf32> to vector<8x128xf32>
    %305 = vector.extract_strided_slice %287 {offsets = [0, 256], sizes = [8, 128], strides = [1, 1]} : vector<8x384xf32> to vector<8x128xf32>
    %306 = arith.addf %305, %6 : vector<8x128xf32>
    %307 = arith.mulf %295, %306 : vector<8x128xf32>
    %308 = arith.addf %304, %307 : vector<8x128xf32>
    %309 = math.tanh %308 : vector<8x128xf32>
    %cst_83 = arith.constant 1.000000e+00 : f32
    %310 = vector.broadcast %cst_83 : f32 to vector<8x128xf32>
    %311 = arith.subf %310, %303 : vector<8x128xf32>
    %312 = arith.mulf %311, %309 : vector<8x128xf32>
    %313 = arith.mulf %303, %275 : vector<8x128xf32>
    %314 = arith.addf %312, %313 : vector<8x128xf32>
    %315 = arith.truncf %314 : vector<8x128xf32> to vector<8x128xbf16>
    %316 = arith.index_cast %c7_i32 : i32 to index
    %c0_84 = arith.constant 0 : index
    %c0_85 = arith.constant 0 : index
    %317 = vector.load %arg7[%316, %c0_84, %c0_85] : memref<8x8x128xbf16, #tpu.memory_space<vmem>>, vector<1x8x128xbf16>
    %318 = vector.shape_cast %317 : vector<1x8x128xbf16> to vector<8x128xbf16>
    %319 = vector.shape_cast %315 : vector<8x128xbf16> to vector<1x8x128xbf16>
    tpu.vector_store %arg7[%316, %c0_84, %c0_85], %319 {strides = array<i32>} : memref<8x8x128xbf16, #tpu.memory_space<vmem>>, vector<1x8x128xbf16>,
    %c8_i32 = arith.constant 8 : i32
    %c0_86 = arith.constant 0 : index
    %c0_87 = arith.constant 0 : index
    %320 = vector.load %arg9[%c0_86, %c0_87] : memref<8x128xf32, #tpu.memory_space<vmem>>, vector<8x128xf32>
    tpu.vector_store %arg9[%c0_86, %c0_87], %314 {strides = array<i32>} : memref<8x128xf32, #tpu.memory_space<vmem>>, vector<8x128xf32>,
    %c0_i32_88 = arith.constant 0 : i32
    %321 = arith.cmpi eq, %arg1, %c0_i32_88 : i32
    %322 = arith.extui %321 : i1 to i32
    %c0_i32_89 = arith.constant 0 : i32
    %323 = arith.cmpi ne, %322, %c0_i32_89 : i32
    scf.if %323 {
      %c0_90 = arith.constant 0 : index
      %c0_91 = arith.constant 0 : index
      %324 = vector.load %arg8[%c0_90, %c0_91] : memref<8x128xf32, #tpu.memory_space<vmem>>, vector<8x128xf32>
      tpu.vector_store %arg8[%c0_90, %c0_91], %314 {strides = array<i32>} : memref<8x128xf32, #tpu.memory_space<vmem>>, vector<8x128xf32>,
    } else {
    }
    return
  }
  func.func @transform_0(%arg0: i32, %arg1: i32) -> (i32, i32, i32) {
    %c0_i32 = arith.constant 0 : i32
    %c0_i32_0 = arith.constant 0 : i32
    return %arg1, %arg0, %c0_i32 : i32, i32, i32
  }
  func.func @transform_1(%arg0: i32, %arg1: i32) -> (i32, i32) {
    %c0_i32 = arith.constant 0 : i32
    %c0_i32_0 = arith.constant 0 : i32
    return %arg0, %c0_i32 : i32, i32
  }
  func.func @transform_2(%arg0: i32, %arg1: i32) -> (i32, i32) {
    %c0_i32 = arith.constant 0 : i32
    %c0_i32_0 = arith.constant 0 : i32
    return %arg0, %c0_i32 : i32, i32
  }
  func.func @transform_3(%arg0: i32, %arg1: i32) -> (i32, i32) {
    %c0_i32 = arith.constant 0 : i32
    %c0_i32_0 = arith.constant 0 : i32
    %c0_i32_1 = arith.constant 0 : i32
    return %c0_i32, %c0_i32_0 : i32, i32
  }
  func.func @transform_4(%arg0: i32, %arg1: i32) -> (i32, i32) {
    %c0_i32 = arith.constant 0 : i32
    %c0_i32_0 = arith.constant 0 : i32
    %c0_i32_1 = arith.constant 0 : i32
    return %c0_i32, %c0_i32_0 : i32, i32
  }
  func.func @transform_5(%arg0: i32, %arg1: i32) -> (i32, i32, i32) {
    %c0_i32 = arith.constant 0 : i32
    %c0_i32_0 = arith.constant 0 : i32
    return %arg1, %arg0, %c0_i32 : i32, i32, i32
  }
  func.func @transform_6(%arg0: i32, %arg1: i32) -> (i32, i32) {
    %c0_i32 = arith.constant 0 : i32
    %c0_i32_0 = arith.constant 0 : i32
    return %arg0, %c0_i32 : i32, i32
  }
}

module attributes {stable_mosaic.version = 11 : i64} {
  func.func @matmul_bias_kernel(%arg0: i32, %arg1: i32, %arg2: i32, %arg3: memref<64x128xbf16, #tpu.memory_space<vmem>>, %arg4: memref<128x128xbf16, #tpu.memory_space<vmem>>, %arg5: memref<1x128xf32, #tpu.memory_space<vmem>>, %arg6: memref<64x128xf32, #tpu.memory_space<vmem>>, %arg7: memref<64x128xf32, #tpu.memory_space<vmem>>) attributes {dimension_semantics = [#tpu.dimension_semantics<parallel>, #tpu.dimension_semantics<parallel>, #tpu.dimension_semantics<arbitrary>], iteration_bounds = array<i64: 1, 3, 1>, scalar_prefetch = 0 : i64, scratch_operands = 1 : i64, tpu.core_type = #tpu.core_type<tc>, window_params = [{transform_indices = @transform_0, window_bounds = array<i64: 64, 128>}, {transform_indices = @transform_1, window_bounds = array<i64: 128, 128>}, {transform_indices = @transform_2, window_bounds = array<i64: 1, 128>}, {transform_indices = @transform_3, window_bounds = array<i64: 64, 128>}]} {
    %c0_i32 = arith.constant 0 : i32
    %0 = arith.cmpi eq, %arg2, %c0_i32 : i32
    %1 = arith.extui %0 : i1 to i32
    %c0_i32_0 = arith.constant 0 : i32
    %2 = arith.cmpi ne, %1, %c0_i32_0 : i32
    scf.if %2 {
      %cst_10 = arith.constant 0.000000e+00 : f32
      %12 = vector.broadcast %cst_10 : f32 to vector<64x128xf32>
      %c0_11 = arith.constant 0 : index
      %c0_12 = arith.constant 0 : index
      %13 = vector.load %arg7[%c0_11, %c0_12] : memref<64x128xf32, #tpu.memory_space<vmem>>, vector<64x128xf32>
      tpu.vector_store %arg7[%c0_11, %c0_12], %12 {strides = array<i32>} : memref<64x128xf32, #tpu.memory_space<vmem>>, vector<64x128xf32>,
    } else {
    }
    %c0 = arith.constant 0 : index
    %c0_1 = arith.constant 0 : index
    %3 = vector.load %arg7[%c0, %c0_1] : memref<64x128xf32, #tpu.memory_space<vmem>>, vector<64x128xf32>
    %c0_2 = arith.constant 0 : index
    %c0_3 = arith.constant 0 : index
    %4 = vector.load %arg3[%c0_2, %c0_3] : memref<64x128xbf16, #tpu.memory_space<vmem>>, vector<64x128xbf16>
    %c0_4 = arith.constant 0 : index
    %c0_5 = arith.constant 0 : index
    %5 = vector.load %arg4[%c0_4, %c0_5] : memref<128x128xbf16, #tpu.memory_space<vmem>>, vector<128x128xbf16>
    %cst = arith.constant dense<0.000000e+00> : vector<64x128xf32>
    %6 = tpu.matmul %4, %5, %cst {dimension_numbers = #tpu.dot_dimension_numbers<[1], [0], [0], [1], [0, 0, 1, 1], [], []>} : vector<64x128xbf16>, vector<128x128xbf16>, vector<64x128xf32> -> vector<64x128xf32>
    %7 = arith.addf %3, %6 : vector<64x128xf32>
    %c0_6 = arith.constant 0 : index
    %c0_7 = arith.constant 0 : index
    %8 = vector.load %arg7[%c0_6, %c0_7] : memref<64x128xf32, #tpu.memory_space<vmem>>, vector<64x128xf32>
    tpu.vector_store %arg7[%c0_6, %c0_7], %7 {strides = array<i32>} : memref<64x128xf32, #tpu.memory_space<vmem>>, vector<64x128xf32>,
    %c0_i32_8 = arith.constant 0 : i32
    %9 = arith.cmpi eq, %arg2, %c0_i32_8 : i32
    %10 = arith.extui %9 : i1 to i32
    %c0_i32_9 = arith.constant 0 : i32
    %11 = arith.cmpi ne, %10, %c0_i32_9 : i32
    scf.if %11 {
      %c0_10 = arith.constant 0 : index
      %c0_11 = arith.constant 0 : index
      %12 = vector.load %arg7[%c0_10, %c0_11] : memref<64x128xf32, #tpu.memory_space<vmem>>, vector<64x128xf32>
      %c0_12 = arith.constant 0 : index
      %c0_13 = arith.constant 0 : index
      %13 = vector.load %arg5[%c0_12, %c0_13] : memref<1x128xf32, #tpu.memory_space<vmem>>, vector<1x128xf32>
      %14 = vector.broadcast %13 : vector<1x128xf32> to vector<64x128xf32>
      %15 = arith.addf %12, %14 : vector<64x128xf32>
      %c0_14 = arith.constant 0 : index
      %c0_15 = arith.constant 0 : index
      %16 = vector.load %arg6[%c0_14, %c0_15] : memref<64x128xf32, #tpu.memory_space<vmem>>, vector<64x128xf32>
      tpu.vector_store %arg6[%c0_14, %c0_15], %15 {strides = array<i32>} : memref<64x128xf32, #tpu.memory_space<vmem>>, vector<64x128xf32>,
    } else {
    }
    return
  }
  func.func @transform_0(%arg0: i32, %arg1: i32, %arg2: i32) -> (i32, i32) {
    %c0_i32 = arith.constant 0 : i32
    return %arg0, %arg2 : i32, i32
  }
  func.func @transform_1(%arg0: i32, %arg1: i32, %arg2: i32) -> (i32, i32) {
    %c0_i32 = arith.constant 0 : i32
    return %arg2, %arg1 : i32, i32
  }
  func.func @transform_2(%arg0: i32, %arg1: i32, %arg2: i32) -> (i32, i32) {
    %c0_i32 = arith.constant 0 : i32
    %c0_i32_0 = arith.constant 0 : i32
    return %c0_i32, %arg1 : i32, i32
  }
  func.func @transform_3(%arg0: i32, %arg1: i32, %arg2: i32) -> (i32, i32) {
    %c0_i32 = arith.constant 0 : i32
    return %arg0, %arg1 : i32, i32
  }
}

module attributes {stable_mosaic.version = 11 : i64} {
  func.func @dense_head_kernel(%arg0: i32, %arg1: i32, %arg2: i32, %arg3: memref<64x128xbf16, #tpu.memory_space<vmem>>, %arg4: memref<128x128xbf16, #tpu.memory_space<vmem>>, %arg5: memref<1x128xf32, #tpu.memory_space<vmem>>, %arg6: memref<8x8x128xf32, #tpu.memory_space<vmem>>, %arg7: memref<64x128xf32, #tpu.memory_space<vmem>>) attributes {dimension_semantics = [#tpu.dimension_semantics<parallel>, #tpu.dimension_semantics<parallel>, #tpu.dimension_semantics<arbitrary>], iteration_bounds = array<i64: 1, 1, 1>, scalar_prefetch = 0 : i64, scratch_operands = 1 : i64, tpu.core_type = #tpu.core_type<tc>, window_params = [{transform_indices = @transform_0, window_bounds = array<i64: 64, 128>}, {transform_indices = @transform_1, window_bounds = array<i64: 128, 128>}, {transform_indices = @transform_2, window_bounds = array<i64: 1, 128>}, {transform_indices = @transform_3, window_bounds = array<i64: 8, 8, 128>}]} {
    %c0_i32 = arith.constant 0 : i32
    %0 = arith.cmpi eq, %arg2, %c0_i32 : i32
    %1 = arith.extui %0 : i1 to i32
    %c0_i32_0 = arith.constant 0 : i32
    %2 = arith.cmpi ne, %1, %c0_i32_0 : i32
    scf.if %2 {
      %cst_10 = arith.constant 0.000000e+00 : f32
      %12 = vector.broadcast %cst_10 : f32 to vector<64x128xf32>
      %c0_11 = arith.constant 0 : index
      %c0_12 = arith.constant 0 : index
      %13 = vector.load %arg7[%c0_11, %c0_12] : memref<64x128xf32, #tpu.memory_space<vmem>>, vector<64x128xf32>
      tpu.vector_store %arg7[%c0_11, %c0_12], %12 {strides = array<i32>} : memref<64x128xf32, #tpu.memory_space<vmem>>, vector<64x128xf32>,
    } else {
    }
    %c0 = arith.constant 0 : index
    %c0_1 = arith.constant 0 : index
    %3 = vector.load %arg7[%c0, %c0_1] : memref<64x128xf32, #tpu.memory_space<vmem>>, vector<64x128xf32>
    %c0_2 = arith.constant 0 : index
    %c0_3 = arith.constant 0 : index
    %4 = vector.load %arg3[%c0_2, %c0_3] : memref<64x128xbf16, #tpu.memory_space<vmem>>, vector<64x128xbf16>
    %c0_4 = arith.constant 0 : index
    %c0_5 = arith.constant 0 : index
    %5 = vector.load %arg4[%c0_4, %c0_5] : memref<128x128xbf16, #tpu.memory_space<vmem>>, vector<128x128xbf16>
    %cst = arith.constant dense<0.000000e+00> : vector<64x128xf32>
    %6 = tpu.matmul %4, %5, %cst {dimension_numbers = #tpu.dot_dimension_numbers<[1], [0], [0], [1], [0, 0, 1, 1], [], []>} : vector<64x128xbf16>, vector<128x128xbf16>, vector<64x128xf32> -> vector<64x128xf32>
    %7 = arith.addf %3, %6 : vector<64x128xf32>
    %c0_6 = arith.constant 0 : index
    %c0_7 = arith.constant 0 : index
    %8 = vector.load %arg7[%c0_6, %c0_7] : memref<64x128xf32, #tpu.memory_space<vmem>>, vector<64x128xf32>
    tpu.vector_store %arg7[%c0_6, %c0_7], %7 {strides = array<i32>} : memref<64x128xf32, #tpu.memory_space<vmem>>, vector<64x128xf32>,
    %c0_i32_8 = arith.constant 0 : i32
    %9 = arith.cmpi eq, %arg2, %c0_i32_8 : i32
    %10 = arith.extui %9 : i1 to i32
    %c0_i32_9 = arith.constant 0 : i32
    %11 = arith.cmpi ne, %10, %c0_i32_9 : i32
    scf.if %11 {
      %c0_10 = arith.constant 0 : index
      %c0_11 = arith.constant 0 : index
      %12 = vector.load %arg7[%c0_10, %c0_11] : memref<64x128xf32, #tpu.memory_space<vmem>>, vector<64x128xf32>
      %c0_12 = arith.constant 0 : index
      %c0_13 = arith.constant 0 : index
      %13 = vector.load %arg5[%c0_12, %c0_13] : memref<1x128xf32, #tpu.memory_space<vmem>>, vector<1x128xf32>
      %14 = vector.broadcast %13 : vector<1x128xf32> to vector<64x128xf32>
      %15 = arith.addf %12, %14 : vector<64x128xf32>
      %16 = vector.extract_strided_slice %15 {offsets = [0, 0], sizes = [8, 128], strides = [1, 1]} : vector<64x128xf32> to vector<8x128xf32>
      %c0_14 = arith.constant 0 : index
      %c0_15 = arith.constant 0 : index
      %c0_16 = arith.constant 0 : index
      %17 = vector.load %arg6[%c0_14, %c0_15, %c0_16] : memref<8x8x128xf32, #tpu.memory_space<vmem>>, vector<8x1x128xf32>
      %18 = vector.shape_cast %17 : vector<8x1x128xf32> to vector<8x128xf32>
      %19 = vector.shape_cast %16 : vector<8x128xf32> to vector<8x1x128xf32>
      tpu.vector_store %arg6[%c0_14, %c0_15, %c0_16], %19 {strides = array<i32>} : memref<8x8x128xf32, #tpu.memory_space<vmem>>, vector<8x1x128xf32>,
      %20 = vector.extract_strided_slice %15 {offsets = [8, 0], sizes = [8, 128], strides = [1, 1]} : vector<64x128xf32> to vector<8x128xf32>
      %c0_17 = arith.constant 0 : index
      %c1 = arith.constant 1 : index
      %c0_18 = arith.constant 0 : index
      %21 = vector.load %arg6[%c0_17, %c1, %c0_18] : memref<8x8x128xf32, #tpu.memory_space<vmem>>, vector<8x1x128xf32>
      %22 = vector.shape_cast %21 : vector<8x1x128xf32> to vector<8x128xf32>
      %23 = vector.shape_cast %20 : vector<8x128xf32> to vector<8x1x128xf32>
      tpu.vector_store %arg6[%c0_17, %c1, %c0_18], %23 {strides = array<i32>} : memref<8x8x128xf32, #tpu.memory_space<vmem>>, vector<8x1x128xf32>,
      %24 = vector.extract_strided_slice %15 {offsets = [16, 0], sizes = [8, 128], strides = [1, 1]} : vector<64x128xf32> to vector<8x128xf32>
      %c0_19 = arith.constant 0 : index
      %c2 = arith.constant 2 : index
      %c0_20 = arith.constant 0 : index
      %25 = vector.load %arg6[%c0_19, %c2, %c0_20] : memref<8x8x128xf32, #tpu.memory_space<vmem>>, vector<8x1x128xf32>
      %26 = vector.shape_cast %25 : vector<8x1x128xf32> to vector<8x128xf32>
      %27 = vector.shape_cast %24 : vector<8x128xf32> to vector<8x1x128xf32>
      tpu.vector_store %arg6[%c0_19, %c2, %c0_20], %27 {strides = array<i32>} : memref<8x8x128xf32, #tpu.memory_space<vmem>>, vector<8x1x128xf32>,
      %28 = vector.extract_strided_slice %15 {offsets = [24, 0], sizes = [8, 128], strides = [1, 1]} : vector<64x128xf32> to vector<8x128xf32>
      %c0_21 = arith.constant 0 : index
      %c3 = arith.constant 3 : index
      %c0_22 = arith.constant 0 : index
      %29 = vector.load %arg6[%c0_21, %c3, %c0_22] : memref<8x8x128xf32, #tpu.memory_space<vmem>>, vector<8x1x128xf32>
      %30 = vector.shape_cast %29 : vector<8x1x128xf32> to vector<8x128xf32>
      %31 = vector.shape_cast %28 : vector<8x128xf32> to vector<8x1x128xf32>
      tpu.vector_store %arg6[%c0_21, %c3, %c0_22], %31 {strides = array<i32>} : memref<8x8x128xf32, #tpu.memory_space<vmem>>, vector<8x1x128xf32>,
      %32 = vector.extract_strided_slice %15 {offsets = [32, 0], sizes = [8, 128], strides = [1, 1]} : vector<64x128xf32> to vector<8x128xf32>
      %c0_23 = arith.constant 0 : index
      %c4 = arith.constant 4 : index
      %c0_24 = arith.constant 0 : index
      %33 = vector.load %arg6[%c0_23, %c4, %c0_24] : memref<8x8x128xf32, #tpu.memory_space<vmem>>, vector<8x1x128xf32>
      %34 = vector.shape_cast %33 : vector<8x1x128xf32> to vector<8x128xf32>
      %35 = vector.shape_cast %32 : vector<8x128xf32> to vector<8x1x128xf32>
      tpu.vector_store %arg6[%c0_23, %c4, %c0_24], %35 {strides = array<i32>} : memref<8x8x128xf32, #tpu.memory_space<vmem>>, vector<8x1x128xf32>,
      %36 = vector.extract_strided_slice %15 {offsets = [40, 0], sizes = [8, 128], strides = [1, 1]} : vector<64x128xf32> to vector<8x128xf32>
      %c0_25 = arith.constant 0 : index
      %c5 = arith.constant 5 : index
      %c0_26 = arith.constant 0 : index
      %37 = vector.load %arg6[%c0_25, %c5, %c0_26] : memref<8x8x128xf32, #tpu.memory_space<vmem>>, vector<8x1x128xf32>
      %38 = vector.shape_cast %37 : vector<8x1x128xf32> to vector<8x128xf32>
      %39 = vector.shape_cast %36 : vector<8x128xf32> to vector<8x1x128xf32>
      tpu.vector_store %arg6[%c0_25, %c5, %c0_26], %39 {strides = array<i32>} : memref<8x8x128xf32, #tpu.memory_space<vmem>>, vector<8x1x128xf32>,
      %40 = vector.extract_strided_slice %15 {offsets = [48, 0], sizes = [8, 128], strides = [1, 1]} : vector<64x128xf32> to vector<8x128xf32>
      %c0_27 = arith.constant 0 : index
      %c6 = arith.constant 6 : index
      %c0_28 = arith.constant 0 : index
      %41 = vector.load %arg6[%c0_27, %c6, %c0_28] : memref<8x8x128xf32, #tpu.memory_space<vmem>>, vector<8x1x128xf32>
      %42 = vector.shape_cast %41 : vector<8x1x128xf32> to vector<8x128xf32>
      %43 = vector.shape_cast %40 : vector<8x128xf32> to vector<8x1x128xf32>
      tpu.vector_store %arg6[%c0_27, %c6, %c0_28], %43 {strides = array<i32>} : memref<8x8x128xf32, #tpu.memory_space<vmem>>, vector<8x1x128xf32>,
      %44 = vector.extract_strided_slice %15 {offsets = [56, 0], sizes = [8, 128], strides = [1, 1]} : vector<64x128xf32> to vector<8x128xf32>
      %c0_29 = arith.constant 0 : index
      %c7 = arith.constant 7 : index
      %c0_30 = arith.constant 0 : index
      %45 = vector.load %arg6[%c0_29, %c7, %c0_30] : memref<8x8x128xf32, #tpu.memory_space<vmem>>, vector<8x1x128xf32>
      %46 = vector.shape_cast %45 : vector<8x1x128xf32> to vector<8x128xf32>
      %47 = vector.shape_cast %44 : vector<8x128xf32> to vector<8x1x128xf32>
      tpu.vector_store %arg6[%c0_29, %c7, %c0_30], %47 {strides = array<i32>} : memref<8x8x128xf32, #tpu.memory_space<vmem>>, vector<8x1x128xf32>,
    } else {
    }
    return
  }
  func.func @transform_0(%arg0: i32, %arg1: i32, %arg2: i32) -> (i32, i32) {
    %c0_i32 = arith.constant 0 : i32
    return %arg0, %arg2 : i32, i32
  }
  func.func @transform_1(%arg0: i32, %arg1: i32, %arg2: i32) -> (i32, i32) {
    %c0_i32 = arith.constant 0 : i32
    return %arg2, %arg1 : i32, i32
  }
  func.func @transform_2(%arg0: i32, %arg1: i32, %arg2: i32) -> (i32, i32) {
    %c0_i32 = arith.constant 0 : i32
    %c0_i32_0 = arith.constant 0 : i32
    return %c0_i32, %arg1 : i32, i32
  }
  func.func @transform_3(%arg0: i32, %arg1: i32, %arg2: i32) -> (i32, i32, i32) {
    %c0_i32 = arith.constant 0 : i32
    %c0_i32_0 = arith.constant 0 : i32
    return %c0_i32, %arg0, %arg1 : i32, i32, i32
  }
}

</mosaic_0001>

<llo_original>
// kernel: seq2seq_decoder_forward.7
$region0: #{seq2seq_decoder_forward.7}
  #allocation0 [shape = 'u32[]', space=smem, size = 0x4, offset = 0x4, fixed_abs, tag = 'smem constant byte address 0x4 - core index']
  #allocation1 [shape = 'u32[144,128]{1,0:T(1,128)}', space=vmem, size = 0x12000, scoped, tag = 'internal scratch']
  #allocation2 [shape = 'f32[64,128]{1,0:T(8,128)}', space=vmem, size = 0x8000, scoped, tag = 'scratch operand']
  %s0 = inlined_call_operand.vmem [shape: bf16[64,128], index: 0, kind: input, shape index: {}]
  %s1 = inlined_call_operand.vmem [shape: bf16[128,384], index: 1, kind: input, shape index: {}]
  %s2 = inlined_call_operand.vmem [shape: f32[1,384], index: 2, kind: input, shape index: {}]
  %s3 = inlined_call_operand.vmem [shape: f32[64,384], index: 3, kind: output, shape index: {}]
  %s4 = sld [smem:[#allocation0]]
  $region128: #{seq2seq_decoder_forward.7} parent=0
    _
  %s6 = ssub.s32 1, %s4
  %s7 = scalar_select 0, %s6, %s4
  $region1: #{seq2seq_decoder_forward.7} parent=0
    #allocation3 [shape = 'u8[65536]{0}', space=vmem, size = 0x10000, scoped, tag = 'input window, operand 1']
    #allocation4 [shape = 'u8[65536]{0}', space=vmem, size = 0x10000, scoped, tag = 'output window, operand 0']
    loop: start=0, step=1, limit=5
    $region2: #{seq2seq_decoder_forward.7} parent=1 // loop_pre_header
      _
    $region3: #{seq2seq_decoder_forward.7} parent=1 // loop_header
      %s9 = sphi 0, %s13
      %p10 = scmp.ge.s32.totalorder %s9, 5
      %s16 = sphi 0, %s35
      %s17 = sphi 0, %s31
      %s18 = sphi 0, %s27
      %s19 = sphi 0, %s16
      %s20 = sphi 0, %s17
      %s21 = sphi 0, %s18
      %s22 = sphi 0, %s19
      %s23 = sphi 0, %s20
      %s24 = sphi 0, %s21
      %s40 = sphi 0, %s42
      %s43 = sphi 0, %s40
      %s44 = sphi 0, %s43
      %s60 = sphi 0, %s44
      %s68 = sphi 0, %s70
      %s71 = sphi 0, %s68
      %s72 = sphi 0, %s71
      %s88 = sphi 0, %s72
      %s94 = sphi 0, %s96
      %s97 = sphi 0, %s94
      %s98 = sphi 0, %s97
      %s114 = sphi 0, %s98
      %s122 = sphi 0, %s124
      %s125 = sphi 0, %s122
      %s126 = sphi 0, %s125
      %s142 = sphi 0, %s126
    $region4: #{seq2seq_decoder_forward.7} parent=1 // loop_header_branch
      %12 = sbr.rel (%p10) target = $region8
    $region5: #{seq2seq_decoder_forward.7} parent=1 // loop_body
      %s14 = ssub.s32 %s9, 1
      %s15 = ssub.s32 %s9, 2
      %s25 = sadd.s32 1, %s18
      %p26 = scmp.ge.s32.totalorder %s25, 1
      %s27 = scalar_select %p26, 0, %s25
      %s28 = sadd.s32 1, %s17
      %s29 = scalar_select %p26, %s28, %s17
      %p30 = scmp.ge.s32.totalorder %s29, 3
      %s31 = scalar_select %p30, 0, %s29
      %s32 = sadd.s32 1, %s16
      %s33 = scalar_select %p30, %s32, %s16
      %p34 = scmp.ge.s32.totalorder %s33, 1
      %s35 = scalar_select %p34, 0, %s33
      %s36 = ssub.s32 %s16, %s35
      %s37 = ssub.s32 %s18, %s27
      %s38 = sor.u32 %s36, %s37
      %p39 = scmp.eq.s32.totalorder %s38, 0
      %s41 = sadd.s32 %s40, 1
      %s42 = scalar_select %p39, %s40, %s41
      %p45 = pneg %p39
      %p46 = scmp.eq.s32.totalorder %s9, 2
      %p47 = por %p45, %p46
      %p48 = scmp.ne.s32.totalorder %s40, %s43
      %p49 = scmp.eq.s32.totalorder %s9, 0
      %p50 = por %p48, %p49
      %p51 = scmp.ne.s32.totalorder %s40, %s43
      %p52 = scmp.eq.s32.totalorder %s14, 2
      %p53 = por %p51, %p52
      %p54 = scmp.ne.s32.totalorder %s43, %s44
      %p55 = scmp.eq.s32.totalorder %s14, 0
      %p56 = por %p54, %p55
      %p57 = scmp.ne.s32.totalorder %s43, %s44
      %p58 = scmp.eq.s32.totalorder %s15, 2
      %p59 = por %p57, %p58
      %p61 = scmp.ne.s32.totalorder %s44, %s60
      %p62 = scmp.eq.s32.totalorder %s15, 0
      %p63 = por %p61, %p62
      %s64 = ssub.s32 %s18, %s27
      %s65 = ssub.s32 %s17, %s31
      %s66 = sor.u32 %s64, %s65
      %p67 = scmp.eq.s32.totalorder %s66, 0
      %s69 = sadd.s32 %s68, 1
      %s70 = scalar_select %p67, %s68, %s69
      %p73 = pneg %p67
      %p74 = scmp.eq.s32.totalorder %s9, 2
      %p75 = por %p73, %p74
      %p76 = scmp.ne.s32.totalorder %s68, %s71
      %p77 = scmp.eq.s32.totalorder %s9, 0
      %p78 = por %p76, %p77
      %p79 = scmp.ne.s32.totalorder %s68, %s71
      %p80 = scmp.eq.s32.totalorder %s14, 2
      %p81 = por %p79, %p80
      %p82 = scmp.ne.s32.totalorder %s71, %s72
      %p83 = scmp.eq.s32.totalorder %s14, 0
      %p84 = por %p82, %p83
      %p85 = scmp.ne.s32.totalorder %s71, %s72
      %p86 = scmp.eq.s32.totalorder %s15, 2
      %p87 = por %p85, %p86
      %p89 = scmp.ne.s32.totalorder %s72, %s88
      %p90 = scmp.eq.s32.totalorder %s15, 0
      %p91 = por %p89, %p90
      %s92 = ssub.s32 %s17, %s31
      %p93 = scmp.eq.s32.totalorder %s92, 0
      %s95 = sadd.s32 %s94, 1
      %s96 = scalar_select %p93, %s94, %s95
      %p99 = pneg %p93
      %p100 = scmp.eq.s32.totalorder %s9, 2
      %p101 = por %p99, %p100
      %p102 = scmp.ne.s32.totalorder %s94, %s97
      %p103 = scmp.eq.s32.totalorder %s9, 0
      %p104 = por %p102, %p103
      %p105 = scmp.ne.s32.totalorder %s94, %s97
      %p106 = scmp.eq.s32.totalorder %s14, 2
      %p107 = por %p105, %p106
      %p108 = scmp.ne.s32.totalorder %s97, %s98
      %p109 = scmp.eq.s32.totalorder %s14, 0
      %p110 = por %p108, %p109
      %p111 = scmp.ne.s32.totalorder %s97, %s98
      %p112 = scmp.eq.s32.totalorder %s15, 2
      %p113 = por %p111, %p112
      %p115 = scmp.ne.s32.totalorder %s98, %s114
      %p116 = scmp.eq.s32.totalorder %s15, 0
      %p117 = por %p115, %p116
      %s118 = ssub.s32 %s16, %s35
      %s119 = ssub.s32 %s17, %s31
      %s120 = sor.u32 %s118, %s119
      %p121 = scmp.eq.s32.totalorder %s120, 0
      %s123 = sadd.s32 %s122, 1
      %s124 = scalar_select %p121, %s122, %s123
      %p127 = pneg %p121
      %p128 = scmp.eq.s32.totalorder %s9, 2
      %p129 = por %p127, %p128
      %p130 = scmp.ne.s32.totalorder %s122, %s125
      %p131 = scmp.eq.s32.totalorder %s9, 0
      %p132 = por %p130, %p131
      %p133 = scmp.ne.s32.totalorder %s122, %s125
      %p134 = scmp.eq.s32.totalorder %s14, 2
      %p135 = por %p133, %p134
      %p136 = scmp.ne.s32.totalorder %s125, %s126
      %p137 = scmp.eq.s32.totalorder %s14, 0
      %p138 = por %p136, %p137
      %p139 = scmp.ne.s32.totalorder %s125, %s126
      %p140 = scmp.eq.s32.totalorder %s15, 2
      %p141 = por %p139, %p140
      %p143 = scmp.ne.s32.totalorder %s126, %s142
      %p144 = scmp.eq.s32.totalorder %s15, 0
      %p145 = por %p143, %p144
      %p146 = scmp.le.s32.totalorder 1, %s9
      %p147 = scmp.lt.s32.totalorder %s9, 4
      %p148 = pnand %p146, %p147
      %p149 = pneg %p148
      // Predicated region
      $region9: #{seq2seq_decoder_forward.7} parent=5 // pred_check
        _
      $region10: #{seq2seq_decoder_forward.7} parent=5 // pred_check_branch
        %151 = sbr.rel (%p148) target = $region12
      $region11: #{seq2seq_decoder_forward.7} parent=5 // pred_region
        %s152 = ssub.s32 %s9, 1
        // Predicated region
        $region13: #{seq2seq_decoder_forward.7} parent=11 // pred_check
          %p153 = pneg %p56
        $region14: #{seq2seq_decoder_forward.7} parent=11 // pred_check_branch
          %155 = sbr.rel (%p153) target = $region16
        $region15: #{seq2seq_decoder_forward.7} parent=11 // pred_region
          %s156 = smul.u32 8, %s19
          %p157 = scmp.lt.s32.totalorder %s156, 7
          %s158 = scalar_select %p157, %s156, 7
          %p159 = scmp.lt.s32.totalorder %s21, 0
          %s160 = scalar_select %p159, %s21, 0
          %s161 = sadd.s32 %s160, %s158
          %s162 = smul.addr %s161, 4
          %s163 = scalar_lea.vmem %s0, %s162
          %s164 = smul.u32 8, %s19
        $region16: #{seq2seq_decoder_forward.7} parent=11 // pred_fallthru
          _
      $region12: #{seq2seq_decoder_forward.7} parent=5 // pred_fallthru
        _
      %p165 = scmp.lt.s32.totalorder %s9, 3
      // Predicated region
      $region17: #{seq2seq_decoder_forward.7} parent=5 // pred_check
        %p166 = pneg %p165
      $region18: #{seq2seq_decoder_forward.7} parent=5 // pred_check_branch
        %168 = sbr.rel (%p166) target = $region20
      $region19: #{seq2seq_decoder_forward.7} parent=5 // pred_region
        // Predicated region
        $region21: #{seq2seq_decoder_forward.7} parent=19 // pred_check
          %p169 = pneg %p78
        $region22: #{seq2seq_decoder_forward.7} parent=19 // pred_check_branch
          %171 = sbr.rel (%p169) target = $region24
        $region23: #{seq2seq_decoder_forward.7} parent=19 // pred_region
          %s172 = sand.u32 %s68, 1
          %s173 = sand.u32 %s68, 1
          %s174 = smul.addr %s173, 64
          %s175 = scalar_lea.vmem [#allocation3], %s174
          %s176 = smul.u32 16, %s18
          %s177 = smul.addr %s176, 3
          %s178 = sadd.s32 %s17, %s177
          %s179 = smul.addr %s178, 4
          %s180 = scalar_lea.vmem %s1, %s179
          // Predicated region
          $region25: #{seq2seq_decoder_forward.7} parent=23 // pred_check
            _
          $region26: #{seq2seq_decoder_forward.7} parent=23 // pred_check_branch
            %182 = sbr.rel (0) target = $region28
          $region27: #{seq2seq_decoder_forward.7} parent=23 // pred_region
            // Predicated region
            $region29: #{seq2seq_decoder_forward.7} parent=27 // pred_check
              _
            $region30: #{seq2seq_decoder_forward.7} parent=27 // pred_check_branch
              %184 = sbr.rel target = $region32
            $region31: #{seq2seq_decoder_forward.7} parent=27 // pred_region
              // Predicated region
              $region44: #{seq2seq_decoder_forward.7} parent=31 // pred_check
                _
              $region45: #{seq2seq_decoder_forward.7} parent=31 // pred_check_branch
                %229 = sbr.rel (0) target = $region47
              $region46: #{seq2seq_decoder_forward.7} parent=31 // pred_region
                loop: start=0, step=1, limit=1
                $region48: #{seq2seq_decoder_forward.7} parent=46 // loop_pre_header
                  _
                $region49: #{seq2seq_decoder_forward.7} parent=46 // loop_header
                  %s231 = sphi 0, %s235
                  %p232 = scmp.ge.s32.totalorder %s231, 1
                  %s236 = sphi %s180, %s180
                  %s237 = sphi %s175, %s175
                $region50: #{seq2seq_decoder_forward.7} parent=46 // loop_header_branch
                  %234 = sbr.rel (%p232) target = $region54
                $region51: #{seq2seq_decoder_forward.7} parent=46 // loop_body
                  _
                $region52: #{seq2seq_decoder_forward.7} parent=46 // loop_footer
                  %s235 = sadd.s32 1, %s231
                $region53: #{seq2seq_decoder_forward.7} parent=46 // loop_footer_branch
                  %230 = sbr.rel target = $region49
                $region54: #{seq2seq_decoder_forward.7} parent=46 // loop_exit
                  _
                loop: start=0, step=1, limit=1
                $region55: #{seq2seq_decoder_forward.7} parent=46 // loop_pre_header
                  _
                $region56: #{seq2seq_decoder_forward.7} parent=46 // loop_header
                  %s240 = sphi 0, %s244
                  %p241 = scmp.ge.s32.totalorder %s240, 1
                  %s245 = sphi %s180, %s180
                  %s246 = sphi %s175, %s175
                $region57: #{seq2seq_decoder_forward.7} parent=46 // loop_header_branch
                  %243 = sbr.rel (%p241) target = $region61
                $region58: #{seq2seq_decoder_forward.7} parent=46 // loop_body
                  %v247 = vld [vmem:[%s245] sm:$0xf]
                  %248 = vst [vmem:[%s246] sm:$0xf] %v247
                  %v249 = vld [vmem:[%s245 + $0xc] sm:$0xf]
                  %250 = vst [vmem:[%s246 + $0x4] sm:$0xf] %v249
                  %v251 = vld [vmem:[%s245 + $0x18] sm:$0xf]
                  %252 = vst [vmem:[%s246 + $0x8] sm:$0xf] %v251
                  %v253 = vld [vmem:[%s245 + $0x24] sm:$0xf]
                  %254 = vst [vmem:[%s246 + $0xc] sm:$0xf] %v253
                  %v255 = vld [vmem:[%s245 + $0x30] sm:$0xf]
                  %256 = vst [vmem:[%s246 + $0x10] sm:$0xf] %v255
                  %v257 = vld [vmem:[%s245 + $0x3c] sm:$0xf]
                  %258 = vst [vmem:[%s246 + $0x14] sm:$0xf] %v257
                  %v259 = vld [vmem:[%s245 + $0x48] sm:$0xf]
                  %260 = vst [vmem:[%s246 + $0x18] sm:$0xf] %v259
                  %v261 = vld [vmem:[%s245 + $0x54] sm:$0xf]
                  %262 = vst [vmem:[%s246 + $0x1c] sm:$0xf] %v261
                  %v263 = vld [vmem:[%s245 + $0x60] sm:$0xf]
                  %264 = vst [vmem:[%s246 + $0x20] sm:$0xf] %v263
                  %v265 = vld [vmem:[%s245 + $0x6c] sm:$0xf]
                  %266 = vst [vmem:[%s246 + $0x24] sm:$0xf] %v265
                  %v267 = vld [vmem:[%s245 + $0x78] sm:$0xf]
                  %268 = vst [vmem:[%s246 + $0x28] sm:$0xf] %v267
                  %v269 = vld [vmem:[%s245 + $0x84] sm:$0xf]
                  %270 = vst [vmem:[%s246 + $0x2c] sm:$0xf] %v269
                  %v271 = vld [vmem:[%s245 + $0x90] sm:$0xf]
                  %272 = vst [vmem:[%s246 + $0x30] sm:$0xf] %v271
                  %v273 = vld [vmem:[%s245 + $0x9c] sm:$0xf]
                  %274 = vst [vmem:[%s246 + $0x34] sm:$0xf] %v273
                  %v275 = vld [vmem:[%s245 + $0xa8] sm:$0xf]
                  %276 = vst [vmem:[%s246 + $0x38] sm:$0xf] %v275
                  %v277 = vld [vmem:[%s245 + $0xb4] sm:$0xf]
                  %278 = vst [vmem:[%s246 + $0x3c] sm:$0xf] %v277
                $region59: #{seq2seq_decoder_forward.7} parent=46 // loop_footer
                  %s244 = sadd.s32 1, %s240
                $region60: #{seq2seq_decoder_forward.7} parent=46 // loop_footer_branch
                  %239 = sbr.rel target = $region56
                $region61: #{seq2seq_decoder_forward.7} parent=46 // loop_exit
                  _
              $region47: #{seq2seq_decoder_forward.7} parent=31 // pred_fallthru
                _
            $region32: #{seq2seq_decoder_forward.7} parent=27 // pred_fallthru
              _
            // Predicated region
            $region33: #{seq2seq_decoder_forward.7} parent=27 // pred_check
              _
            $region34: #{seq2seq_decoder_forward.7} parent=27 // pred_check_branch
              %186 = sbr.rel (0) target = $region36
            $region35: #{seq2seq_decoder_forward.7} parent=27 // pred_region
              loop: start=0, step=1, limit=1
              $region37: #{seq2seq_decoder_forward.7} parent=35 // loop_pre_header
                _
              $region38: #{seq2seq_decoder_forward.7} parent=35 // loop_header
                %s189 = sphi 0, %s193
                %p190 = scmp.ge.s32.totalorder %s189, 1
                %s194 = sphi %s180, %s180
                %s195 = sphi %s175, %s175
              $region39: #{seq2seq_decoder_forward.7} parent=35 // loop_header_branch
                %192 = sbr.rel (%p190) target = $region43
              $region40: #{seq2seq_decoder_forward.7} parent=35 // loop_body
                %v196 = vld [vmem:[%s194] sm:$0xf]
                %197 = vst [vmem:[%s195] sm:$0xf] %v196
                %v198 = vld [vmem:[%s194 + $0xc] sm:$0xf]
                %199 = vst [vmem:[%s195 + $0x4] sm:$0xf] %v198
                %v200 = vld [vmem:[%s194 + $0x18] sm:$0xf]
                %201 = vst [vmem:[%s195 + $0x8] sm:$0xf] %v200
                %v202 = vld [vmem:[%s194 + $0x24] sm:$0xf]
                %203 = vst [vmem:[%s195 + $0xc] sm:$0xf] %v202
                %v204 = vld [vmem:[%s194 + $0x30] sm:$0xf]
                %205 = vst [vmem:[%s195 + $0x10] sm:$0xf] %v204
                %v206 = vld [vmem:[%s194 + $0x3c] sm:$0xf]
                %207 = vst [vmem:[%s195 + $0x14] sm:$0xf] %v206
                %v208 = vld [vmem:[%s194 + $0x48] sm:$0xf]
                %209 = vst [vmem:[%s195 + $0x18] sm:$0xf] %v208
                %v210 = vld [vmem:[%s194 + $0x54] sm:$0xf]
                %211 = vst [vmem:[%s195 + $0x1c] sm:$0xf] %v210
                %v212 = vld [vmem:[%s194 + $0x60] sm:$0xf]
                %213 = vst [vmem:[%s195 + $0x20] sm:$0xf] %v212
                %v214 = vld [vmem:[%s194 + $0x6c] sm:$0xf]
                %215 = vst [vmem:[%s195 + $0x24] sm:$0xf] %v214
                %v216 = vld [vmem:[%s194 + $0x78] sm:$0xf]
                %217 = vst [vmem:[%s195 + $0x28] sm:$0xf] %v216
                %v218 = vld [vmem:[%s194 + $0x84] sm:$0xf]
                %219 = vst [vmem:[%s195 + $0x2c] sm:$0xf] %v218
                %v220 = vld [vmem:[%s194 + $0x90] sm:$0xf]
                %221 = vst [vmem:[%s195 + $0x30] sm:$0xf] %v220
                %v222 = vld [vmem:[%s194 + $0x9c] sm:$0xf]
                %223 = vst [vmem:[%s195 + $0x34] sm:$0xf] %v222
                %v224 = vld [vmem:[%s194 + $0xa8] sm:$0xf]
                %225 = vst [vmem:[%s195 + $0x38] sm:$0xf] %v224
                %v226 = vld [vmem:[%s194 + $0xb4] sm:$0xf]
                %227 = vst [vmem:[%s195 + $0x3c] sm:$0xf] %v226
              $region41: #{seq2seq_decoder_forward.7} parent=35 // loop_footer
                %s193 = sadd.s32 1, %s189
              $region42: #{seq2seq_decoder_forward.7} parent=35 // loop_footer_branch
                %188 = sbr.rel target = $region38
              $region43: #{seq2seq_decoder_forward.7} parent=35 // loop_exit
                _
            $region36: #{seq2seq_decoder_forward.7} parent=27 // pred_fallthru
              _
          $region28: #{seq2seq_decoder_forward.7} parent=23 // pred_fallthru
            _
          %279 = vnop
        $region24: #{seq2seq_decoder_forward.7} parent=19 // pred_fallthru
          _
        // Predicated region
        $region62: #{seq2seq_decoder_forward.7} parent=19 // pred_check
          %p280 = pneg %p104
        $region63: #{seq2seq_decoder_forward.7} parent=19 // pred_check_branch
          %282 = sbr.rel (%p280) target = $region65
        $region64: #{seq2seq_decoder_forward.7} parent=19 // pred_region
          %p283 = scmp.lt.s32.totalorder %s17, 2
          %s284 = scalar_select %p283, %s17, 2
          %s285 = scalar_lea.vmem %s2, %s284
        $region65: #{seq2seq_decoder_forward.7} parent=19 // pred_fallthru
          _
      $region20: #{seq2seq_decoder_forward.7} parent=5 // pred_fallthru
        _
      %p286 = scmp.le.s32.totalorder 1, %s9
      %p287 = scmp.lt.s32.totalorder %s9, 4
      %p288 = pnand %p286, %p287
      %p289 = pneg %p288
      // Predicated region
      $region66: #{seq2seq_decoder_forward.7} parent=5 // pred_check
        _
      $region67: #{seq2seq_decoder_forward.7} parent=5 // pred_check_branch
        %291 = sbr.rel (%p288) target = $region69
      $region68: #{seq2seq_decoder_forward.7} parent=5 // pred_region
        %s292 = ssub.s32 %s9, 1
        %s293 = sand.u32 %s71, 1
        %s294 = sand.u32 %s71, 1
        %s295 = smul.addr %s294, 64
        %s296 = scalar_lea.vmem [#allocation3], %s295
        // Predicated region
        $region70: #{seq2seq_decoder_forward.7} parent=68 // pred_check
          %p297 = pneg %p84
        $region71: #{seq2seq_decoder_forward.7} parent=68 // pred_check_branch
          %299 = sbr.rel (%p297) target = $region73
        $region72: #{seq2seq_decoder_forward.7} parent=68 // pred_region
          _
        $region73: #{seq2seq_decoder_forward.7} parent=68 // pred_fallthru
          _
        %s300 = smul.u32 8, %s19
        %p301 = scmp.lt.s32.totalorder %s300, 7
        %s302 = scalar_select %p301, %s300, 7
        %p303 = scmp.lt.s32.totalorder %s21, 0
        %s304 = scalar_select %p303, %s21, 0
        %s305 = sadd.s32 %s304, %s302
        %s306 = smul.addr %s305, 4
        %s307 = scalar_lea.vmem %s0, %s306
        %p308 = pneg %p56
        %p309 = pneg %p53
        %s310 = sand.u32 %s71, 1
        %s311 = sand.u32 %s71, 1
        %s312 = smul.addr %s311, 64
        %s313 = scalar_lea.vmem [#allocation3], %s312
        %p314 = pneg %p84
        %p315 = pneg %p81
        %p316 = scmp.lt.s32.totalorder %s20, 2
        %s317 = scalar_select %p316, %s20, 2
        %s318 = scalar_lea.vmem %s2, %s317
        %p319 = pneg %p110
        %p320 = pneg %p107
        %p321 = pneg %p138
        %p322 = pneg %p135
        %s323 = sand.u32 %s125, 1
        %s324 = sand.u32 %s125, 1
        %s325 = smul.addr %s324, 64
        %s326 = scalar_lea.vmem [#allocation4], %s325
        %s327 = smul.u32 8, %s19
        %p328 = scmp.lt.s32.totalorder %s327, 7
        %s329 = scalar_select %p328, %s327, 7
        %p330 = scmp.lt.s32.totalorder %s21, 0
        %s331 = scalar_select %p330, %s21, 0
        %s332 = sadd.s32 %s331, %s329
        %s333 = smul.addr %s332, 4
        %s334 = scalar_lea.vmem %s0, %s333
        %s335 = smul.u32 8, %s19
        %s336 = smul.u32 16, %s21
        %p337 = scmp.lt.s32.totalorder %s20, 2
        %s338 = scalar_select %p337, %s20, 2
        %s339 = scalar_lea.vmem %s2, %s338
        %s340 = smul.u32 8, %s19
        %p342 = scmp.eq.s32.totalorder %s21, 0
        // Predicated region
        $region74: #{seq2seq_decoder_forward.7} parent=68 // pred_check
          %p343 = pneg %p342
        $region75: #{seq2seq_decoder_forward.7} parent=68 // pred_check_branch
          %345 = sbr.rel (%p343) target = $region77
        $region76: #{seq2seq_decoder_forward.7} parent=68 // pred_region
          %346 = vst [vmem:[#allocation2] sm:$0xff] 0.0
          %347 = vst [vmem:[#allocation2 + $0x8] sm:$0xff] 0.0
          %348 = vst [vmem:[#allocation2 + $0x10] sm:$0xff] 0.0
          %349 = vst [vmem:[#allocation2 + $0x18] sm:$0xff] 0.0
          %350 = vst [vmem:[#allocation2 + $0x20] sm:$0xff] 0.0
          %351 = vst [vmem:[#allocation2 + $0x28] sm:$0xff] 0.0
          %352 = vst [vmem:[#allocation2 + $0x30] sm:$0xff] 0.0
          %353 = vst [vmem:[#allocation2 + $0x38] sm:$0xff] 0.0
        $region77: #{seq2seq_decoder_forward.7} parent=68 // pred_fallthru
          _
        %v354 = vld [vmem:[#allocation2] sm:$0xff]
        %v355 = vld [vmem:[#allocation2 + $0x8] sm:$0xff]
        %v356 = vld [vmem:[#allocation2 + $0x10] sm:$0xff]
        %v357 = vld [vmem:[#allocation2 + $0x18] sm:$0xff]
        %v358 = vld [vmem:[#allocation2 + $0x20] sm:$0xff]
        %v359 = vld [vmem:[#allocation2 + $0x28] sm:$0xff]
        %v360 = vld [vmem:[#allocation2 + $0x30] sm:$0xff]
        %v361 = vld [vmem:[#allocation2 + $0x38] sm:$0xff]
        %v362 = vld [vmem:[%s334] sm:$0xf]
        %v363 = vld [vmem:[%s334 + $0x4] sm:$0xf]
        %v364 = vld [vmem:[%s334 + $0x8] sm:$0xf]
        %v365 = vld [vmem:[%s334 + $0xc] sm:$0xf]
        %v366 = vld [vmem:[%s334 + $0x10] sm:$0xf]
        %v367 = vld [vmem:[%s334 + $0x14] sm:$0xf]
        %v368 = vld [vmem:[%s334 + $0x18] sm:$0xf]
        %v369 = vld [vmem:[%s334 + $0x1c] sm:$0xf]
        %v370 = vld [vmem:[%s296] sm:$0xf]
        %v371 = vld [vmem:[%s296 + $0x4] sm:$0xf]
        %v372 = vld [vmem:[%s296 + $0x8] sm:$0xf]
        %v373 = vld [vmem:[%s296 + $0xc] sm:$0xf]
        %v374 = vld [vmem:[%s296 + $0x10] sm:$0xf]
        %v375 = vld [vmem:[%s296 + $0x14] sm:$0xf]
        %v376 = vld [vmem:[%s296 + $0x18] sm:$0xf]
        %v377 = vld [vmem:[%s296 + $0x1c] sm:$0xf]
        %v378 = vld [vmem:[%s296 + $0x20] sm:$0xf]
        %v379 = vld [vmem:[%s296 + $0x24] sm:$0xf]
        %v380 = vld [vmem:[%s296 + $0x28] sm:$0xf]
        %v381 = vld [vmem:[%s296 + $0x2c] sm:$0xf]
        %v382 = vld [vmem:[%s296 + $0x30] sm:$0xf]
        %v383 = vld [vmem:[%s296 + $0x34] sm:$0xf]
        %v384 = vld [vmem:[%s296 + $0x38] sm:$0xf]
        %v385 = vld [vmem:[%s296 + $0x3c] sm:$0xf]
        %v394 = vunpack.c.l.b16 %v362
        %v395 = vunpack.c.l.b16 %v363
        %v396 = vunpack.c.l.b16 %v364
        %v397 = vunpack.c.l.b16 %v365
        %v398 = vunpack.c.l.b16 %v366
        %v399 = vunpack.c.l.b16 %v367
        %v400 = vunpack.c.l.b16 %v368
        %v401 = vunpack.c.l.b16 %v369
        %v402 = vpack.c.b16 %v395, %v394
        %v403 = vpack.c.b16 %v397, %v396
        %v404 = vpack.c.b16 %v399, %v398
        %v405 = vpack.c.b16 %v401, %v400
        %v426 = vunpack.c.l.b16 %v370
        %v427 = vunpack.c.l.b16 %v371
        %v428 = vunpack.c.l.b16 %v372
        %v429 = vunpack.c.l.b16 %v373
        %v430 = vunpack.c.l.b16 %v374
        %v431 = vunpack.c.l.b16 %v375
        %v432 = vunpack.c.l.b16 %v376
        %v433 = vunpack.c.l.b16 %v377
        %v434 = vunpack.c.l.b16 %v378
        %v435 = vunpack.c.l.b16 %v379
        %v436 = vunpack.c.l.b16 %v380
        %v437 = vunpack.c.l.b16 %v381
        %v438 = vunpack.c.l.b16 %v382
        %v439 = vunpack.c.l.b16 %v383
        %v440 = vunpack.c.l.b16 %v384
        %v441 = vunpack.c.l.b16 %v385
        %v442 = vpack.c.b16 %v427, %v426
        %v443 = vpack.c.b16 %v429, %v428
        %v444 = vpack.c.b16 %v431, %v430
        %v445 = vpack.c.b16 %v433, %v432
        %v446 = vpack.c.b16 %v435, %v434
        %v447 = vpack.c.b16 %v437, %v436
        %v448 = vpack.c.b16 %v439, %v438
        %v449 = vpack.c.b16 %v441, %v440
        %458 = vmatprep.subr.bf16.mxu0 0
        %459 = vmatpush1.bf16.msra.mxu0 %v442
        %460 = vmatprep.subr.bf16.mxu0 0
        %461 = vmatpush1.bf16.msra.mxu0 %v443
        %462 = vmatprep.subr.bf16.mxu0 0
        %463 = vmatpush1.bf16.msra.mxu0 %v444
        %464 = vmatprep.subr.bf16.mxu0 0
        %465 = vmatpush1.bf16.msra.mxu0 %v445
        %466 = vmatprep.subr.bf16.mxu0 0
        %467 = vmatpush1.bf16.msra.mxu0 %v446
        %468 = vmatprep.subr.bf16.mxu0 0
        %469 = vmatpush1.bf16.msra.mxu0 %v447
        %470 = vmatprep.subr.bf16.mxu0 0
        %471 = vmatpush1.bf16.msra.mxu0 %v448
        %472 = vmatprep.subr.bf16.mxu0 0
        %473 = vmatpush1.bf16.msra.mxu0 %v449
        %474 = vmatprep.subr.bf16.mxu0 0
        %475 = vmatpush1.bf16.msra.mxu0 0
        %476 = vmatprep.subr.bf16.mxu0 0
        %477 = vmatpush1.bf16.msra.mxu0 0
        %478 = vmatprep.subr.bf16.mxu0 0
        %479 = vmatpush1.bf16.msra.mxu0 0
        %480 = vmatprep.subr.bf16.mxu0 0
        %481 = vmatpush1.bf16.msra.mxu0 0
        %482 = vmatprep.subr.bf16.mxu0 0
        %483 = vmatpush1.bf16.msra.mxu0 0
        %484 = vmatprep.subr.bf16.mxu0 0
        %485 = vmatpush1.bf16.msra.mxu0 0
        %486 = vmatprep.subr.bf16.mxu0 0
        %487 = vmatpush1.bf16.msra.mxu0 0
        %488 = vmatprep.subr.bf16.mxu0 0
        %489 = vmatpush1.bf16.msra.mxu0 0
        %490 = vmatprep.mubr.bf16.mxu0 0
        %491 = vmatmul.mubr.bf16.gmra.mrb[0].mxu0 %v402
        %v492 = vpop.f32.mrb[0].mxu0
        %v493 = vadd.f32 0.0, %v492
        %v494 = vpop.f32.mrb[0].mxu0
        %v495 = vpop.f32.mrb[0].mxu0
        %v496 = vadd.f32 0.0, %v495
        %v497 = vpop.f32.mrb[0].mxu0
        %498 = vmatprep.mubr.bf16.mxu0 0
        %499 = vmatmul.mubr.bf16.gmra.mrb[0].mxu0 %v403
        %v500 = vpop.f32.mrb[0].mxu0
        %v501 = vadd.f32 0.0, %v500
        %v502 = vpop.f32.mrb[0].mxu0
        %v503 = vpop.f32.mrb[0].mxu0
        %v504 = vadd.f32 0.0, %v503
        %v505 = vpop.f32.mrb[0].mxu0
        %506 = vmatprep.mubr.bf16.mxu0 0
        %507 = vmatmul.mubr.bf16.gmra.mrb[0].mxu0 %v404
        %v508 = vpop.f32.mrb[0].mxu0
        %v509 = vadd.f32 0.0, %v508
        %v510 = vpop.f32.mrb[0].mxu0
        %v511 = vpop.f32.mrb[0].mxu0
        %v512 = vadd.f32 0.0, %v511
        %v513 = vpop.f32.mrb[0].mxu0
        %514 = vmatprep.mubr.bf16.mxu0 0
        %515 = vmatmul.mubr.bf16.gmra.mrb[0].mxu0 %v405
        %v516 = vpop.f32.mrb[0].mxu0
        %v517 = vadd.f32 0.0, %v516
        %v518 = vpop.f32.mrb[0].mxu0
        %v519 = vpop.f32.mrb[0].mxu0
        %v520 = vadd.f32 0.0, %v519
        %v521 = vpop.f32.mrb[0].mxu0
        %522 = vdwg.mxu0
        %v523 = vadd.f32 %v354, %v493
        %v524 = vadd.f32 %v355, %v496
        %v525 = vadd.f32 %v356, %v501
        %v526 = vadd.f32 %v357, %v504
        %v527 = vadd.f32 %v358, %v509
        %v528 = vadd.f32 %v359, %v512
        %v529 = vadd.f32 %v360, %v517
        %v530 = vadd.f32 %v361, %v520
        %531 = vst [vmem:[#allocation2] sm:$0xff] %v523
        %532 = vst [vmem:[#allocation2 + $0x8] sm:$0xff] %v524
        %533 = vst [vmem:[#allocation2 + $0x10] sm:$0xff] %v525
        %534 = vst [vmem:[#allocation2 + $0x18] sm:$0xff] %v526
        %535 = vst [vmem:[#allocation2 + $0x20] sm:$0xff] %v527
        %536 = vst [vmem:[#allocation2 + $0x28] sm:$0xff] %v528
        %537 = vst [vmem:[#allocation2 + $0x30] sm:$0xff] %v529
        %538 = vst [vmem:[#allocation2 + $0x38] sm:$0xff] %v530
        // Predicated region
        $region78: #{seq2seq_decoder_forward.7} parent=68 // pred_check
          %p539 = pneg %p342
        $region79: #{seq2seq_decoder_forward.7} parent=68 // pred_check_branch
          %541 = sbr.rel (%p539) target = $region81
        $region80: #{seq2seq_decoder_forward.7} parent=68 // pred_region
          %v542 = vld [vmem:[#allocation2] sm:$0xff]
          %v543 = vld [vmem:[#allocation2 + $0x8] sm:$0xff]
          %v544 = vld [vmem:[#allocation2 + $0x10] sm:$0xff]
          %v545 = vld [vmem:[#allocation2 + $0x18] sm:$0xff]
          %v546 = vld [vmem:[#allocation2 + $0x20] sm:$0xff]
          %v547 = vld [vmem:[#allocation2 + $0x28] sm:$0xff]
          %v548 = vld [vmem:[#allocation2 + $0x30] sm:$0xff]
          %v549 = vld [vmem:[#allocation2 + $0x38] sm:$0xff]
          %v550 = vld [vmem:[%s339] sm:$0x1]
          %v552 = vlaneseq
          %v553 = vshrl.u32 %v552, 7
          %v554 = vsub.s32 0, %v553
          %v555 = vrot.slane %v550, %v554
          %v557 = vadd.f32 %v542, %v555
          %v558 = vadd.f32 %v543, %v555
          %v559 = vadd.f32 %v544, %v555
          %v560 = vadd.f32 %v545, %v555
          %v561 = vadd.f32 %v546, %v555
          %v562 = vadd.f32 %v547, %v555
          %v563 = vadd.f32 %v548, %v555
          %v564 = vadd.f32 %v549, %v555
          %565 = vst [vmem:[%s326] sm:$0xff] %v557
          %566 = vst [vmem:[%s326 + $0x8] sm:$0xff] %v558
          %567 = vst [vmem:[%s326 + $0x10] sm:$0xff] %v559
          %568 = vst [vmem:[%s326 + $0x18] sm:$0xff] %v560
          %569 = vst [vmem:[%s326 + $0x20] sm:$0xff] %v561
          %570 = vst [vmem:[%s326 + $0x28] sm:$0xff] %v562
          %571 = vst [vmem:[%s326 + $0x30] sm:$0xff] %v563
          %572 = vst [vmem:[%s326 + $0x38] sm:$0xff] %v564
        $region81: #{seq2seq_decoder_forward.7} parent=68 // pred_fallthru
          _
        %s573 = sand.u32 %s125, 1
        %s574 = sand.u32 %s125, 1
        %s575 = smul.addr %s574, 64
        %s576 = scalar_lea.vmem [#allocation4], %s575
        // Predicated region
        $region82: #{seq2seq_decoder_forward.7} parent=68 // pred_check
          %p577 = pneg %p135
        $region83: #{seq2seq_decoder_forward.7} parent=68 // pred_check_branch
          %579 = sbr.rel (%p577) target = $region85
        $region84: #{seq2seq_decoder_forward.7} parent=68 // pred_region
          %s580 = smul.u32 8, %s19
          %s581 = smul.addr %s580, 3
          %s582 = sadd.s32 %s20, %s581
          %s583 = smul.addr %s582, 8
          %s584 = scalar_lea.vmem %s3, %s583
          // Predicated region
          $region86: #{seq2seq_decoder_forward.7} parent=84 // pred_check
            _
          $region87: #{seq2seq_decoder_forward.7} parent=84 // pred_check_branch
            %586 = sbr.rel (0) target = $region89
          $region88: #{seq2seq_decoder_forward.7} parent=84 // pred_region
            // Predicated region
            $region90: #{seq2seq_decoder_forward.7} parent=88 // pred_check
              _
            $region91: #{seq2seq_decoder_forward.7} parent=88 // pred_check_branch
              %588 = sbr.rel (0) target = $region93
            $region92: #{seq2seq_decoder_forward.7} parent=88 // pred_region
              // Predicated region
              $region105: #{seq2seq_decoder_forward.7} parent=92 // pred_check
                _
              $region106: #{seq2seq_decoder_forward.7} parent=92 // pred_check_branch
                %617 = sbr.rel (0) target = $region108
              $region107: #{seq2seq_decoder_forward.7} parent=92 // pred_region
                loop: start=0, step=1, limit=1
                $region109: #{seq2seq_decoder_forward.7} parent=107 // loop_pre_header
                  _
                $region110: #{seq2seq_decoder_forward.7} parent=107 // loop_header
                  %s619 = sphi 0, %s623
                  %p620 = scmp.ge.s32.totalorder %s619, 1
                  %s624 = sphi %s576, %s576
                  %s625 = sphi %s584, %s584
                $region111: #{seq2seq_decoder_forward.7} parent=107 // loop_header_branch
                  %622 = sbr.rel (%p620) target = $region115
                $region112: #{seq2seq_decoder_forward.7} parent=107 // loop_body
                  %v626 = vld [vmem:[%s624] sm:$0xff]
                  %627 = vst [vmem:[%s625] sm:$0xff] %v626
                  %v628 = vld [vmem:[%s624 + $0x8] sm:$0xff]
                  %629 = vst [vmem:[%s625 + $0x18] sm:$0xff] %v628
                  %v630 = vld [vmem:[%s624 + $0x10] sm:$0xff]
                  %631 = vst [vmem:[%s625 + $0x30] sm:$0xff] %v630
                  %v632 = vld [vmem:[%s624 + $0x18] sm:$0xff]
                  %633 = vst [vmem:[%s625 + $0x48] sm:$0xff] %v632
                  %v634 = vld [vmem:[%s624 + $0x20] sm:$0xff]
                  %635 = vst [vmem:[%s625 + $0x60] sm:$0xff] %v634
                  %v636 = vld [vmem:[%s624 + $0x28] sm:$0xff]
                  %637 = vst [vmem:[%s625 + $0x78] sm:$0xff] %v636
                  %v638 = vld [vmem:[%s624 + $0x30] sm:$0xff]
                  %639 = vst [vmem:[%s625 + $0x90] sm:$0xff] %v638
                  %v640 = vld [vmem:[%s624 + $0x38] sm:$0xff]
                  %641 = vst [vmem:[%s625 + $0xa8] sm:$0xff] %v640
                $region113: #{seq2seq_decoder_forward.7} parent=107 // loop_footer
                  %s623 = sadd.s32 1, %s619
                $region114: #{seq2seq_decoder_forward.7} parent=107 // loop_footer_branch
                  %618 = sbr.rel target = $region110
                $region115: #{seq2seq_decoder_forward.7} parent=107 // loop_exit
                  _
              $region108: #{seq2seq_decoder_forward.7} parent=92 // pred_fallthru
                _
              // Predicated region
              $region116: #{seq2seq_decoder_forward.7} parent=92 // pred_check
                _
              $region117: #{seq2seq_decoder_forward.7} parent=92 // pred_check_branch
                %643 = sbr.rel target = $region119
              $region118: #{seq2seq_decoder_forward.7} parent=92 // pred_region
                _
              $region119: #{seq2seq_decoder_forward.7} parent=92 // pred_fallthru
                _
            $region93: #{seq2seq_decoder_forward.7} parent=88 // pred_fallthru
              _
            // Predicated region
            $region94: #{seq2seq_decoder_forward.7} parent=88 // pred_check
              _
            $region95: #{seq2seq_decoder_forward.7} parent=88 // pred_check_branch
              %590 = sbr.rel target = $region97
            $region96: #{seq2seq_decoder_forward.7} parent=88 // pred_region
              loop: start=0, step=1, limit=1
              $region98: #{seq2seq_decoder_forward.7} parent=96 // loop_pre_header
                _
              $region99: #{seq2seq_decoder_forward.7} parent=96 // loop_header
                %s593 = sphi 0, %s597
                %p594 = scmp.ge.s32.totalorder %s593, 1
                %s598 = sphi %s576, %s576
                %s599 = sphi %s584, %s584
              $region100: #{seq2seq_decoder_forward.7} parent=96 // loop_header_branch
                %596 = sbr.rel (%p594) target = $region104
              $region101: #{seq2seq_decoder_forward.7} parent=96 // loop_body
                %v600 = vld [vmem:[%s598] sm:$0xff]
                %601 = vst [vmem:[%s599] sm:$0xff] %v600
                %v602 = vld [vmem:[%s598 + $0x8] sm:$0xff]
                %603 = vst [vmem:[%s599 + $0x18] sm:$0xff] %v602
                %v604 = vld [vmem:[%s598 + $0x10] sm:$0xff]
                %605 = vst [vmem:[%s599 + $0x30] sm:$0xff] %v604
                %v606 = vld [vmem:[%s598 + $0x18] sm:$0xff]
                %607 = vst [vmem:[%s599 + $0x48] sm:$0xff] %v606
                %v608 = vld [vmem:[%s598 + $0x20] sm:$0xff]
                %609 = vst [vmem:[%s599 + $0x60] sm:$0xff] %v608
                %v610 = vld [vmem:[%s598 + $0x28] sm:$0xff]
                %611 = vst [vmem:[%s599 + $0x78] sm:$0xff] %v610
                %v612 = vld [vmem:[%s598 + $0x30] sm:$0xff]
                %613 = vst [vmem:[%s599 + $0x90] sm:$0xff] %v612
                %v614 = vld [vmem:[%s598 + $0x38] sm:$0xff]
                %615 = vst [vmem:[%s599 + $0xa8] sm:$0xff] %v614
              $region102: #{seq2seq_decoder_forward.7} parent=96 // loop_footer
                %s597 = sadd.s32 1, %s593
              $region103: #{seq2seq_decoder_forward.7} parent=96 // loop_footer_branch
                %592 = sbr.rel target = $region99
              $region104: #{seq2seq_decoder_forward.7} parent=96 // loop_exit
                _
            $region97: #{seq2seq_decoder_forward.7} parent=88 // pred_fallthru
              _
          $region89: #{seq2seq_decoder_forward.7} parent=84 // pred_fallthru
            _
          %644 = vnop
        $region85: #{seq2seq_decoder_forward.7} parent=68 // pred_fallthru
          _
      $region69: #{seq2seq_decoder_forward.7} parent=5 // pred_fallthru
        _
      %p645 = scmp.le.s32.totalorder 2, %s9
      // Predicated region
      $region120: #{seq2seq_decoder_forward.7} parent=5 // pred_check
        %p646 = pneg %p645
      $region121: #{seq2seq_decoder_forward.7} parent=5 // pred_check_branch
        %648 = sbr.rel (%p646) target = $region123
      $region122: #{seq2seq_decoder_forward.7} parent=5 // pred_region
        %s649 = ssub.s32 %s9, 2
        // Predicated region
        $region124: #{seq2seq_decoder_forward.7} parent=122 // pred_check
          %p650 = pneg %p141
        $region125: #{seq2seq_decoder_forward.7} parent=122 // pred_check_branch
          %652 = sbr.rel (%p650) target = $region127
        $region126: #{seq2seq_decoder_forward.7} parent=122 // pred_region
          %s653 = sand.u32 %s126, 1
          %s654 = sand.u32 %s126, 1
          %s655 = smul.addr %s654, 64
          %s656 = scalar_lea.vmem [#allocation4], %s655
        $region127: #{seq2seq_decoder_forward.7} parent=122 // pred_fallthru
          _
      $region123: #{seq2seq_decoder_forward.7} parent=5 // pred_fallthru
        _
    $region6: #{seq2seq_decoder_forward.7} parent=1 // loop_footer
      %s13 = sadd.s32 1, %s9
    $region7: #{seq2seq_decoder_forward.7} parent=1 // loop_footer_branch
      %8 = sbr.rel target = $region3
    $region8: #{seq2seq_decoder_forward.7} parent=1 // loop_exit
      _

// kernel: seq2seq_decoder_forward.5
$region0: #{seq2seq_decoder_forward.5}
  #allocation0 [shape = 'u32[]', space=smem, size = 0x4, offset = 0x4, fixed_abs, tag = 'smem constant byte address 0x4 - core index']
  #allocation1 [shape = 'u32[144,128]{1,0:T(1,128)}', space=vmem, size = 0x12000, scoped, tag = 'internal scratch']
  #allocation2 [shape = 'f32[64,128]{1,0:T(8,128)}', space=vmem, size = 0x8000, scoped, tag = 'scratch operand']
  %s0 = inlined_call_operand.vmem [shape: bf16[64,32], index: 0, kind: input, shape index: {}]
  %s1 = inlined_call_operand.vmem [shape: bf16[32,384], index: 1, kind: input, shape index: {}]
  %s2 = inlined_call_operand.vmem [shape: f32[1,384], index: 2, kind: input, shape index: {}]
  %s3 = inlined_call_operand.vmem [shape: f32[64,384], index: 3, kind: output, shape index: {}]
  %s4 = sld [smem:[#allocation0]]
  $region128: #{seq2seq_decoder_forward.5} parent=0
    _
  %s6 = ssub.s32 1, %s4
  %s7 = scalar_select 0, %s6, %s4
  $region1: #{seq2seq_decoder_forward.5} parent=0
    #allocation3 [shape = 'u8[16384]{0}', space=vmem, size = 0x4000, scoped, tag = 'input window, operand 1']
    #allocation4 [shape = 'u8[65536]{0}', space=vmem, size = 0x10000, scoped, tag = 'output window, operand 0']
    loop: start=0, step=1, limit=5
    $region2: #{seq2seq_decoder_forward.5} parent=1 // loop_pre_header
      _
    $region3: #{seq2seq_decoder_forward.5} parent=1 // loop_header
      %s9 = sphi 0, %s13
      %p10 = scmp.ge.s32.totalorder %s9, 5
      %s16 = sphi 0, %s35
      %s17 = sphi 0, %s31
      %s18 = sphi 0, %s27
      %s19 = sphi 0, %s16
      %s20 = sphi 0, %s17
      %s21 = sphi 0, %s18
      %s22 = sphi 0, %s19
      %s23 = sphi 0, %s20
      %s24 = sphi 0, %s21
      %s40 = sphi 0, %s42
      %s43 = sphi 0, %s40
      %s44 = sphi 0, %s43
      %s60 = sphi 0, %s44
      %s68 = sphi 0, %s70
      %s71 = sphi 0, %s68
      %s72 = sphi 0, %s71
      %s88 = sphi 0, %s72
      %s94 = sphi 0, %s96
      %s97 = sphi 0, %s94
      %s98 = sphi 0, %s97
      %s114 = sphi 0, %s98
      %s122 = sphi 0, %s124
      %s125 = sphi 0, %s122
      %s126 = sphi 0, %s125
      %s142 = sphi 0, %s126
    $region4: #{seq2seq_decoder_forward.5} parent=1 // loop_header_branch
      %12 = sbr.rel (%p10) target = $region8
    $region5: #{seq2seq_decoder_forward.5} parent=1 // loop_body
      %s14 = ssub.s32 %s9, 1
      %s15 = ssub.s32 %s9, 2
      %s25 = sadd.s32 1, %s18
      %p26 = scmp.ge.s32.totalorder %s25, 1
      %s27 = scalar_select %p26, 0, %s25
      %s28 = sadd.s32 1, %s17
      %s29 = scalar_select %p26, %s28, %s17
      %p30 = scmp.ge.s32.totalorder %s29, 3
      %s31 = scalar_select %p30, 0, %s29
      %s32 = sadd.s32 1, %s16
      %s33 = scalar_select %p30, %s32, %s16
      %p34 = scmp.ge.s32.totalorder %s33, 1
      %s35 = scalar_select %p34, 0, %s33
      %s36 = ssub.s32 %s16, %s35
      %s37 = ssub.s32 %s18, %s27
      %s38 = sor.u32 %s36, %s37
      %p39 = scmp.eq.s32.totalorder %s38, 0
      %s41 = sadd.s32 %s40, 1
      %s42 = scalar_select %p39, %s40, %s41
      %p45 = pneg %p39
      %p46 = scmp.eq.s32.totalorder %s9, 2
      %p47 = por %p45, %p46
      %p48 = scmp.ne.s32.totalorder %s40, %s43
      %p49 = scmp.eq.s32.totalorder %s9, 0
      %p50 = por %p48, %p49
      %p51 = scmp.ne.s32.totalorder %s40, %s43
      %p52 = scmp.eq.s32.totalorder %s14, 2
      %p53 = por %p51, %p52
      %p54 = scmp.ne.s32.totalorder %s43, %s44
      %p55 = scmp.eq.s32.totalorder %s14, 0
      %p56 = por %p54, %p55
      %p57 = scmp.ne.s32.totalorder %s43, %s44
      %p58 = scmp.eq.s32.totalorder %s15, 2
      %p59 = por %p57, %p58
      %p61 = scmp.ne.s32.totalorder %s44, %s60
      %p62 = scmp.eq.s32.totalorder %s15, 0
      %p63 = por %p61, %p62
      %s64 = ssub.s32 %s18, %s27
      %s65 = ssub.s32 %s17, %s31
      %s66 = sor.u32 %s64, %s65
      %p67 = scmp.eq.s32.totalorder %s66, 0
      %s69 = sadd.s32 %s68, 1
      %s70 = scalar_select %p67, %s68, %s69
      %p73 = pneg %p67
      %p74 = scmp.eq.s32.totalorder %s9, 2
      %p75 = por %p73, %p74
      %p76 = scmp.ne.s32.totalorder %s68, %s71
      %p77 = scmp.eq.s32.totalorder %s9, 0
      %p78 = por %p76, %p77
      %p79 = scmp.ne.s32.totalorder %s68, %s71
      %p80 = scmp.eq.s32.totalorder %s14, 2
      %p81 = por %p79, %p80
      %p82 = scmp.ne.s32.totalorder %s71, %s72
      %p83 = scmp.eq.s32.totalorder %s14, 0
      %p84 = por %p82, %p83
      %p85 = scmp.ne.s32.totalorder %s71, %s72
      %p86 = scmp.eq.s32.totalorder %s15, 2
      %p87 = por %p85, %p86
      %p89 = scmp.ne.s32.totalorder %s72, %s88
      %p90 = scmp.eq.s32.totalorder %s15, 0
      %p91 = por %p89, %p90
      %s92 = ssub.s32 %s17, %s31
      %p93 = scmp.eq.s32.totalorder %s92, 0
      %s95 = sadd.s32 %s94, 1
      %s96 = scalar_select %p93, %s94, %s95
      %p99 = pneg %p93
      %p100 = scmp.eq.s32.totalorder %s9, 2
      %p101 = por %p99, %p100
      %p102 = scmp.ne.s32.totalorder %s94, %s97
      %p103 = scmp.eq.s32.totalorder %s9, 0
      %p104 = por %p102, %p103
      %p105 = scmp.ne.s32.totalorder %s94, %s97
      %p106 = scmp.eq.s32.totalorder %s14, 2
      %p107 = por %p105, %p106
      %p108 = scmp.ne.s32.totalorder %s97, %s98
      %p109 = scmp.eq.s32.totalorder %s14, 0
      %p110 = por %p108, %p109
      %p111 = scmp.ne.s32.totalorder %s97, %s98
      %p112 = scmp.eq.s32.totalorder %s15, 2
      %p113 = por %p111, %p112
      %p115 = scmp.ne.s32.totalorder %s98, %s114
      %p116 = scmp.eq.s32.totalorder %s15, 0
      %p117 = por %p115, %p116
      %s118 = ssub.s32 %s16, %s35
      %s119 = ssub.s32 %s17, %s31
      %s120 = sor.u32 %s118, %s119
      %p121 = scmp.eq.s32.totalorder %s120, 0
      %s123 = sadd.s32 %s122, 1
      %s124 = scalar_select %p121, %s122, %s123
      %p127 = pneg %p121
      %p128 = scmp.eq.s32.totalorder %s9, 2
      %p129 = por %p127, %p128
      %p130 = scmp.ne.s32.totalorder %s122, %s125
      %p131 = scmp.eq.s32.totalorder %s9, 0
      %p132 = por %p130, %p131
      %p133 = scmp.ne.s32.totalorder %s122, %s125
      %p134 = scmp.eq.s32.totalorder %s14, 2
      %p135 = por %p133, %p134
      %p136 = scmp.ne.s32.totalorder %s125, %s126
      %p137 = scmp.eq.s32.totalorder %s14, 0
      %p138 = por %p136, %p137
      %p139 = scmp.ne.s32.totalorder %s125, %s126
      %p140 = scmp.eq.s32.totalorder %s15, 2
      %p141 = por %p139, %p140
      %p143 = scmp.ne.s32.totalorder %s126, %s142
      %p144 = scmp.eq.s32.totalorder %s15, 0
      %p145 = por %p143, %p144
      %p146 = scmp.le.s32.totalorder 1, %s9
      %p147 = scmp.lt.s32.totalorder %s9, 4
      %p148 = pnand %p146, %p147
      %p149 = pneg %p148
      // Predicated region
      $region9: #{seq2seq_decoder_forward.5} parent=5 // pred_check
        _
      $region10: #{seq2seq_decoder_forward.5} parent=5 // pred_check_branch
        %151 = sbr.rel (%p148) target = $region12
      $region11: #{seq2seq_decoder_forward.5} parent=5 // pred_region
        %s152 = ssub.s32 %s9, 1
        // Predicated region
        $region13: #{seq2seq_decoder_forward.5} parent=11 // pred_check
          %p153 = pneg %p56
        $region14: #{seq2seq_decoder_forward.5} parent=11 // pred_check_branch
          %155 = sbr.rel (%p153) target = $region16
        $region15: #{seq2seq_decoder_forward.5} parent=11 // pred_region
          %s156 = smul.u32 8, %s19
          %p157 = scmp.lt.s32.totalorder %s156, 7
          %s158 = scalar_select %p157, %s156, 7
          %p159 = scmp.lt.s32.totalorder %s21, 0
          %s160 = scalar_select %p159, %s21, 0
          %s161 = sadd.s32 %s160, %s158
          %s162 = smul.addr %s161, 4
          %s163 = scalar_lea.vmem %s0, %s162
          %s164 = smul.u32 8, %s19
        $region16: #{seq2seq_decoder_forward.5} parent=11 // pred_fallthru
          _
      $region12: #{seq2seq_decoder_forward.5} parent=5 // pred_fallthru
        _
      %p165 = scmp.lt.s32.totalorder %s9, 3
      // Predicated region
      $region17: #{seq2seq_decoder_forward.5} parent=5 // pred_check
        %p166 = pneg %p165
      $region18: #{seq2seq_decoder_forward.5} parent=5 // pred_check_branch
        %168 = sbr.rel (%p166) target = $region20
      $region19: #{seq2seq_decoder_forward.5} parent=5 // pred_region
        // Predicated region
        $region21: #{seq2seq_decoder_forward.5} parent=19 // pred_check
          %p169 = pneg %p78
        $region22: #{seq2seq_decoder_forward.5} parent=19 // pred_check_branch
          %171 = sbr.rel (%p169) target = $region24
        $region23: #{seq2seq_decoder_forward.5} parent=19 // pred_region
          %s172 = sand.u32 %s68, 1
          %s173 = sand.u32 %s68, 1
          %s174 = smul.addr %s173, 16
          %s175 = scalar_lea.vmem [#allocation3], %s174
          %s176 = smul.u32 4, %s18
          %s177 = smul.addr %s176, 3
          %s178 = sadd.s32 %s17, %s177
          %s179 = smul.addr %s178, 4
          %s180 = scalar_lea.vmem %s1, %s179
          // Predicated region
          $region25: #{seq2seq_decoder_forward.5} parent=23 // pred_check
            _
          $region26: #{seq2seq_decoder_forward.5} parent=23 // pred_check_branch
            %182 = sbr.rel (0) target = $region28
          $region27: #{seq2seq_decoder_forward.5} parent=23 // pred_region
            // Predicated region
            $region29: #{seq2seq_decoder_forward.5} parent=27 // pred_check
              _
            $region30: #{seq2seq_decoder_forward.5} parent=27 // pred_check_branch
              %184 = sbr.rel target = $region32
            $region31: #{seq2seq_decoder_forward.5} parent=27 // pred_region
              // Predicated region
              $region44: #{seq2seq_decoder_forward.5} parent=31 // pred_check
                _
              $region45: #{seq2seq_decoder_forward.5} parent=31 // pred_check_branch
                %205 = sbr.rel (0) target = $region47
              $region46: #{seq2seq_decoder_forward.5} parent=31 // pred_region
                loop: start=0, step=1, limit=1
                $region48: #{seq2seq_decoder_forward.5} parent=46 // loop_pre_header
                  _
                $region49: #{seq2seq_decoder_forward.5} parent=46 // loop_header
                  %s207 = sphi 0, %s211
                  %p208 = scmp.ge.s32.totalorder %s207, 1
                  %s212 = sphi %s180, %s180
                  %s213 = sphi %s175, %s175
                $region50: #{seq2seq_decoder_forward.5} parent=46 // loop_header_branch
                  %210 = sbr.rel (%p208) target = $region54
                $region51: #{seq2seq_decoder_forward.5} parent=46 // loop_body
                  _
                $region52: #{seq2seq_decoder_forward.5} parent=46 // loop_footer
                  %s211 = sadd.s32 1, %s207
                $region53: #{seq2seq_decoder_forward.5} parent=46 // loop_footer_branch
                  %206 = sbr.rel target = $region49
                $region54: #{seq2seq_decoder_forward.5} parent=46 // loop_exit
                  _
                loop: start=0, step=1, limit=1
                $region55: #{seq2seq_decoder_forward.5} parent=46 // loop_pre_header
                  _
                $region56: #{seq2seq_decoder_forward.5} parent=46 // loop_header
                  %s216 = sphi 0, %s220
                  %p217 = scmp.ge.s32.totalorder %s216, 1
                  %s221 = sphi %s180, %s180
                  %s222 = sphi %s175, %s175
                $region57: #{seq2seq_decoder_forward.5} parent=46 // loop_header_branch
                  %219 = sbr.rel (%p217) target = $region61
                $region58: #{seq2seq_decoder_forward.5} parent=46 // loop_body
                  %v223 = vld [vmem:[%s221] sm:$0xf]
                  %224 = vst [vmem:[%s222] sm:$0xf] %v223
                  %v225 = vld [vmem:[%s221 + $0xc] sm:$0xf]
                  %226 = vst [vmem:[%s222 + $0x4] sm:$0xf] %v225
                  %v227 = vld [vmem:[%s221 + $0x18] sm:$0xf]
                  %228 = vst [vmem:[%s222 + $0x8] sm:$0xf] %v227
                  %v229 = vld [vmem:[%s221 + $0x24] sm:$0xf]
                  %230 = vst [vmem:[%s222 + $0xc] sm:$0xf] %v229
                $region59: #{seq2seq_decoder_forward.5} parent=46 // loop_footer
                  %s220 = sadd.s32 1, %s216
                $region60: #{seq2seq_decoder_forward.5} parent=46 // loop_footer_branch
                  %215 = sbr.rel target = $region56
                $region61: #{seq2seq_decoder_forward.5} parent=46 // loop_exit
                  _
              $region47: #{seq2seq_decoder_forward.5} parent=31 // pred_fallthru
                _
            $region32: #{seq2seq_decoder_forward.5} parent=27 // pred_fallthru
              _
            // Predicated region
            $region33: #{seq2seq_decoder_forward.5} parent=27 // pred_check
              _
            $region34: #{seq2seq_decoder_forward.5} parent=27 // pred_check_branch
              %186 = sbr.rel (0) target = $region36
            $region35: #{seq2seq_decoder_forward.5} parent=27 // pred_region
              loop: start=0, step=1, limit=1
              $region37: #{seq2seq_decoder_forward.5} parent=35 // loop_pre_header
                _
              $region38: #{seq2seq_decoder_forward.5} parent=35 // loop_header
                %s189 = sphi 0, %s193
                %p190 = scmp.ge.s32.totalorder %s189, 1
                %s194 = sphi %s180, %s180
                %s195 = sphi %s175, %s175
              $region39: #{seq2seq_decoder_forward.5} parent=35 // loop_header_branch
                %192 = sbr.rel (%p190) target = $region43
              $region40: #{seq2seq_decoder_forward.5} parent=35 // loop_body
                %v196 = vld [vmem:[%s194] sm:$0xf]
                %197 = vst [vmem:[%s195] sm:$0xf] %v196
                %v198 = vld [vmem:[%s194 + $0xc] sm:$0xf]
                %199 = vst [vmem:[%s195 + $0x4] sm:$0xf] %v198
                %v200 = vld [vmem:[%s194 + $0x18] sm:$0xf]
                %201 = vst [vmem:[%s195 + $0x8] sm:$0xf] %v200
                %v202 = vld [vmem:[%s194 + $0x24] sm:$0xf]
                %203 = vst [vmem:[%s195 + $0xc] sm:$0xf] %v202
              $region41: #{seq2seq_decoder_forward.5} parent=35 // loop_footer
                %s193 = sadd.s32 1, %s189
              $region42: #{seq2seq_decoder_forward.5} parent=35 // loop_footer_branch
                %188 = sbr.rel target = $region38
              $region43: #{seq2seq_decoder_forward.5} parent=35 // loop_exit
                _
            $region36: #{seq2seq_decoder_forward.5} parent=27 // pred_fallthru
              _
          $region28: #{seq2seq_decoder_forward.5} parent=23 // pred_fallthru
            _
          %231 = vnop
        $region24: #{seq2seq_decoder_forward.5} parent=19 // pred_fallthru
          _
        // Predicated region
        $region62: #{seq2seq_decoder_forward.5} parent=19 // pred_check
          %p232 = pneg %p104
        $region63: #{seq2seq_decoder_forward.5} parent=19 // pred_check_branch
          %234 = sbr.rel (%p232) target = $region65
        $region64: #{seq2seq_decoder_forward.5} parent=19 // pred_region
          %p235 = scmp.lt.s32.totalorder %s17, 2
          %s236 = scalar_select %p235, %s17, 2
          %s237 = scalar_lea.vmem %s2, %s236
        $region65: #{seq2seq_decoder_forward.5} parent=19 // pred_fallthru
          _
      $region20: #{seq2seq_decoder_forward.5} parent=5 // pred_fallthru
        _
      %p238 = scmp.le.s32.totalorder 1, %s9
      %p239 = scmp.lt.s32.totalorder %s9, 4
      %p240 = pnand %p238, %p239
      %p241 = pneg %p240
      // Predicated region
      $region66: #{seq2seq_decoder_forward.5} parent=5 // pred_check
        _
      $region67: #{seq2seq_decoder_forward.5} parent=5 // pred_check_branch
        %243 = sbr.rel (%p240) target = $region69
      $region68: #{seq2seq_decoder_forward.5} parent=5 // pred_region
        %s244 = ssub.s32 %s9, 1
        %s245 = sand.u32 %s71, 1
        %s246 = sand.u32 %s71, 1
        %s247 = smul.addr %s246, 16
        %s248 = scalar_lea.vmem [#allocation3], %s247
        // Predicated region
        $region70: #{seq2seq_decoder_forward.5} parent=68 // pred_check
          %p249 = pneg %p84
        $region71: #{seq2seq_decoder_forward.5} parent=68 // pred_check_branch
          %251 = sbr.rel (%p249) target = $region73
        $region72: #{seq2seq_decoder_forward.5} parent=68 // pred_region
          _
        $region73: #{seq2seq_decoder_forward.5} parent=68 // pred_fallthru
          _
        %s252 = smul.u32 8, %s19
        %p253 = scmp.lt.s32.totalorder %s252, 7
        %s254 = scalar_select %p253, %s252, 7
        %p255 = scmp.lt.s32.totalorder %s21, 0
        %s256 = scalar_select %p255, %s21, 0
        %s257 = sadd.s32 %s256, %s254
        %s258 = smul.addr %s257, 4
        %s259 = scalar_lea.vmem %s0, %s258
        %p260 = pneg %p56
        %p261 = pneg %p53
        %s262 = sand.u32 %s71, 1
        %s263 = sand.u32 %s71, 1
        %s264 = smul.addr %s263, 16
        %s265 = scalar_lea.vmem [#allocation3], %s264
        %p266 = pneg %p84
        %p267 = pneg %p81
        %p268 = scmp.lt.s32.totalorder %s20, 2
        %s269 = scalar_select %p268, %s20, 2
        %s270 = scalar_lea.vmem %s2, %s269
        %p271 = pneg %p110
        %p272 = pneg %p107
        %p273 = pneg %p138
        %p274 = pneg %p135
        %s275 = sand.u32 %s125, 1
        %s276 = sand.u32 %s125, 1
        %s277 = smul.addr %s276, 64
        %s278 = scalar_lea.vmem [#allocation4], %s277
        %s279 = smul.u32 8, %s19
        %p280 = scmp.lt.s32.totalorder %s279, 7
        %s281 = scalar_select %p280, %s279, 7
        %p282 = scmp.lt.s32.totalorder %s21, 0
        %s283 = scalar_select %p282, %s21, 0
        %s284 = sadd.s32 %s283, %s281
        %s285 = smul.addr %s284, 4
        %s286 = scalar_lea.vmem %s0, %s285
        %s287 = smul.u32 8, %s19
        %s288 = smul.u32 4, %s21
        %p289 = scmp.lt.s32.totalorder %s20, 2
        %s290 = scalar_select %p289, %s20, 2
        %s291 = scalar_lea.vmem %s2, %s290
        %s292 = smul.u32 8, %s19
        %p294 = scmp.eq.s32.totalorder %s21, 0
        // Predicated region
        $region74: #{seq2seq_decoder_forward.5} parent=68 // pred_check
          %p295 = pneg %p294
        $region75: #{seq2seq_decoder_forward.5} parent=68 // pred_check_branch
          %297 = sbr.rel (%p295) target = $region77
        $region76: #{seq2seq_decoder_forward.5} parent=68 // pred_region
          %298 = vst [vmem:[#allocation2] sm:$0xff] 0.0
          %299 = vst [vmem:[#allocation2 + $0x8] sm:$0xff] 0.0
          %300 = vst [vmem:[#allocation2 + $0x10] sm:$0xff] 0.0
          %301 = vst [vmem:[#allocation2 + $0x18] sm:$0xff] 0.0
          %302 = vst [vmem:[#allocation2 + $0x20] sm:$0xff] 0.0
          %303 = vst [vmem:[#allocation2 + $0x28] sm:$0xff] 0.0
          %304 = vst [vmem:[#allocation2 + $0x30] sm:$0xff] 0.0
          %305 = vst [vmem:[#allocation2 + $0x38] sm:$0xff] 0.0
        $region77: #{seq2seq_decoder_forward.5} parent=68 // pred_fallthru
          _
        %v306 = vld [vmem:[#allocation2] sm:$0xff]
        %v307 = vld [vmem:[#allocation2 + $0x8] sm:$0xff]
        %v308 = vld [vmem:[#allocation2 + $0x10] sm:$0xff]
        %v309 = vld [vmem:[#allocation2 + $0x18] sm:$0xff]
        %v310 = vld [vmem:[#allocation2 + $0x20] sm:$0xff]
        %v311 = vld [vmem:[#allocation2 + $0x28] sm:$0xff]
        %v312 = vld [vmem:[#allocation2 + $0x30] sm:$0xff]
        %v313 = vld [vmem:[#allocation2 + $0x38] sm:$0xff]
        %v314 = vld [vmem:[%s286] sm:$0xf]
        %v315 = vld [vmem:[%s286 + $0x4] sm:$0xf]
        %v316 = vld [vmem:[%s286 + $0x8] sm:$0xf]
        %v317 = vld [vmem:[%s286 + $0xc] sm:$0xf]
        %v318 = vld [vmem:[%s286 + $0x10] sm:$0xf]
        %v319 = vld [vmem:[%s286 + $0x14] sm:$0xf]
        %v320 = vld [vmem:[%s286 + $0x18] sm:$0xf]
        %v321 = vld [vmem:[%s286 + $0x1c] sm:$0xf]
        %v322 = vld [vmem:[%s248] sm:$0xf]
        %v323 = vld [vmem:[%s248 + $0x4] sm:$0xf]
        %v324 = vld [vmem:[%s248 + $0x8] sm:$0xf]
        %v325 = vld [vmem:[%s248 + $0xc] sm:$0xf]
        %v334 = vunpack.c.l.b16 %v314
        %v335 = vunpack.c.l.b16 %v315
        %v336 = vunpack.c.l.b16 %v316
        %v337 = vunpack.c.l.b16 %v317
        %v338 = vunpack.c.l.b16 %v318
        %v339 = vunpack.c.l.b16 %v319
        %v340 = vunpack.c.l.b16 %v320
        %v341 = vunpack.c.l.b16 %v321
        %v342 = vpack.c.b16 %v335, %v334
        %v343 = vpack.c.b16 %v337, %v336
        %v344 = vpack.c.b16 %v339, %v338
        %v345 = vpack.c.b16 %v341, %v340
        %v350 = vunpack.c.l.b16 %v322
        %v351 = vunpack.c.l.b16 %v323
        %v352 = vunpack.c.l.b16 %v324
        %v353 = vunpack.c.l.b16 %v325
        %v354 = vpack.c.b16 %v351, %v350
        %v355 = vpack.c.b16 %v353, %v352
        %vm358 = vcmask 261120
        %v360 = vsel %vm358, %v342, 0
        %v363 = vsel %vm358, %v343, 0
        %v366 = vsel %vm358, %v344, 0
        %v369 = vsel %vm358, %v345, 0
        %371 = vmatprep.subr.bf16.mxu0 0
        %372 = vmatpush1.bf16.msra.mxu0 %v354
        %373 = vmatprep.subr.bf16.mxu0 0
        %374 = vmatpush1.bf16.msra.mxu0 %v355
        %375 = vmatprep.subr.bf16.mxu0 0
        %376 = vmatpush1.bf16.msra.mxu0 0
        %377 = vmatprep.subr.bf16.mxu0 0
        %378 = vmatpush1.bf16.msra.mxu0 0
        %379 = vmatprep.subr.bf16.mxu0 0
        %380 = vmatpush1.bf16.msra.mxu0 0
        %381 = vmatprep.subr.bf16.mxu0 0
        %382 = vmatpush1.bf16.msra.mxu0 0
        %383 = vmatprep.subr.bf16.mxu0 0
        %384 = vmatpush1.bf16.msra.mxu0 0
        %385 = vmatprep.subr.bf16.mxu0 0
        %386 = vmatpush1.bf16.msra.mxu0 0
        %387 = vmatprep.subr.bf16.mxu0 0
        %388 = vmatpush1.bf16.msra.mxu0 0
        %389 = vmatprep.subr.bf16.mxu0 0
        %390 = vmatpush1.bf16.msra.mxu0 0
        %391 = vmatprep.subr.bf16.mxu0 0
        %392 = vmatpush1.bf16.msra.mxu0 0
        %393 = vmatprep.subr.bf16.mxu0 0
        %394 = vmatpush1.bf16.msra.mxu0 0
        %395 = vmatprep.subr.bf16.mxu0 0
        %396 = vmatpush1.bf16.msra.mxu0 0
        %397 = vmatprep.subr.bf16.mxu0 0
        %398 = vmatpush1.bf16.msra.mxu0 0
        %399 = vmatprep.subr.bf16.mxu0 0
        %400 = vmatpush1.bf16.msra.mxu0 0
        %401 = vmatprep.subr.bf16.mxu0 0
        %402 = vmatpush1.bf16.msra.mxu0 0
        %403 = vmatprep.mubr.bf16.mxu0 0
        %404 = vmatmul.mubr.bf16.gmra.mrb[0].mxu0 %v360
        %v405 = vpop.f32.mrb[0].mxu0
        %v406 = vadd.f32 0.0, %v405
        %v407 = vpop.f32.mrb[0].mxu0
        %v408 = vpop.f32.mrb[0].mxu0
        %v409 = vadd.f32 0.0, %v408
        %v410 = vpop.f32.mrb[0].mxu0
        %411 = vmatprep.mubr.bf16.mxu0 0
        %412 = vmatmul.mubr.bf16.gmra.mrb[0].mxu0 %v363
        %v413 = vpop.f32.mrb[0].mxu0
        %v414 = vadd.f32 0.0, %v413
        %v415 = vpop.f32.mrb[0].mxu0
        %v416 = vpop.f32.mrb[0].mxu0
        %v417 = vadd.f32 0.0, %v416
        %v418 = vpop.f32.mrb[0].mxu0
        %419 = vmatprep.mubr.bf16.mxu0 0
        %420 = vmatmul.mubr.bf16.gmra.mrb[0].mxu0 %v366
        %v421 = vpop.f32.mrb[0].mxu0
        %v422 = vadd.f32 0.0, %v421
        %v423 = vpop.f32.mrb[0].mxu0
        %v424 = vpop.f32.mrb[0].mxu0
        %v425 = vadd.f32 0.0, %v424
        %v426 = vpop.f32.mrb[0].mxu0
        %427 = vmatprep.mubr.bf16.mxu0 0
        %428 = vmatmul.mubr.bf16.gmra.mrb[0].mxu0 %v369
        %v429 = vpop.f32.mrb[0].mxu0
        %v430 = vadd.f32 0.0, %v429
        %v431 = vpop.f32.mrb[0].mxu0
        %v432 = vpop.f32.mrb[0].mxu0
        %v433 = vadd.f32 0.0, %v432
        %v434 = vpop.f32.mrb[0].mxu0
        %435 = vdwg.mxu0
        %v436 = vadd.f32 %v306, %v406
        %v437 = vadd.f32 %v307, %v409
        %v438 = vadd.f32 %v308, %v414
        %v439 = vadd.f32 %v309, %v417
        %v440 = vadd.f32 %v310, %v422
        %v441 = vadd.f32 %v311, %v425
        %v442 = vadd.f32 %v312, %v430
        %v443 = vadd.f32 %v313, %v433
        %444 = vst [vmem:[#allocation2] sm:$0xff] %v436
        %445 = vst [vmem:[#allocation2 + $0x8] sm:$0xff] %v437
        %446 = vst [vmem:[#allocation2 + $0x10] sm:$0xff] %v438
        %447 = vst [vmem:[#allocation2 + $0x18] sm:$0xff] %v439
        %448 = vst [vmem:[#allocation2 + $0x20] sm:$0xff] %v440
        %449 = vst [vmem:[#allocation2 + $0x28] sm:$0xff] %v441
        %450 = vst [vmem:[#allocation2 + $0x30] sm:$0xff] %v442
        %451 = vst [vmem:[#allocation2 + $0x38] sm:$0xff] %v443
        // Predicated region
        $region78: #{seq2seq_decoder_forward.5} parent=68 // pred_check
          %p452 = pneg %p294
        $region79: #{seq2seq_decoder_forward.5} parent=68 // pred_check_branch
          %454 = sbr.rel (%p452) target = $region81
        $region80: #{seq2seq_decoder_forward.5} parent=68 // pred_region
          %v455 = vld [vmem:[#allocation2] sm:$0xff]
          %v456 = vld [vmem:[#allocation2 + $0x8] sm:$0xff]
          %v457 = vld [vmem:[#allocation2 + $0x10] sm:$0xff]
          %v458 = vld [vmem:[#allocation2 + $0x18] sm:$0xff]
          %v459 = vld [vmem:[#allocation2 + $0x20] sm:$0xff]
          %v460 = vld [vmem:[#allocation2 + $0x28] sm:$0xff]
          %v461 = vld [vmem:[#allocation2 + $0x30] sm:$0xff]
          %v462 = vld [vmem:[#allocation2 + $0x38] sm:$0xff]
          %v463 = vld [vmem:[%s291] sm:$0x1]
          %v465 = vlaneseq
          %v466 = vshrl.u32 %v465, 7
          %v467 = vsub.s32 0, %v466
          %v468 = vrot.slane %v463, %v467
          %v470 = vadd.f32 %v455, %v468
          %v471 = vadd.f32 %v456, %v468
          %v472 = vadd.f32 %v457, %v468
          %v473 = vadd.f32 %v458, %v468
          %v474 = vadd.f32 %v459, %v468
          %v475 = vadd.f32 %v460, %v468
          %v476 = vadd.f32 %v461, %v468
          %v477 = vadd.f32 %v462, %v468
          %478 = vst [vmem:[%s278] sm:$0xff] %v470
          %479 = vst [vmem:[%s278 + $0x8] sm:$0xff] %v471
          %480 = vst [vmem:[%s278 + $0x10] sm:$0xff] %v472
          %481 = vst [vmem:[%s278 + $0x18] sm:$0xff] %v473
          %482 = vst [vmem:[%s278 + $0x20] sm:$0xff] %v474
          %483 = vst [vmem:[%s278 + $0x28] sm:$0xff] %v475
          %484 = vst [vmem:[%s278 + $0x30] sm:$0xff] %v476
          %485 = vst [vmem:[%s278 + $0x38] sm:$0xff] %v477
        $region81: #{seq2seq_decoder_forward.5} parent=68 // pred_fallthru
          _
        %s486 = sand.u32 %s125, 1
        %s487 = sand.u32 %s125, 1
        %s488 = smul.addr %s487, 64
        %s489 = scalar_lea.vmem [#allocation4], %s488
        // Predicated region
        $region82: #{seq2seq_decoder_forward.5} parent=68 // pred_check
          %p490 = pneg %p135
        $region83: #{seq2seq_decoder_forward.5} parent=68 // pred_check_branch
          %492 = sbr.rel (%p490) target = $region85
        $region84: #{seq2seq_decoder_forward.5} parent=68 // pred_region
          %s493 = smul.u32 8, %s19
          %s494 = smul.addr %s493, 3
          %s495 = sadd.s32 %s20, %s494
          %s496 = smul.addr %s495, 8
          %s497 = scalar_lea.vmem %s3, %s496
          // Predicated region
          $region86: #{seq2seq_decoder_forward.5} parent=84 // pred_check
            _
          $region87: #{seq2seq_decoder_forward.5} parent=84 // pred_check_branch
            %499 = sbr.rel (0) target = $region89
          $region88: #{seq2seq_decoder_forward.5} parent=84 // pred_region
            // Predicated region
            $region90: #{seq2seq_decoder_forward.5} parent=88 // pred_check
              _
            $region91: #{seq2seq_decoder_forward.5} parent=88 // pred_check_branch
              %501 = sbr.rel (0) target = $region93
            $region92: #{seq2seq_decoder_forward.5} parent=88 // pred_region
              // Predicated region
              $region105: #{seq2seq_decoder_forward.5} parent=92 // pred_check
                _
              $region106: #{seq2seq_decoder_forward.5} parent=92 // pred_check_branch
                %530 = sbr.rel (0) target = $region108
              $region107: #{seq2seq_decoder_forward.5} parent=92 // pred_region
                loop: start=0, step=1, limit=1
                $region109: #{seq2seq_decoder_forward.5} parent=107 // loop_pre_header
                  _
                $region110: #{seq2seq_decoder_forward.5} parent=107 // loop_header
                  %s532 = sphi 0, %s536
                  %p533 = scmp.ge.s32.totalorder %s532, 1
                  %s537 = sphi %s489, %s489
                  %s538 = sphi %s497, %s497
                $region111: #{seq2seq_decoder_forward.5} parent=107 // loop_header_branch
                  %535 = sbr.rel (%p533) target = $region115
                $region112: #{seq2seq_decoder_forward.5} parent=107 // loop_body
                  %v539 = vld [vmem:[%s537] sm:$0xff]
                  %540 = vst [vmem:[%s538] sm:$0xff] %v539
                  %v541 = vld [vmem:[%s537 + $0x8] sm:$0xff]
                  %542 = vst [vmem:[%s538 + $0x18] sm:$0xff] %v541
                  %v543 = vld [vmem:[%s537 + $0x10] sm:$0xff]
                  %544 = vst [vmem:[%s538 + $0x30] sm:$0xff] %v543
                  %v545 = vld [vmem:[%s537 + $0x18] sm:$0xff]
                  %546 = vst [vmem:[%s538 + $0x48] sm:$0xff] %v545
                  %v547 = vld [vmem:[%s537 + $0x20] sm:$0xff]
                  %548 = vst [vmem:[%s538 + $0x60] sm:$0xff] %v547
                  %v549 = vld [vmem:[%s537 + $0x28] sm:$0xff]
                  %550 = vst [vmem:[%s538 + $0x78] sm:$0xff] %v549
                  %v551 = vld [vmem:[%s537 + $0x30] sm:$0xff]
                  %552 = vst [vmem:[%s538 + $0x90] sm:$0xff] %v551
                  %v553 = vld [vmem:[%s537 + $0x38] sm:$0xff]
                  %554 = vst [vmem:[%s538 + $0xa8] sm:$0xff] %v553
                $region113: #{seq2seq_decoder_forward.5} parent=107 // loop_footer
                  %s536 = sadd.s32 1, %s532
                $region114: #{seq2seq_decoder_forward.5} parent=107 // loop_footer_branch
                  %531 = sbr.rel target = $region110
                $region115: #{seq2seq_decoder_forward.5} parent=107 // loop_exit
                  _
              $region108: #{seq2seq_decoder_forward.5} parent=92 // pred_fallthru
                _
              // Predicated region
              $region116: #{seq2seq_decoder_forward.5} parent=92 // pred_check
                _
              $region117: #{seq2seq_decoder_forward.5} parent=92 // pred_check_branch
                %556 = sbr.rel target = $region119
              $region118: #{seq2seq_decoder_forward.5} parent=92 // pred_region
                _
              $region119: #{seq2seq_decoder_forward.5} parent=92 // pred_fallthru
                _
            $region93: #{seq2seq_decoder_forward.5} parent=88 // pred_fallthru
              _
            // Predicated region
            $region94: #{seq2seq_decoder_forward.5} parent=88 // pred_check
              _
            $region95: #{seq2seq_decoder_forward.5} parent=88 // pred_check_branch
              %503 = sbr.rel target = $region97
            $region96: #{seq2seq_decoder_forward.5} parent=88 // pred_region
              loop: start=0, step=1, limit=1
              $region98: #{seq2seq_decoder_forward.5} parent=96 // loop_pre_header
                _
              $region99: #{seq2seq_decoder_forward.5} parent=96 // loop_header
                %s506 = sphi 0, %s510
                %p507 = scmp.ge.s32.totalorder %s506, 1
                %s511 = sphi %s489, %s489
                %s512 = sphi %s497, %s497
              $region100: #{seq2seq_decoder_forward.5} parent=96 // loop_header_branch
                %509 = sbr.rel (%p507) target = $region104
              $region101: #{seq2seq_decoder_forward.5} parent=96 // loop_body
                %v513 = vld [vmem:[%s511] sm:$0xff]
                %514 = vst [vmem:[%s512] sm:$0xff] %v513
                %v515 = vld [vmem:[%s511 + $0x8] sm:$0xff]
                %516 = vst [vmem:[%s512 + $0x18] sm:$0xff] %v515
                %v517 = vld [vmem:[%s511 + $0x10] sm:$0xff]
                %518 = vst [vmem:[%s512 + $0x30] sm:$0xff] %v517
                %v519 = vld [vmem:[%s511 + $0x18] sm:$0xff]
                %520 = vst [vmem:[%s512 + $0x48] sm:$0xff] %v519
                %v521 = vld [vmem:[%s511 + $0x20] sm:$0xff]
                %522 = vst [vmem:[%s512 + $0x60] sm:$0xff] %v521
                %v523 = vld [vmem:[%s511 + $0x28] sm:$0xff]
                %524 = vst [vmem:[%s512 + $0x78] sm:$0xff] %v523
                %v525 = vld [vmem:[%s511 + $0x30] sm:$0xff]
                %526 = vst [vmem:[%s512 + $0x90] sm:$0xff] %v525
                %v527 = vld [vmem:[%s511 + $0x38] sm:$0xff]
                %528 = vst [vmem:[%s512 + $0xa8] sm:$0xff] %v527
              $region102: #{seq2seq_decoder_forward.5} parent=96 // loop_footer
                %s510 = sadd.s32 1, %s506
              $region103: #{seq2seq_decoder_forward.5} parent=96 // loop_footer_branch
                %505 = sbr.rel target = $region99
              $region104: #{seq2seq_decoder_forward.5} parent=96 // loop_exit
                _
            $region97: #{seq2seq_decoder_forward.5} parent=88 // pred_fallthru
              _
          $region89: #{seq2seq_decoder_forward.5} parent=84 // pred_fallthru
            _
          %557 = vnop
        $region85: #{seq2seq_decoder_forward.5} parent=68 // pred_fallthru
          _
      $region69: #{seq2seq_decoder_forward.5} parent=5 // pred_fallthru
        _
      %p558 = scmp.le.s32.totalorder 2, %s9
      // Predicated region
      $region120: #{seq2seq_decoder_forward.5} parent=5 // pred_check
        %p559 = pneg %p558
      $region121: #{seq2seq_decoder_forward.5} parent=5 // pred_check_branch
        %561 = sbr.rel (%p559) target = $region123
      $region122: #{seq2seq_decoder_forward.5} parent=5 // pred_region
        %s562 = ssub.s32 %s9, 2
        // Predicated region
        $region124: #{seq2seq_decoder_forward.5} parent=122 // pred_check
          %p563 = pneg %p141
        $region125: #{seq2seq_decoder_forward.5} parent=122 // pred_check_branch
          %565 = sbr.rel (%p563) target = $region127
        $region126: #{seq2seq_decoder_forward.5} parent=122 // pred_region
          %s566 = sand.u32 %s126, 1
          %s567 = sand.u32 %s126, 1
          %s568 = smul.addr %s567, 64
          %s569 = scalar_lea.vmem [#allocation4], %s568
        $region127: #{seq2seq_decoder_forward.5} parent=122 // pred_fallthru
          _
      $region123: #{seq2seq_decoder_forward.5} parent=5 // pred_fallthru
        _
    $region6: #{seq2seq_decoder_forward.5} parent=1 // loop_footer
      %s13 = sadd.s32 1, %s9
    $region7: #{seq2seq_decoder_forward.5} parent=1 // loop_footer_branch
      %8 = sbr.rel target = $region3
    $region8: #{seq2seq_decoder_forward.5} parent=1 // loop_exit
      _

// kernel: seq2seq_decoder_forward.8
$region0: #{seq2seq_decoder_forward.8}
  #allocation0 [shape = 'u32[]', space=smem, size = 0x4, offset = 0x4, fixed_abs, tag = 'smem constant byte address 0x4 - core index']
  #allocation1 [shape = 'u32[144,128]{1,0:T(1,128)}', space=vmem, size = 0x12000, scoped, tag = 'internal scratch']
  #allocation2 [shape = 'f32[8,128]{1,0:T(8,128)}', space=vmem, size = 0x1000, scoped, tag = 'scratch operand']
  %s0 = inlined_call_operand.vmem [shape: f32[8,8,384], index: 0, kind: input, shape index: {}]
  %s1 = inlined_call_operand.vmem [shape: f32[8,128], index: 1, kind: input, shape index: {}]
  %s2 = inlined_call_operand.vmem [shape: bf16[128,384], index: 2, kind: input, shape index: {}]
  %s3 = inlined_call_operand.vmem [shape: f32[1,128], index: 3, kind: input, shape index: {}]
  %s4 = inlined_call_operand.vmem [shape: bf16[8,8,128], index: 4, kind: output, shape index: {0}]
  %s5 = inlined_call_operand.vmem [shape: f32[8,128], index: 5, kind: output, shape index: {1}]
  %6 = xla_tuple %s4, %s5
  %s7 = sld [smem:[#allocation0]]
  $region42: #{seq2seq_decoder_forward.8} parent=0
    _
  %s9 = ssub.s32 1, %s7
  %s10 = scalar_select 0, %s9, %s7
  // Predicated region
  $region2: #{seq2seq_decoder_forward.8} parent=0 // pred_check
    _
  $region3: #{seq2seq_decoder_forward.8} parent=0 // pred_check_branch
    %12 = sbr.rel (0) target = $region5
  $region4: #{seq2seq_decoder_forward.8} parent=0 // pred_region
    _
  $region5: #{seq2seq_decoder_forward.8} parent=0 // pred_fallthru
    _
  // Predicated region
  $region6: #{seq2seq_decoder_forward.8} parent=0 // pred_check
    _
  $region7: #{seq2seq_decoder_forward.8} parent=0 // pred_check_branch
    %14 = sbr.rel (0) target = $region9
  $region8: #{seq2seq_decoder_forward.8} parent=0 // pred_region
    _
  $region9: #{seq2seq_decoder_forward.8} parent=0 // pred_fallthru
    _
  // Predicated region
  $region10: #{seq2seq_decoder_forward.8} parent=0 // pred_check
    _
  $region11: #{seq2seq_decoder_forward.8} parent=0 // pred_check_branch
    %16 = sbr.rel (0) target = $region13
  $region12: #{seq2seq_decoder_forward.8} parent=0 // pred_region
    _
  $region13: #{seq2seq_decoder_forward.8} parent=0 // pred_fallthru
    _
  // Predicated region
  $region14: #{seq2seq_decoder_forward.8} parent=0 // pred_check
    _
  $region15: #{seq2seq_decoder_forward.8} parent=0 // pred_check_branch
    %18 = sbr.rel (0) target = $region17
  $region16: #{seq2seq_decoder_forward.8} parent=0 // pred_region
    _
  $region17: #{seq2seq_decoder_forward.8} parent=0 // pred_fallthru
    _
  %p20 = scmp.eq.s32.totalorder 0, 0
  // Predicated region
  $region18: #{seq2seq_decoder_forward.8} parent=0 // pred_check
    %p21 = pneg %p20
  $region19: #{seq2seq_decoder_forward.8} parent=0 // pred_check_branch
    %23 = sbr.rel (%p21) target = $region21
  $region20: #{seq2seq_decoder_forward.8} parent=0 // pred_region
    %v24 = vld [vmem:[%s1] sm:$0xff]
    %25 = vst [vmem:[#allocation2] sm:$0xff] %v24
  $region21: #{seq2seq_decoder_forward.8} parent=0 // pred_fallthru
    _
  %v26 = vld [vmem:[%s3] sm:$0x1]
  %v28 = vlaneseq
  %v29 = vshrl.u32 %v28, 7
  %v30 = vsub.s32 0, %v29
  %v31 = vrot.slane %v26, %v30
  %v33 = vld [vmem:[#allocation2] sm:$0xff]
  %v34 = vld [vmem:[%s0] sm:$0xff]
  %v35 = vld [vmem:[%s0 + $0x8] sm:$0xff]
  %v36 = vld [vmem:[%s0 + $0x10] sm:$0xff]
  %v37 = vpack.c.bf16 %v33, %v33
  %v38 = vld [vmem:[%s2] sm:$0xff]
  %v39 = vld [vmem:[%s2 + $0x8] sm:$0xf]
  %v40 = vld [vmem:[%s2 + $0xc] sm:$0xff]
  %v41 = vld [vmem:[%s2 + $0x14] sm:$0xf]
  %v42 = vld [vmem:[%s2 + $0x18] sm:$0xff]
  %v43 = vld [vmem:[%s2 + $0x20] sm:$0xf]
  %v44 = vld [vmem:[%s2 + $0x24] sm:$0xff]
  %v45 = vld [vmem:[%s2 + $0x2c] sm:$0xf]
  %v46 = vld [vmem:[%s2 + $0x30] sm:$0xff]
  %v47 = vld [vmem:[%s2 + $0x38] sm:$0xf]
  %v48 = vld [vmem:[%s2 + $0x3c] sm:$0xff]
  %v49 = vld [vmem:[%s2 + $0x44] sm:$0xf]
  %v50 = vld [vmem:[%s2 + $0x48] sm:$0xff]
  %v51 = vld [vmem:[%s2 + $0x50] sm:$0xf]
  %v52 = vld [vmem:[%s2 + $0x54] sm:$0xff]
  %v53 = vld [vmem:[%s2 + $0x5c] sm:$0xf]
  %v54 = vld [vmem:[%s2 + $0x60] sm:$0xff]
  %v55 = vld [vmem:[%s2 + $0x68] sm:$0xf]
  %v56 = vld [vmem:[%s2 + $0x6c] sm:$0xff]
  %v57 = vld [vmem:[%s2 + $0x74] sm:$0xf]
  %v58 = vld [vmem:[%s2 + $0x78] sm:$0xff]
  %v59 = vld [vmem:[%s2 + $0x80] sm:$0xf]
  %v60 = vld [vmem:[%s2 + $0x84] sm:$0xff]
  %v61 = vld [vmem:[%s2 + $0x8c] sm:$0xf]
  %v62 = vld [vmem:[%s2 + $0x90] sm:$0xff]
  %v63 = vld [vmem:[%s2 + $0x98] sm:$0xf]
  %v64 = vld [vmem:[%s2 + $0x9c] sm:$0xff]
  %v65 = vld [vmem:[%s2 + $0xa4] sm:$0xf]
  %v66 = vld [vmem:[%s2 + $0xa8] sm:$0xff]
  %v67 = vld [vmem:[%s2 + $0xb0] sm:$0xf]
  %v68 = vld [vmem:[%s2 + $0xb4] sm:$0xff]
  %v69 = vld [vmem:[%s2 + $0xbc] sm:$0xf]
  %v102 = vunpack.c.l.b16 %v38
  %v103 = vunpack.c.h.b16 %v38
  %v104 = vunpack.c.l.b16 %v39
  %v105 = vunpack.c.l.b16 %v40
  %v106 = vunpack.c.h.b16 %v40
  %v107 = vunpack.c.l.b16 %v41
  %v108 = vunpack.c.l.b16 %v42
  %v109 = vunpack.c.h.b16 %v42
  %v110 = vunpack.c.l.b16 %v43
  %v111 = vunpack.c.l.b16 %v44
  %v112 = vunpack.c.h.b16 %v44
  %v113 = vunpack.c.l.b16 %v45
  %v114 = vunpack.c.l.b16 %v46
  %v115 = vunpack.c.h.b16 %v46
  %v116 = vunpack.c.l.b16 %v47
  %v117 = vunpack.c.l.b16 %v48
  %v118 = vunpack.c.h.b16 %v48
  %v119 = vunpack.c.l.b16 %v49
  %v120 = vunpack.c.l.b16 %v50
  %v121 = vunpack.c.h.b16 %v50
  %v122 = vunpack.c.l.b16 %v51
  %v123 = vunpack.c.l.b16 %v52
  %v124 = vunpack.c.h.b16 %v52
  %v125 = vunpack.c.l.b16 %v53
  %v126 = vunpack.c.l.b16 %v54
  %v127 = vunpack.c.h.b16 %v54
  %v128 = vunpack.c.l.b16 %v55
  %v129 = vunpack.c.l.b16 %v56
  %v130 = vunpack.c.h.b16 %v56
  %v131 = vunpack.c.l.b16 %v57
  %v132 = vunpack.c.l.b16 %v58
  %v133 = vunpack.c.h.b16 %v58
  %v134 = vunpack.c.l.b16 %v59
  %v135 = vunpack.c.l.b16 %v60
  %v136 = vunpack.c.h.b16 %v60
  %v137 = vunpack.c.l.b16 %v61
  %v138 = vunpack.c.l.b16 %v62
  %v139 = vunpack.c.h.b16 %v62
  %v140 = vunpack.c.l.b16 %v63
  %v141 = vunpack.c.l.b16 %v64
  %v142 = vunpack.c.h.b16 %v64
  %v143 = vunpack.c.l.b16 %v65
  %v144 = vunpack.c.l.b16 %v66
  %v145 = vunpack.c.h.b16 %v66
  %v146 = vunpack.c.l.b16 %v67
  %v147 = vunpack.c.l.b16 %v68
  %v148 = vunpack.c.h.b16 %v68
  %v149 = vunpack.c.l.b16 %v69
  %v150 = vpack.c.b16 %v105, %v102
  %v151 = vpack.c.b16 %v106, %v103
  %v152 = vpack.c.b16 %v107, %v104
  %v153 = vpack.c.b16 %v111, %v108
  %v154 = vpack.c.b16 %v112, %v109
  %v155 = vpack.c.b16 %v113, %v110
  %v156 = vpack.c.b16 %v117, %v114
  %v157 = vpack.c.b16 %v118, %v115
  %v158 = vpack.c.b16 %v119, %v116
  %v159 = vpack.c.b16 %v123, %v120
  %v160 = vpack.c.b16 %v124, %v121
  %v161 = vpack.c.b16 %v125, %v122
  %v162 = vpack.c.b16 %v129, %v126
  %v163 = vpack.c.b16 %v130, %v127
  %v164 = vpack.c.b16 %v131, %v128
  %v165 = vpack.c.b16 %v135, %v132
  %v166 = vpack.c.b16 %v136, %v133
  %v167 = vpack.c.b16 %v137, %v134
  %v168 = vpack.c.b16 %v141, %v138
  %v169 = vpack.c.b16 %v142, %v139
  %v170 = vpack.c.b16 %v143, %v140
  %v171 = vpack.c.b16 %v147, %v144
  %v172 = vpack.c.b16 %v148, %v145
  %v173 = vpack.c.b16 %v149, %v146
  %198 = vmatprep.subr.bf16.mxu0 %v151
  %199 = vmatpush1.bf16.msra.mxu0 %v150
  %200 = vmatprep.subr.bf16.mxu0 %v154
  %201 = vmatpush1.bf16.msra.mxu0 %v153
  %202 = vmatprep.subr.bf16.mxu0 %v157
  %203 = vmatpush1.bf16.msra.mxu0 %v156
  %204 = vmatprep.subr.bf16.mxu0 %v160
  %205 = vmatpush1.bf16.msra.mxu0 %v159
  %206 = vmatprep.subr.bf16.mxu0 %v163
  %207 = vmatpush1.bf16.msra.mxu0 %v162
  %208 = vmatprep.subr.bf16.mxu0 %v166
  %209 = vmatpush1.bf16.msra.mxu0 %v165
  %210 = vmatprep.subr.bf16.mxu0 %v169
  %211 = vmatpush1.bf16.msra.mxu0 %v168
  %212 = vmatprep.subr.bf16.mxu0 %v172
  %213 = vmatpush1.bf16.msra.mxu0 %v171
  %214 = vmatprep.subr.bf16.mxu0 0
  %215 = vmatpush1.bf16.msra.mxu0 0
  %216 = vmatprep.subr.bf16.mxu0 0
  %217 = vmatpush1.bf16.msra.mxu0 0
  %218 = vmatprep.subr.bf16.mxu0 0
  %219 = vmatpush1.bf16.msra.mxu0 0
  %220 = vmatprep.subr.bf16.mxu0 0
  %221 = vmatpush1.bf16.msra.mxu0 0
  %222 = vmatprep.subr.bf16.mxu0 0
  %223 = vmatpush1.bf16.msra.mxu0 0
  %224 = vmatprep.subr.bf16.mxu0 0
  %225 = vmatpush1.bf16.msra.mxu0 0
  %226 = vmatprep.subr.bf16.mxu0 0
  %227 = vmatpush1.bf16.msra.mxu0 0
  %228 = vmatprep.subr.bf16.mxu0 0
  %229 = vmatpush1.bf16.msra.mxu0 0
  %230 = vmatprep.mubr.bf16.mxu0 0
  %231 = vmatmul.mubr.bf16.gmra.mrb[0].mxu0 %v37
  %v232 = vpop.f32.mrb[0].mxu0
  %v233 = vadd.f32 0.0, %v232
  %v234 = vpop.f32.mrb[0].mxu0
  %v235 = vadd.f32 0.0, %v234
  %v236 = vpop.f32.mrb[0].mxu0
  %v237 = vpop.f32.mrb[0].mxu0
  %238 = vdwg.mxu0
  %239 = vmatprep.subr.bf16.mxu0 0
  %240 = vmatpush1.bf16.msra.mxu0 %v152
  %241 = vmatprep.subr.bf16.mxu0 0
  %242 = vmatpush1.bf16.msra.mxu0 %v155
  %243 = vmatprep.subr.bf16.mxu0 0
  %244 = vmatpush1.bf16.msra.mxu0 %v158
  %245 = vmatprep.subr.bf16.mxu0 0
  %246 = vmatpush1.bf16.msra.mxu0 %v161
  %247 = vmatprep.subr.bf16.mxu0 0
  %248 = vmatpush1.bf16.msra.mxu0 %v164
  %249 = vmatprep.subr.bf16.mxu0 0
  %250 = vmatpush1.bf16.msra.mxu0 %v167
  %251 = vmatprep.subr.bf16.mxu0 0
  %252 = vmatpush1.bf16.msra.mxu0 %v170
  %253 = vmatprep.subr.bf16.mxu0 0
  %254 = vmatpush1.bf16.msra.mxu0 %v173
  %255 = vmatprep.subr.bf16.mxu0 0
  %256 = vmatpush1.bf16.msra.mxu0 0
  %257 = vmatprep.subr.bf16.mxu0 0
  %258 = vmatpush1.bf16.msra.mxu0 0
  %259 = vmatprep.subr.bf16.mxu0 0
  %260 = vmatpush1.bf16.msra.mxu0 0
  %261 = vmatprep.subr.bf16.mxu0 0
  %262 = vmatpush1.bf16.msra.mxu0 0
  %263 = vmatprep.subr.bf16.mxu0 0
  %264 = vmatpush1.bf16.msra.mxu0 0
  %265 = vmatprep.subr.bf16.mxu0 0
  %266 = vmatpush1.bf16.msra.mxu0 0
  %267 = vmatprep.subr.bf16.mxu0 0
  %268 = vmatpush1.bf16.msra.mxu0 0
  %269 = vmatprep.subr.bf16.mxu0 0
  %270 = vmatpush1.bf16.msra.mxu0 0
  %271 = vmatprep.mubr.bf16.mxu0 0
  %272 = vmatmul.mubr.bf16.gmra.mrb[0].mxu0 %v37
  %v273 = vpop.f32.mrb[0].mxu0
  %v274 = vadd.f32 0.0, %v273
  %v275 = vpop.f32.mrb[0].mxu0
  %v276 = vpop.f32.mrb[0].mxu0
  %v277 = vpop.f32.mrb[0].mxu0
  %278 = vdwg.mxu0
  %v279 = vadd.f32 %v34, %v233
  %v280 = vxor.u32 %v279, 2147483648
  %v281 = vmul.f32 %v280, 1.442695
  %v282 = vpow.pop %v281
  %v283 = vadd.f32 %v282, 1.0
  %v284 = vrcp.pop %v283
  %v285 = vmul.f32 1.0, %v284
  %v286 = vadd.f32 %v35, %v235
  %v287 = vxor.u32 %v286, 2147483648
  %v288 = vmul.f32 %v287, 1.442695
  %v289 = vpow.pop %v288
  %v290 = vadd.f32 %v289, 1.0
  %v291 = vrcp.pop %v290
  %v292 = vmul.f32 1.0, %v291
  %v293 = vadd.f32 %v274, %v31
  %v294 = vmul.f32 %v285, %v293
  %v295 = vadd.f32 %v36, %v294
  %v296 = vtanh.pop %v295
  %v297 = vsub.f32 1.0, %v292
  %v298 = vmul.f32 %v297, %v296
  %v299 = vmul.f32 %v292, %v33
  %v300 = vadd.f32 %v298, %v299
  %v301 = vpack.c.bf16 %v300, %v300
  %302 = vst [vmem:[%s4] sm:$0xf] %v301
  %s303 = scalar_lea.vmem %s0, 24
  %v304 = vld [vmem:[%s303] sm:$0xff]
  %v305 = vld [vmem:[%s303 + $0x8] sm:$0xff]
  %v306 = vld [vmem:[%s303 + $0x10] sm:$0xff]
  %v307 = vld [vmem:[%s2] sm:$0xff]
  %v308 = vld [vmem:[%s2 + $0x8] sm:$0xf]
  %v309 = vld [vmem:[%s2 + $0xc] sm:$0xff]
  %v310 = vld [vmem:[%s2 + $0x14] sm:$0xf]
  %v311 = vld [vmem:[%s2 + $0x18] sm:$0xff]
  %v312 = vld [vmem:[%s2 + $0x20] sm:$0xf]
  %v313 = vld [vmem:[%s2 + $0x24] sm:$0xff]
  %v314 = vld [vmem:[%s2 + $0x2c] sm:$0xf]
  %v315 = vld [vmem:[%s2 + $0x30] sm:$0xff]
  %v316 = vld [vmem:[%s2 + $0x38] sm:$0xf]
  %v317 = vld [vmem:[%s2 + $0x3c] sm:$0xff]
  %v318 = vld [vmem:[%s2 + $0x44] sm:$0xf]
  %v319 = vld [vmem:[%s2 + $0x48] sm:$0xff]
  %v320 = vld [vmem:[%s2 + $0x50] sm:$0xf]
  %v321 = vld [vmem:[%s2 + $0x54] sm:$0xff]
  %v322 = vld [vmem:[%s2 + $0x5c] sm:$0xf]
  %v323 = vld [vmem:[%s2 + $0x60] sm:$0xff]
  %v324 = vld [vmem:[%s2 + $0x68] sm:$0xf]
  %v325 = vld [vmem:[%s2 + $0x6c] sm:$0xff]
  %v326 = vld [vmem:[%s2 + $0x74] sm:$0xf]
  %v327 = vld [vmem:[%s2 + $0x78] sm:$0xff]
  %v328 = vld [vmem:[%s2 + $0x80] sm:$0xf]
  %v329 = vld [vmem:[%s2 + $0x84] sm:$0xff]
  %v330 = vld [vmem:[%s2 + $0x8c] sm:$0xf]
  %v331 = vld [vmem:[%s2 + $0x90] sm:$0xff]
  %v332 = vld [vmem:[%s2 + $0x98] sm:$0xf]
  %v333 = vld [vmem:[%s2 + $0x9c] sm:$0xff]
  %v334 = vld [vmem:[%s2 + $0xa4] sm:$0xf]
  %v335 = vld [vmem:[%s2 + $0xa8] sm:$0xff]
  %v336 = vld [vmem:[%s2 + $0xb0] sm:$0xf]
  %v337 = vld [vmem:[%s2 + $0xb4] sm:$0xff]
  %v338 = vld [vmem:[%s2 + $0xbc] sm:$0xf]
  %v371 = vunpack.c.l.b16 %v307
  %v372 = vunpack.c.h.b16 %v307
  %v373 = vunpack.c.l.b16 %v308
  %v374 = vunpack.c.l.b16 %v309
  %v375 = vunpack.c.h.b16 %v309
  %v376 = vunpack.c.l.b16 %v310
  %v377 = vunpack.c.l.b16 %v311
  %v378 = vunpack.c.h.b16 %v311
  %v379 = vunpack.c.l.b16 %v312
  %v380 = vunpack.c.l.b16 %v313
  %v381 = vunpack.c.h.b16 %v313
  %v382 = vunpack.c.l.b16 %v314
  %v383 = vunpack.c.l.b16 %v315
  %v384 = vunpack.c.h.b16 %v315
  %v385 = vunpack.c.l.b16 %v316
  %v386 = vunpack.c.l.b16 %v317
  %v387 = vunpack.c.h.b16 %v317
  %v388 = vunpack.c.l.b16 %v318
  %v389 = vunpack.c.l.b16 %v319
  %v390 = vunpack.c.h.b16 %v319
  %v391 = vunpack.c.l.b16 %v320
  %v392 = vunpack.c.l.b16 %v321
  %v393 = vunpack.c.h.b16 %v321
  %v394 = vunpack.c.l.b16 %v322
  %v395 = vunpack.c.l.b16 %v323
  %v396 = vunpack.c.h.b16 %v323
  %v397 = vunpack.c.l.b16 %v324
  %v398 = vunpack.c.l.b16 %v325
  %v399 = vunpack.c.h.b16 %v325
  %v400 = vunpack.c.l.b16 %v326
  %v401 = vunpack.c.l.b16 %v327
  %v402 = vunpack.c.h.b16 %v327
  %v403 = vunpack.c.l.b16 %v328
  %v404 = vunpack.c.l.b16 %v329
  %v405 = vunpack.c.h.b16 %v329
  %v406 = vunpack.c.l.b16 %v330
  %v407 = vunpack.c.l.b16 %v331
  %v408 = vunpack.c.h.b16 %v331
  %v409 = vunpack.c.l.b16 %v332
  %v410 = vunpack.c.l.b16 %v333
  %v411 = vunpack.c.h.b16 %v333
  %v412 = vunpack.c.l.b16 %v334
  %v413 = vunpack.c.l.b16 %v335
  %v414 = vunpack.c.h.b16 %v335
  %v415 = vunpack.c.l.b16 %v336
  %v416 = vunpack.c.l.b16 %v337
  %v417 = vunpack.c.h.b16 %v337
  %v418 = vunpack.c.l.b16 %v338
  %v419 = vpack.c.b16 %v374, %v371
  %v420 = vpack.c.b16 %v375, %v372
  %v421 = vpack.c.b16 %v376, %v373
  %v422 = vpack.c.b16 %v380, %v377
  %v423 = vpack.c.b16 %v381, %v378
  %v424 = vpack.c.b16 %v382, %v379
  %v425 = vpack.c.b16 %v386, %v383
  %v426 = vpack.c.b16 %v387, %v384
  %v427 = vpack.c.b16 %v388, %v385
  %v428 = vpack.c.b16 %v392, %v389
  %v429 = vpack.c.b16 %v393, %v390
  %v430 = vpack.c.b16 %v394, %v391
  %v431 = vpack.c.b16 %v398, %v395
  %v432 = vpack.c.b16 %v399, %v396
  %v433 = vpack.c.b16 %v400, %v397
  %v434 = vpack.c.b16 %v404, %v401
  %v435 = vpack.c.b16 %v405, %v402
  %v436 = vpack.c.b16 %v406, %v403
  %v437 = vpack.c.b16 %v410, %v407
  %v438 = vpack.c.b16 %v411, %v408
  %v439 = vpack.c.b16 %v412, %v409
  %v440 = vpack.c.b16 %v416, %v413
  %v441 = vpack.c.b16 %v417, %v414
  %v442 = vpack.c.b16 %v418, %v415
  %467 = vmatprep.subr.bf16.mxu0 %v420
  %468 = vmatpush1.bf16.msra.mxu0 %v419
  %469 = vmatprep.subr.bf16.mxu0 %v423
  %470 = vmatpush1.bf16.msra.mxu0 %v422
  %471 = vmatprep.subr.bf16.mxu0 %v426
  %472 = vmatpush1.bf16.msra.mxu0 %v425
  %473 = vmatprep.subr.bf16.mxu0 %v429
  %474 = vmatpush1.bf16.msra.mxu0 %v428
  %475 = vmatprep.subr.bf16.mxu0 %v432
  %476 = vmatpush1.bf16.msra.mxu0 %v431
  %477 = vmatprep.subr.bf16.mxu0 %v435
  %478 = vmatpush1.bf16.msra.mxu0 %v434
  %479 = vmatprep.subr.bf16.mxu0 %v438
  %480 = vmatpush1.bf16.msra.mxu0 %v437
  %481 = vmatprep.subr.bf16.mxu0 %v441
  %482 = vmatpush1.bf16.msra.mxu0 %v440
  %483 = vmatprep.subr.bf16.mxu0 0
  %484 = vmatpush1.bf16.msra.mxu0 0
  %485 = vmatprep.subr.bf16.mxu0 0
  %486 = vmatpush1.bf16.msra.mxu0 0
  %487 = vmatprep.subr.bf16.mxu0 0
  %488 = vmatpush1.bf16.msra.mxu0 0
  %489 = vmatprep.subr.bf16.mxu0 0
  %490 = vmatpush1.bf16.msra.mxu0 0
  %491 = vmatprep.subr.bf16.mxu0 0
  %492 = vmatpush1.bf16.msra.mxu0 0
  %493 = vmatprep.subr.bf16.mxu0 0
  %494 = vmatpush1.bf16.msra.mxu0 0
  %495 = vmatprep.subr.bf16.mxu0 0
  %496 = vmatpush1.bf16.msra.mxu0 0
  %497 = vmatprep.subr.bf16.mxu0 0
  %498 = vmatpush1.bf16.msra.mxu0 0
  %499 = vmatprep.mubr.bf16.mxu0 0
  %500 = vmatmul.mubr.bf16.gmra.mrb[0].mxu0 %v301
  %v501 = vpop.f32.mrb[0].mxu0
  %v502 = vadd.f32 0.0, %v501
  %v503 = vpop.f32.mrb[0].mxu0
  %v504 = vadd.f32 0.0, %v503
  %v505 = vpop.f32.mrb[0].mxu0
  %v506 = vpop.f32.mrb[0].mxu0
  %507 = vdwg.mxu0
  %508 = vmatprep.subr.bf16.mxu0 0
  %509 = vmatpush1.bf16.msra.mxu0 %v421
  %510 = vmatprep.subr.bf16.mxu0 0
  %511 = vmatpush1.bf16.msra.mxu0 %v424
  %512 = vmatprep.subr.bf16.mxu0 0
  %513 = vmatpush1.bf16.msra.mxu0 %v427
  %514 = vmatprep.subr.bf16.mxu0 0
  %515 = vmatpush1.bf16.msra.mxu0 %v430
  %516 = vmatprep.subr.bf16.mxu0 0
  %517 = vmatpush1.bf16.msra.mxu0 %v433
  %518 = vmatprep.subr.bf16.mxu0 0
  %519 = vmatpush1.bf16.msra.mxu0 %v436
  %520 = vmatprep.subr.bf16.mxu0 0
  %521 = vmatpush1.bf16.msra.mxu0 %v439
  %522 = vmatprep.subr.bf16.mxu0 0
  %523 = vmatpush1.bf16.msra.mxu0 %v442
  %524 = vmatprep.subr.bf16.mxu0 0
  %525 = vmatpush1.bf16.msra.mxu0 0
  %526 = vmatprep.subr.bf16.mxu0 0
  %527 = vmatpush1.bf16.msra.mxu0 0
  %528 = vmatprep.subr.bf16.mxu0 0
  %529 = vmatpush1.bf16.msra.mxu0 0
  %530 = vmatprep.subr.bf16.mxu0 0
  %531 = vmatpush1.bf16.msra.mxu0 0
  %532 = vmatprep.subr.bf16.mxu0 0
  %533 = vmatpush1.bf16.msra.mxu0 0
  %534 = vmatprep.subr.bf16.mxu0 0
  %535 = vmatpush1.bf16.msra.mxu0 0
  %536 = vmatprep.subr.bf16.mxu0 0
  %537 = vmatpush1.bf16.msra.mxu0 0
  %538 = vmatprep.subr.bf16.mxu0 0
  %539 = vmatpush1.bf16.msra.mxu0 0
  %540 = vmatprep.mubr.bf16.mxu0 0
  %541 = vmatmul.mubr.bf16.gmra.mrb[0].mxu0 %v301
  %v542 = vpop.f32.mrb[0].mxu0
  %v543 = vadd.f32 0.0, %v542
  %v544 = vpop.f32.mrb[0].mxu0
  %v545 = vpop.f32.mrb[0].mxu0
  %v546 = vpop.f32.mrb[0].mxu0
  %547 = vdwg.mxu0
  %v548 = vadd.f32 %v304, %v502
  %v549 = vxor.u32 %v548, 2147483648
  %v550 = vmul.f32 %v549, 1.442695
  %v551 = vpow.pop %v550
  %v552 = vadd.f32 %v551, 1.0
  %v553 = vrcp.pop %v552
  %v554 = vmul.f32 1.0, %v553
  %v555 = vadd.f32 %v305, %v504
  %v556 = vxor.u32 %v555, 2147483648
  %v557 = vmul.f32 %v556, 1.442695
  %v558 = vpow.pop %v557
  %v559 = vadd.f32 %v558, 1.0
  %v560 = vrcp.pop %v559
  %v561 = vmul.f32 1.0, %v560
  %v562 = vadd.f32 %v543, %v31
  %v563 = vmul.f32 %v554, %v562
  %v564 = vadd.f32 %v306, %v563
  %v565 = vtanh.pop %v564
  %v566 = vsub.f32 1.0, %v561
  %v567 = vmul.f32 %v566, %v565
  %v568 = vmul.f32 %v561, %v300
  %v569 = vadd.f32 %v567, %v568
  %v570 = vpack.c.bf16 %v569, %v569
  %s571 = scalar_lea.vmem %s4, 4
  %572 = vst [vmem:[%s571] sm:$0xf] %v570
  %s573 = scalar_lea.vmem %s0, 48
  %v574 = vld [vmem:[%s573] sm:$0xff]
  %v575 = vld [vmem:[%s573 + $0x8] sm:$0xff]
  %v576 = vld [vmem:[%s573 + $0x10] sm:$0xff]
  %v577 = vld [vmem:[%s2] sm:$0xff]
  %v578 = vld [vmem:[%s2 + $0x8] sm:$0xf]
  %v579 = vld [vmem:[%s2 + $0xc] sm:$0xff]
  %v580 = vld [vmem:[%s2 + $0x14] sm:$0xf]
  %v581 = vld [vmem:[%s2 + $0x18] sm:$0xff]
  %v582 = vld [vmem:[%s2 + $0x20] sm:$0xf]
  %v583 = vld [vmem:[%s2 + $0x24] sm:$0xff]
  %v584 = vld [vmem:[%s2 + $0x2c] sm:$0xf]
  %v585 = vld [vmem:[%s2 + $0x30] sm:$0xff]
  %v586 = vld [vmem:[%s2 + $0x38] sm:$0xf]
  %v587 = vld [vmem:[%s2 + $0x3c] sm:$0xff]
  %v588 = vld [vmem:[%s2 + $0x44] sm:$0xf]
  %v589 = vld [vmem:[%s2 + $0x48] sm:$0xff]
  %v590 = vld [vmem:[%s2 + $0x50] sm:$0xf]
  %v591 = vld [vmem:[%s2 + $0x54] sm:$0xff]
  %v592 = vld [vmem:[%s2 + $0x5c] sm:$0xf]
  %v593 = vld [vmem:[%s2 + $0x60] sm:$0xff]
  %v594 = vld [vmem:[%s2 + $0x68] sm:$0xf]
  %v595 = vld [vmem:[%s2 + $0x6c] sm:$0xff]
  %v596 = vld [vmem:[%s2 + $0x74] sm:$0xf]
  %v597 = vld [vmem:[%s2 + $0x78] sm:$0xff]
  %v598 = vld [vmem:[%s2 + $0x80] sm:$0xf]
  %v599 = vld [vmem:[%s2 + $0x84] sm:$0xff]
  %v600 = vld [vmem:[%s2 + $0x8c] sm:$0xf]
  %v601 = vld [vmem:[%s2 + $0x90] sm:$0xff]
  %v602 = vld [vmem:[%s2 + $0x98] sm:$0xf]
  %v603 = vld [vmem:[%s2 + $0x9c] sm:$0xff]
  %v604 = vld [vmem:[%s2 + $0xa4] sm:$0xf]
  %v605 = vld [vmem:[%s2 + $0xa8] sm:$0xff]
  %v606 = vld [vmem:[%s2 + $0xb0] sm:$0xf]
  %v607 = vld [vmem:[%s2 + $0xb4] sm:$0xff]
  %v608 = vld [vmem:[%s2 + $0xbc] sm:$0xf]
  %v641 = vunpack.c.l.b16 %v577
  %v642 = vunpack.c.h.b16 %v577
  %v643 = vunpack.c.l.b16 %v578
  %v644 = vunpack.c.l.b16 %v579
  %v645 = vunpack.c.h.b16 %v579
  %v646 = vunpack.c.l.b16 %v580
  %v647 = vunpack.c.l.b16 %v581
  %v648 = vunpack.c.h.b16 %v581
  %v649 = vunpack.c.l.b16 %v582
  %v650 = vunpack.c.l.b16 %v583
  %v651 = vunpack.c.h.b16 %v583
  %v652 = vunpack.c.l.b16 %v584
  %v653 = vunpack.c.l.b16 %v585
  %v654 = vunpack.c.h.b16 %v585
  %v655 = vunpack.c.l.b16 %v586
  %v656 = vunpack.c.l.b16 %v587
  %v657 = vunpack.c.h.b16 %v587
  %v658 = vunpack.c.l.b16 %v588
  %v659 = vunpack.c.l.b16 %v589
  %v660 = vunpack.c.h.b16 %v589
  %v661 = vunpack.c.l.b16 %v590
  %v662 = vunpack.c.l.b16 %v591
  %v663 = vunpack.c.h.b16 %v591
  %v664 = vunpack.c.l.b16 %v592
  %v665 = vunpack.c.l.b16 %v593
  %v666 = vunpack.c.h.b16 %v593
  %v667 = vunpack.c.l.b16 %v594
  %v668 = vunpack.c.l.b16 %v595
  %v669 = vunpack.c.h.b16 %v595
  %v670 = vunpack.c.l.b16 %v596
  %v671 = vunpack.c.l.b16 %v597
  %v672 = vunpack.c.h.b16 %v597
  %v673 = vunpack.c.l.b16 %v598
  %v674 = vunpack.c.l.b16 %v599
  %v675 = vunpack.c.h.b16 %v599
  %v676 = vunpack.c.l.b16 %v600
  %v677 = vunpack.c.l.b16 %v601
  %v678 = vunpack.c.h.b16 %v601
  %v679 = vunpack.c.l.b16 %v602
  %v680 = vunpack.c.l.b16 %v603
  %v681 = vunpack.c.h.b16 %v603
  %v682 = vunpack.c.l.b16 %v604
  %v683 = vunpack.c.l.b16 %v605
  %v684 = vunpack.c.h.b16 %v605
  %v685 = vunpack.c.l.b16 %v606
  %v686 = vunpack.c.l.b16 %v607
  %v687 = vunpack.c.h.b16 %v607
  %v688 = vunpack.c.l.b16 %v608
  %v689 = vpack.c.b16 %v644, %v641
  %v690 = vpack.c.b16 %v645, %v642
  %v691 = vpack.c.b16 %v646, %v643
  %v692 = vpack.c.b16 %v650, %v647
  %v693 = vpack.c.b16 %v651, %v648
  %v694 = vpack.c.b16 %v652, %v649
  %v695 = vpack.c.b16 %v656, %v653
  %v696 = vpack.c.b16 %v657, %v654
  %v697 = vpack.c.b16 %v658, %v655
  %v698 = vpack.c.b16 %v662, %v659
  %v699 = vpack.c.b16 %v663, %v660
  %v700 = vpack.c.b16 %v664, %v661
  %v701 = vpack.c.b16 %v668, %v665
  %v702 = vpack.c.b16 %v669, %v666
  %v703 = vpack.c.b16 %v670, %v667
  %v704 = vpack.c.b16 %v674, %v671
  %v705 = vpack.c.b16 %v675, %v672
  %v706 = vpack.c.b16 %v676, %v673
  %v707 = vpack.c.b16 %v680, %v677
  %v708 = vpack.c.b16 %v681, %v678
  %v709 = vpack.c.b16 %v682, %v679
  %v710 = vpack.c.b16 %v686, %v683
  %v711 = vpack.c.b16 %v687, %v684
  %v712 = vpack.c.b16 %v688, %v685
  %737 = vmatprep.subr.bf16.mxu0 %v690
  %738 = vmatpush1.bf16.msra.mxu0 %v689
  %739 = vmatprep.subr.bf16.mxu0 %v693
  %740 = vmatpush1.bf16.msra.mxu0 %v692
  %741 = vmatprep.subr.bf16.mxu0 %v696
  %742 = vmatpush1.bf16.msra.mxu0 %v695
  %743 = vmatprep.subr.bf16.mxu0 %v699
  %744 = vmatpush1.bf16.msra.mxu0 %v698
  %745 = vmatprep.subr.bf16.mxu0 %v702
  %746 = vmatpush1.bf16.msra.mxu0 %v701
  %747 = vmatprep.subr.bf16.mxu0 %v705
  %748 = vmatpush1.bf16.msra.mxu0 %v704
  %749 = vmatprep.subr.bf16.mxu0 %v708
  %750 = vmatpush1.bf16.msra.mxu0 %v707
  %751 = vmatprep.subr.bf16.mxu0 %v711
  %752 = vmatpush1.bf16.msra.mxu0 %v710
  %753 = vmatprep.subr.bf16.mxu0 0
  %754 = vmatpush1.bf16.msra.mxu0 0
  %755 = vmatprep.subr.bf16.mxu0 0
  %756 = vmatpush1.bf16.msra.mxu0 0
  %757 = vmatprep.subr.bf16.mxu0 0
  %758 = vmatpush1.bf16.msra.mxu0 0
  %759 = vmatprep.subr.bf16.mxu0 0
  %760 = vmatpush1.bf16.msra.mxu0 0
  %761 = vmatprep.subr.bf16.mxu0 0
  %762 = vmatpush1.bf16.msra.mxu0 0
  %763 = vmatprep.subr.bf16.mxu0 0
  %764 = vmatpush1.bf16.msra.mxu0 0
  %765 = vmatprep.subr.bf16.mxu0 0
  %766 = vmatpush1.bf16.msra.mxu0 0
  %767 = vmatprep.subr.bf16.mxu0 0
  %768 = vmatpush1.bf16.msra.mxu0 0
  %769 = vmatprep.mubr.bf16.mxu0 0
  %770 = vmatmul.mubr.bf16.gmra.mrb[0].mxu0 %v570
  %v771 = vpop.f32.mrb[0].mxu0
  %v772 = vadd.f32 0.0, %v771
  %v773 = vpop.f32.mrb[0].mxu0
  %v774 = vadd.f32 0.0, %v773
  %v775 = vpop.f32.mrb[0].mxu0
  %v776 = vpop.f32.mrb[0].mxu0
  %777 = vdwg.mxu0
  %778 = vmatprep.subr.bf16.mxu0 0
  %779 = vmatpush1.bf16.msra.mxu0 %v691
  %780 = vmatprep.subr.bf16.mxu0 0
  %781 = vmatpush1.bf16.msra.mxu0 %v694
  %782 = vmatprep.subr.bf16.mxu0 0
  %783 = vmatpush1.bf16.msra.mxu0 %v697
  %784 = vmatprep.subr.bf16.mxu0 0
  %785 = vmatpush1.bf16.msra.mxu0 %v700
  %786 = vmatprep.subr.bf16.mxu0 0
  %787 = vmatpush1.bf16.msra.mxu0 %v703
  %788 = vmatprep.subr.bf16.mxu0 0
  %789 = vmatpush1.bf16.msra.mxu0 %v706
  %790 = vmatprep.subr.bf16.mxu0 0
  %791 = vmatpush1.bf16.msra.mxu0 %v709
  %792 = vmatprep.subr.bf16.mxu0 0
  %793 = vmatpush1.bf16.msra.mxu0 %v712
  %794 = vmatprep.subr.bf16.mxu0 0
  %795 = vmatpush1.bf16.msra.mxu0 0
  %796 = vmatprep.subr.bf16.mxu0 0
  %797 = vmatpush1.bf16.msra.mxu0 0
  %798 = vmatprep.subr.bf16.mxu0 0
  %799 = vmatpush1.bf16.msra.mxu0 0
  %800 = vmatprep.subr.bf16.mxu0 0
  %801 = vmatpush1.bf16.msra.mxu0 0
  %802 = vmatprep.subr.bf16.mxu0 0
  %803 = vmatpush1.bf16.msra.mxu0 0
  %804 = vmatprep.subr.bf16.mxu0 0
  %805 = vmatpush1.bf16.msra.mxu0 0
  %806 = vmatprep.subr.bf16.mxu0 0
  %807 = vmatpush1.bf16.msra.mxu0 0
  %808 = vmatprep.subr.bf16.mxu0 0
  %809 = vmatpush1.bf16.msra.mxu0 0
  %810 = vmatprep.mubr.bf16.mxu0 0
  %811 = vmatmul.mubr.bf16.gmra.mrb[0].mxu0 %v570
  %v812 = vpop.f32.mrb[0].mxu0
  %v813 = vadd.f32 0.0, %v812
  %v814 = vpop.f32.mrb[0].mxu0
  %v815 = vpop.f32.mrb[0].mxu0
  %v816 = vpop.f32.mrb[0].mxu0
  %817 = vdwg.mxu0
  %v818 = vadd.f32 %v574, %v772
  %v819 = vxor.u32 %v818, 2147483648
  %v820 = vmul.f32 %v819, 1.442695
  %v821 = vpow.pop %v820
  %v822 = vadd.f32 %v821, 1.0
  %v823 = vrcp.pop %v822
  %v824 = vmul.f32 1.0, %v823
  %v825 = vadd.f32 %v575, %v774
  %v826 = vxor.u32 %v825, 2147483648
  %v827 = vmul.f32 %v826, 1.442695
  %v828 = vpow.pop %v827
  %v829 = vadd.f32 %v828, 1.0
  %v830 = vrcp.pop %v829
  %v831 = vmul.f32 1.0, %v830
  %v832 = vadd.f32 %v813, %v31
  %v833 = vmul.f32 %v824, %v832
  %v834 = vadd.f32 %v576, %v833
  %v835 = vtanh.pop %v834
  %v836 = vsub.f32 1.0, %v831
  %v837 = vmul.f32 %v836, %v835
  %v838 = vmul.f32 %v831, %v569
  %v839 = vadd.f32 %v837, %v838
  %v840 = vpack.c.bf16 %v839, %v839
  %s841 = scalar_lea.vmem %s4, 8
  %842 = vst [vmem:[%s841] sm:$0xf] %v840
  %s843 = scalar_lea.vmem %s0, 72
  %v844 = vld [vmem:[%s843] sm:$0xff]
  %v845 = vld [vmem:[%s843 + $0x8] sm:$0xff]
  %v846 = vld [vmem:[%s843 + $0x10] sm:$0xff]
  %v847 = vld [vmem:[%s2] sm:$0xff]
  %v848 = vld [vmem:[%s2 + $0x8] sm:$0xf]
  %v849 = vld [vmem:[%s2 + $0xc] sm:$0xff]
  %v850 = vld [vmem:[%s2 + $0x14] sm:$0xf]
  %v851 = vld [vmem:[%s2 + $0x18] sm:$0xff]
  %v852 = vld [vmem:[%s2 + $0x20] sm:$0xf]
  %v853 = vld [vmem:[%s2 + $0x24] sm:$0xff]
  %v854 = vld [vmem:[%s2 + $0x2c] sm:$0xf]
  %v855 = vld [vmem:[%s2 + $0x30] sm:$0xff]
  %v856 = vld [vmem:[%s2 + $0x38] sm:$0xf]
  %v857 = vld [vmem:[%s2 + $0x3c] sm:$0xff]
  %v858 = vld [vmem:[%s2 + $0x44] sm:$0xf]
  %v859 = vld [vmem:[%s2 + $0x48] sm:$0xff]
  %v860 = vld [vmem:[%s2 + $0x50] sm:$0xf]
  %v861 = vld [vmem:[%s2 + $0x54] sm:$0xff]
  %v862 = vld [vmem:[%s2 + $0x5c] sm:$0xf]
  %v863 = vld [vmem:[%s2 + $0x60] sm:$0xff]
  %v864 = vld [vmem:[%s2 + $0x68] sm:$0xf]
  %v865 = vld [vmem:[%s2 + $0x6c] sm:$0xff]
  %v866 = vld [vmem:[%s2 + $0x74] sm:$0xf]
  %v867 = vld [vmem:[%s2 + $0x78] sm:$0xff]
  %v868 = vld [vmem:[%s2 + $0x80] sm:$0xf]
  %v869 = vld [vmem:[%s2 + $0x84] sm:$0xff]
  %v870 = vld [vmem:[%s2 + $0x8c] sm:$0xf]
  %v871 = vld [vmem:[%s2 + $0x90] sm:$0xff]
  %v872 = vld [vmem:[%s2 + $0x98] sm:$0xf]
  %v873 = vld [vmem:[%s2 + $0x9c] sm:$0xff]
  %v874 = vld [vmem:[%s2 + $0xa4] sm:$0xf]
  %v875 = vld [vmem:[%s2 + $0xa8] sm:$0xff]
  %v876 = vld [vmem:[%s2 + $0xb0] sm:$0xf]
  %v877 = vld [vmem:[%s2 + $0xb4] sm:$0xff]
  %v878 = vld [vmem:[%s2 + $0xbc] sm:$0xf]
  %v911 = vunpack.c.l.b16 %v847
  %v912 = vunpack.c.h.b16 %v847
  %v913 = vunpack.c.l.b16 %v848
  %v914 = vunpack.c.l.b16 %v849
  %v915 = vunpack.c.h.b16 %v849
  %v916 = vunpack.c.l.b16 %v850
  %v917 = vunpack.c.l.b16 %v851
  %v918 = vunpack.c.h.b16 %v851
  %v919 = vunpack.c.l.b16 %v852
  %v920 = vunpack.c.l.b16 %v853
  %v921 = vunpack.c.h.b16 %v853
  %v922 = vunpack.c.l.b16 %v854
  %v923 = vunpack.c.l.b16 %v855
  %v924 = vunpack.c.h.b16 %v855
  %v925 = vunpack.c.l.b16 %v856
  %v926 = vunpack.c.l.b16 %v857
  %v927 = vunpack.c.h.b16 %v857
  %v928 = vunpack.c.l.b16 %v858
  %v929 = vunpack.c.l.b16 %v859
  %v930 = vunpack.c.h.b16 %v859
  %v931 = vunpack.c.l.b16 %v860
  %v932 = vunpack.c.l.b16 %v861
  %v933 = vunpack.c.h.b16 %v861
  %v934 = vunpack.c.l.b16 %v862
  %v935 = vunpack.c.l.b16 %v863
  %v936 = vunpack.c.h.b16 %v863
  %v937 = vunpack.c.l.b16 %v864
  %v938 = vunpack.c.l.b16 %v865
  %v939 = vunpack.c.h.b16 %v865
  %v940 = vunpack.c.l.b16 %v866
  %v941 = vunpack.c.l.b16 %v867
  %v942 = vunpack.c.h.b16 %v867
  %v943 = vunpack.c.l.b16 %v868
  %v944 = vunpack.c.l.b16 %v869
  %v945 = vunpack.c.h.b16 %v869
  %v946 = vunpack.c.l.b16 %v870
  %v947 = vunpack.c.l.b16 %v871
  %v948 = vunpack.c.h.b16 %v871
  %v949 = vunpack.c.l.b16 %v872
  %v950 = vunpack.c.l.b16 %v873
  %v951 = vunpack.c.h.b16 %v873
  %v952 = vunpack.c.l.b16 %v874
  %v953 = vunpack.c.l.b16 %v875
  %v954 = vunpack.c.h.b16 %v875
  %v955 = vunpack.c.l.b16 %v876
  %v956 = vunpack.c.l.b16 %v877
  %v957 = vunpack.c.h.b16 %v877
  %v958 = vunpack.c.l.b16 %v878
  %v959 = vpack.c.b16 %v914, %v911
  %v960 = vpack.c.b16 %v915, %v912
  %v961 = vpack.c.b16 %v916, %v913
  %v962 = vpack.c.b16 %v920, %v917
  %v963 = vpack.c.b16 %v921, %v918
  %v964 = vpack.c.b16 %v922, %v919
  %v965 = vpack.c.b16 %v926, %v923
  %v966 = vpack.c.b16 %v927, %v924
  %v967 = vpack.c.b16 %v928, %v925
  %v968 = vpack.c.b16 %v932, %v929
  %v969 = vpack.c.b16 %v933, %v930
  %v970 = vpack.c.b16 %v934, %v931
  %v971 = vpack.c.b16 %v938, %v935
  %v972 = vpack.c.b16 %v939, %v936
  %v973 = vpack.c.b16 %v940, %v937
  %v974 = vpack.c.b16 %v944, %v941
  %v975 = vpack.c.b16 %v945, %v942
  %v976 = vpack.c.b16 %v946, %v943
  %v977 = vpack.c.b16 %v950, %v947
  %v978 = vpack.c.b16 %v951, %v948
  %v979 = vpack.c.b16 %v952, %v949
  %v980 = vpack.c.b16 %v956, %v953
  %v981 = vpack.c.b16 %v957, %v954
  %v982 = vpack.c.b16 %v958, %v955
  %1007 = vmatprep.subr.bf16.mxu0 %v960
  %1008 = vmatpush1.bf16.msra.mxu0 %v959
  %1009 = vmatprep.subr.bf16.mxu0 %v963
  %1010 = vmatpush1.bf16.msra.mxu0 %v962
  %1011 = vmatprep.subr.bf16.mxu0 %v966
  %1012 = vmatpush1.bf16.msra.mxu0 %v965
  %1013 = vmatprep.subr.bf16.mxu0 %v969
  %1014 = vmatpush1.bf16.msra.mxu0 %v968
  %1015 = vmatprep.subr.bf16.mxu0 %v972
  %1016 = vmatpush1.bf16.msra.mxu0 %v971
  %1017 = vmatprep.subr.bf16.mxu0 %v975
  %1018 = vmatpush1.bf16.msra.mxu0 %v974
  %1019 = vmatprep.subr.bf16.mxu0 %v978
  %1020 = vmatpush1.bf16.msra.mxu0 %v977
  %1021 = vmatprep.subr.bf16.mxu0 %v981
  %1022 = vmatpush1.bf16.msra.mxu0 %v980
  %1023 = vmatprep.subr.bf16.mxu0 0
  %1024 = vmatpush1.bf16.msra.mxu0 0
  %1025 = vmatprep.subr.bf16.mxu0 0
  %1026 = vmatpush1.bf16.msra.mxu0 0
  %1027 = vmatprep.subr.bf16.mxu0 0
  %1028 = vmatpush1.bf16.msra.mxu0 0
  %1029 = vmatprep.subr.bf16.mxu0 0
  %1030 = vmatpush1.bf16.msra.mxu0 0
  %1031 = vmatprep.subr.bf16.mxu0 0
  %1032 = vmatpush1.bf16.msra.mxu0 0
  %1033 = vmatprep.subr.bf16.mxu0 0
  %1034 = vmatpush1.bf16.msra.mxu0 0
  %1035 = vmatprep.subr.bf16.mxu0 0
  %1036 = vmatpush1.bf16.msra.mxu0 0
  %1037 = vmatprep.subr.bf16.mxu0 0
  %1038 = vmatpush1.bf16.msra.mxu0 0
  %1039 = vmatprep.mubr.bf16.mxu0 0
  %1040 = vmatmul.mubr.bf16.gmra.mrb[0].mxu0 %v840
  %v1041 = vpop.f32.mrb[0].mxu0
  %v1042 = vadd.f32 0.0, %v1041
  %v1043 = vpop.f32.mrb[0].mxu0
  %v1044 = vadd.f32 0.0, %v1043
  %v1045 = vpop.f32.mrb[0].mxu0
  %v1046 = vpop.f32.mrb[0].mxu0
  %1047 = vdwg.mxu0
  %1048 = vmatprep.subr.bf16.mxu0 0
  %1049 = vmatpush1.bf16.msra.mxu0 %v961
  %1050 = vmatprep.subr.bf16.mxu0 0
  %1051 = vmatpush1.bf16.msra.mxu0 %v964
  %1052 = vmatprep.subr.bf16.mxu0 0
  %1053 = vmatpush1.bf16.msra.mxu0 %v967
  %1054 = vmatprep.subr.bf16.mxu0 0
  %1055 = vmatpush1.bf16.msra.mxu0 %v970
  %1056 = vmatprep.subr.bf16.mxu0 0
  %1057 = vmatpush1.bf16.msra.mxu0 %v973
  %1058 = vmatprep.subr.bf16.mxu0 0
  %1059 = vmatpush1.bf16.msra.mxu0 %v976
  %1060 = vmatprep.subr.bf16.mxu0 0
  %1061 = vmatpush1.bf16.msra.mxu0 %v979
  %1062 = vmatprep.subr.bf16.mxu0 0
  %1063 = vmatpush1.bf16.msra.mxu0 %v982
  %1064 = vmatprep.subr.bf16.mxu0 0
  %1065 = vmatpush1.bf16.msra.mxu0 0
  %1066 = vmatprep.subr.bf16.mxu0 0
  %1067 = vmatpush1.bf16.msra.mxu0 0
  %1068 = vmatprep.subr.bf16.mxu0 0
  %1069 = vmatpush1.bf16.msra.mxu0 0
  %1070 = vmatprep.subr.bf16.mxu0 0
  %1071 = vmatpush1.bf16.msra.mxu0 0
  %1072 = vmatprep.subr.bf16.mxu0 0
  %1073 = vmatpush1.bf16.msra.mxu0 0
  %1074 = vmatprep.subr.bf16.mxu0 0
  %1075 = vmatpush1.bf16.msra.mxu0 0
  %1076 = vmatprep.subr.bf16.mxu0 0
  %1077 = vmatpush1.bf16.msra.mxu0 0
  %1078 = vmatprep.subr.bf16.mxu0 0
  %1079 = vmatpush1.bf16.msra.mxu0 0
  %1080 = vmatprep.mubr.bf16.mxu0 0
  %1081 = vmatmul.mubr.bf16.gmra.mrb[0].mxu0 %v840
  %v1082 = vpop.f32.mrb[0].mxu0
  %v1083 = vadd.f32 0.0, %v1082
  %v1084 = vpop.f32.mrb[0].mxu0
  %v1085 = vpop.f32.mrb[0].mxu0
  %v1086 = vpop.f32.mrb[0].mxu0
  %1087 = vdwg.mxu0
  %v1088 = vadd.f32 %v844, %v1042
  %v1089 = vxor.u32 %v1088, 2147483648
  %v1090 = vmul.f32 %v1089, 1.442695
  %v1091 = vpow.pop %v1090
  %v1092 = vadd.f32 %v1091, 1.0
  %v1093 = vrcp.pop %v1092
  %v1094 = vmul.f32 1.0, %v1093
  %v1095 = vadd.f32 %v845, %v1044
  %v1096 = vxor.u32 %v1095, 2147483648
  %v1097 = vmul.f32 %v1096, 1.442695
  %v1098 = vpow.pop %v1097
  %v1099 = vadd.f32 %v1098, 1.0
  %v1100 = vrcp.pop %v1099
  %v1101 = vmul.f32 1.0, %v1100
  %v1102 = vadd.f32 %v1083, %v31
  %v1103 = vmul.f32 %v1094, %v1102
  %v1104 = vadd.f32 %v846, %v1103
  %v1105 = vtanh.pop %v1104
  %v1106 = vsub.f32 1.0, %v1101
  %v1107 = vmul.f32 %v1106, %v1105
  %v1108 = vmul.f32 %v1101, %v839
  %v1109 = vadd.f32 %v1107, %v1108
  %v1110 = vpack.c.bf16 %v1109, %v1109
  %s1111 = scalar_lea.vmem %s4, 12
  %1112 = vst [vmem:[%s1111] sm:$0xf] %v1110
  %s1113 = scalar_lea.vmem %s0, 96
  %v1114 = vld [vmem:[%s1113] sm:$0xff]
  %v1115 = vld [vmem:[%s1113 + $0x8] sm:$0xff]
  %v1116 = vld [vmem:[%s1113 + $0x10] sm:$0xff]
  %v1117 = vld [vmem:[%s2] sm:$0xff]
  %v1118 = vld [vmem:[%s2 + $0x8] sm:$0xf]
  %v1119 = vld [vmem:[%s2 + $0xc] sm:$0xff]
  %v1120 = vld [vmem:[%s2 + $0x14] sm:$0xf]
  %v1121 = vld [vmem:[%s2 + $0x18] sm:$0xff]
  %v1122 = vld [vmem:[%s2 + $0x20] sm:$0xf]
  %v1123 = vld [vmem:[%s2 + $0x24] sm:$0xff]
  %v1124 = vld [vmem:[%s2 + $0x2c] sm:$0xf]
  %v1125 = vld [vmem:[%s2 + $0x30] sm:$0xff]
  %v1126 = vld [vmem:[%s2 + $0x38] sm:$0xf]
  %v1127 = vld [vmem:[%s2 + $0x3c] sm:$0xff]
  %v1128 = vld [vmem:[%s2 + $0x44] sm:$0xf]
  %v1129 = vld [vmem:[%s2 + $0x48] sm:$0xff]
  %v1130 = vld [vmem:[%s2 + $0x50] sm:$0xf]
  %v1131 = vld [vmem:[%s2 + $0x54] sm:$0xff]
  %v1132 = vld [vmem:[%s2 + $0x5c] sm:$0xf]
  %v1133 = vld [vmem:[%s2 + $0x60] sm:$0xff]
  %v1134 = vld [vmem:[%s2 + $0x68] sm:$0xf]
  %v1135 = vld [vmem:[%s2 + $0x6c] sm:$0xff]
  %v1136 = vld [vmem:[%s2 + $0x74] sm:$0xf]
  %v1137 = vld [vmem:[%s2 + $0x78] sm:$0xff]
  %v1138 = vld [vmem:[%s2 + $0x80] sm:$0xf]
  %v1139 = vld [vmem:[%s2 + $0x84] sm:$0xff]
  %v1140 = vld [vmem:[%s2 + $0x8c] sm:$0xf]
  %v1141 = vld [vmem:[%s2 + $0x90] sm:$0xff]
  %v1142 = vld [vmem:[%s2 + $0x98] sm:$0xf]
  %v1143 = vld [vmem:[%s2 + $0x9c] sm:$0xff]
  %v1144 = vld [vmem:[%s2 + $0xa4] sm:$0xf]
  %v1145 = vld [vmem:[%s2 + $0xa8] sm:$0xff]
  %v1146 = vld [vmem:[%s2 + $0xb0] sm:$0xf]
  %v1147 = vld [vmem:[%s2 + $0xb4] sm:$0xff]
  %v1148 = vld [vmem:[%s2 + $0xbc] sm:$0xf]
  %v1181 = vunpack.c.l.b16 %v1117
  %v1182 = vunpack.c.h.b16 %v1117
  %v1183 = vunpack.c.l.b16 %v1118
  %v1184 = vunpack.c.l.b16 %v1119
  %v1185 = vunpack.c.h.b16 %v1119
  %v1186 = vunpack.c.l.b16 %v1120
  %v1187 = vunpack.c.l.b16 %v1121
  %v1188 = vunpack.c.h.b16 %v1121
  %v1189 = vunpack.c.l.b16 %v1122
  %v1190 = vunpack.c.l.b16 %v1123
  %v1191 = vunpack.c.h.b16 %v1123
  %v1192 = vunpack.c.l.b16 %v1124
  %v1193 = vunpack.c.l.b16 %v1125
  %v1194 = vunpack.c.h.b16 %v1125
  %v1195 = vunpack.c.l.b16 %v1126
  %v1196 = vunpack.c.l.b16 %v1127
  %v1197 = vunpack.c.h.b16 %v1127
  %v1198 = vunpack.c.l.b16 %v1128
  %v1199 = vunpack.c.l.b16 %v1129
  %v1200 = vunpack.c.h.b16 %v1129
  %v1201 = vunpack.c.l.b16 %v1130
  %v1202 = vunpack.c.l.b16 %v1131
  %v1203 = vunpack.c.h.b16 %v1131
  %v1204 = vunpack.c.l.b16 %v1132
  %v1205 = vunpack.c.l.b16 %v1133
  %v1206 = vunpack.c.h.b16 %v1133
  %v1207 = vunpack.c.l.b16 %v1134
  %v1208 = vunpack.c.l.b16 %v1135
  %v1209 = vunpack.c.h.b16 %v1135
  %v1210 = vunpack.c.l.b16 %v1136
  %v1211 = vunpack.c.l.b16 %v1137
  %v1212 = vunpack.c.h.b16 %v1137
  %v1213 = vunpack.c.l.b16 %v1138
  %v1214 = vunpack.c.l.b16 %v1139
  %v1215 = vunpack.c.h.b16 %v1139
  %v1216 = vunpack.c.l.b16 %v1140
  %v1217 = vunpack.c.l.b16 %v1141
  %v1218 = vunpack.c.h.b16 %v1141
  %v1219 = vunpack.c.l.b16 %v1142
  %v1220 = vunpack.c.l.b16 %v1143
  %v1221 = vunpack.c.h.b16 %v1143
  %v1222 = vunpack.c.l.b16 %v1144
  %v1223 = vunpack.c.l.b16 %v1145
  %v1224 = vunpack.c.h.b16 %v1145
  %v1225 = vunpack.c.l.b16 %v1146
  %v1226 = vunpack.c.l.b16 %v1147
  %v1227 = vunpack.c.h.b16 %v1147
  %v1228 = vunpack.c.l.b16 %v1148
  %v1229 = vpack.c.b16 %v1184, %v1181
  %v1230 = vpack.c.b16 %v1185, %v1182
  %v1231 = vpack.c.b16 %v1186, %v1183
  %v1232 = vpack.c.b16 %v1190, %v1187
  %v1233 = vpack.c.b16 %v1191, %v1188
  %v1234 = vpack.c.b16 %v1192, %v1189
  %v1235 = vpack.c.b16 %v1196, %v1193
  %v1236 = vpack.c.b16 %v1197, %v1194
  %v1237 = vpack.c.b16 %v1198, %v1195
  %v1238 = vpack.c.b16 %v1202, %v1199
  %v1239 = vpack.c.b16 %v1203, %v1200
  %v1240 = vpack.c.b16 %v1204, %v1201
  %v1241 = vpack.c.b16 %v1208, %v1205
  %v1242 = vpack.c.b16 %v1209, %v1206
  %v1243 = vpack.c.b16 %v1210, %v1207
  %v1244 = vpack.c.b16 %v1214, %v1211
  %v1245 = vpack.c.b16 %v1215, %v1212
  %v1246 = vpack.c.b16 %v1216, %v1213
  %v1247 = vpack.c.b16 %v1220, %v1217
  %v1248 = vpack.c.b16 %v1221, %v1218
  %v1249 = vpack.c.b16 %v1222, %v1219
  %v1250 = vpack.c.b16 %v1226, %v1223
  %v1251 = vpack.c.b16 %v1227, %v1224
  %v1252 = vpack.c.b16 %v1228, %v1225
  %1277 = vmatprep.subr.bf16.mxu0 %v1230
  %1278 = vmatpush1.bf16.msra.mxu0 %v1229
  %1279 = vmatprep.subr.bf16.mxu0 %v1233
  %1280 = vmatpush1.bf16.msra.mxu0 %v1232
  %1281 = vmatprep.subr.bf16.mxu0 %v1236
  %1282 = vmatpush1.bf16.msra.mxu0 %v1235
  %1283 = vmatprep.subr.bf16.mxu0 %v1239
  %1284 = vmatpush1.bf16.msra.mxu0 %v1238
  %1285 = vmatprep.subr.bf16.mxu0 %v1242
  %1286 = vmatpush1.bf16.msra.mxu0 %v1241
  %1287 = vmatprep.subr.bf16.mxu0 %v1245
  %1288 = vmatpush1.bf16.msra.mxu0 %v1244
  %1289 = vmatprep.subr.bf16.mxu0 %v1248
  %1290 = vmatpush1.bf16.msra.mxu0 %v1247
  %1291 = vmatprep.subr.bf16.mxu0 %v1251
  %1292 = vmatpush1.bf16.msra.mxu0 %v1250
  %1293 = vmatprep.subr.bf16.mxu0 0
  %1294 = vmatpush1.bf16.msra.mxu0 0
  %1295 = vmatprep.subr.bf16.mxu0 0
  %1296 = vmatpush1.bf16.msra.mxu0 0
  %1297 = vmatprep.subr.bf16.mxu0 0
  %1298 = vmatpush1.bf16.msra.mxu0 0
  %1299 = vmatprep.subr.bf16.mxu0 0
  %1300 = vmatpush1.bf16.msra.mxu0 0
  %1301 = vmatprep.subr.bf16.mxu0 0
  %1302 = vmatpush1.bf16.msra.mxu0 0
  %1303 = vmatprep.subr.bf16.mxu0 0
  %1304 = vmatpush1.bf16.msra.mxu0 0
  %1305 = vmatprep.subr.bf16.mxu0 0
  %1306 = vmatpush1.bf16.msra.mxu0 0
  %1307 = vmatprep.subr.bf16.mxu0 0
  %1308 = vmatpush1.bf16.msra.mxu0 0
  %1309 = vmatprep.mubr.bf16.mxu0 0
  %1310 = vmatmul.mubr.bf16.gmra.mrb[0].mxu0 %v1110
  %v1311 = vpop.f32.mrb[0].mxu0
  %v1312 = vadd.f32 0.0, %v1311
  %v1313 = vpop.f32.mrb[0].mxu0
  %v1314 = vadd.f32 0.0, %v1313
  %v1315 = vpop.f32.mrb[0].mxu0
  %v1316 = vpop.f32.mrb[0].mxu0
  %1317 = vdwg.mxu0
  %1318 = vmatprep.subr.bf16.mxu0 0
  %1319 = vmatpush1.bf16.msra.mxu0 %v1231
  %1320 = vmatprep.subr.bf16.mxu0 0
  %1321 = vmatpush1.bf16.msra.mxu0 %v1234
  %1322 = vmatprep.subr.bf16.mxu0 0
  %1323 = vmatpush1.bf16.msra.mxu0 %v1237
  %1324 = vmatprep.subr.bf16.mxu0 0
  %1325 = vmatpush1.bf16.msra.mxu0 %v1240
  %1326 = vmatprep.subr.bf16.mxu0 0
  %1327 = vmatpush1.bf16.msra.mxu0 %v1243
  %1328 = vmatprep.subr.bf16.mxu0 0
  %1329 = vmatpush1.bf16.msra.mxu0 %v1246
  %1330 = vmatprep.subr.bf16.mxu0 0
  %1331 = vmatpush1.bf16.msra.mxu0 %v1249
  %1332 = vmatprep.subr.bf16.mxu0 0
  %1333 = vmatpush1.bf16.msra.mxu0 %v1252
  %1334 = vmatprep.subr.bf16.mxu0 0
  %1335 = vmatpush1.bf16.msra.mxu0 0
  %1336 = vmatprep.subr.bf16.mxu0 0
  %1337 = vmatpush1.bf16.msra.mxu0 0
  %1338 = vmatprep.subr.bf16.mxu0 0
  %1339 = vmatpush1.bf16.msra.mxu0 0
  %1340 = vmatprep.subr.bf16.mxu0 0
  %1341 = vmatpush1.bf16.msra.mxu0 0
  %1342 = vmatprep.subr.bf16.mxu0 0
  %1343 = vmatpush1.bf16.msra.mxu0 0
  %1344 = vmatprep.subr.bf16.mxu0 0
  %1345 = vmatpush1.bf16.msra.mxu0 0
  %1346 = vmatprep.subr.bf16.mxu0 0
  %1347 = vmatpush1.bf16.msra.mxu0 0
  %1348 = vmatprep.subr.bf16.mxu0 0
  %1349 = vmatpush1.bf16.msra.mxu0 0
  %1350 = vmatprep.mubr.bf16.mxu0 0
  %1351 = vmatmul.mubr.bf16.gmra.mrb[0].mxu0 %v1110
  %v1352 = vpop.f32.mrb[0].mxu0
  %v1353 = vadd.f32 0.0, %v1352
  %v1354 = vpop.f32.mrb[0].mxu0
  %v1355 = vpop.f32.mrb[0].mxu0
  %v1356 = vpop.f32.mrb[0].mxu0
  %1357 = vdwg.mxu0
  %v1358 = vadd.f32 %v1114, %v1312
  %v1359 = vxor.u32 %v1358, 2147483648
  %v1360 = vmul.f32 %v1359, 1.442695
  %v1361 = vpow.pop %v1360
  %v1362 = vadd.f32 %v1361, 1.0
  %v1363 = vrcp.pop %v1362
  %v1364 = vmul.f32 1.0, %v1363
  %v1365 = vadd.f32 %v1115, %v1314
  %v1366 = vxor.u32 %v1365, 2147483648
  %v1367 = vmul.f32 %v1366, 1.442695
  %v1368 = vpow.pop %v1367
  %v1369 = vadd.f32 %v1368, 1.0
  %v1370 = vrcp.pop %v1369
  %v1371 = vmul.f32 1.0, %v1370
  %v1372 = vadd.f32 %v1353, %v31
  %v1373 = vmul.f32 %v1364, %v1372
  %v1374 = vadd.f32 %v1116, %v1373
  %v1375 = vtanh.pop %v1374
  %v1376 = vsub.f32 1.0, %v1371
  %v1377 = vmul.f32 %v1376, %v1375
  %v1378 = vmul.f32 %v1371, %v1109
  %v1379 = vadd.f32 %v1377, %v1378
  %v1380 = vpack.c.bf16 %v1379, %v1379
  %s1381 = scalar_lea.vmem %s4, 16
  %1382 = vst [vmem:[%s1381] sm:$0xf] %v1380
  %s1383 = scalar_lea.vmem %s0, 120
  %v1384 = vld [vmem:[%s1383] sm:$0xff]
  %v1385 = vld [vmem:[%s1383 + $0x8] sm:$0xff]
  %v1386 = vld [vmem:[%s1383 + $0x10] sm:$0xff]
  %v1387 = vld [vmem:[%s2] sm:$0xff]
  %v1388 = vld [vmem:[%s2 + $0x8] sm:$0xf]
  %v1389 = vld [vmem:[%s2 + $0xc] sm:$0xff]
  %v1390 = vld [vmem:[%s2 + $0x14] sm:$0xf]
  %v1391 = vld [vmem:[%s2 + $0x18] sm:$0xff]
  %v1392 = vld [vmem:[%s2 + $0x20] sm:$0xf]
  %v1393 = vld [vmem:[%s2 + $0x24] sm:$0xff]
  %v1394 = vld [vmem:[%s2 + $0x2c] sm:$0xf]
  %v1395 = vld [vmem:[%s2 + $0x30] sm:$0xff]
  %v1396 = vld [vmem:[%s2 + $0x38] sm:$0xf]
  %v1397 = vld [vmem:[%s2 + $0x3c] sm:$0xff]
  %v1398 = vld [vmem:[%s2 + $0x44] sm:$0xf]
  %v1399 = vld [vmem:[%s2 + $0x48] sm:$0xff]
  %v1400 = vld [vmem:[%s2 + $0x50] sm:$0xf]
  %v1401 = vld [vmem:[%s2 + $0x54] sm:$0xff]
  %v1402 = vld [vmem:[%s2 + $0x5c] sm:$0xf]
  %v1403 = vld [vmem:[%s2 + $0x60] sm:$0xff]
  %v1404 = vld [vmem:[%s2 + $0x68] sm:$0xf]
  %v1405 = vld [vmem:[%s2 + $0x6c] sm:$0xff]
  %v1406 = vld [vmem:[%s2 + $0x74] sm:$0xf]
  %v1407 = vld [vmem:[%s2 + $0x78] sm:$0xff]
  %v1408 = vld [vmem:[%s2 + $0x80] sm:$0xf]
  %v1409 = vld [vmem:[%s2 + $0x84] sm:$0xff]
  %v1410 = vld [vmem:[%s2 + $0x8c] sm:$0xf]
  %v1411 = vld [vmem:[%s2 + $0x90] sm:$0xff]
  %v1412 = vld [vmem:[%s2 + $0x98] sm:$0xf]
  %v1413 = vld [vmem:[%s2 + $0x9c] sm:$0xff]
  %v1414 = vld [vmem:[%s2 + $0xa4] sm:$0xf]
  %v1415 = vld [vmem:[%s2 + $0xa8] sm:$0xff]
  %v1416 = vld [vmem:[%s2 + $0xb0] sm:$0xf]
  %v1417 = vld [vmem:[%s2 + $0xb4] sm:$0xff]
  %v1418 = vld [vmem:[%s2 + $0xbc] sm:$0xf]
  %v1451 = vunpack.c.l.b16 %v1387
  %v1452 = vunpack.c.h.b16 %v1387
  %v1453 = vunpack.c.l.b16 %v1388
  %v1454 = vunpack.c.l.b16 %v1389
  %v1455 = vunpack.c.h.b16 %v1389
  %v1456 = vunpack.c.l.b16 %v1390
  %v1457 = vunpack.c.l.b16 %v1391
  %v1458 = vunpack.c.h.b16 %v1391
  %v1459 = vunpack.c.l.b16 %v1392
  %v1460 = vunpack.c.l.b16 %v1393
  %v1461 = vunpack.c.h.b16 %v1393
  %v1462 = vunpack.c.l.b16 %v1394
  %v1463 = vunpack.c.l.b16 %v1395
  %v1464 = vunpack.c.h.b16 %v1395
  %v1465 = vunpack.c.l.b16 %v1396
  %v1466 = vunpack.c.l.b16 %v1397
  %v1467 = vunpack.c.h.b16 %v1397
  %v1468 = vunpack.c.l.b16 %v1398
  %v1469 = vunpack.c.l.b16 %v1399
  %v1470 = vunpack.c.h.b16 %v1399
  %v1471 = vunpack.c.l.b16 %v1400
  %v1472 = vunpack.c.l.b16 %v1401
  %v1473 = vunpack.c.h.b16 %v1401
  %v1474 = vunpack.c.l.b16 %v1402
  %v1475 = vunpack.c.l.b16 %v1403
  %v1476 = vunpack.c.h.b16 %v1403
  %v1477 = vunpack.c.l.b16 %v1404
  %v1478 = vunpack.c.l.b16 %v1405
  %v1479 = vunpack.c.h.b16 %v1405
  %v1480 = vunpack.c.l.b16 %v1406
  %v1481 = vunpack.c.l.b16 %v1407
  %v1482 = vunpack.c.h.b16 %v1407
  %v1483 = vunpack.c.l.b16 %v1408
  %v1484 = vunpack.c.l.b16 %v1409
  %v1485 = vunpack.c.h.b16 %v1409
  %v1486 = vunpack.c.l.b16 %v1410
  %v1487 = vunpack.c.l.b16 %v1411
  %v1488 = vunpack.c.h.b16 %v1411
  %v1489 = vunpack.c.l.b16 %v1412
  %v1490 = vunpack.c.l.b16 %v1413
  %v1491 = vunpack.c.h.b16 %v1413
  %v1492 = vunpack.c.l.b16 %v1414
  %v1493 = vunpack.c.l.b16 %v1415
  %v1494 = vunpack.c.h.b16 %v1415
  %v1495 = vunpack.c.l.b16 %v1416
  %v1496 = vunpack.c.l.b16 %v1417
  %v1497 = vunpack.c.h.b16 %v1417
  %v1498 = vunpack.c.l.b16 %v1418
  %v1499 = vpack.c.b16 %v1454, %v1451
  %v1500 = vpack.c.b16 %v1455, %v1452
  %v1501 = vpack.c.b16 %v1456, %v1453
  %v1502 = vpack.c.b16 %v1460, %v1457
  %v1503 = vpack.c.b16 %v1461, %v1458
  %v1504 = vpack.c.b16 %v1462, %v1459
  %v1505 = vpack.c.b16 %v1466, %v1463
  %v1506 = vpack.c.b16 %v1467, %v1464
  %v1507 = vpack.c.b16 %v1468, %v1465
  %v1508 = vpack.c.b16 %v1472, %v1469
  %v1509 = vpack.c.b16 %v1473, %v1470
  %v1510 = vpack.c.b16 %v1474, %v1471
  %v1511 = vpack.c.b16 %v1478, %v1475
  %v1512 = vpack.c.b16 %v1479, %v1476
  %v1513 = vpack.c.b16 %v1480, %v1477
  %v1514 = vpack.c.b16 %v1484, %v1481
  %v1515 = vpack.c.b16 %v1485, %v1482
  %v1516 = vpack.c.b16 %v1486, %v1483
  %v1517 = vpack.c.b16 %v1490, %v1487
  %v1518 = vpack.c.b16 %v1491, %v1488
  %v1519 = vpack.c.b16 %v1492, %v1489
  %v1520 = vpack.c.b16 %v1496, %v1493
  %v1521 = vpack.c.b16 %v1497, %v1494
  %v1522 = vpack.c.b16 %v1498, %v1495
  %1547 = vmatprep.subr.bf16.mxu0 %v1500
  %1548 = vmatpush1.bf16.msra.mxu0 %v1499
  %1549 = vmatprep.subr.bf16.mxu0 %v1503
  %1550 = vmatpush1.bf16.msra.mxu0 %v1502
  %1551 = vmatprep.subr.bf16.mxu0 %v1506
  %1552 = vmatpush1.bf16.msra.mxu0 %v1505
  %1553 = vmatprep.subr.bf16.mxu0 %v1509
  %1554 = vmatpush1.bf16.msra.mxu0 %v1508
  %1555 = vmatprep.subr.bf16.mxu0 %v1512
  %1556 = vmatpush1.bf16.msra.mxu0 %v1511
  %1557 = vmatprep.subr.bf16.mxu0 %v1515
  %1558 = vmatpush1.bf16.msra.mxu0 %v1514
  %1559 = vmatprep.subr.bf16.mxu0 %v1518
  %1560 = vmatpush1.bf16.msra.mxu0 %v1517
  %1561 = vmatprep.subr.bf16.mxu0 %v1521
  %1562 = vmatpush1.bf16.msra.mxu0 %v1520
  %1563 = vmatprep.subr.bf16.mxu0 0
  %1564 = vmatpush1.bf16.msra.mxu0 0
  %1565 = vmatprep.subr.bf16.mxu0 0
  %1566 = vmatpush1.bf16.msra.mxu0 0
  %1567 = vmatprep.subr.bf16.mxu0 0
  %1568 = vmatpush1.bf16.msra.mxu0 0
  %1569 = vmatprep.subr.bf16.mxu0 0
  %1570 = vmatpush1.bf16.msra.mxu0 0
  %1571 = vmatprep.subr.bf16.mxu0 0
  %1572 = vmatpush1.bf16.msra.mxu0 0
  %1573 = vmatprep.subr.bf16.mxu0 0
  %1574 = vmatpush1.bf16.msra.mxu0 0
  %1575 = vmatprep.subr.bf16.mxu0 0
  %1576 = vmatpush1.bf16.msra.mxu0 0
  %1577 = vmatprep.subr.bf16.mxu0 0
  %1578 = vmatpush1.bf16.msra.mxu0 0
  %1579 = vmatprep.mubr.bf16.mxu0 0
  %1580 = vmatmul.mubr.bf16.gmra.mrb[0].mxu0 %v1380
  %v1581 = vpop.f32.mrb[0].mxu0
  %v1582 = vadd.f32 0.0, %v1581
  %v1583 = vpop.f32.mrb[0].mxu0
  %v1584 = vadd.f32 0.0, %v1583
  %v1585 = vpop.f32.mrb[0].mxu0
  %v1586 = vpop.f32.mrb[0].mxu0
  %1587 = vdwg.mxu0
  %1588 = vmatprep.subr.bf16.mxu0 0
  %1589 = vmatpush1.bf16.msra.mxu0 %v1501
  %1590 = vmatprep.subr.bf16.mxu0 0
  %1591 = vmatpush1.bf16.msra.mxu0 %v1504
  %1592 = vmatprep.subr.bf16.mxu0 0
  %1593 = vmatpush1.bf16.msra.mxu0 %v1507
  %1594 = vmatprep.subr.bf16.mxu0 0
  %1595 = vmatpush1.bf16.msra.mxu0 %v1510
  %1596 = vmatprep.subr.bf16.mxu0 0
  %1597 = vmatpush1.bf16.msra.mxu0 %v1513
  %1598 = vmatprep.subr.bf16.mxu0 0
  %1599 = vmatpush1.bf16.msra.mxu0 %v1516
  %1600 = vmatprep.subr.bf16.mxu0 0
  %1601 = vmatpush1.bf16.msra.mxu0 %v1519
  %1602 = vmatprep.subr.bf16.mxu0 0
  %1603 = vmatpush1.bf16.msra.mxu0 %v1522
  %1604 = vmatprep.subr.bf16.mxu0 0
  %1605 = vmatpush1.bf16.msra.mxu0 0
  %1606 = vmatprep.subr.bf16.mxu0 0
  %1607 = vmatpush1.bf16.msra.mxu0 0
  %1608 = vmatprep.subr.bf16.mxu0 0
  %1609 = vmatpush1.bf16.msra.mxu0 0
  %1610 = vmatprep.subr.bf16.mxu0 0
  %1611 = vmatpush1.bf16.msra.mxu0 0
  %1612 = vmatprep.subr.bf16.mxu0 0
  %1613 = vmatpush1.bf16.msra.mxu0 0
  %1614 = vmatprep.subr.bf16.mxu0 0
  %1615 = vmatpush1.bf16.msra.mxu0 0
  %1616 = vmatprep.subr.bf16.mxu0 0
  %1617 = vmatpush1.bf16.msra.mxu0 0
  %1618 = vmatprep.subr.bf16.mxu0 0
  %1619 = vmatpush1.bf16.msra.mxu0 0
  %1620 = vmatprep.mubr.bf16.mxu0 0
  %1621 = vmatmul.mubr.bf16.gmra.mrb[0].mxu0 %v1380
  %v1622 = vpop.f32.mrb[0].mxu0
  %v1623 = vadd.f32 0.0, %v1622
  %v1624 = vpop.f32.mrb[0].mxu0
  %v1625 = vpop.f32.mrb[0].mxu0
  %v1626 = vpop.f32.mrb[0].mxu0
  %1627 = vdwg.mxu0
  %v1628 = vadd.f32 %v1384, %v1582
  %v1629 = vxor.u32 %v1628, 2147483648
  %v1630 = vmul.f32 %v1629, 1.442695
  %v1631 = vpow.pop %v1630
  %v1632 = vadd.f32 %v1631, 1.0
  %v1633 = vrcp.pop %v1632
  %v1634 = vmul.f32 1.0, %v1633
  %v1635 = vadd.f32 %v1385, %v1584
  %v1636 = vxor.u32 %v1635, 2147483648
  %v1637 = vmul.f32 %v1636, 1.442695
  %v1638 = vpow.pop %v1637
  %v1639 = vadd.f32 %v1638, 1.0
  %v1640 = vrcp.pop %v1639
  %v1641 = vmul.f32 1.0, %v1640
  %v1642 = vadd.f32 %v1623, %v31
  %v1643 = vmul.f32 %v1634, %v1642
  %v1644 = vadd.f32 %v1386, %v1643
  %v1645 = vtanh.pop %v1644
  %v1646 = vsub.f32 1.0, %v1641
  %v1647 = vmul.f32 %v1646, %v1645
  %v1648 = vmul.f32 %v1641, %v1379
  %v1649 = vadd.f32 %v1647, %v1648
  %v1650 = vpack.c.bf16 %v1649, %v1649
  %s1651 = scalar_lea.vmem %s4, 20
  %1652 = vst [vmem:[%s1651] sm:$0xf] %v1650
  %s1653 = scalar_lea.vmem %s0, 144
  %v1654 = vld [vmem:[%s1653] sm:$0xff]
  %v1655 = vld [vmem:[%s1653 + $0x8] sm:$0xff]
  %v1656 = vld [vmem:[%s1653 + $0x10] sm:$0xff]
  %v1657 = vld [vmem:[%s2] sm:$0xff]
  %v1658 = vld [vmem:[%s2 + $0x8] sm:$0xf]
  %v1659 = vld [vmem:[%s2 + $0xc] sm:$0xff]
  %v1660 = vld [vmem:[%s2 + $0x14] sm:$0xf]
  %v1661 = vld [vmem:[%s2 + $0x18] sm:$0xff]
  %v1662 = vld [vmem:[%s2 + $0x20] sm:$0xf]
  %v1663 = vld [vmem:[%s2 + $0x24] sm:$0xff]
  %v1664 = vld [vmem:[%s2 + $0x2c] sm:$0xf]
  %v1665 = vld [vmem:[%s2 + $0x30] sm:$0xff]
  %v1666 = vld [vmem:[%s2 + $0x38] sm:$0xf]
  %v1667 = vld [vmem:[%s2 + $0x3c] sm:$0xff]
  %v1668 = vld [vmem:[%s2 + $0x44] sm:$0xf]
  %v1669 = vld [vmem:[%s2 + $0x48] sm:$0xff]
  %v1670 = vld [vmem:[%s2 + $0x50] sm:$0xf]
  %v1671 = vld [vmem:[%s2 + $0x54] sm:$0xff]
  %v1672 = vld [vmem:[%s2 + $0x5c] sm:$0xf]
  %v1673 = vld [vmem:[%s2 + $0x60] sm:$0xff]
  %v1674 = vld [vmem:[%s2 + $0x68] sm:$0xf]
  %v1675 = vld [vmem:[%s2 + $0x6c] sm:$0xff]
  %v1676 = vld [vmem:[%s2 + $0x74] sm:$0xf]
  %v1677 = vld [vmem:[%s2 + $0x78] sm:$0xff]
  %v1678 = vld [vmem:[%s2 + $0x80] sm:$0xf]
  %v1679 = vld [vmem:[%s2 + $0x84] sm:$0xff]
  %v1680 = vld [vmem:[%s2 + $0x8c] sm:$0xf]
  %v1681 = vld [vmem:[%s2 + $0x90] sm:$0xff]
  %v1682 = vld [vmem:[%s2 + $0x98] sm:$0xf]
  %v1683 = vld [vmem:[%s2 + $0x9c] sm:$0xff]
  %v1684 = vld [vmem:[%s2 + $0xa4] sm:$0xf]
  %v1685 = vld [vmem:[%s2 + $0xa8] sm:$0xff]
  %v1686 = vld [vmem:[%s2 + $0xb0] sm:$0xf]
  %v1687 = vld [vmem:[%s2 + $0xb4] sm:$0xff]
  %v1688 = vld [vmem:[%s2 + $0xbc] sm:$0xf]
  %v1721 = vunpack.c.l.b16 %v1657
  %v1722 = vunpack.c.h.b16 %v1657
  %v1723 = vunpack.c.l.b16 %v1658
  %v1724 = vunpack.c.l.b16 %v1659
  %v1725 = vunpack.c.h.b16 %v1659
  %v1726 = vunpack.c.l.b16 %v1660
  %v1727 = vunpack.c.l.b16 %v1661
  %v1728 = vunpack.c.h.b16 %v1661
  %v1729 = vunpack.c.l.b16 %v1662
  %v1730 = vunpack.c.l.b16 %v1663
  %v1731 = vunpack.c.h.b16 %v1663
  %v1732 = vunpack.c.l.b16 %v1664
  %v1733 = vunpack.c.l.b16 %v1665
  %v1734 = vunpack.c.h.b16 %v1665
  %v1735 = vunpack.c.l.b16 %v1666
  %v1736 = vunpack.c.l.b16 %v1667
  %v1737 = vunpack.c.h.b16 %v1667
  %v1738 = vunpack.c.l.b16 %v1668
  %v1739 = vunpack.c.l.b16 %v1669
  %v1740 = vunpack.c.h.b16 %v1669
  %v1741 = vunpack.c.l.b16 %v1670
  %v1742 = vunpack.c.l.b16 %v1671
  %v1743 = vunpack.c.h.b16 %v1671
  %v1744 = vunpack.c.l.b16 %v1672
  %v1745 = vunpack.c.l.b16 %v1673
  %v1746 = vunpack.c.h.b16 %v1673
  %v1747 = vunpack.c.l.b16 %v1674
  %v1748 = vunpack.c.l.b16 %v1675
  %v1749 = vunpack.c.h.b16 %v1675
  %v1750 = vunpack.c.l.b16 %v1676
  %v1751 = vunpack.c.l.b16 %v1677
  %v1752 = vunpack.c.h.b16 %v1677
  %v1753 = vunpack.c.l.b16 %v1678
  %v1754 = vunpack.c.l.b16 %v1679
  %v1755 = vunpack.c.h.b16 %v1679
  %v1756 = vunpack.c.l.b16 %v1680
  %v1757 = vunpack.c.l.b16 %v1681
  %v1758 = vunpack.c.h.b16 %v1681
  %v1759 = vunpack.c.l.b16 %v1682
  %v1760 = vunpack.c.l.b16 %v1683
  %v1761 = vunpack.c.h.b16 %v1683
  %v1762 = vunpack.c.l.b16 %v1684
  %v1763 = vunpack.c.l.b16 %v1685
  %v1764 = vunpack.c.h.b16 %v1685
  %v1765 = vunpack.c.l.b16 %v1686
  %v1766 = vunpack.c.l.b16 %v1687
  %v1767 = vunpack.c.h.b16 %v1687
  %v1768 = vunpack.c.l.b16 %v1688
  %v1769 = vpack.c.b16 %v1724, %v1721
  %v1770 = vpack.c.b16 %v1725, %v1722
  %v1771 = vpack.c.b16 %v1726, %v1723
  %v1772 = vpack.c.b16 %v1730, %v1727
  %v1773 = vpack.c.b16 %v1731, %v1728
  %v1774 = vpack.c.b16 %v1732, %v1729
  %v1775 = vpack.c.b16 %v1736, %v1733
  %v1776 = vpack.c.b16 %v1737, %v1734
  %v1777 = vpack.c.b16 %v1738, %v1735
  %v1778 = vpack.c.b16 %v1742, %v1739
  %v1779 = vpack.c.b16 %v1743, %v1740
  %v1780 = vpack.c.b16 %v1744, %v1741
  %v1781 = vpack.c.b16 %v1748, %v1745
  %v1782 = vpack.c.b16 %v1749, %v1746
  %v1783 = vpack.c.b16 %v1750, %v1747
  %v1784 = vpack.c.b16 %v1754, %v1751
  %v1785 = vpack.c.b16 %v1755, %v1752
  %v1786 = vpack.c.b16 %v1756, %v1753
  %v1787 = vpack.c.b16 %v1760, %v1757
  %v1788 = vpack.c.b16 %v1761, %v1758
  %v1789 = vpack.c.b16 %v1762, %v1759
  %v1790 = vpack.c.b16 %v1766, %v1763
  %v1791 = vpack.c.b16 %v1767, %v1764
  %v1792 = vpack.c.b16 %v1768, %v1765
  %1817 = vmatprep.subr.bf16.mxu0 %v1770
  %1818 = vmatpush1.bf16.msra.mxu0 %v1769
  %1819 = vmatprep.subr.bf16.mxu0 %v1773
  %1820 = vmatpush1.bf16.msra.mxu0 %v1772
  %1821 = vmatprep.subr.bf16.mxu0 %v1776
  %1822 = vmatpush1.bf16.msra.mxu0 %v1775
  %1823 = vmatprep.subr.bf16.mxu0 %v1779
  %1824 = vmatpush1.bf16.msra.mxu0 %v1778
  %1825 = vmatprep.subr.bf16.mxu0 %v1782
  %1826 = vmatpush1.bf16.msra.mxu0 %v1781
  %1827 = vmatprep.subr.bf16.mxu0 %v1785
  %1828 = vmatpush1.bf16.msra.mxu0 %v1784
  %1829 = vmatprep.subr.bf16.mxu0 %v1788
  %1830 = vmatpush1.bf16.msra.mxu0 %v1787
  %1831 = vmatprep.subr.bf16.mxu0 %v1791
  %1832 = vmatpush1.bf16.msra.mxu0 %v1790
  %1833 = vmatprep.subr.bf16.mxu0 0
  %1834 = vmatpush1.bf16.msra.mxu0 0
  %1835 = vmatprep.subr.bf16.mxu0 0
  %1836 = vmatpush1.bf16.msra.mxu0 0
  %1837 = vmatprep.subr.bf16.mxu0 0
  %1838 = vmatpush1.bf16.msra.mxu0 0
  %1839 = vmatprep.subr.bf16.mxu0 0
  %1840 = vmatpush1.bf16.msra.mxu0 0
  %1841 = vmatprep.subr.bf16.mxu0 0
  %1842 = vmatpush1.bf16.msra.mxu0 0
  %1843 = vmatprep.subr.bf16.mxu0 0
  %1844 = vmatpush1.bf16.msra.mxu0 0
  %1845 = vmatprep.subr.bf16.mxu0 0
  %1846 = vmatpush1.bf16.msra.mxu0 0
  %1847 = vmatprep.subr.bf16.mxu0 0
  %1848 = vmatpush1.bf16.msra.mxu0 0
  %1849 = vmatprep.mubr.bf16.mxu0 0
  %1850 = vmatmul.mubr.bf16.gmra.mrb[0].mxu0 %v1650
  %v1851 = vpop.f32.mrb[0].mxu0
  %v1852 = vadd.f32 0.0, %v1851
  %v1853 = vpop.f32.mrb[0].mxu0
  %v1854 = vadd.f32 0.0, %v1853
  %v1855 = vpop.f32.mrb[0].mxu0
  %v1856 = vpop.f32.mrb[0].mxu0
  %1857 = vdwg.mxu0
  %1858 = vmatprep.subr.bf16.mxu0 0
  %1859 = vmatpush1.bf16.msra.mxu0 %v1771
  %1860 = vmatprep.subr.bf16.mxu0 0
  %1861 = vmatpush1.bf16.msra.mxu0 %v1774
  %1862 = vmatprep.subr.bf16.mxu0 0
  %1863 = vmatpush1.bf16.msra.mxu0 %v1777
  %1864 = vmatprep.subr.bf16.mxu0 0
  %1865 = vmatpush1.bf16.msra.mxu0 %v1780
  %1866 = vmatprep.subr.bf16.mxu0 0
  %1867 = vmatpush1.bf16.msra.mxu0 %v1783
  %1868 = vmatprep.subr.bf16.mxu0 0
  %1869 = vmatpush1.bf16.msra.mxu0 %v1786
  %1870 = vmatprep.subr.bf16.mxu0 0
  %1871 = vmatpush1.bf16.msra.mxu0 %v1789
  %1872 = vmatprep.subr.bf16.mxu0 0
  %1873 = vmatpush1.bf16.msra.mxu0 %v1792
  %1874 = vmatprep.subr.bf16.mxu0 0
  %1875 = vmatpush1.bf16.msra.mxu0 0
  %1876 = vmatprep.subr.bf16.mxu0 0
  %1877 = vmatpush1.bf16.msra.mxu0 0
  %1878 = vmatprep.subr.bf16.mxu0 0
  %1879 = vmatpush1.bf16.msra.mxu0 0
  %1880 = vmatprep.subr.bf16.mxu0 0
  %1881 = vmatpush1.bf16.msra.mxu0 0
  %1882 = vmatprep.subr.bf16.mxu0 0
  %1883 = vmatpush1.bf16.msra.mxu0 0
  %1884 = vmatprep.subr.bf16.mxu0 0
  %1885 = vmatpush1.bf16.msra.mxu0 0
  %1886 = vmatprep.subr.bf16.mxu0 0
  %1887 = vmatpush1.bf16.msra.mxu0 0
  %1888 = vmatprep.subr.bf16.mxu0 0
  %1889 = vmatpush1.bf16.msra.mxu0 0
  %1890 = vmatprep.mubr.bf16.mxu0 0
  %1891 = vmatmul.mubr.bf16.gmra.mrb[0].mxu0 %v1650
  %v1892 = vpop.f32.mrb[0].mxu0
  %v1893 = vadd.f32 0.0, %v1892
  %v1894 = vpop.f32.mrb[0].mxu0
  %v1895 = vpop.f32.mrb[0].mxu0
  %v1896 = vpop.f32.mrb[0].mxu0
  %1897 = vdwg.mxu0
  %v1898 = vadd.f32 %v1654, %v1852
  %v1899 = vxor.u32 %v1898, 2147483648
  %v1900 = vmul.f32 %v1899, 1.442695
  %v1901 = vpow.pop %v1900
  %v1902 = vadd.f32 %v1901, 1.0
  %v1903 = vrcp.pop %v1902
  %v1904 = vmul.f32 1.0, %v1903
  %v1905 = vadd.f32 %v1655, %v1854
  %v1906 = vxor.u32 %v1905, 2147483648
  %v1907 = vmul.f32 %v1906, 1.442695
  %v1908 = vpow.pop %v1907
  %v1909 = vadd.f32 %v1908, 1.0
  %v1910 = vrcp.pop %v1909
  %v1911 = vmul.f32 1.0, %v1910
  %v1912 = vadd.f32 %v1893, %v31
  %v1913 = vmul.f32 %v1904, %v1912
  %v1914 = vadd.f32 %v1656, %v1913
  %v1915 = vtanh.pop %v1914
  %v1916 = vsub.f32 1.0, %v1911
  %v1917 = vmul.f32 %v1916, %v1915
  %v1918 = vmul.f32 %v1911, %v1649
  %v1919 = vadd.f32 %v1917, %v1918
  %v1920 = vpack.c.bf16 %v1919, %v1919
  %s1921 = scalar_lea.vmem %s4, 24
  %1922 = vst [vmem:[%s1921] sm:$0xf] %v1920
  %s1923 = scalar_lea.vmem %s0, 168
  %v1924 = vld [vmem:[%s1923] sm:$0xff]
  %v1925 = vld [vmem:[%s1923 + $0x8] sm:$0xff]
  %v1926 = vld [vmem:[%s1923 + $0x10] sm:$0xff]
  %v1927 = vld [vmem:[%s2] sm:$0xff]
  %v1928 = vld [vmem:[%s2 + $0x8] sm:$0xf]
  %v1929 = vld [vmem:[%s2 + $0xc] sm:$0xff]
  %v1930 = vld [vmem:[%s2 + $0x14] sm:$0xf]
  %v1931 = vld [vmem:[%s2 + $0x18] sm:$0xff]
  %v1932 = vld [vmem:[%s2 + $0x20] sm:$0xf]
  %v1933 = vld [vmem:[%s2 + $0x24] sm:$0xff]
  %v1934 = vld [vmem:[%s2 + $0x2c] sm:$0xf]
  %v1935 = vld [vmem:[%s2 + $0x30] sm:$0xff]
  %v1936 = vld [vmem:[%s2 + $0x38] sm:$0xf]
  %v1937 = vld [vmem:[%s2 + $0x3c] sm:$0xff]
  %v1938 = vld [vmem:[%s2 + $0x44] sm:$0xf]
  %v1939 = vld [vmem:[%s2 + $0x48] sm:$0xff]
  %v1940 = vld [vmem:[%s2 + $0x50] sm:$0xf]
  %v1941 = vld [vmem:[%s2 + $0x54] sm:$0xff]
  %v1942 = vld [vmem:[%s2 + $0x5c] sm:$0xf]
  %v1943 = vld [vmem:[%s2 + $0x60] sm:$0xff]
  %v1944 = vld [vmem:[%s2 + $0x68] sm:$0xf]
  %v1945 = vld [vmem:[%s2 + $0x6c] sm:$0xff]
  %v1946 = vld [vmem:[%s2 + $0x74] sm:$0xf]
  %v1947 = vld [vmem:[%s2 + $0x78] sm:$0xff]
  %v1948 = vld [vmem:[%s2 + $0x80] sm:$0xf]
  %v1949 = vld [vmem:[%s2 + $0x84] sm:$0xff]
  %v1950 = vld [vmem:[%s2 + $0x8c] sm:$0xf]
  %v1951 = vld [vmem:[%s2 + $0x90] sm:$0xff]
  %v1952 = vld [vmem:[%s2 + $0x98] sm:$0xf]
  %v1953 = vld [vmem:[%s2 + $0x9c] sm:$0xff]
  %v1954 = vld [vmem:[%s2 + $0xa4] sm:$0xf]
  %v1955 = vld [vmem:[%s2 + $0xa8] sm:$0xff]
  %v1956 = vld [vmem:[%s2 + $0xb0] sm:$0xf]
  %v1957 = vld [vmem:[%s2 + $0xb4] sm:$0xff]
  %v1958 = vld [vmem:[%s2 + $0xbc] sm:$0xf]
  %v1991 = vunpack.c.l.b16 %v1927
  %v1992 = vunpack.c.h.b16 %v1927
  %v1993 = vunpack.c.l.b16 %v1928
  %v1994 = vunpack.c.l.b16 %v1929
  %v1995 = vunpack.c.h.b16 %v1929
  %v1996 = vunpack.c.l.b16 %v1930
  %v1997 = vunpack.c.l.b16 %v1931
  %v1998 = vunpack.c.h.b16 %v1931
  %v1999 = vunpack.c.l.b16 %v1932
  %v2000 = vunpack.c.l.b16 %v1933
  %v2001 = vunpack.c.h.b16 %v1933
  %v2002 = vunpack.c.l.b16 %v1934
  %v2003 = vunpack.c.l.b16 %v1935
  %v2004 = vunpack.c.h.b16 %v1935
  %v2005 = vunpack.c.l.b16 %v1936
  %v2006 = vunpack.c.l.b16 %v1937
  %v2007 = vunpack.c.h.b16 %v1937
  %v2008 = vunpack.c.l.b16 %v1938
  %v2009 = vunpack.c.l.b16 %v1939
  %v2010 = vunpack.c.h.b16 %v1939
  %v2011 = vunpack.c.l.b16 %v1940
  %v2012 = vunpack.c.l.b16 %v1941
  %v2013 = vunpack.c.h.b16 %v1941
  %v2014 = vunpack.c.l.b16 %v1942
  %v2015 = vunpack.c.l.b16 %v1943
  %v2016 = vunpack.c.h.b16 %v1943
  %v2017 = vunpack.c.l.b16 %v1944
  %v2018 = vunpack.c.l.b16 %v1945
  %v2019 = vunpack.c.h.b16 %v1945
  %v2020 = vunpack.c.l.b16 %v1946
  %v2021 = vunpack.c.l.b16 %v1947
  %v2022 = vunpack.c.h.b16 %v1947
  %v2023 = vunpack.c.l.b16 %v1948
  %v2024 = vunpack.c.l.b16 %v1949
  %v2025 = vunpack.c.h.b16 %v1949
  %v2026 = vunpack.c.l.b16 %v1950
  %v2027 = vunpack.c.l.b16 %v1951
  %v2028 = vunpack.c.h.b16 %v1951
  %v2029 = vunpack.c.l.b16 %v1952
  %v2030 = vunpack.c.l.b16 %v1953
  %v2031 = vunpack.c.h.b16 %v1953
  %v2032 = vunpack.c.l.b16 %v1954
  %v2033 = vunpack.c.l.b16 %v1955
  %v2034 = vunpack.c.h.b16 %v1955
  %v2035 = vunpack.c.l.b16 %v1956
  %v2036 = vunpack.c.l.b16 %v1957
  %v2037 = vunpack.c.h.b16 %v1957
  %v2038 = vunpack.c.l.b16 %v1958
  %v2039 = vpack.c.b16 %v1994, %v1991
  %v2040 = vpack.c.b16 %v1995, %v1992
  %v2041 = vpack.c.b16 %v1996, %v1993
  %v2042 = vpack.c.b16 %v2000, %v1997
  %v2043 = vpack.c.b16 %v2001, %v1998
  %v2044 = vpack.c.b16 %v2002, %v1999
  %v2045 = vpack.c.b16 %v2006, %v2003
  %v2046 = vpack.c.b16 %v2007, %v2004
  %v2047 = vpack.c.b16 %v2008, %v2005
  %v2048 = vpack.c.b16 %v2012, %v2009
  %v2049 = vpack.c.b16 %v2013, %v2010
  %v2050 = vpack.c.b16 %v2014, %v2011
  %v2051 = vpack.c.b16 %v2018, %v2015
  %v2052 = vpack.c.b16 %v2019, %v2016
  %v2053 = vpack.c.b16 %v2020, %v2017
  %v2054 = vpack.c.b16 %v2024, %v2021
  %v2055 = vpack.c.b16 %v2025, %v2022
  %v2056 = vpack.c.b16 %v2026, %v2023
  %v2057 = vpack.c.b16 %v2030, %v2027
  %v2058 = vpack.c.b16 %v2031, %v2028
  %v2059 = vpack.c.b16 %v2032, %v2029
  %v2060 = vpack.c.b16 %v2036, %v2033
  %v2061 = vpack.c.b16 %v2037, %v2034
  %v2062 = vpack.c.b16 %v2038, %v2035
  %2087 = vmatprep.subr.bf16.mxu0 %v2040
  %2088 = vmatpush1.bf16.msra.mxu0 %v2039
  %2089 = vmatprep.subr.bf16.mxu0 %v2043
  %2090 = vmatpush1.bf16.msra.mxu0 %v2042
  %2091 = vmatprep.subr.bf16.mxu0 %v2046
  %2092 = vmatpush1.bf16.msra.mxu0 %v2045
  %2093 = vmatprep.subr.bf16.mxu0 %v2049
  %2094 = vmatpush1.bf16.msra.mxu0 %v2048
  %2095 = vmatprep.subr.bf16.mxu0 %v2052
  %2096 = vmatpush1.bf16.msra.mxu0 %v2051
  %2097 = vmatprep.subr.bf16.mxu0 %v2055
  %2098 = vmatpush1.bf16.msra.mxu0 %v2054
  %2099 = vmatprep.subr.bf16.mxu0 %v2058
  %2100 = vmatpush1.bf16.msra.mxu0 %v2057
  %2101 = vmatprep.subr.bf16.mxu0 %v2061
  %2102 = vmatpush1.bf16.msra.mxu0 %v2060
  %2103 = vmatprep.subr.bf16.mxu0 0
  %2104 = vmatpush1.bf16.msra.mxu0 0
  %2105 = vmatprep.subr.bf16.mxu0 0
  %2106 = vmatpush1.bf16.msra.mxu0 0
  %2107 = vmatprep.subr.bf16.mxu0 0
  %2108 = vmatpush1.bf16.msra.mxu0 0
  %2109 = vmatprep.subr.bf16.mxu0 0
  %2110 = vmatpush1.bf16.msra.mxu0 0
  %2111 = vmatprep.subr.bf16.mxu0 0
  %2112 = vmatpush1.bf16.msra.mxu0 0
  %2113 = vmatprep.subr.bf16.mxu0 0
  %2114 = vmatpush1.bf16.msra.mxu0 0
  %2115 = vmatprep.subr.bf16.mxu0 0
  %2116 = vmatpush1.bf16.msra.mxu0 0
  %2117 = vmatprep.subr.bf16.mxu0 0
  %2118 = vmatpush1.bf16.msra.mxu0 0
  %2119 = vmatprep.mubr.bf16.mxu0 0
  %2120 = vmatmul.mubr.bf16.gmra.mrb[0].mxu0 %v1920
  %v2121 = vpop.f32.mrb[0].mxu0
  %v2122 = vadd.f32 0.0, %v2121
  %v2123 = vpop.f32.mrb[0].mxu0
  %v2124 = vadd.f32 0.0, %v2123
  %v2125 = vpop.f32.mrb[0].mxu0
  %v2126 = vpop.f32.mrb[0].mxu0
  %2127 = vdwg.mxu0
  %2128 = vmatprep.subr.bf16.mxu0 0
  %2129 = vmatpush1.bf16.msra.mxu0 %v2041
  %2130 = vmatprep.subr.bf16.mxu0 0
  %2131 = vmatpush1.bf16.msra.mxu0 %v2044
  %2132 = vmatprep.subr.bf16.mxu0 0
  %2133 = vmatpush1.bf16.msra.mxu0 %v2047
  %2134 = vmatprep.subr.bf16.mxu0 0
  %2135 = vmatpush1.bf16.msra.mxu0 %v2050
  %2136 = vmatprep.subr.bf16.mxu0 0
  %2137 = vmatpush1.bf16.msra.mxu0 %v2053
  %2138 = vmatprep.subr.bf16.mxu0 0
  %2139 = vmatpush1.bf16.msra.mxu0 %v2056
  %2140 = vmatprep.subr.bf16.mxu0 0
  %2141 = vmatpush1.bf16.msra.mxu0 %v2059
  %2142 = vmatprep.subr.bf16.mxu0 0
  %2143 = vmatpush1.bf16.msra.mxu0 %v2062
  %2144 = vmatprep.subr.bf16.mxu0 0
  %2145 = vmatpush1.bf16.msra.mxu0 0
  %2146 = vmatprep.subr.bf16.mxu0 0
  %2147 = vmatpush1.bf16.msra.mxu0 0
  %2148 = vmatprep.subr.bf16.mxu0 0
  %2149 = vmatpush1.bf16.msra.mxu0 0
  %2150 = vmatprep.subr.bf16.mxu0 0
  %2151 = vmatpush1.bf16.msra.mxu0 0
  %2152 = vmatprep.subr.bf16.mxu0 0
  %2153 = vmatpush1.bf16.msra.mxu0 0
  %2154 = vmatprep.subr.bf16.mxu0 0
  %2155 = vmatpush1.bf16.msra.mxu0 0
  %2156 = vmatprep.subr.bf16.mxu0 0
  %2157 = vmatpush1.bf16.msra.mxu0 0
  %2158 = vmatprep.subr.bf16.mxu0 0
  %2159 = vmatpush1.bf16.msra.mxu0 0
  %2160 = vmatprep.mubr.bf16.mxu0 0
  %2161 = vmatmul.mubr.bf16.gmra.mrb[0].mxu0 %v1920
  %v2162 = vpop.f32.mrb[0].mxu0
  %v2163 = vadd.f32 0.0, %v2162
  %v2164 = vpop.f32.mrb[0].mxu0
  %v2165 = vpop.f32.mrb[0].mxu0
  %v2166 = vpop.f32.mrb[0].mxu0
  %2167 = vdwg.mxu0
  %v2168 = vadd.f32 %v1924, %v2122
  %v2169 = vxor.u32 %v2168, 2147483648
  %v2170 = vmul.f32 %v2169, 1.442695
  %v2171 = vpow.pop %v2170
  %v2172 = vadd.f32 %v2171, 1.0
  %v2173 = vrcp.pop %v2172
  %v2174 = vmul.f32 1.0, %v2173
  %v2175 = vadd.f32 %v1925, %v2124
  %v2176 = vxor.u32 %v2175, 2147483648
  %v2177 = vmul.f32 %v2176, 1.442695
  %v2178 = vpow.pop %v2177
  %v2179 = vadd.f32 %v2178, 1.0
  %v2180 = vrcp.pop %v2179
  %v2181 = vmul.f32 1.0, %v2180
  %v2182 = vadd.f32 %v2163, %v31
  %v2183 = vmul.f32 %v2174, %v2182
  %v2184 = vadd.f32 %v1926, %v2183
  %v2185 = vtanh.pop %v2184
  %v2186 = vsub.f32 1.0, %v2181
  %v2187 = vmul.f32 %v2186, %v2185
  %v2188 = vmul.f32 %v2181, %v1919
  %v2189 = vadd.f32 %v2187, %v2188
  %v2190 = vpack.c.bf16 %v2189, %v2189
  %s2191 = scalar_lea.vmem %s4, 28
  %2192 = vst [vmem:[%s2191] sm:$0xf] %v2190
  %2193 = vst [vmem:[#allocation2] sm:$0xff] %v2189
  // Predicated region
  $region22: #{seq2seq_decoder_forward.8} parent=0 // pred_check
    %p2194 = pneg %p20
  $region23: #{seq2seq_decoder_forward.8} parent=0 // pred_check_branch
    %2196 = sbr.rel (%p2194) target = $region25
  $region24: #{seq2seq_decoder_forward.8} parent=0 // pred_region
    %2197 = vst [vmem:[%s5] sm:$0xff] %v2189
  $region25: #{seq2seq_decoder_forward.8} parent=0 // pred_fallthru
    _
  // Predicated region
  $region26: #{seq2seq_decoder_forward.8} parent=0 // pred_check
    _
  $region27: #{seq2seq_decoder_forward.8} parent=0 // pred_check_branch
    %2199 = sbr.rel (0) target = $region29
  $region28: #{seq2seq_decoder_forward.8} parent=0 // pred_region
    _
  $region29: #{seq2seq_decoder_forward.8} parent=0 // pred_fallthru
    _
  // Predicated region
  $region30: #{seq2seq_decoder_forward.8} parent=0 // pred_check
    _
  $region31: #{seq2seq_decoder_forward.8} parent=0 // pred_check_branch
    %2201 = sbr.rel (0) target = $region33
  $region32: #{seq2seq_decoder_forward.8} parent=0 // pred_region
    _
  $region33: #{seq2seq_decoder_forward.8} parent=0 // pred_fallthru
    _
  // Predicated region
  $region34: #{seq2seq_decoder_forward.8} parent=0 // pred_check
    _
  $region35: #{seq2seq_decoder_forward.8} parent=0 // pred_check_branch
    %2203 = sbr.rel (0) target = $region37
  $region36: #{seq2seq_decoder_forward.8} parent=0 // pred_region
    _
  $region37: #{seq2seq_decoder_forward.8} parent=0 // pred_fallthru
    _
  // Predicated region
  $region38: #{seq2seq_decoder_forward.8} parent=0 // pred_check
    _
  $region39: #{seq2seq_decoder_forward.8} parent=0 // pred_check_branch
    %2205 = sbr.rel (0) target = $region41
  $region40: #{seq2seq_decoder_forward.8} parent=0 // pred_region
    _
  $region41: #{seq2seq_decoder_forward.8} parent=0 // pred_fallthru
    _

// kernel: seq2seq_decoder_forward.9
$region0: #{seq2seq_decoder_forward.9}
  #allocation0 [shape = 'u32[]', space=smem, size = 0x4, offset = 0x4, fixed_abs, tag = 'smem constant byte address 0x4 - core index']
  #allocation1 [shape = 'u32[144,128]{1,0:T(1,128)}', space=vmem, size = 0x12000, scoped, tag = 'internal scratch']
  #allocation2 [shape = 'f32[64,128]{1,0:T(8,128)}', space=vmem, size = 0x8000, scoped, tag = 'scratch operand']
  %s0 = inlined_call_operand.vmem [shape: bf16[64,128], index: 0, kind: input, shape index: {}]
  %s1 = inlined_call_operand.vmem [shape: bf16[128,128], index: 1, kind: input, shape index: {}]
  %s2 = inlined_call_operand.vmem [shape: f32[1,128], index: 2, kind: input, shape index: {}]
  %s3 = inlined_call_operand.hbm [shape: f32[8,8,128], index: 3, kind: output, shape index: {}]
  %s4 = sld [smem:[#allocation0]]
  $region30: #{seq2seq_decoder_forward.9} parent=0
    _
  %s6 = ssub.s32 1, %s4
  %s7 = scalar_select 0, %s6, %s4
  $region1: #{seq2seq_decoder_forward.9} parent=0
    #allocation3 [shape = 'u8[32768]{0}', space=vmem, size = 0x8000, scoped, tag = 'output window, operand 0, single buffered']
    #allocation4 [shape = 's32[1]{0}', space=sflag, size = 0x4, scoped, tag = 'scoped memory for seq2seq_decoder_forward.9']
    %8 = vsyncpa [#allocation4], 0
    // Predicated region
    $region2: #{seq2seq_decoder_forward.9} parent=1 // pred_check
      _
    $region3: #{seq2seq_decoder_forward.9} parent=1 // pred_check_branch
      %10 = sbr.rel (0) target = $region5
    $region4: #{seq2seq_decoder_forward.9} parent=1 // pred_region
      _
    $region5: #{seq2seq_decoder_forward.9} parent=1 // pred_fallthru
      _
    // Predicated region
    $region6: #{seq2seq_decoder_forward.9} parent=1 // pred_check
      _
    $region7: #{seq2seq_decoder_forward.9} parent=1 // pred_check_branch
      %12 = sbr.rel (0) target = $region9
    $region8: #{seq2seq_decoder_forward.9} parent=1 // pred_region
      _
    $region9: #{seq2seq_decoder_forward.9} parent=1 // pred_fallthru
      _
    // Predicated region
    $region10: #{seq2seq_decoder_forward.9} parent=1 // pred_check
      _
    $region11: #{seq2seq_decoder_forward.9} parent=1 // pred_check_branch
      %14 = sbr.rel (0) target = $region13
    $region12: #{seq2seq_decoder_forward.9} parent=1 // pred_region
      _
    $region13: #{seq2seq_decoder_forward.9} parent=1 // pred_fallthru
      _
    %p16 = scmp.eq.s32.totalorder 0, 0
    // Predicated region
    $region14: #{seq2seq_decoder_forward.9} parent=1 // pred_check
      %p17 = pneg %p16
    $region15: #{seq2seq_decoder_forward.9} parent=1 // pred_check_branch
      %19 = sbr.rel (%p17) target = $region17
    $region16: #{seq2seq_decoder_forward.9} parent=1 // pred_region
      %20 = vst [vmem:[#allocation2] sm:$0xff] 0.0
      %21 = vst [vmem:[#allocation2 + $0x8] sm:$0xff] 0.0
      %22 = vst [vmem:[#allocation2 + $0x10] sm:$0xff] 0.0
      %23 = vst [vmem:[#allocation2 + $0x18] sm:$0xff] 0.0
      %24 = vst [vmem:[#allocation2 + $0x20] sm:$0xff] 0.0
      %25 = vst [vmem:[#allocation2 + $0x28] sm:$0xff] 0.0
      %26 = vst [vmem:[#allocation2 + $0x30] sm:$0xff] 0.0
      %27 = vst [vmem:[#allocation2 + $0x38] sm:$0xff] 0.0
    $region17: #{seq2seq_decoder_forward.9} parent=1 // pred_fallthru
      _
    %v28 = vld [vmem:[#allocation2] sm:$0xff]
    %v29 = vld [vmem:[#allocation2 + $0x8] sm:$0xff]
    %v30 = vld [vmem:[#allocation2 + $0x10] sm:$0xff]
    %v31 = vld [vmem:[#allocation2 + $0x18] sm:$0xff]
    %v32 = vld [vmem:[#allocation2 + $0x20] sm:$0xff]
    %v33 = vld [vmem:[#allocation2 + $0x28] sm:$0xff]
    %v34 = vld [vmem:[#allocation2 + $0x30] sm:$0xff]
    %v35 = vld [vmem:[#allocation2 + $0x38] sm:$0xff]
    %v36 = vld [vmem:[%s0] sm:$0xf]
    %v37 = vld [vmem:[%s0 + $0x4] sm:$0xf]
    %v38 = vld [vmem:[%s0 + $0x8] sm:$0xf]
    %v39 = vld [vmem:[%s0 + $0xc] sm:$0xf]
    %v40 = vld [vmem:[%s0 + $0x10] sm:$0xf]
    %v41 = vld [vmem:[%s0 + $0x14] sm:$0xf]
    %v42 = vld [vmem:[%s0 + $0x18] sm:$0xf]
    %v43 = vld [vmem:[%s0 + $0x1c] sm:$0xf]
    %v44 = vld [vmem:[%s1] sm:$0xf]
    %v45 = vld [vmem:[%s1 + $0x4] sm:$0xf]
    %v46 = vld [vmem:[%s1 + $0x8] sm:$0xf]
    %v47 = vld [vmem:[%s1 + $0xc] sm:$0xf]
    %v48 = vld [vmem:[%s1 + $0x10] sm:$0xf]
    %v49 = vld [vmem:[%s1 + $0x14] sm:$0xf]
    %v50 = vld [vmem:[%s1 + $0x18] sm:$0xf]
    %v51 = vld [vmem:[%s1 + $0x1c] sm:$0xf]
    %v52 = vld [vmem:[%s1 + $0x20] sm:$0xf]
    %v53 = vld [vmem:[%s1 + $0x24] sm:$0xf]
    %v54 = vld [vmem:[%s1 + $0x28] sm:$0xf]
    %v55 = vld [vmem:[%s1 + $0x2c] sm:$0xf]
    %v56 = vld [vmem:[%s1 + $0x30] sm:$0xf]
    %v57 = vld [vmem:[%s1 + $0x34] sm:$0xf]
    %v58 = vld [vmem:[%s1 + $0x38] sm:$0xf]
    %v59 = vld [vmem:[%s1 + $0x3c] sm:$0xf]
    %v68 = vunpack.c.l.b16 %v36
    %v69 = vunpack.c.l.b16 %v37
    %v70 = vunpack.c.l.b16 %v38
    %v71 = vunpack.c.l.b16 %v39
    %v72 = vunpack.c.l.b16 %v40
    %v73 = vunpack.c.l.b16 %v41
    %v74 = vunpack.c.l.b16 %v42
    %v75 = vunpack.c.l.b16 %v43
    %v76 = vpack.c.b16 %v69, %v68
    %v77 = vpack.c.b16 %v71, %v70
    %v78 = vpack.c.b16 %v73, %v72
    %v79 = vpack.c.b16 %v75, %v74
    %v100 = vunpack.c.l.b16 %v44
    %v101 = vunpack.c.l.b16 %v45
    %v102 = vunpack.c.l.b16 %v46
    %v103 = vunpack.c.l.b16 %v47
    %v104 = vunpack.c.l.b16 %v48
    %v105 = vunpack.c.l.b16 %v49
    %v106 = vunpack.c.l.b16 %v50
    %v107 = vunpack.c.l.b16 %v51
    %v108 = vunpack.c.l.b16 %v52
    %v109 = vunpack.c.l.b16 %v53
    %v110 = vunpack.c.l.b16 %v54
    %v111 = vunpack.c.l.b16 %v55
    %v112 = vunpack.c.l.b16 %v56
    %v113 = vunpack.c.l.b16 %v57
    %v114 = vunpack.c.l.b16 %v58
    %v115 = vunpack.c.l.b16 %v59
    %v116 = vpack.c.b16 %v101, %v100
    %v117 = vpack.c.b16 %v103, %v102
    %v118 = vpack.c.b16 %v105, %v104
    %v119 = vpack.c.b16 %v107, %v106
    %v120 = vpack.c.b16 %v109, %v108
    %v121 = vpack.c.b16 %v111, %v110
    %v122 = vpack.c.b16 %v113, %v112
    %v123 = vpack.c.b16 %v115, %v114
    %132 = vmatprep.subr.bf16.mxu0 0
    %133 = vmatpush1.bf16.msra.mxu0 %v116
    %134 = vmatprep.subr.bf16.mxu0 0
    %135 = vmatpush1.bf16.msra.mxu0 %v117
    %136 = vmatprep.subr.bf16.mxu0 0
    %137 = vmatpush1.bf16.msra.mxu0 %v118
    %138 = vmatprep.subr.bf16.mxu0 0
    %139 = vmatpush1.bf16.msra.mxu0 %v119
    %140 = vmatprep.subr.bf16.mxu0 0
    %141 = vmatpush1.bf16.msra.mxu0 %v120
    %142 = vmatprep.subr.bf16.mxu0 0
    %143 = vmatpush1.bf16.msra.mxu0 %v121
    %144 = vmatprep.subr.bf16.mxu0 0
    %145 = vmatpush1.bf16.msra.mxu0 %v122
    %146 = vmatprep.subr.bf16.mxu0 0
    %147 = vmatpush1.bf16.msra.mxu0 %v123
    %148 = vmatprep.subr.bf16.mxu0 0
    %149 = vmatpush1.bf16.msra.mxu0 0
    %150 = vmatprep.subr.bf16.mxu0 0
    %151 = vmatpush1.bf16.msra.mxu0 0
    %152 = vmatprep.subr.bf16.mxu0 0
    %153 = vmatpush1.bf16.msra.mxu0 0
    %154 = vmatprep.subr.bf16.mxu0 0
    %155 = vmatpush1.bf16.msra.mxu0 0
    %156 = vmatprep.subr.bf16.mxu0 0
    %157 = vmatpush1.bf16.msra.mxu0 0
    %158 = vmatprep.subr.bf16.mxu0 0
    %159 = vmatpush1.bf16.msra.mxu0 0
    %160 = vmatprep.subr.bf16.mxu0 0
    %161 = vmatpush1.bf16.msra.mxu0 0
    %162 = vmatprep.subr.bf16.mxu0 0
    %163 = vmatpush1.bf16.msra.mxu0 0
    %164 = vmatprep.mubr.bf16.mxu0 0
    %165 = vmatmul.mubr.bf16.gmra.mrb[0].mxu0 %v76
    %v166 = vpop.f32.mrb[0].mxu0
    %v167 = vadd.f32 0.0, %v166
    %v168 = vpop.f32.mrb[0].mxu0
    %v169 = vpop.f32.mrb[0].mxu0
    %v170 = vadd.f32 0.0, %v169
    %v171 = vpop.f32.mrb[0].mxu0
    %172 = vmatprep.mubr.bf16.mxu0 0
    %173 = vmatmul.mubr.bf16.gmra.mrb[0].mxu0 %v77
    %v174 = vpop.f32.mrb[0].mxu0
    %v175 = vadd.f32 0.0, %v174
    %v176 = vpop.f32.mrb[0].mxu0
    %v177 = vpop.f32.mrb[0].mxu0
    %v178 = vadd.f32 0.0, %v177
    %v179 = vpop.f32.mrb[0].mxu0
    %180 = vmatprep.mubr.bf16.mxu0 0
    %181 = vmatmul.mubr.bf16.gmra.mrb[0].mxu0 %v78
    %v182 = vpop.f32.mrb[0].mxu0
    %v183 = vadd.f32 0.0, %v182
    %v184 = vpop.f32.mrb[0].mxu0
    %v185 = vpop.f32.mrb[0].mxu0
    %v186 = vadd.f32 0.0, %v185
    %v187 = vpop.f32.mrb[0].mxu0
    %188 = vmatprep.mubr.bf16.mxu0 0
    %189 = vmatmul.mubr.bf16.gmra.mrb[0].mxu0 %v79
    %v190 = vpop.f32.mrb[0].mxu0
    %v191 = vadd.f32 0.0, %v190
    %v192 = vpop.f32.mrb[0].mxu0
    %v193 = vpop.f32.mrb[0].mxu0
    %v194 = vadd.f32 0.0, %v193
    %v195 = vpop.f32.mrb[0].mxu0
    %196 = vdwg.mxu0
    %v197 = vadd.f32 %v28, %v167
    %v198 = vadd.f32 %v29, %v170
    %v199 = vadd.f32 %v30, %v175
    %v200 = vadd.f32 %v31, %v178
    %v201 = vadd.f32 %v32, %v183
    %v202 = vadd.f32 %v33, %v186
    %v203 = vadd.f32 %v34, %v191
    %v204 = vadd.f32 %v35, %v194
    %205 = vst [vmem:[#allocation2] sm:$0xff] %v197
    %206 = vst [vmem:[#allocation2 + $0x8] sm:$0xff] %v198
    %207 = vst [vmem:[#allocation2 + $0x10] sm:$0xff] %v199
    %208 = vst [vmem:[#allocation2 + $0x18] sm:$0xff] %v200
    %209 = vst [vmem:[#allocation2 + $0x20] sm:$0xff] %v201
    %210 = vst [vmem:[#allocation2 + $0x28] sm:$0xff] %v202
    %211 = vst [vmem:[#allocation2 + $0x30] sm:$0xff] %v203
    %212 = vst [vmem:[#allocation2 + $0x38] sm:$0xff] %v204
    // Predicated region
    $region18: #{seq2seq_decoder_forward.9} parent=1 // pred_check
      %p213 = pneg %p16
    $region19: #{seq2seq_decoder_forward.9} parent=1 // pred_check_branch
      %215 = sbr.rel (%p213) target = $region21
    $region20: #{seq2seq_decoder_forward.9} parent=1 // pred_region
      %v216 = vld [vmem:[#allocation2] sm:$0xff]
      %v217 = vld [vmem:[#allocation2 + $0x8] sm:$0xff]
      %v218 = vld [vmem:[#allocation2 + $0x10] sm:$0xff]
      %v219 = vld [vmem:[#allocation2 + $0x18] sm:$0xff]
      %v220 = vld [vmem:[#allocation2 + $0x20] sm:$0xff]
      %v221 = vld [vmem:[#allocation2 + $0x28] sm:$0xff]
      %v222 = vld [vmem:[#allocation2 + $0x30] sm:$0xff]
      %v223 = vld [vmem:[#allocation2 + $0x38] sm:$0xff]
      %v224 = vld [vmem:[%s2] sm:$0x1]
      %v226 = vlaneseq
      %v227 = vshrl.u32 %v226, 7
      %v228 = vsub.s32 0, %v227
      %v229 = vrot.slane %v224, %v228
      %v231 = vadd.f32 %v216, %v229
      %v232 = vadd.f32 %v217, %v229
      %v233 = vadd.f32 %v218, %v229
      %v234 = vadd.f32 %v219, %v229
      %v235 = vadd.f32 %v220, %v229
      %v236 = vadd.f32 %v221, %v229
      %v237 = vadd.f32 %v222, %v229
      %v238 = vadd.f32 %v223, %v229
      %v240 = vcombine.high %v231, %v231
      %v242 = vunpack.c.l.s4 1966171168
      %v243 = vunpack.c.0.s8 %v242
      %v244 = vlaneseq
      %v245 = vshrl.u32 %v244, 7
      %v246 = vsub.s32 %v243, %v245
      %v247 = vrot.slane %v231, %v246
      %v249 = vunpack.c.l.s4 1966171168
      %v250 = vunpack.c.0.s8 %v249
      %v251 = vlaneseq
      %v252 = vshrl.u32 %v251, 7
      %v253 = vsub.s32 %v250, %v252
      %v254 = vrot.slane %v240, %v253
      %v255 = vcombine.high %v247, %v247
      %v256 = vcombine.high %v254, %v254
      %v258 = vunpack.c.l.s4 1966171168
      %v259 = vunpack.c.0.s8 %v258
      %v260 = vlaneseq
      %v261 = vshrl.u32 %v260, 7
      %v262 = vsub.s32 %v259, %v261
      %v263 = vrot.slane %v247, %v262
      %v265 = vunpack.c.l.s4 1966171168
      %v266 = vunpack.c.0.s8 %v265
      %v267 = vlaneseq
      %v268 = vshrl.u32 %v267, 7
      %v269 = vsub.s32 %v266, %v268
      %v270 = vrot.slane %v254, %v269
      %v272 = vunpack.c.l.s4 1966171168
      %v273 = vunpack.c.0.s8 %v272
      %v274 = vlaneseq
      %v275 = vshrl.u32 %v274, 7
      %v276 = vsub.s32 %v273, %v275
      %v277 = vrot.slane %v255, %v276
      %v279 = vunpack.c.l.s4 1966171168
      %v280 = vunpack.c.0.s8 %v279
      %v281 = vlaneseq
      %v282 = vshrl.u32 %v281, 7
      %v283 = vsub.s32 %v280, %v282
      %v284 = vrot.slane %v256, %v283
      %v285 = vcombine.high %v263, %v263
      %v286 = vcombine.high %v270, %v270
      %v287 = vcombine.high %v277, %v277
      %v288 = vcombine.high %v284, %v284
      %297 = vst [vmem:[#allocation3] sm:$0x1] %v263
      %298 = vst [vmem:[#allocation3 + $0x8] sm:$0x1] %v277
      %299 = vst [vmem:[#allocation3 + $0x10] sm:$0x1] %v285
      %300 = vst [vmem:[#allocation3 + $0x18] sm:$0x1] %v287
      %301 = vst [vmem:[#allocation3 + $0x20] sm:$0x1] %v270
      %302 = vst [vmem:[#allocation3 + $0x28] sm:$0x1] %v284
      %303 = vst [vmem:[#allocation3 + $0x30] sm:$0x1] %v286
      %304 = vst [vmem:[#allocation3 + $0x38] sm:$0x1] %v288
      %v306 = vcombine.high %v232, %v232
      %v308 = vunpack.c.l.s4 1966171168
      %v309 = vunpack.c.0.s8 %v308
      %v310 = vlaneseq
      %v311 = vshrl.u32 %v310, 7
      %v312 = vsub.s32 %v309, %v311
      %v313 = vrot.slane %v232, %v312
      %v315 = vunpack.c.l.s4 1966171168
      %v316 = vunpack.c.0.s8 %v315
      %v317 = vlaneseq
      %v318 = vshrl.u32 %v317, 7
      %v319 = vsub.s32 %v316, %v318
      %v320 = vrot.slane %v306, %v319
      %v321 = vcombine.high %v313, %v313
      %v322 = vcombine.high %v320, %v320
      %v324 = vunpack.c.l.s4 1966171168
      %v325 = vunpack.c.0.s8 %v324
      %v326 = vlaneseq
      %v327 = vshrl.u32 %v326, 7
      %v328 = vsub.s32 %v325, %v327
      %v329 = vrot.slane %v313, %v328
      %v331 = vunpack.c.l.s4 1966171168
      %v332 = vunpack.c.0.s8 %v331
      %v333 = vlaneseq
      %v334 = vshrl.u32 %v333, 7
      %v335 = vsub.s32 %v332, %v334
      %v336 = vrot.slane %v320, %v335
      %v338 = vunpack.c.l.s4 1966171168
      %v339 = vunpack.c.0.s8 %v338
      %v340 = vlaneseq
      %v341 = vshrl.u32 %v340, 7
      %v342 = vsub.s32 %v339, %v341
      %v343 = vrot.slane %v321, %v342
      %v345 = vunpack.c.l.s4 1966171168
      %v346 = vunpack.c.0.s8 %v345
      %v347 = vlaneseq
      %v348 = vshrl.u32 %v347, 7
      %v349 = vsub.s32 %v346, %v348
      %v350 = vrot.slane %v322, %v349
      %v351 = vcombine.high %v329, %v329
      %v352 = vcombine.high %v336, %v336
      %v353 = vcombine.high %v343, %v343
      %v354 = vcombine.high %v350, %v350
      %363 = vst [vmem:[#allocation3 + $0x1] sm:$0x1] %v329
      %364 = vst [vmem:[#allocation3 + $0x9] sm:$0x1] %v343
      %365 = vst [vmem:[#allocation3 + $0x11] sm:$0x1] %v351
      %366 = vst [vmem:[#allocation3 + $0x19] sm:$0x1] %v353
      %367 = vst [vmem:[#allocation3 + $0x21] sm:$0x1] %v336
      %368 = vst [vmem:[#allocation3 + $0x29] sm:$0x1] %v350
      %369 = vst [vmem:[#allocation3 + $0x31] sm:$0x1] %v352
      %370 = vst [vmem:[#allocation3 + $0x39] sm:$0x1] %v354
      %v372 = vcombine.high %v233, %v233
      %v374 = vunpack.c.l.s4 1966171168
      %v375 = vunpack.c.0.s8 %v374
      %v376 = vlaneseq
      %v377 = vshrl.u32 %v376, 7
      %v378 = vsub.s32 %v375, %v377
      %v379 = vrot.slane %v233, %v378
      %v381 = vunpack.c.l.s4 1966171168
      %v382 = vunpack.c.0.s8 %v381
      %v383 = vlaneseq
      %v384 = vshrl.u32 %v383, 7
      %v385 = vsub.s32 %v382, %v384
      %v386 = vrot.slane %v372, %v385
      %v387 = vcombine.high %v379, %v379
      %v388 = vcombine.high %v386, %v386
      %v390 = vunpack.c.l.s4 1966171168
      %v391 = vunpack.c.0.s8 %v390
      %v392 = vlaneseq
      %v393 = vshrl.u32 %v392, 7
      %v394 = vsub.s32 %v391, %v393
      %v395 = vrot.slane %v379, %v394
      %v397 = vunpack.c.l.s4 1966171168
      %v398 = vunpack.c.0.s8 %v397
      %v399 = vlaneseq
      %v400 = vshrl.u32 %v399, 7
      %v401 = vsub.s32 %v398, %v400
      %v402 = vrot.slane %v386, %v401
      %v404 = vunpack.c.l.s4 1966171168
      %v405 = vunpack.c.0.s8 %v404
      %v406 = vlaneseq
      %v407 = vshrl.u32 %v406, 7
      %v408 = vsub.s32 %v405, %v407
      %v409 = vrot.slane %v387, %v408
      %v411 = vunpack.c.l.s4 1966171168
      %v412 = vunpack.c.0.s8 %v411
      %v413 = vlaneseq
      %v414 = vshrl.u32 %v413, 7
      %v415 = vsub.s32 %v412, %v414
      %v416 = vrot.slane %v388, %v415
      %v417 = vcombine.high %v395, %v395
      %v418 = vcombine.high %v402, %v402
      %v419 = vcombine.high %v409, %v409
      %v420 = vcombine.high %v416, %v416
      %429 = vst [vmem:[#allocation3 + $0x2] sm:$0x1] %v395
      %430 = vst [vmem:[#allocation3 + $0xa] sm:$0x1] %v409
      %431 = vst [vmem:[#allocation3 + $0x12] sm:$0x1] %v417
      %432 = vst [vmem:[#allocation3 + $0x1a] sm:$0x1] %v419
      %433 = vst [vmem:[#allocation3 + $0x22] sm:$0x1] %v402
      %434 = vst [vmem:[#allocation3 + $0x2a] sm:$0x1] %v416
      %435 = vst [vmem:[#allocation3 + $0x32] sm:$0x1] %v418
      %436 = vst [vmem:[#allocation3 + $0x3a] sm:$0x1] %v420
      %v438 = vcombine.high %v234, %v234
      %v440 = vunpack.c.l.s4 1966171168
      %v441 = vunpack.c.0.s8 %v440
      %v442 = vlaneseq
      %v443 = vshrl.u32 %v442, 7
      %v444 = vsub.s32 %v441, %v443
      %v445 = vrot.slane %v234, %v444
      %v447 = vunpack.c.l.s4 1966171168
      %v448 = vunpack.c.0.s8 %v447
      %v449 = vlaneseq
      %v450 = vshrl.u32 %v449, 7
      %v451 = vsub.s32 %v448, %v450
      %v452 = vrot.slane %v438, %v451
      %v453 = vcombine.high %v445, %v445
      %v454 = vcombine.high %v452, %v452
      %v456 = vunpack.c.l.s4 1966171168
      %v457 = vunpack.c.0.s8 %v456
      %v458 = vlaneseq
      %v459 = vshrl.u32 %v458, 7
      %v460 = vsub.s32 %v457, %v459
      %v461 = vrot.slane %v445, %v460
      %v463 = vunpack.c.l.s4 1966171168
      %v464 = vunpack.c.0.s8 %v463
      %v465 = vlaneseq
      %v466 = vshrl.u32 %v465, 7
      %v467 = vsub.s32 %v464, %v466
      %v468 = vrot.slane %v452, %v467
      %v470 = vunpack.c.l.s4 1966171168
      %v471 = vunpack.c.0.s8 %v470
      %v472 = vlaneseq
      %v473 = vshrl.u32 %v472, 7
      %v474 = vsub.s32 %v471, %v473
      %v475 = vrot.slane %v453, %v474
      %v477 = vunpack.c.l.s4 1966171168
      %v478 = vunpack.c.0.s8 %v477
      %v479 = vlaneseq
      %v480 = vshrl.u32 %v479, 7
      %v481 = vsub.s32 %v478, %v480
      %v482 = vrot.slane %v454, %v481
      %v483 = vcombine.high %v461, %v461
      %v484 = vcombine.high %v468, %v468
      %v485 = vcombine.high %v475, %v475
      %v486 = vcombine.high %v482, %v482
      %495 = vst [vmem:[#allocation3 + $0x3] sm:$0x1] %v461
      %496 = vst [vmem:[#allocation3 + $0xb] sm:$0x1] %v475
      %497 = vst [vmem:[#allocation3 + $0x13] sm:$0x1] %v483
      %498 = vst [vmem:[#allocation3 + $0x1b] sm:$0x1] %v485
      %499 = vst [vmem:[#allocation3 + $0x23] sm:$0x1] %v468
      %500 = vst [vmem:[#allocation3 + $0x2b] sm:$0x1] %v482
      %501 = vst [vmem:[#allocation3 + $0x33] sm:$0x1] %v484
      %502 = vst [vmem:[#allocation3 + $0x3b] sm:$0x1] %v486
      %v504 = vcombine.high %v235, %v235
      %v506 = vunpack.c.l.s4 1966171168
      %v507 = vunpack.c.0.s8 %v506
      %v508 = vlaneseq
      %v509 = vshrl.u32 %v508, 7
      %v510 = vsub.s32 %v507, %v509
      %v511 = vrot.slane %v235, %v510
      %v513 = vunpack.c.l.s4 1966171168
      %v514 = vunpack.c.0.s8 %v513
      %v515 = vlaneseq
      %v516 = vshrl.u32 %v515, 7
      %v517 = vsub.s32 %v514, %v516
      %v518 = vrot.slane %v504, %v517
      %v519 = vcombine.high %v511, %v511
      %v520 = vcombine.high %v518, %v518
      %v522 = vunpack.c.l.s4 1966171168
      %v523 = vunpack.c.0.s8 %v522
      %v524 = vlaneseq
      %v525 = vshrl.u32 %v524, 7
      %v526 = vsub.s32 %v523, %v525
      %v527 = vrot.slane %v511, %v526
      %v529 = vunpack.c.l.s4 1966171168
      %v530 = vunpack.c.0.s8 %v529
      %v531 = vlaneseq
      %v532 = vshrl.u32 %v531, 7
      %v533 = vsub.s32 %v530, %v532
      %v534 = vrot.slane %v518, %v533
      %v536 = vunpack.c.l.s4 1966171168
      %v537 = vunpack.c.0.s8 %v536
      %v538 = vlaneseq
      %v539 = vshrl.u32 %v538, 7
      %v540 = vsub.s32 %v537, %v539
      %v541 = vrot.slane %v519, %v540
      %v543 = vunpack.c.l.s4 1966171168
      %v544 = vunpack.c.0.s8 %v543
      %v545 = vlaneseq
      %v546 = vshrl.u32 %v545, 7
      %v547 = vsub.s32 %v544, %v546
      %v548 = vrot.slane %v520, %v547
      %v549 = vcombine.high %v527, %v527
      %v550 = vcombine.high %v534, %v534
      %v551 = vcombine.high %v541, %v541
      %v552 = vcombine.high %v548, %v548
      %561 = vst [vmem:[#allocation3 + $0x4] sm:$0x1] %v527
      %562 = vst [vmem:[#allocation3 + $0xc] sm:$0x1] %v541
      %563 = vst [vmem:[#allocation3 + $0x14] sm:$0x1] %v549
      %564 = vst [vmem:[#allocation3 + $0x1c] sm:$0x1] %v551
      %565 = vst [vmem:[#allocation3 + $0x24] sm:$0x1] %v534
      %566 = vst [vmem:[#allocation3 + $0x2c] sm:$0x1] %v548
      %567 = vst [vmem:[#allocation3 + $0x34] sm:$0x1] %v550
      %568 = vst [vmem:[#allocation3 + $0x3c] sm:$0x1] %v552
      %v570 = vcombine.high %v236, %v236
      %v572 = vunpack.c.l.s4 1966171168
      %v573 = vunpack.c.0.s8 %v572
      %v574 = vlaneseq
      %v575 = vshrl.u32 %v574, 7
      %v576 = vsub.s32 %v573, %v575
      %v577 = vrot.slane %v236, %v576
      %v579 = vunpack.c.l.s4 1966171168
      %v580 = vunpack.c.0.s8 %v579
      %v581 = vlaneseq
      %v582 = vshrl.u32 %v581, 7
      %v583 = vsub.s32 %v580, %v582
      %v584 = vrot.slane %v570, %v583
      %v585 = vcombine.high %v577, %v577
      %v586 = vcombine.high %v584, %v584
      %v588 = vunpack.c.l.s4 1966171168
      %v589 = vunpack.c.0.s8 %v588
      %v590 = vlaneseq
      %v591 = vshrl.u32 %v590, 7
      %v592 = vsub.s32 %v589, %v591
      %v593 = vrot.slane %v577, %v592
      %v595 = vunpack.c.l.s4 1966171168
      %v596 = vunpack.c.0.s8 %v595
      %v597 = vlaneseq
      %v598 = vshrl.u32 %v597, 7
      %v599 = vsub.s32 %v596, %v598
      %v600 = vrot.slane %v584, %v599
      %v602 = vunpack.c.l.s4 1966171168
      %v603 = vunpack.c.0.s8 %v602
      %v604 = vlaneseq
      %v605 = vshrl.u32 %v604, 7
      %v606 = vsub.s32 %v603, %v605
      %v607 = vrot.slane %v585, %v606
      %v609 = vunpack.c.l.s4 1966171168
      %v610 = vunpack.c.0.s8 %v609
      %v611 = vlaneseq
      %v612 = vshrl.u32 %v611, 7
      %v613 = vsub.s32 %v610, %v612
      %v614 = vrot.slane %v586, %v613
      %v615 = vcombine.high %v593, %v593
      %v616 = vcombine.high %v600, %v600
      %v617 = vcombine.high %v607, %v607
      %v618 = vcombine.high %v614, %v614
      %627 = vst [vmem:[#allocation3 + $0x5] sm:$0x1] %v593
      %628 = vst [vmem:[#allocation3 + $0xd] sm:$0x1] %v607
      %629 = vst [vmem:[#allocation3 + $0x15] sm:$0x1] %v615
      %630 = vst [vmem:[#allocation3 + $0x1d] sm:$0x1] %v617
      %631 = vst [vmem:[#allocation3 + $0x25] sm:$0x1] %v600
      %632 = vst [vmem:[#allocation3 + $0x2d] sm:$0x1] %v614
      %633 = vst [vmem:[#allocation3 + $0x35] sm:$0x1] %v616
      %634 = vst [vmem:[#allocation3 + $0x3d] sm:$0x1] %v618
      %v636 = vcombine.high %v237, %v237
      %v638 = vunpack.c.l.s4 1966171168
      %v639 = vunpack.c.0.s8 %v638
      %v640 = vlaneseq
      %v641 = vshrl.u32 %v640, 7
      %v642 = vsub.s32 %v639, %v641
      %v643 = vrot.slane %v237, %v642
      %v645 = vunpack.c.l.s4 1966171168
      %v646 = vunpack.c.0.s8 %v645
      %v647 = vlaneseq
      %v648 = vshrl.u32 %v647, 7
      %v649 = vsub.s32 %v646, %v648
      %v650 = vrot.slane %v636, %v649
      %v651 = vcombine.high %v643, %v643
      %v652 = vcombine.high %v650, %v650
      %v654 = vunpack.c.l.s4 1966171168
      %v655 = vunpack.c.0.s8 %v654
      %v656 = vlaneseq
      %v657 = vshrl.u32 %v656, 7
      %v658 = vsub.s32 %v655, %v657
      %v659 = vrot.slane %v643, %v658
      %v661 = vunpack.c.l.s4 1966171168
      %v662 = vunpack.c.0.s8 %v661
      %v663 = vlaneseq
      %v664 = vshrl.u32 %v663, 7
      %v665 = vsub.s32 %v662, %v664
      %v666 = vrot.slane %v650, %v665
      %v668 = vunpack.c.l.s4 1966171168
      %v669 = vunpack.c.0.s8 %v668
      %v670 = vlaneseq
      %v671 = vshrl.u32 %v670, 7
      %v672 = vsub.s32 %v669, %v671
      %v673 = vrot.slane %v651, %v672
      %v675 = vunpack.c.l.s4 1966171168
      %v676 = vunpack.c.0.s8 %v675
      %v677 = vlaneseq
      %v678 = vshrl.u32 %v677, 7
      %v679 = vsub.s32 %v676, %v678
      %v680 = vrot.slane %v652, %v679
      %v681 = vcombine.high %v659, %v659
      %v682 = vcombine.high %v666, %v666
      %v683 = vcombine.high %v673, %v673
      %v684 = vcombine.high %v680, %v680
      %693 = vst [vmem:[#allocation3 + $0x6] sm:$0x1] %v659
      %694 = vst [vmem:[#allocation3 + $0xe] sm:$0x1] %v673
      %695 = vst [vmem:[#allocation3 + $0x16] sm:$0x1] %v681
      %696 = vst [vmem:[#allocation3 + $0x1e] sm:$0x1] %v683
      %697 = vst [vmem:[#allocation3 + $0x26] sm:$0x1] %v666
      %698 = vst [vmem:[#allocation3 + $0x2e] sm:$0x1] %v680
      %699 = vst [vmem:[#allocation3 + $0x36] sm:$0x1] %v682
      %700 = vst [vmem:[#allocation3 + $0x3e] sm:$0x1] %v684
      %v702 = vcombine.high %v238, %v238
      %v704 = vunpack.c.l.s4 1966171168
      %v705 = vunpack.c.0.s8 %v704
      %v706 = vlaneseq
      %v707 = vshrl.u32 %v706, 7
      %v708 = vsub.s32 %v705, %v707
      %v709 = vrot.slane %v238, %v708
      %v711 = vunpack.c.l.s4 1966171168
      %v712 = vunpack.c.0.s8 %v711
      %v713 = vlaneseq
      %v714 = vshrl.u32 %v713, 7
      %v715 = vsub.s32 %v712, %v714
      %v716 = vrot.slane %v702, %v715
      %v717 = vcombine.high %v709, %v709
      %v718 = vcombine.high %v716, %v716
      %v720 = vunpack.c.l.s4 1966171168
      %v721 = vunpack.c.0.s8 %v720
      %v722 = vlaneseq
      %v723 = vshrl.u32 %v722, 7
      %v724 = vsub.s32 %v721, %v723
      %v725 = vrot.slane %v709, %v724
      %v727 = vunpack.c.l.s4 1966171168
      %v728 = vunpack.c.0.s8 %v727
      %v729 = vlaneseq
      %v730 = vshrl.u32 %v729, 7
      %v731 = vsub.s32 %v728, %v730
      %v732 = vrot.slane %v716, %v731
      %v734 = vunpack.c.l.s4 1966171168
      %v735 = vunpack.c.0.s8 %v734
      %v736 = vlaneseq
      %v737 = vshrl.u32 %v736, 7
      %v738 = vsub.s32 %v735, %v737
      %v739 = vrot.slane %v717, %v738
      %v741 = vunpack.c.l.s4 1966171168
      %v742 = vunpack.c.0.s8 %v741
      %v743 = vlaneseq
      %v744 = vshrl.u32 %v743, 7
      %v745 = vsub.s32 %v742, %v744
      %v746 = vrot.slane %v718, %v745
      %v747 = vcombine.high %v725, %v725
      %v748 = vcombine.high %v732, %v732
      %v749 = vcombine.high %v739, %v739
      %v750 = vcombine.high %v746, %v746
      %759 = vst [vmem:[#allocation3 + $0x7] sm:$0x1] %v725
      %760 = vst [vmem:[#allocation3 + $0xf] sm:$0x1] %v739
      %761 = vst [vmem:[#allocation3 + $0x17] sm:$0x1] %v747
      %762 = vst [vmem:[#allocation3 + $0x1f] sm:$0x1] %v749
      %763 = vst [vmem:[#allocation3 + $0x27] sm:$0x1] %v732
      %764 = vst [vmem:[#allocation3 + $0x2f] sm:$0x1] %v746
      %765 = vst [vmem:[#allocation3 + $0x37] sm:$0x1] %v748
      %766 = vst [vmem:[#allocation3 + $0x3f] sm:$0x1] %v750
    $region21: #{seq2seq_decoder_forward.9} parent=1 // pred_fallthru
      _
    // Predicated region
    $region22: #{seq2seq_decoder_forward.9} parent=1 // pred_check
      _
    $region23: #{seq2seq_decoder_forward.9} parent=1 // pred_check_branch
      %768 = sbr.rel (0) target = $region25
    $region24: #{seq2seq_decoder_forward.9} parent=1 // pred_region
      %s770 = ssub.s32 1024, 1024
      %771 = vsyncadd [#allocation4], %s770
      %s772 = sshll.u32 [#allocation3], 4
      %s773 = int_to_ptr.vmem [resolvable:$true] %s772
      %778 = dma.vmem_to_hbm [thread:$0]  %s773, 1024, %s3, [#allocation4], 128, 128, 8
    $region25: #{seq2seq_decoder_forward.9} parent=1 // pred_fallthru
      _
    // Predicated region
    $region26: #{seq2seq_decoder_forward.9} parent=1 // pred_check
      _
    $region27: #{seq2seq_decoder_forward.9} parent=1 // pred_check_branch
      %780 = sbr.rel (0) target = $region29
    $region28: #{seq2seq_decoder_forward.9} parent=1 // pred_region
      %781 = dma.done [#allocation4], 1024
    $region29: #{seq2seq_decoder_forward.9} parent=1 // pred_fallthru
      _
    %782 = vsyncpa [#allocation4], 1

// kernel: seq2seq_decoder_forward.6
$region0: #{seq2seq_decoder_forward.6}
  #allocation0 [shape = 'u32[]', space=smem, size = 0x4, offset = 0x4, fixed_abs, tag = 'smem constant byte address 0x4 - core index']
  #allocation1 [shape = 'u32[144,128]{1,0:T(1,128)}', space=vmem, size = 0x12000, scoped, tag = 'internal scratch']
  #allocation2 [shape = 'f32[8,128]{1,0:T(8,128)}', space=vmem, size = 0x1000, scoped, tag = 'scratch operand']
  %s0 = inlined_call_operand.vmem [shape: f32[8,8,384], index: 0, kind: input, shape index: {}]
  %s1 = inlined_call_operand.vmem [shape: f32[8,128], index: 1, kind: input, shape index: {}]
  %s2 = inlined_call_operand.vmem [shape: f32[8,384], index: 2, kind: input, shape index: {}]
  %s3 = inlined_call_operand.vmem [shape: bf16[128,384], index: 3, kind: input, shape index: {}]
  %s4 = inlined_call_operand.vmem [shape: f32[1,128], index: 4, kind: input, shape index: {}]
  %s5 = inlined_call_operand.vmem [shape: bf16[8,8,128], index: 5, kind: output, shape index: {0}]
  %s6 = inlined_call_operand.vmem [shape: f32[8,128], index: 6, kind: output, shape index: {1}]
  %7 = xla_tuple %s5, %s6
  %s8 = sld [smem:[#allocation0]]
  $region46: #{seq2seq_decoder_forward.6} parent=0
    _
  %s10 = ssub.s32 1, %s8
  %s11 = scalar_select 0, %s10, %s8
  // Predicated region
  $region2: #{seq2seq_decoder_forward.6} parent=0 // pred_check
    _
  $region3: #{seq2seq_decoder_forward.6} parent=0 // pred_check_branch
    %13 = sbr.rel (0) target = $region5
  $region4: #{seq2seq_decoder_forward.6} parent=0 // pred_region
    _
  $region5: #{seq2seq_decoder_forward.6} parent=0 // pred_fallthru
    _
  // Predicated region
  $region6: #{seq2seq_decoder_forward.6} parent=0 // pred_check
    _
  $region7: #{seq2seq_decoder_forward.6} parent=0 // pred_check_branch
    %15 = sbr.rel (0) target = $region9
  $region8: #{seq2seq_decoder_forward.6} parent=0 // pred_region
    _
  $region9: #{seq2seq_decoder_forward.6} parent=0 // pred_fallthru
    _
  // Predicated region
  $region10: #{seq2seq_decoder_forward.6} parent=0 // pred_check
    _
  $region11: #{seq2seq_decoder_forward.6} parent=0 // pred_check_branch
    %17 = sbr.rel (0) target = $region13
  $region12: #{seq2seq_decoder_forward.6} parent=0 // pred_region
    _
  $region13: #{seq2seq_decoder_forward.6} parent=0 // pred_fallthru
    _
  // Predicated region
  $region14: #{seq2seq_decoder_forward.6} parent=0 // pred_check
    _
  $region15: #{seq2seq_decoder_forward.6} parent=0 // pred_check_branch
    %19 = sbr.rel (0) target = $region17
  $region16: #{seq2seq_decoder_forward.6} parent=0 // pred_region
    _
  $region17: #{seq2seq_decoder_forward.6} parent=0 // pred_fallthru
    _
  // Predicated region
  $region18: #{seq2seq_decoder_forward.6} parent=0 // pred_check
    _
  $region19: #{seq2seq_decoder_forward.6} parent=0 // pred_check_branch
    %21 = sbr.rel (0) target = $region21
  $region20: #{seq2seq_decoder_forward.6} parent=0 // pred_region
    _
  $region21: #{seq2seq_decoder_forward.6} parent=0 // pred_fallthru
    _
  %p23 = scmp.eq.s32.totalorder 0, 0
  // Predicated region
  $region22: #{seq2seq_decoder_forward.6} parent=0 // pred_check
    %p24 = pneg %p23
  $region23: #{seq2seq_decoder_forward.6} parent=0 // pred_check_branch
    %26 = sbr.rel (%p24) target = $region25
  $region24: #{seq2seq_decoder_forward.6} parent=0 // pred_region
    %v27 = vld [vmem:[%s1] sm:$0xff]
    %28 = vst [vmem:[#allocation2] sm:$0xff] %v27
  $region25: #{seq2seq_decoder_forward.6} parent=0 // pred_fallthru
    _
  %v29 = vld [vmem:[%s2] sm:$0xff]
  %v30 = vld [vmem:[%s2 + $0x8] sm:$0xff]
  %v31 = vld [vmem:[%s2 + $0x10] sm:$0xff]
  %v32 = vld [vmem:[%s4] sm:$0x1]
  %v34 = vlaneseq
  %v35 = vshrl.u32 %v34, 7
  %v36 = vsub.s32 0, %v35
  %v37 = vrot.slane %v32, %v36
  %v39 = vld [vmem:[#allocation2] sm:$0xff]
  %v40 = vld [vmem:[%s0] sm:$0xff]
  %v41 = vld [vmem:[%s0 + $0x8] sm:$0xff]
  %v42 = vld [vmem:[%s0 + $0x10] sm:$0xff]
  %v43 = vadd.f32 %v40, %v29
  %v44 = vadd.f32 %v41, %v30
  %v45 = vadd.f32 %v42, %v31
  %v46 = vpack.c.bf16 %v39, %v39
  %v47 = vld [vmem:[%s3] sm:$0xff]
  %v48 = vld [vmem:[%s3 + $0x8] sm:$0xf]
  %v49 = vld [vmem:[%s3 + $0xc] sm:$0xff]
  %v50 = vld [vmem:[%s3 + $0x14] sm:$0xf]
  %v51 = vld [vmem:[%s3 + $0x18] sm:$0xff]
  %v52 = vld [vmem:[%s3 + $0x20] sm:$0xf]
  %v53 = vld [vmem:[%s3 + $0x24] sm:$0xff]
  %v54 = vld [vmem:[%s3 + $0x2c] sm:$0xf]
  %v55 = vld [vmem:[%s3 + $0x30] sm:$0xff]
  %v56 = vld [vmem:[%s3 + $0x38] sm:$0xf]
  %v57 = vld [vmem:[%s3 + $0x3c] sm:$0xff]
  %v58 = vld [vmem:[%s3 + $0x44] sm:$0xf]
  %v59 = vld [vmem:[%s3 + $0x48] sm:$0xff]
  %v60 = vld [vmem:[%s3 + $0x50] sm:$0xf]
  %v61 = vld [vmem:[%s3 + $0x54] sm:$0xff]
  %v62 = vld [vmem:[%s3 + $0x5c] sm:$0xf]
  %v63 = vld [vmem:[%s3 + $0x60] sm:$0xff]
  %v64 = vld [vmem:[%s3 + $0x68] sm:$0xf]
  %v65 = vld [vmem:[%s3 + $0x6c] sm:$0xff]
  %v66 = vld [vmem:[%s3 + $0x74] sm:$0xf]
  %v67 = vld [vmem:[%s3 + $0x78] sm:$0xff]
  %v68 = vld [vmem:[%s3 + $0x80] sm:$0xf]
  %v69 = vld [vmem:[%s3 + $0x84] sm:$0xff]
  %v70 = vld [vmem:[%s3 + $0x8c] sm:$0xf]
  %v71 = vld [vmem:[%s3 + $0x90] sm:$0xff]
  %v72 = vld [vmem:[%s3 + $0x98] sm:$0xf]
  %v73 = vld [vmem:[%s3 + $0x9c] sm:$0xff]
  %v74 = vld [vmem:[%s3 + $0xa4] sm:$0xf]
  %v75 = vld [vmem:[%s3 + $0xa8] sm:$0xff]
  %v76 = vld [vmem:[%s3 + $0xb0] sm:$0xf]
  %v77 = vld [vmem:[%s3 + $0xb4] sm:$0xff]
  %v78 = vld [vmem:[%s3 + $0xbc] sm:$0xf]
  %v111 = vunpack.c.l.b16 %v47
  %v112 = vunpack.c.h.b16 %v47
  %v113 = vunpack.c.l.b16 %v48
  %v114 = vunpack.c.l.b16 %v49
  %v115 = vunpack.c.h.b16 %v49
  %v116 = vunpack.c.l.b16 %v50
  %v117 = vunpack.c.l.b16 %v51
  %v118 = vunpack.c.h.b16 %v51
  %v119 = vunpack.c.l.b16 %v52
  %v120 = vunpack.c.l.b16 %v53
  %v121 = vunpack.c.h.b16 %v53
  %v122 = vunpack.c.l.b16 %v54
  %v123 = vunpack.c.l.b16 %v55
  %v124 = vunpack.c.h.b16 %v55
  %v125 = vunpack.c.l.b16 %v56
  %v126 = vunpack.c.l.b16 %v57
  %v127 = vunpack.c.h.b16 %v57
  %v128 = vunpack.c.l.b16 %v58
  %v129 = vunpack.c.l.b16 %v59
  %v130 = vunpack.c.h.b16 %v59
  %v131 = vunpack.c.l.b16 %v60
  %v132 = vunpack.c.l.b16 %v61
  %v133 = vunpack.c.h.b16 %v61
  %v134 = vunpack.c.l.b16 %v62
  %v135 = vunpack.c.l.b16 %v63
  %v136 = vunpack.c.h.b16 %v63
  %v137 = vunpack.c.l.b16 %v64
  %v138 = vunpack.c.l.b16 %v65
  %v139 = vunpack.c.h.b16 %v65
  %v140 = vunpack.c.l.b16 %v66
  %v141 = vunpack.c.l.b16 %v67
  %v142 = vunpack.c.h.b16 %v67
  %v143 = vunpack.c.l.b16 %v68
  %v144 = vunpack.c.l.b16 %v69
  %v145 = vunpack.c.h.b16 %v69
  %v146 = vunpack.c.l.b16 %v70
  %v147 = vunpack.c.l.b16 %v71
  %v148 = vunpack.c.h.b16 %v71
  %v149 = vunpack.c.l.b16 %v72
  %v150 = vunpack.c.l.b16 %v73
  %v151 = vunpack.c.h.b16 %v73
  %v152 = vunpack.c.l.b16 %v74
  %v153 = vunpack.c.l.b16 %v75
  %v154 = vunpack.c.h.b16 %v75
  %v155 = vunpack.c.l.b16 %v76
  %v156 = vunpack.c.l.b16 %v77
  %v157 = vunpack.c.h.b16 %v77
  %v158 = vunpack.c.l.b16 %v78
  %v159 = vpack.c.b16 %v114, %v111
  %v160 = vpack.c.b16 %v115, %v112
  %v161 = vpack.c.b16 %v116, %v113
  %v162 = vpack.c.b16 %v120, %v117
  %v163 = vpack.c.b16 %v121, %v118
  %v164 = vpack.c.b16 %v122, %v119
  %v165 = vpack.c.b16 %v126, %v123
  %v166 = vpack.c.b16 %v127, %v124
  %v167 = vpack.c.b16 %v128, %v125
  %v168 = vpack.c.b16 %v132, %v129
  %v169 = vpack.c.b16 %v133, %v130
  %v170 = vpack.c.b16 %v134, %v131
  %v171 = vpack.c.b16 %v138, %v135
  %v172 = vpack.c.b16 %v139, %v136
  %v173 = vpack.c.b16 %v140, %v137
  %v174 = vpack.c.b16 %v144, %v141
  %v175 = vpack.c.b16 %v145, %v142
  %v176 = vpack.c.b16 %v146, %v143
  %v177 = vpack.c.b16 %v150, %v147
  %v178 = vpack.c.b16 %v151, %v148
  %v179 = vpack.c.b16 %v152, %v149
  %v180 = vpack.c.b16 %v156, %v153
  %v181 = vpack.c.b16 %v157, %v154
  %v182 = vpack.c.b16 %v158, %v155
  %207 = vmatprep.subr.bf16.mxu0 %v160
  %208 = vmatpush1.bf16.msra.mxu0 %v159
  %209 = vmatprep.subr.bf16.mxu0 %v163
  %210 = vmatpush1.bf16.msra.mxu0 %v162
  %211 = vmatprep.subr.bf16.mxu0 %v166
  %212 = vmatpush1.bf16.msra.mxu0 %v165
  %213 = vmatprep.subr.bf16.mxu0 %v169
  %214 = vmatpush1.bf16.msra.mxu0 %v168
  %215 = vmatprep.subr.bf16.mxu0 %v172
  %216 = vmatpush1.bf16.msra.mxu0 %v171
  %217 = vmatprep.subr.bf16.mxu0 %v175
  %218 = vmatpush1.bf16.msra.mxu0 %v174
  %219 = vmatprep.subr.bf16.mxu0 %v178
  %220 = vmatpush1.bf16.msra.mxu0 %v177
  %221 = vmatprep.subr.bf16.mxu0 %v181
  %222 = vmatpush1.bf16.msra.mxu0 %v180
  %223 = vmatprep.subr.bf16.mxu0 0
  %224 = vmatpush1.bf16.msra.mxu0 0
  %225 = vmatprep.subr.bf16.mxu0 0
  %226 = vmatpush1.bf16.msra.mxu0 0
  %227 = vmatprep.subr.bf16.mxu0 0
  %228 = vmatpush1.bf16.msra.mxu0 0
  %229 = vmatprep.subr.bf16.mxu0 0
  %230 = vmatpush1.bf16.msra.mxu0 0
  %231 = vmatprep.subr.bf16.mxu0 0
  %232 = vmatpush1.bf16.msra.mxu0 0
  %233 = vmatprep.subr.bf16.mxu0 0
  %234 = vmatpush1.bf16.msra.mxu0 0
  %235 = vmatprep.subr.bf16.mxu0 0
  %236 = vmatpush1.bf16.msra.mxu0 0
  %237 = vmatprep.subr.bf16.mxu0 0
  %238 = vmatpush1.bf16.msra.mxu0 0
  %239 = vmatprep.mubr.bf16.mxu0 0
  %240 = vmatmul.mubr.bf16.gmra.mrb[0].mxu0 %v46
  %v241 = vpop.f32.mrb[0].mxu0
  %v242 = vadd.f32 0.0, %v241
  %v243 = vpop.f32.mrb[0].mxu0
  %v244 = vadd.f32 0.0, %v243
  %v245 = vpop.f32.mrb[0].mxu0
  %v246 = vpop.f32.mrb[0].mxu0
  %247 = vdwg.mxu0
  %248 = vmatprep.subr.bf16.mxu0 0
  %249 = vmatpush1.bf16.msra.mxu0 %v161
  %250 = vmatprep.subr.bf16.mxu0 0
  %251 = vmatpush1.bf16.msra.mxu0 %v164
  %252 = vmatprep.subr.bf16.mxu0 0
  %253 = vmatpush1.bf16.msra.mxu0 %v167
  %254 = vmatprep.subr.bf16.mxu0 0
  %255 = vmatpush1.bf16.msra.mxu0 %v170
  %256 = vmatprep.subr.bf16.mxu0 0
  %257 = vmatpush1.bf16.msra.mxu0 %v173
  %258 = vmatprep.subr.bf16.mxu0 0
  %259 = vmatpush1.bf16.msra.mxu0 %v176
  %260 = vmatprep.subr.bf16.mxu0 0
  %261 = vmatpush1.bf16.msra.mxu0 %v179
  %262 = vmatprep.subr.bf16.mxu0 0
  %263 = vmatpush1.bf16.msra.mxu0 %v182
  %264 = vmatprep.subr.bf16.mxu0 0
  %265 = vmatpush1.bf16.msra.mxu0 0
  %266 = vmatprep.subr.bf16.mxu0 0
  %267 = vmatpush1.bf16.msra.mxu0 0
  %268 = vmatprep.subr.bf16.mxu0 0
  %269 = vmatpush1.bf16.msra.mxu0 0
  %270 = vmatprep.subr.bf16.mxu0 0
  %271 = vmatpush1.bf16.msra.mxu0 0
  %272 = vmatprep.subr.bf16.mxu0 0
  %273 = vmatpush1.bf16.msra.mxu0 0
  %274 = vmatprep.subr.bf16.mxu0 0
  %275 = vmatpush1.bf16.msra.mxu0 0
  %276 = vmatprep.subr.bf16.mxu0 0
  %277 = vmatpush1.bf16.msra.mxu0 0
  %278 = vmatprep.subr.bf16.mxu0 0
  %279 = vmatpush1.bf16.msra.mxu0 0
  %280 = vmatprep.mubr.bf16.mxu0 0
  %281 = vmatmul.mubr.bf16.gmra.mrb[0].mxu0 %v46
  %v282 = vpop.f32.mrb[0].mxu0
  %v283 = vadd.f32 0.0, %v282
  %v284 = vpop.f32.mrb[0].mxu0
  %v285 = vpop.f32.mrb[0].mxu0
  %v286 = vpop.f32.mrb[0].mxu0
  %287 = vdwg.mxu0
  %v288 = vadd.f32 %v43, %v242
  %v289 = vxor.u32 %v288, 2147483648
  %v290 = vmul.f32 %v289, 1.442695
  %v291 = vpow.pop %v290
  %v292 = vadd.f32 %v291, 1.0
  %v293 = vrcp.pop %v292
  %v294 = vmul.f32 1.0, %v293
  %v295 = vadd.f32 %v44, %v244
  %v296 = vxor.u32 %v295, 2147483648
  %v297 = vmul.f32 %v296, 1.442695
  %v298 = vpow.pop %v297
  %v299 = vadd.f32 %v298, 1.0
  %v300 = vrcp.pop %v299
  %v301 = vmul.f32 1.0, %v300
  %v302 = vadd.f32 %v283, %v37
  %v303 = vmul.f32 %v294, %v302
  %v304 = vadd.f32 %v45, %v303
  %v305 = vtanh.pop %v304
  %v306 = vsub.f32 1.0, %v301
  %v307 = vmul.f32 %v306, %v305
  %v308 = vmul.f32 %v301, %v39
  %v309 = vadd.f32 %v307, %v308
  %v310 = vpack.c.bf16 %v309, %v309
  %311 = vst [vmem:[%s5] sm:$0xf] %v310
  %s312 = scalar_lea.vmem %s0, 24
  %v313 = vld [vmem:[%s312] sm:$0xff]
  %v314 = vld [vmem:[%s312 + $0x8] sm:$0xff]
  %v315 = vld [vmem:[%s312 + $0x10] sm:$0xff]
  %v316 = vadd.f32 %v313, %v29
  %v317 = vadd.f32 %v314, %v30
  %v318 = vadd.f32 %v315, %v31
  %v319 = vld [vmem:[%s3] sm:$0xff]
  %v320 = vld [vmem:[%s3 + $0x8] sm:$0xf]
  %v321 = vld [vmem:[%s3 + $0xc] sm:$0xff]
  %v322 = vld [vmem:[%s3 + $0x14] sm:$0xf]
  %v323 = vld [vmem:[%s3 + $0x18] sm:$0xff]
  %v324 = vld [vmem:[%s3 + $0x20] sm:$0xf]
  %v325 = vld [vmem:[%s3 + $0x24] sm:$0xff]
  %v326 = vld [vmem:[%s3 + $0x2c] sm:$0xf]
  %v327 = vld [vmem:[%s3 + $0x30] sm:$0xff]
  %v328 = vld [vmem:[%s3 + $0x38] sm:$0xf]
  %v329 = vld [vmem:[%s3 + $0x3c] sm:$0xff]
  %v330 = vld [vmem:[%s3 + $0x44] sm:$0xf]
  %v331 = vld [vmem:[%s3 + $0x48] sm:$0xff]
  %v332 = vld [vmem:[%s3 + $0x50] sm:$0xf]
  %v333 = vld [vmem:[%s3 + $0x54] sm:$0xff]
  %v334 = vld [vmem:[%s3 + $0x5c] sm:$0xf]
  %v335 = vld [vmem:[%s3 + $0x60] sm:$0xff]
  %v336 = vld [vmem:[%s3 + $0x68] sm:$0xf]
  %v337 = vld [vmem:[%s3 + $0x6c] sm:$0xff]
  %v338 = vld [vmem:[%s3 + $0x74] sm:$0xf]
  %v339 = vld [vmem:[%s3 + $0x78] sm:$0xff]
  %v340 = vld [vmem:[%s3 + $0x80] sm:$0xf]
  %v341 = vld [vmem:[%s3 + $0x84] sm:$0xff]
  %v342 = vld [vmem:[%s3 + $0x8c] sm:$0xf]
  %v343 = vld [vmem:[%s3 + $0x90] sm:$0xff]
  %v344 = vld [vmem:[%s3 + $0x98] sm:$0xf]
  %v345 = vld [vmem:[%s3 + $0x9c] sm:$0xff]
  %v346 = vld [vmem:[%s3 + $0xa4] sm:$0xf]
  %v347 = vld [vmem:[%s3 + $0xa8] sm:$0xff]
  %v348 = vld [vmem:[%s3 + $0xb0] sm:$0xf]
  %v349 = vld [vmem:[%s3 + $0xb4] sm:$0xff]
  %v350 = vld [vmem:[%s3 + $0xbc] sm:$0xf]
  %v383 = vunpack.c.l.b16 %v319
  %v384 = vunpack.c.h.b16 %v319
  %v385 = vunpack.c.l.b16 %v320
  %v386 = vunpack.c.l.b16 %v321
  %v387 = vunpack.c.h.b16 %v321
  %v388 = vunpack.c.l.b16 %v322
  %v389 = vunpack.c.l.b16 %v323
  %v390 = vunpack.c.h.b16 %v323
  %v391 = vunpack.c.l.b16 %v324
  %v392 = vunpack.c.l.b16 %v325
  %v393 = vunpack.c.h.b16 %v325
  %v394 = vunpack.c.l.b16 %v326
  %v395 = vunpack.c.l.b16 %v327
  %v396 = vunpack.c.h.b16 %v327
  %v397 = vunpack.c.l.b16 %v328
  %v398 = vunpack.c.l.b16 %v329
  %v399 = vunpack.c.h.b16 %v329
  %v400 = vunpack.c.l.b16 %v330
  %v401 = vunpack.c.l.b16 %v331
  %v402 = vunpack.c.h.b16 %v331
  %v403 = vunpack.c.l.b16 %v332
  %v404 = vunpack.c.l.b16 %v333
  %v405 = vunpack.c.h.b16 %v333
  %v406 = vunpack.c.l.b16 %v334
  %v407 = vunpack.c.l.b16 %v335
  %v408 = vunpack.c.h.b16 %v335
  %v409 = vunpack.c.l.b16 %v336
  %v410 = vunpack.c.l.b16 %v337
  %v411 = vunpack.c.h.b16 %v337
  %v412 = vunpack.c.l.b16 %v338
  %v413 = vunpack.c.l.b16 %v339
  %v414 = vunpack.c.h.b16 %v339
  %v415 = vunpack.c.l.b16 %v340
  %v416 = vunpack.c.l.b16 %v341
  %v417 = vunpack.c.h.b16 %v341
  %v418 = vunpack.c.l.b16 %v342
  %v419 = vunpack.c.l.b16 %v343
  %v420 = vunpack.c.h.b16 %v343
  %v421 = vunpack.c.l.b16 %v344
  %v422 = vunpack.c.l.b16 %v345
  %v423 = vunpack.c.h.b16 %v345
  %v424 = vunpack.c.l.b16 %v346
  %v425 = vunpack.c.l.b16 %v347
  %v426 = vunpack.c.h.b16 %v347
  %v427 = vunpack.c.l.b16 %v348
  %v428 = vunpack.c.l.b16 %v349
  %v429 = vunpack.c.h.b16 %v349
  %v430 = vunpack.c.l.b16 %v350
  %v431 = vpack.c.b16 %v386, %v383
  %v432 = vpack.c.b16 %v387, %v384
  %v433 = vpack.c.b16 %v388, %v385
  %v434 = vpack.c.b16 %v392, %v389
  %v435 = vpack.c.b16 %v393, %v390
  %v436 = vpack.c.b16 %v394, %v391
  %v437 = vpack.c.b16 %v398, %v395
  %v438 = vpack.c.b16 %v399, %v396
  %v439 = vpack.c.b16 %v400, %v397
  %v440 = vpack.c.b16 %v404, %v401
  %v441 = vpack.c.b16 %v405, %v402
  %v442 = vpack.c.b16 %v406, %v403
  %v443 = vpack.c.b16 %v410, %v407
  %v444 = vpack.c.b16 %v411, %v408
  %v445 = vpack.c.b16 %v412, %v409
  %v446 = vpack.c.b16 %v416, %v413
  %v447 = vpack.c.b16 %v417, %v414
  %v448 = vpack.c.b16 %v418, %v415
  %v449 = vpack.c.b16 %v422, %v419
  %v450 = vpack.c.b16 %v423, %v420
  %v451 = vpack.c.b16 %v424, %v421
  %v452 = vpack.c.b16 %v428, %v425
  %v453 = vpack.c.b16 %v429, %v426
  %v454 = vpack.c.b16 %v430, %v427
  %479 = vmatprep.subr.bf16.mxu0 %v432
  %480 = vmatpush1.bf16.msra.mxu0 %v431
  %481 = vmatprep.subr.bf16.mxu0 %v435
  %482 = vmatpush1.bf16.msra.mxu0 %v434
  %483 = vmatprep.subr.bf16.mxu0 %v438
  %484 = vmatpush1.bf16.msra.mxu0 %v437
  %485 = vmatprep.subr.bf16.mxu0 %v441
  %486 = vmatpush1.bf16.msra.mxu0 %v440
  %487 = vmatprep.subr.bf16.mxu0 %v444
  %488 = vmatpush1.bf16.msra.mxu0 %v443
  %489 = vmatprep.subr.bf16.mxu0 %v447
  %490 = vmatpush1.bf16.msra.mxu0 %v446
  %491 = vmatprep.subr.bf16.mxu0 %v450
  %492 = vmatpush1.bf16.msra.mxu0 %v449
  %493 = vmatprep.subr.bf16.mxu0 %v453
  %494 = vmatpush1.bf16.msra.mxu0 %v452
  %495 = vmatprep.subr.bf16.mxu0 0
  %496 = vmatpush1.bf16.msra.mxu0 0
  %497 = vmatprep.subr.bf16.mxu0 0
  %498 = vmatpush1.bf16.msra.mxu0 0
  %499 = vmatprep.subr.bf16.mxu0 0
  %500 = vmatpush1.bf16.msra.mxu0 0
  %501 = vmatprep.subr.bf16.mxu0 0
  %502 = vmatpush1.bf16.msra.mxu0 0
  %503 = vmatprep.subr.bf16.mxu0 0
  %504 = vmatpush1.bf16.msra.mxu0 0
  %505 = vmatprep.subr.bf16.mxu0 0
  %506 = vmatpush1.bf16.msra.mxu0 0
  %507 = vmatprep.subr.bf16.mxu0 0
  %508 = vmatpush1.bf16.msra.mxu0 0
  %509 = vmatprep.subr.bf16.mxu0 0
  %510 = vmatpush1.bf16.msra.mxu0 0
  %511 = vmatprep.mubr.bf16.mxu0 0
  %512 = vmatmul.mubr.bf16.gmra.mrb[0].mxu0 %v310
  %v513 = vpop.f32.mrb[0].mxu0
  %v514 = vadd.f32 0.0, %v513
  %v515 = vpop.f32.mrb[0].mxu0
  %v516 = vadd.f32 0.0, %v515
  %v517 = vpop.f32.mrb[0].mxu0
  %v518 = vpop.f32.mrb[0].mxu0
  %519 = vdwg.mxu0
  %520 = vmatprep.subr.bf16.mxu0 0
  %521 = vmatpush1.bf16.msra.mxu0 %v433
  %522 = vmatprep.subr.bf16.mxu0 0
  %523 = vmatpush1.bf16.msra.mxu0 %v436
  %524 = vmatprep.subr.bf16.mxu0 0
  %525 = vmatpush1.bf16.msra.mxu0 %v439
  %526 = vmatprep.subr.bf16.mxu0 0
  %527 = vmatpush1.bf16.msra.mxu0 %v442
  %528 = vmatprep.subr.bf16.mxu0 0
  %529 = vmatpush1.bf16.msra.mxu0 %v445
  %530 = vmatprep.subr.bf16.mxu0 0
  %531 = vmatpush1.bf16.msra.mxu0 %v448
  %532 = vmatprep.subr.bf16.mxu0 0
  %533 = vmatpush1.bf16.msra.mxu0 %v451
  %534 = vmatprep.subr.bf16.mxu0 0
  %535 = vmatpush1.bf16.msra.mxu0 %v454
  %536 = vmatprep.subr.bf16.mxu0 0
  %537 = vmatpush1.bf16.msra.mxu0 0
  %538 = vmatprep.subr.bf16.mxu0 0
  %539 = vmatpush1.bf16.msra.mxu0 0
  %540 = vmatprep.subr.bf16.mxu0 0
  %541 = vmatpush1.bf16.msra.mxu0 0
  %542 = vmatprep.subr.bf16.mxu0 0
  %543 = vmatpush1.bf16.msra.mxu0 0
  %544 = vmatprep.subr.bf16.mxu0 0
  %545 = vmatpush1.bf16.msra.mxu0 0
  %546 = vmatprep.subr.bf16.mxu0 0
  %547 = vmatpush1.bf16.msra.mxu0 0
  %548 = vmatprep.subr.bf16.mxu0 0
  %549 = vmatpush1.bf16.msra.mxu0 0
  %550 = vmatprep.subr.bf16.mxu0 0
  %551 = vmatpush1.bf16.msra.mxu0 0
  %552 = vmatprep.mubr.bf16.mxu0 0
  %553 = vmatmul.mubr.bf16.gmra.mrb[0].mxu0 %v310
  %v554 = vpop.f32.mrb[0].mxu0
  %v555 = vadd.f32 0.0, %v554
  %v556 = vpop.f32.mrb[0].mxu0
  %v557 = vpop.f32.mrb[0].mxu0
  %v558 = vpop.f32.mrb[0].mxu0
  %559 = vdwg.mxu0
  %v560 = vadd.f32 %v316, %v514
  %v561 = vxor.u32 %v560, 2147483648
  %v562 = vmul.f32 %v561, 1.442695
  %v563 = vpow.pop %v562
  %v564 = vadd.f32 %v563, 1.0
  %v565 = vrcp.pop %v564
  %v566 = vmul.f32 1.0, %v565
  %v567 = vadd.f32 %v317, %v516
  %v568 = vxor.u32 %v567, 2147483648
  %v569 = vmul.f32 %v568, 1.442695
  %v570 = vpow.pop %v569
  %v571 = vadd.f32 %v570, 1.0
  %v572 = vrcp.pop %v571
  %v573 = vmul.f32 1.0, %v572
  %v574 = vadd.f32 %v555, %v37
  %v575 = vmul.f32 %v566, %v574
  %v576 = vadd.f32 %v318, %v575
  %v577 = vtanh.pop %v576
  %v578 = vsub.f32 1.0, %v573
  %v579 = vmul.f32 %v578, %v577
  %v580 = vmul.f32 %v573, %v309
  %v581 = vadd.f32 %v579, %v580
  %v582 = vpack.c.bf16 %v581, %v581
  %s583 = scalar_lea.vmem %s5, 4
  %584 = vst [vmem:[%s583] sm:$0xf] %v582
  %s585 = scalar_lea.vmem %s0, 48
  %v586 = vld [vmem:[%s585] sm:$0xff]
  %v587 = vld [vmem:[%s585 + $0x8] sm:$0xff]
  %v588 = vld [vmem:[%s585 + $0x10] sm:$0xff]
  %v589 = vadd.f32 %v586, %v29
  %v590 = vadd.f32 %v587, %v30
  %v591 = vadd.f32 %v588, %v31
  %v592 = vld [vmem:[%s3] sm:$0xff]
  %v593 = vld [vmem:[%s3 + $0x8] sm:$0xf]
  %v594 = vld [vmem:[%s3 + $0xc] sm:$0xff]
  %v595 = vld [vmem:[%s3 + $0x14] sm:$0xf]
  %v596 = vld [vmem:[%s3 + $0x18] sm:$0xff]
  %v597 = vld [vmem:[%s3 + $0x20] sm:$0xf]
  %v598 = vld [vmem:[%s3 + $0x24] sm:$0xff]
  %v599 = vld [vmem:[%s3 + $0x2c] sm:$0xf]
  %v600 = vld [vmem:[%s3 + $0x30] sm:$0xff]
  %v601 = vld [vmem:[%s3 + $0x38] sm:$0xf]
  %v602 = vld [vmem:[%s3 + $0x3c] sm:$0xff]
  %v603 = vld [vmem:[%s3 + $0x44] sm:$0xf]
  %v604 = vld [vmem:[%s3 + $0x48] sm:$0xff]
  %v605 = vld [vmem:[%s3 + $0x50] sm:$0xf]
  %v606 = vld [vmem:[%s3 + $0x54] sm:$0xff]
  %v607 = vld [vmem:[%s3 + $0x5c] sm:$0xf]
  %v608 = vld [vmem:[%s3 + $0x60] sm:$0xff]
  %v609 = vld [vmem:[%s3 + $0x68] sm:$0xf]
  %v610 = vld [vmem:[%s3 + $0x6c] sm:$0xff]
  %v611 = vld [vmem:[%s3 + $0x74] sm:$0xf]
  %v612 = vld [vmem:[%s3 + $0x78] sm:$0xff]
  %v613 = vld [vmem:[%s3 + $0x80] sm:$0xf]
  %v614 = vld [vmem:[%s3 + $0x84] sm:$0xff]
  %v615 = vld [vmem:[%s3 + $0x8c] sm:$0xf]
  %v616 = vld [vmem:[%s3 + $0x90] sm:$0xff]
  %v617 = vld [vmem:[%s3 + $0x98] sm:$0xf]
  %v618 = vld [vmem:[%s3 + $0x9c] sm:$0xff]
  %v619 = vld [vmem:[%s3 + $0xa4] sm:$0xf]
  %v620 = vld [vmem:[%s3 + $0xa8] sm:$0xff]
  %v621 = vld [vmem:[%s3 + $0xb0] sm:$0xf]
  %v622 = vld [vmem:[%s3 + $0xb4] sm:$0xff]
  %v623 = vld [vmem:[%s3 + $0xbc] sm:$0xf]
  %v656 = vunpack.c.l.b16 %v592
  %v657 = vunpack.c.h.b16 %v592
  %v658 = vunpack.c.l.b16 %v593
  %v659 = vunpack.c.l.b16 %v594
  %v660 = vunpack.c.h.b16 %v594
  %v661 = vunpack.c.l.b16 %v595
  %v662 = vunpack.c.l.b16 %v596
  %v663 = vunpack.c.h.b16 %v596
  %v664 = vunpack.c.l.b16 %v597
  %v665 = vunpack.c.l.b16 %v598
  %v666 = vunpack.c.h.b16 %v598
  %v667 = vunpack.c.l.b16 %v599
  %v668 = vunpack.c.l.b16 %v600
  %v669 = vunpack.c.h.b16 %v600
  %v670 = vunpack.c.l.b16 %v601
  %v671 = vunpack.c.l.b16 %v602
  %v672 = vunpack.c.h.b16 %v602
  %v673 = vunpack.c.l.b16 %v603
  %v674 = vunpack.c.l.b16 %v604
  %v675 = vunpack.c.h.b16 %v604
  %v676 = vunpack.c.l.b16 %v605
  %v677 = vunpack.c.l.b16 %v606
  %v678 = vunpack.c.h.b16 %v606
  %v679 = vunpack.c.l.b16 %v607
  %v680 = vunpack.c.l.b16 %v608
  %v681 = vunpack.c.h.b16 %v608
  %v682 = vunpack.c.l.b16 %v609
  %v683 = vunpack.c.l.b16 %v610
  %v684 = vunpack.c.h.b16 %v610
  %v685 = vunpack.c.l.b16 %v611
  %v686 = vunpack.c.l.b16 %v612
  %v687 = vunpack.c.h.b16 %v612
  %v688 = vunpack.c.l.b16 %v613
  %v689 = vunpack.c.l.b16 %v614
  %v690 = vunpack.c.h.b16 %v614
  %v691 = vunpack.c.l.b16 %v615
  %v692 = vunpack.c.l.b16 %v616
  %v693 = vunpack.c.h.b16 %v616
  %v694 = vunpack.c.l.b16 %v617
  %v695 = vunpack.c.l.b16 %v618
  %v696 = vunpack.c.h.b16 %v618
  %v697 = vunpack.c.l.b16 %v619
  %v698 = vunpack.c.l.b16 %v620
  %v699 = vunpack.c.h.b16 %v620
  %v700 = vunpack.c.l.b16 %v621
  %v701 = vunpack.c.l.b16 %v622
  %v702 = vunpack.c.h.b16 %v622
  %v703 = vunpack.c.l.b16 %v623
  %v704 = vpack.c.b16 %v659, %v656
  %v705 = vpack.c.b16 %v660, %v657
  %v706 = vpack.c.b16 %v661, %v658
  %v707 = vpack.c.b16 %v665, %v662
  %v708 = vpack.c.b16 %v666, %v663
  %v709 = vpack.c.b16 %v667, %v664
  %v710 = vpack.c.b16 %v671, %v668
  %v711 = vpack.c.b16 %v672, %v669
  %v712 = vpack.c.b16 %v673, %v670
  %v713 = vpack.c.b16 %v677, %v674
  %v714 = vpack.c.b16 %v678, %v675
  %v715 = vpack.c.b16 %v679, %v676
  %v716 = vpack.c.b16 %v683, %v680
  %v717 = vpack.c.b16 %v684, %v681
  %v718 = vpack.c.b16 %v685, %v682
  %v719 = vpack.c.b16 %v689, %v686
  %v720 = vpack.c.b16 %v690, %v687
  %v721 = vpack.c.b16 %v691, %v688
  %v722 = vpack.c.b16 %v695, %v692
  %v723 = vpack.c.b16 %v696, %v693
  %v724 = vpack.c.b16 %v697, %v694
  %v725 = vpack.c.b16 %v701, %v698
  %v726 = vpack.c.b16 %v702, %v699
  %v727 = vpack.c.b16 %v703, %v700
  %752 = vmatprep.subr.bf16.mxu0 %v705
  %753 = vmatpush1.bf16.msra.mxu0 %v704
  %754 = vmatprep.subr.bf16.mxu0 %v708
  %755 = vmatpush1.bf16.msra.mxu0 %v707
  %756 = vmatprep.subr.bf16.mxu0 %v711
  %757 = vmatpush1.bf16.msra.mxu0 %v710
  %758 = vmatprep.subr.bf16.mxu0 %v714
  %759 = vmatpush1.bf16.msra.mxu0 %v713
  %760 = vmatprep.subr.bf16.mxu0 %v717
  %761 = vmatpush1.bf16.msra.mxu0 %v716
  %762 = vmatprep.subr.bf16.mxu0 %v720
  %763 = vmatpush1.bf16.msra.mxu0 %v719
  %764 = vmatprep.subr.bf16.mxu0 %v723
  %765 = vmatpush1.bf16.msra.mxu0 %v722
  %766 = vmatprep.subr.bf16.mxu0 %v726
  %767 = vmatpush1.bf16.msra.mxu0 %v725
  %768 = vmatprep.subr.bf16.mxu0 0
  %769 = vmatpush1.bf16.msra.mxu0 0
  %770 = vmatprep.subr.bf16.mxu0 0
  %771 = vmatpush1.bf16.msra.mxu0 0
  %772 = vmatprep.subr.bf16.mxu0 0
  %773 = vmatpush1.bf16.msra.mxu0 0
  %774 = vmatprep.subr.bf16.mxu0 0
  %775 = vmatpush1.bf16.msra.mxu0 0
  %776 = vmatprep.subr.bf16.mxu0 0
  %777 = vmatpush1.bf16.msra.mxu0 0
  %778 = vmatprep.subr.bf16.mxu0 0
  %779 = vmatpush1.bf16.msra.mxu0 0
  %780 = vmatprep.subr.bf16.mxu0 0
  %781 = vmatpush1.bf16.msra.mxu0 0
  %782 = vmatprep.subr.bf16.mxu0 0
  %783 = vmatpush1.bf16.msra.mxu0 0
  %784 = vmatprep.mubr.bf16.mxu0 0
  %785 = vmatmul.mubr.bf16.gmra.mrb[0].mxu0 %v582
  %v786 = vpop.f32.mrb[0].mxu0
  %v787 = vadd.f32 0.0, %v786
  %v788 = vpop.f32.mrb[0].mxu0
  %v789 = vadd.f32 0.0, %v788
  %v790 = vpop.f32.mrb[0].mxu0
  %v791 = vpop.f32.mrb[0].mxu0
  %792 = vdwg.mxu0
  %793 = vmatprep.subr.bf16.mxu0 0
  %794 = vmatpush1.bf16.msra.mxu0 %v706
  %795 = vmatprep.subr.bf16.mxu0 0
  %796 = vmatpush1.bf16.msra.mxu0 %v709
  %797 = vmatprep.subr.bf16.mxu0 0
  %798 = vmatpush1.bf16.msra.mxu0 %v712
  %799 = vmatprep.subr.bf16.mxu0 0
  %800 = vmatpush1.bf16.msra.mxu0 %v715
  %801 = vmatprep.subr.bf16.mxu0 0
  %802 = vmatpush1.bf16.msra.mxu0 %v718
  %803 = vmatprep.subr.bf16.mxu0 0
  %804 = vmatpush1.bf16.msra.mxu0 %v721
  %805 = vmatprep.subr.bf16.mxu0 0
  %806 = vmatpush1.bf16.msra.mxu0 %v724
  %807 = vmatprep.subr.bf16.mxu0 0
  %808 = vmatpush1.bf16.msra.mxu0 %v727
  %809 = vmatprep.subr.bf16.mxu0 0
  %810 = vmatpush1.bf16.msra.mxu0 0
  %811 = vmatprep.subr.bf16.mxu0 0
  %812 = vmatpush1.bf16.msra.mxu0 0
  %813 = vmatprep.subr.bf16.mxu0 0
  %814 = vmatpush1.bf16.msra.mxu0 0
  %815 = vmatprep.subr.bf16.mxu0 0
  %816 = vmatpush1.bf16.msra.mxu0 0
  %817 = vmatprep.subr.bf16.mxu0 0
  %818 = vmatpush1.bf16.msra.mxu0 0
  %819 = vmatprep.subr.bf16.mxu0 0
  %820 = vmatpush1.bf16.msra.mxu0 0
  %821 = vmatprep.subr.bf16.mxu0 0
  %822 = vmatpush1.bf16.msra.mxu0 0
  %823 = vmatprep.subr.bf16.mxu0 0
  %824 = vmatpush1.bf16.msra.mxu0 0
  %825 = vmatprep.mubr.bf16.mxu0 0
  %826 = vmatmul.mubr.bf16.gmra.mrb[0].mxu0 %v582
  %v827 = vpop.f32.mrb[0].mxu0
  %v828 = vadd.f32 0.0, %v827
  %v829 = vpop.f32.mrb[0].mxu0
  %v830 = vpop.f32.mrb[0].mxu0
  %v831 = vpop.f32.mrb[0].mxu0
  %832 = vdwg.mxu0
  %v833 = vadd.f32 %v589, %v787
  %v834 = vxor.u32 %v833, 2147483648
  %v835 = vmul.f32 %v834, 1.442695
  %v836 = vpow.pop %v835
  %v837 = vadd.f32 %v836, 1.0
  %v838 = vrcp.pop %v837
  %v839 = vmul.f32 1.0, %v838
  %v840 = vadd.f32 %v590, %v789
  %v841 = vxor.u32 %v840, 2147483648
  %v842 = vmul.f32 %v841, 1.442695
  %v843 = vpow.pop %v842
  %v844 = vadd.f32 %v843, 1.0
  %v845 = vrcp.pop %v844
  %v846 = vmul.f32 1.0, %v845
  %v847 = vadd.f32 %v828, %v37
  %v848 = vmul.f32 %v839, %v847
  %v849 = vadd.f32 %v591, %v848
  %v850 = vtanh.pop %v849
  %v851 = vsub.f32 1.0, %v846
  %v852 = vmul.f32 %v851, %v850
  %v853 = vmul.f32 %v846, %v581
  %v854 = vadd.f32 %v852, %v853
  %v855 = vpack.c.bf16 %v854, %v854
  %s856 = scalar_lea.vmem %s5, 8
  %857 = vst [vmem:[%s856] sm:$0xf] %v855
  %s858 = scalar_lea.vmem %s0, 72
  %v859 = vld [vmem:[%s858] sm:$0xff]
  %v860 = vld [vmem:[%s858 + $0x8] sm:$0xff]
  %v861 = vld [vmem:[%s858 + $0x10] sm:$0xff]
  %v862 = vadd.f32 %v859, %v29
  %v863 = vadd.f32 %v860, %v30
  %v864 = vadd.f32 %v861, %v31
  %v865 = vld [vmem:[%s3] sm:$0xff]
  %v866 = vld [vmem:[%s3 + $0x8] sm:$0xf]
  %v867 = vld [vmem:[%s3 + $0xc] sm:$0xff]
  %v868 = vld [vmem:[%s3 + $0x14] sm:$0xf]
  %v869 = vld [vmem:[%s3 + $0x18] sm:$0xff]
  %v870 = vld [vmem:[%s3 + $0x20] sm:$0xf]
  %v871 = vld [vmem:[%s3 + $0x24] sm:$0xff]
  %v872 = vld [vmem:[%s3 + $0x2c] sm:$0xf]
  %v873 = vld [vmem:[%s3 + $0x30] sm:$0xff]
  %v874 = vld [vmem:[%s3 + $0x38] sm:$0xf]
  %v875 = vld [vmem:[%s3 + $0x3c] sm:$0xff]
  %v876 = vld [vmem:[%s3 + $0x44] sm:$0xf]
  %v877 = vld [vmem:[%s3 + $0x48] sm:$0xff]
  %v878 = vld [vmem:[%s3 + $0x50] sm:$0xf]
  %v879 = vld [vmem:[%s3 + $0x54] sm:$0xff]
  %v880 = vld [vmem:[%s3 + $0x5c] sm:$0xf]
  %v881 = vld [vmem:[%s3 + $0x60] sm:$0xff]
  %v882 = vld [vmem:[%s3 + $0x68] sm:$0xf]
  %v883 = vld [vmem:[%s3 + $0x6c] sm:$0xff]
  %v884 = vld [vmem:[%s3 + $0x74] sm:$0xf]
  %v885 = vld [vmem:[%s3 + $0x78] sm:$0xff]
  %v886 = vld [vmem:[%s3 + $0x80] sm:$0xf]
  %v887 = vld [vmem:[%s3 + $0x84] sm:$0xff]
  %v888 = vld [vmem:[%s3 + $0x8c] sm:$0xf]
  %v889 = vld [vmem:[%s3 + $0x90] sm:$0xff]
  %v890 = vld [vmem:[%s3 + $0x98] sm:$0xf]
  %v891 = vld [vmem:[%s3 + $0x9c] sm:$0xff]
  %v892 = vld [vmem:[%s3 + $0xa4] sm:$0xf]
  %v893 = vld [vmem:[%s3 + $0xa8] sm:$0xff]
  %v894 = vld [vmem:[%s3 + $0xb0] sm:$0xf]
  %v895 = vld [vmem:[%s3 + $0xb4] sm:$0xff]
  %v896 = vld [vmem:[%s3 + $0xbc] sm:$0xf]
  %v929 = vunpack.c.l.b16 %v865
  %v930 = vunpack.c.h.b16 %v865
  %v931 = vunpack.c.l.b16 %v866
  %v932 = vunpack.c.l.b16 %v867
  %v933 = vunpack.c.h.b16 %v867
  %v934 = vunpack.c.l.b16 %v868
  %v935 = vunpack.c.l.b16 %v869
  %v936 = vunpack.c.h.b16 %v869
  %v937 = vunpack.c.l.b16 %v870
  %v938 = vunpack.c.l.b16 %v871
  %v939 = vunpack.c.h.b16 %v871
  %v940 = vunpack.c.l.b16 %v872
  %v941 = vunpack.c.l.b16 %v873
  %v942 = vunpack.c.h.b16 %v873
  %v943 = vunpack.c.l.b16 %v874
  %v944 = vunpack.c.l.b16 %v875
  %v945 = vunpack.c.h.b16 %v875
  %v946 = vunpack.c.l.b16 %v876
  %v947 = vunpack.c.l.b16 %v877
  %v948 = vunpack.c.h.b16 %v877
  %v949 = vunpack.c.l.b16 %v878
  %v950 = vunpack.c.l.b16 %v879
  %v951 = vunpack.c.h.b16 %v879
  %v952 = vunpack.c.l.b16 %v880
  %v953 = vunpack.c.l.b16 %v881
  %v954 = vunpack.c.h.b16 %v881
  %v955 = vunpack.c.l.b16 %v882
  %v956 = vunpack.c.l.b16 %v883
  %v957 = vunpack.c.h.b16 %v883
  %v958 = vunpack.c.l.b16 %v884
  %v959 = vunpack.c.l.b16 %v885
  %v960 = vunpack.c.h.b16 %v885
  %v961 = vunpack.c.l.b16 %v886
  %v962 = vunpack.c.l.b16 %v887
  %v963 = vunpack.c.h.b16 %v887
  %v964 = vunpack.c.l.b16 %v888
  %v965 = vunpack.c.l.b16 %v889
  %v966 = vunpack.c.h.b16 %v889
  %v967 = vunpack.c.l.b16 %v890
  %v968 = vunpack.c.l.b16 %v891
  %v969 = vunpack.c.h.b16 %v891
  %v970 = vunpack.c.l.b16 %v892
  %v971 = vunpack.c.l.b16 %v893
  %v972 = vunpack.c.h.b16 %v893
  %v973 = vunpack.c.l.b16 %v894
  %v974 = vunpack.c.l.b16 %v895
  %v975 = vunpack.c.h.b16 %v895
  %v976 = vunpack.c.l.b16 %v896
  %v977 = vpack.c.b16 %v932, %v929
  %v978 = vpack.c.b16 %v933, %v930
  %v979 = vpack.c.b16 %v934, %v931
  %v980 = vpack.c.b16 %v938, %v935
  %v981 = vpack.c.b16 %v939, %v936
  %v982 = vpack.c.b16 %v940, %v937
  %v983 = vpack.c.b16 %v944, %v941
  %v984 = vpack.c.b16 %v945, %v942
  %v985 = vpack.c.b16 %v946, %v943
  %v986 = vpack.c.b16 %v950, %v947
  %v987 = vpack.c.b16 %v951, %v948
  %v988 = vpack.c.b16 %v952, %v949
  %v989 = vpack.c.b16 %v956, %v953
  %v990 = vpack.c.b16 %v957, %v954
  %v991 = vpack.c.b16 %v958, %v955
  %v992 = vpack.c.b16 %v962, %v959
  %v993 = vpack.c.b16 %v963, %v960
  %v994 = vpack.c.b16 %v964, %v961
  %v995 = vpack.c.b16 %v968, %v965
  %v996 = vpack.c.b16 %v969, %v966
  %v997 = vpack.c.b16 %v970, %v967
  %v998 = vpack.c.b16 %v974, %v971
  %v999 = vpack.c.b16 %v975, %v972
  %v1000 = vpack.c.b16 %v976, %v973
  %1025 = vmatprep.subr.bf16.mxu0 %v978
  %1026 = vmatpush1.bf16.msra.mxu0 %v977
  %1027 = vmatprep.subr.bf16.mxu0 %v981
  %1028 = vmatpush1.bf16.msra.mxu0 %v980
  %1029 = vmatprep.subr.bf16.mxu0 %v984
  %1030 = vmatpush1.bf16.msra.mxu0 %v983
  %1031 = vmatprep.subr.bf16.mxu0 %v987
  %1032 = vmatpush1.bf16.msra.mxu0 %v986
  %1033 = vmatprep.subr.bf16.mxu0 %v990
  %1034 = vmatpush1.bf16.msra.mxu0 %v989
  %1035 = vmatprep.subr.bf16.mxu0 %v993
  %1036 = vmatpush1.bf16.msra.mxu0 %v992
  %1037 = vmatprep.subr.bf16.mxu0 %v996
  %1038 = vmatpush1.bf16.msra.mxu0 %v995
  %1039 = vmatprep.subr.bf16.mxu0 %v999
  %1040 = vmatpush1.bf16.msra.mxu0 %v998
  %1041 = vmatprep.subr.bf16.mxu0 0
  %1042 = vmatpush1.bf16.msra.mxu0 0
  %1043 = vmatprep.subr.bf16.mxu0 0
  %1044 = vmatpush1.bf16.msra.mxu0 0
  %1045 = vmatprep.subr.bf16.mxu0 0
  %1046 = vmatpush1.bf16.msra.mxu0 0
  %1047 = vmatprep.subr.bf16.mxu0 0
  %1048 = vmatpush1.bf16.msra.mxu0 0
  %1049 = vmatprep.subr.bf16.mxu0 0
  %1050 = vmatpush1.bf16.msra.mxu0 0
  %1051 = vmatprep.subr.bf16.mxu0 0
  %1052 = vmatpush1.bf16.msra.mxu0 0
  %1053 = vmatprep.subr.bf16.mxu0 0
  %1054 = vmatpush1.bf16.msra.mxu0 0
  %1055 = vmatprep.subr.bf16.mxu0 0
  %1056 = vmatpush1.bf16.msra.mxu0 0
  %1057 = vmatprep.mubr.bf16.mxu0 0
  %1058 = vmatmul.mubr.bf16.gmra.mrb[0].mxu0 %v855
  %v1059 = vpop.f32.mrb[0].mxu0
  %v1060 = vadd.f32 0.0, %v1059
  %v1061 = vpop.f32.mrb[0].mxu0
  %v1062 = vadd.f32 0.0, %v1061
  %v1063 = vpop.f32.mrb[0].mxu0
  %v1064 = vpop.f32.mrb[0].mxu0
  %1065 = vdwg.mxu0
  %1066 = vmatprep.subr.bf16.mxu0 0
  %1067 = vmatpush1.bf16.msra.mxu0 %v979
  %1068 = vmatprep.subr.bf16.mxu0 0
  %1069 = vmatpush1.bf16.msra.mxu0 %v982
  %1070 = vmatprep.subr.bf16.mxu0 0
  %1071 = vmatpush1.bf16.msra.mxu0 %v985
  %1072 = vmatprep.subr.bf16.mxu0 0
  %1073 = vmatpush1.bf16.msra.mxu0 %v988
  %1074 = vmatprep.subr.bf16.mxu0 0
  %1075 = vmatpush1.bf16.msra.mxu0 %v991
  %1076 = vmatprep.subr.bf16.mxu0 0
  %1077 = vmatpush1.bf16.msra.mxu0 %v994
  %1078 = vmatprep.subr.bf16.mxu0 0
  %1079 = vmatpush1.bf16.msra.mxu0 %v997
  %1080 = vmatprep.subr.bf16.mxu0 0
  %1081 = vmatpush1.bf16.msra.mxu0 %v1000
  %1082 = vmatprep.subr.bf16.mxu0 0
  %1083 = vmatpush1.bf16.msra.mxu0 0
  %1084 = vmatprep.subr.bf16.mxu0 0
  %1085 = vmatpush1.bf16.msra.mxu0 0
  %1086 = vmatprep.subr.bf16.mxu0 0
  %1087 = vmatpush1.bf16.msra.mxu0 0
  %1088 = vmatprep.subr.bf16.mxu0 0
  %1089 = vmatpush1.bf16.msra.mxu0 0
  %1090 = vmatprep.subr.bf16.mxu0 0
  %1091 = vmatpush1.bf16.msra.mxu0 0
  %1092 = vmatprep.subr.bf16.mxu0 0
  %1093 = vmatpush1.bf16.msra.mxu0 0
  %1094 = vmatprep.subr.bf16.mxu0 0
  %1095 = vmatpush1.bf16.msra.mxu0 0
  %1096 = vmatprep.subr.bf16.mxu0 0
  %1097 = vmatpush1.bf16.msra.mxu0 0
  %1098 = vmatprep.mubr.bf16.mxu0 0
  %1099 = vmatmul.mubr.bf16.gmra.mrb[0].mxu0 %v855
  %v1100 = vpop.f32.mrb[0].mxu0
  %v1101 = vadd.f32 0.0, %v1100
  %v1102 = vpop.f32.mrb[0].mxu0
  %v1103 = vpop.f32.mrb[0].mxu0
  %v1104 = vpop.f32.mrb[0].mxu0
  %1105 = vdwg.mxu0
  %v1106 = vadd.f32 %v862, %v1060
  %v1107 = vxor.u32 %v1106, 2147483648
  %v1108 = vmul.f32 %v1107, 1.442695
  %v1109 = vpow.pop %v1108
  %v1110 = vadd.f32 %v1109, 1.0
  %v1111 = vrcp.pop %v1110
  %v1112 = vmul.f32 1.0, %v1111
  %v1113 = vadd.f32 %v863, %v1062
  %v1114 = vxor.u32 %v1113, 2147483648
  %v1115 = vmul.f32 %v1114, 1.442695
  %v1116 = vpow.pop %v1115
  %v1117 = vadd.f32 %v1116, 1.0
  %v1118 = vrcp.pop %v1117
  %v1119 = vmul.f32 1.0, %v1118
  %v1120 = vadd.f32 %v1101, %v37
  %v1121 = vmul.f32 %v1112, %v1120
  %v1122 = vadd.f32 %v864, %v1121
  %v1123 = vtanh.pop %v1122
  %v1124 = vsub.f32 1.0, %v1119
  %v1125 = vmul.f32 %v1124, %v1123
  %v1126 = vmul.f32 %v1119, %v854
  %v1127 = vadd.f32 %v1125, %v1126
  %v1128 = vpack.c.bf16 %v1127, %v1127
  %s1129 = scalar_lea.vmem %s5, 12
  %1130 = vst [vmem:[%s1129] sm:$0xf] %v1128
  %s1131 = scalar_lea.vmem %s0, 96
  %v1132 = vld [vmem:[%s1131] sm:$0xff]
  %v1133 = vld [vmem:[%s1131 + $0x8] sm:$0xff]
  %v1134 = vld [vmem:[%s1131 + $0x10] sm:$0xff]
  %v1135 = vadd.f32 %v1132, %v29
  %v1136 = vadd.f32 %v1133, %v30
  %v1137 = vadd.f32 %v1134, %v31
  %v1138 = vld [vmem:[%s3] sm:$0xff]
  %v1139 = vld [vmem:[%s3 + $0x8] sm:$0xf]
  %v1140 = vld [vmem:[%s3 + $0xc] sm:$0xff]
  %v1141 = vld [vmem:[%s3 + $0x14] sm:$0xf]
  %v1142 = vld [vmem:[%s3 + $0x18] sm:$0xff]
  %v1143 = vld [vmem:[%s3 + $0x20] sm:$0xf]
  %v1144 = vld [vmem:[%s3 + $0x24] sm:$0xff]
  %v1145 = vld [vmem:[%s3 + $0x2c] sm:$0xf]
  %v1146 = vld [vmem:[%s3 + $0x30] sm:$0xff]
  %v1147 = vld [vmem:[%s3 + $0x38] sm:$0xf]
  %v1148 = vld [vmem:[%s3 + $0x3c] sm:$0xff]
  %v1149 = vld [vmem:[%s3 + $0x44] sm:$0xf]
  %v1150 = vld [vmem:[%s3 + $0x48] sm:$0xff]
  %v1151 = vld [vmem:[%s3 + $0x50] sm:$0xf]
  %v1152 = vld [vmem:[%s3 + $0x54] sm:$0xff]
  %v1153 = vld [vmem:[%s3 + $0x5c] sm:$0xf]
  %v1154 = vld [vmem:[%s3 + $0x60] sm:$0xff]
  %v1155 = vld [vmem:[%s3 + $0x68] sm:$0xf]
  %v1156 = vld [vmem:[%s3 + $0x6c] sm:$0xff]
  %v1157 = vld [vmem:[%s3 + $0x74] sm:$0xf]
  %v1158 = vld [vmem:[%s3 + $0x78] sm:$0xff]
  %v1159 = vld [vmem:[%s3 + $0x80] sm:$0xf]
  %v1160 = vld [vmem:[%s3 + $0x84] sm:$0xff]
  %v1161 = vld [vmem:[%s3 + $0x8c] sm:$0xf]
  %v1162 = vld [vmem:[%s3 + $0x90] sm:$0xff]
  %v1163 = vld [vmem:[%s3 + $0x98] sm:$0xf]
  %v1164 = vld [vmem:[%s3 + $0x9c] sm:$0xff]
  %v1165 = vld [vmem:[%s3 + $0xa4] sm:$0xf]
  %v1166 = vld [vmem:[%s3 + $0xa8] sm:$0xff]
  %v1167 = vld [vmem:[%s3 + $0xb0] sm:$0xf]
  %v1168 = vld [vmem:[%s3 + $0xb4] sm:$0xff]
  %v1169 = vld [vmem:[%s3 + $0xbc] sm:$0xf]
  %v1202 = vunpack.c.l.b16 %v1138
  %v1203 = vunpack.c.h.b16 %v1138
  %v1204 = vunpack.c.l.b16 %v1139
  %v1205 = vunpack.c.l.b16 %v1140
  %v1206 = vunpack.c.h.b16 %v1140
  %v1207 = vunpack.c.l.b16 %v1141
  %v1208 = vunpack.c.l.b16 %v1142
  %v1209 = vunpack.c.h.b16 %v1142
  %v1210 = vunpack.c.l.b16 %v1143
  %v1211 = vunpack.c.l.b16 %v1144
  %v1212 = vunpack.c.h.b16 %v1144
  %v1213 = vunpack.c.l.b16 %v1145
  %v1214 = vunpack.c.l.b16 %v1146
  %v1215 = vunpack.c.h.b16 %v1146
  %v1216 = vunpack.c.l.b16 %v1147
  %v1217 = vunpack.c.l.b16 %v1148
  %v1218 = vunpack.c.h.b16 %v1148
  %v1219 = vunpack.c.l.b16 %v1149
  %v1220 = vunpack.c.l.b16 %v1150
  %v1221 = vunpack.c.h.b16 %v1150
  %v1222 = vunpack.c.l.b16 %v1151
  %v1223 = vunpack.c.l.b16 %v1152
  %v1224 = vunpack.c.h.b16 %v1152
  %v1225 = vunpack.c.l.b16 %v1153
  %v1226 = vunpack.c.l.b16 %v1154
  %v1227 = vunpack.c.h.b16 %v1154
  %v1228 = vunpack.c.l.b16 %v1155
  %v1229 = vunpack.c.l.b16 %v1156
  %v1230 = vunpack.c.h.b16 %v1156
  %v1231 = vunpack.c.l.b16 %v1157
  %v1232 = vunpack.c.l.b16 %v1158
  %v1233 = vunpack.c.h.b16 %v1158
  %v1234 = vunpack.c.l.b16 %v1159
  %v1235 = vunpack.c.l.b16 %v1160
  %v1236 = vunpack.c.h.b16 %v1160
  %v1237 = vunpack.c.l.b16 %v1161
  %v1238 = vunpack.c.l.b16 %v1162
  %v1239 = vunpack.c.h.b16 %v1162
  %v1240 = vunpack.c.l.b16 %v1163
  %v1241 = vunpack.c.l.b16 %v1164
  %v1242 = vunpack.c.h.b16 %v1164
  %v1243 = vunpack.c.l.b16 %v1165
  %v1244 = vunpack.c.l.b16 %v1166
  %v1245 = vunpack.c.h.b16 %v1166
  %v1246 = vunpack.c.l.b16 %v1167
  %v1247 = vunpack.c.l.b16 %v1168
  %v1248 = vunpack.c.h.b16 %v1168
  %v1249 = vunpack.c.l.b16 %v1169
  %v1250 = vpack.c.b16 %v1205, %v1202
  %v1251 = vpack.c.b16 %v1206, %v1203
  %v1252 = vpack.c.b16 %v1207, %v1204
  %v1253 = vpack.c.b16 %v1211, %v1208
  %v1254 = vpack.c.b16 %v1212, %v1209
  %v1255 = vpack.c.b16 %v1213, %v1210
  %v1256 = vpack.c.b16 %v1217, %v1214
  %v1257 = vpack.c.b16 %v1218, %v1215
  %v1258 = vpack.c.b16 %v1219, %v1216
  %v1259 = vpack.c.b16 %v1223, %v1220
  %v1260 = vpack.c.b16 %v1224, %v1221
  %v1261 = vpack.c.b16 %v1225, %v1222
  %v1262 = vpack.c.b16 %v1229, %v1226
  %v1263 = vpack.c.b16 %v1230, %v1227
  %v1264 = vpack.c.b16 %v1231, %v1228
  %v1265 = vpack.c.b16 %v1235, %v1232
  %v1266 = vpack.c.b16 %v1236, %v1233
  %v1267 = vpack.c.b16 %v1237, %v1234
  %v1268 = vpack.c.b16 %v1241, %v1238
  %v1269 = vpack.c.b16 %v1242, %v1239
  %v1270 = vpack.c.b16 %v1243, %v1240
  %v1271 = vpack.c.b16 %v1247, %v1244
  %v1272 = vpack.c.b16 %v1248, %v1245
  %v1273 = vpack.c.b16 %v1249, %v1246
  %1298 = vmatprep.subr.bf16.mxu0 %v1251
  %1299 = vmatpush1.bf16.msra.mxu0 %v1250
  %1300 = vmatprep.subr.bf16.mxu0 %v1254
  %1301 = vmatpush1.bf16.msra.mxu0 %v1253
  %1302 = vmatprep.subr.bf16.mxu0 %v1257
  %1303 = vmatpush1.bf16.msra.mxu0 %v1256
  %1304 = vmatprep.subr.bf16.mxu0 %v1260
  %1305 = vmatpush1.bf16.msra.mxu0 %v1259
  %1306 = vmatprep.subr.bf16.mxu0 %v1263
  %1307 = vmatpush1.bf16.msra.mxu0 %v1262
  %1308 = vmatprep.subr.bf16.mxu0 %v1266
  %1309 = vmatpush1.bf16.msra.mxu0 %v1265
  %1310 = vmatprep.subr.bf16.mxu0 %v1269
  %1311 = vmatpush1.bf16.msra.mxu0 %v1268
  %1312 = vmatprep.subr.bf16.mxu0 %v1272
  %1313 = vmatpush1.bf16.msra.mxu0 %v1271
  %1314 = vmatprep.subr.bf16.mxu0 0
  %1315 = vmatpush1.bf16.msra.mxu0 0
  %1316 = vmatprep.subr.bf16.mxu0 0
  %1317 = vmatpush1.bf16.msra.mxu0 0
  %1318 = vmatprep.subr.bf16.mxu0 0
  %1319 = vmatpush1.bf16.msra.mxu0 0
  %1320 = vmatprep.subr.bf16.mxu0 0
  %1321 = vmatpush1.bf16.msra.mxu0 0
  %1322 = vmatprep.subr.bf16.mxu0 0
  %1323 = vmatpush1.bf16.msra.mxu0 0
  %1324 = vmatprep.subr.bf16.mxu0 0
  %1325 = vmatpush1.bf16.msra.mxu0 0
  %1326 = vmatprep.subr.bf16.mxu0 0
  %1327 = vmatpush1.bf16.msra.mxu0 0
  %1328 = vmatprep.subr.bf16.mxu0 0
  %1329 = vmatpush1.bf16.msra.mxu0 0
  %1330 = vmatprep.mubr.bf16.mxu0 0
  %1331 = vmatmul.mubr.bf16.gmra.mrb[0].mxu0 %v1128
  %v1332 = vpop.f32.mrb[0].mxu0
  %v1333 = vadd.f32 0.0, %v1332
  %v1334 = vpop.f32.mrb[0].mxu0
  %v1335 = vadd.f32 0.0, %v1334
  %v1336 = vpop.f32.mrb[0].mxu0
  %v1337 = vpop.f32.mrb[0].mxu0
  %1338 = vdwg.mxu0
  %1339 = vmatprep.subr.bf16.mxu0 0
  %1340 = vmatpush1.bf16.msra.mxu0 %v1252
  %1341 = vmatprep.subr.bf16.mxu0 0
  %1342 = vmatpush1.bf16.msra.mxu0 %v1255
  %1343 = vmatprep.subr.bf16.mxu0 0
  %1344 = vmatpush1.bf16.msra.mxu0 %v1258
  %1345 = vmatprep.subr.bf16.mxu0 0
  %1346 = vmatpush1.bf16.msra.mxu0 %v1261
  %1347 = vmatprep.subr.bf16.mxu0 0
  %1348 = vmatpush1.bf16.msra.mxu0 %v1264
  %1349 = vmatprep.subr.bf16.mxu0 0
  %1350 = vmatpush1.bf16.msra.mxu0 %v1267
  %1351 = vmatprep.subr.bf16.mxu0 0
  %1352 = vmatpush1.bf16.msra.mxu0 %v1270
  %1353 = vmatprep.subr.bf16.mxu0 0
  %1354 = vmatpush1.bf16.msra.mxu0 %v1273
  %1355 = vmatprep.subr.bf16.mxu0 0
  %1356 = vmatpush1.bf16.msra.mxu0 0
  %1357 = vmatprep.subr.bf16.mxu0 0
  %1358 = vmatpush1.bf16.msra.mxu0 0
  %1359 = vmatprep.subr.bf16.mxu0 0
  %1360 = vmatpush1.bf16.msra.mxu0 0
  %1361 = vmatprep.subr.bf16.mxu0 0
  %1362 = vmatpush1.bf16.msra.mxu0 0
  %1363 = vmatprep.subr.bf16.mxu0 0
  %1364 = vmatpush1.bf16.msra.mxu0 0
  %1365 = vmatprep.subr.bf16.mxu0 0
  %1366 = vmatpush1.bf16.msra.mxu0 0
  %1367 = vmatprep.subr.bf16.mxu0 0
  %1368 = vmatpush1.bf16.msra.mxu0 0
  %1369 = vmatprep.subr.bf16.mxu0 0
  %1370 = vmatpush1.bf16.msra.mxu0 0
  %1371 = vmatprep.mubr.bf16.mxu0 0
  %1372 = vmatmul.mubr.bf16.gmra.mrb[0].mxu0 %v1128
  %v1373 = vpop.f32.mrb[0].mxu0
  %v1374 = vadd.f32 0.0, %v1373
  %v1375 = vpop.f32.mrb[0].mxu0
  %v1376 = vpop.f32.mrb[0].mxu0
  %v1377 = vpop.f32.mrb[0].mxu0
  %1378 = vdwg.mxu0
  %v1379 = vadd.f32 %v1135, %v1333
  %v1380 = vxor.u32 %v1379, 2147483648
  %v1381 = vmul.f32 %v1380, 1.442695
  %v1382 = vpow.pop %v1381
  %v1383 = vadd.f32 %v1382, 1.0
  %v1384 = vrcp.pop %v1383
  %v1385 = vmul.f32 1.0, %v1384
  %v1386 = vadd.f32 %v1136, %v1335
  %v1387 = vxor.u32 %v1386, 2147483648
  %v1388 = vmul.f32 %v1387, 1.442695
  %v1389 = vpow.pop %v1388
  %v1390 = vadd.f32 %v1389, 1.0
  %v1391 = vrcp.pop %v1390
  %v1392 = vmul.f32 1.0, %v1391
  %v1393 = vadd.f32 %v1374, %v37
  %v1394 = vmul.f32 %v1385, %v1393
  %v1395 = vadd.f32 %v1137, %v1394
  %v1396 = vtanh.pop %v1395
  %v1397 = vsub.f32 1.0, %v1392
  %v1398 = vmul.f32 %v1397, %v1396
  %v1399 = vmul.f32 %v1392, %v1127
  %v1400 = vadd.f32 %v1398, %v1399
  %v1401 = vpack.c.bf16 %v1400, %v1400
  %s1402 = scalar_lea.vmem %s5, 16
  %1403 = vst [vmem:[%s1402] sm:$0xf] %v1401
  %s1404 = scalar_lea.vmem %s0, 120
  %v1405 = vld [vmem:[%s1404] sm:$0xff]
  %v1406 = vld [vmem:[%s1404 + $0x8] sm:$0xff]
  %v1407 = vld [vmem:[%s1404 + $0x10] sm:$0xff]
  %v1408 = vadd.f32 %v1405, %v29
  %v1409 = vadd.f32 %v1406, %v30
  %v1410 = vadd.f32 %v1407, %v31
  %v1411 = vld [vmem:[%s3] sm:$0xff]
  %v1412 = vld [vmem:[%s3 + $0x8] sm:$0xf]
  %v1413 = vld [vmem:[%s3 + $0xc] sm:$0xff]
  %v1414 = vld [vmem:[%s3 + $0x14] sm:$0xf]
  %v1415 = vld [vmem:[%s3 + $0x18] sm:$0xff]
  %v1416 = vld [vmem:[%s3 + $0x20] sm:$0xf]
  %v1417 = vld [vmem:[%s3 + $0x24] sm:$0xff]
  %v1418 = vld [vmem:[%s3 + $0x2c] sm:$0xf]
  %v1419 = vld [vmem:[%s3 + $0x30] sm:$0xff]
  %v1420 = vld [vmem:[%s3 + $0x38] sm:$0xf]
  %v1421 = vld [vmem:[%s3 + $0x3c] sm:$0xff]
  %v1422 = vld [vmem:[%s3 + $0x44] sm:$0xf]
  %v1423 = vld [vmem:[%s3 + $0x48] sm:$0xff]
  %v1424 = vld [vmem:[%s3 + $0x50] sm:$0xf]
  %v1425 = vld [vmem:[%s3 + $0x54] sm:$0xff]
  %v1426 = vld [vmem:[%s3 + $0x5c] sm:$0xf]
  %v1427 = vld [vmem:[%s3 + $0x60] sm:$0xff]
  %v1428 = vld [vmem:[%s3 + $0x68] sm:$0xf]
  %v1429 = vld [vmem:[%s3 + $0x6c] sm:$0xff]
  %v1430 = vld [vmem:[%s3 + $0x74] sm:$0xf]
  %v1431 = vld [vmem:[%s3 + $0x78] sm:$0xff]
  %v1432 = vld [vmem:[%s3 + $0x80] sm:$0xf]
  %v1433 = vld [vmem:[%s3 + $0x84] sm:$0xff]
  %v1434 = vld [vmem:[%s3 + $0x8c] sm:$0xf]
  %v1435 = vld [vmem:[%s3 + $0x90] sm:$0xff]
  %v1436 = vld [vmem:[%s3 + $0x98] sm:$0xf]
  %v1437 = vld [vmem:[%s3 + $0x9c] sm:$0xff]
  %v1438 = vld [vmem:[%s3 + $0xa4] sm:$0xf]
  %v1439 = vld [vmem:[%s3 + $0xa8] sm:$0xff]
  %v1440 = vld [vmem:[%s3 + $0xb0] sm:$0xf]
  %v1441 = vld [vmem:[%s3 + $0xb4] sm:$0xff]
  %v1442 = vld [vmem:[%s3 + $0xbc] sm:$0xf]
  %v1475 = vunpack.c.l.b16 %v1411
  %v1476 = vunpack.c.h.b16 %v1411
  %v1477 = vunpack.c.l.b16 %v1412
  %v1478 = vunpack.c.l.b16 %v1413
  %v1479 = vunpack.c.h.b16 %v1413
  %v1480 = vunpack.c.l.b16 %v1414
  %v1481 = vunpack.c.l.b16 %v1415
  %v1482 = vunpack.c.h.b16 %v1415
  %v1483 = vunpack.c.l.b16 %v1416
  %v1484 = vunpack.c.l.b16 %v1417
  %v1485 = vunpack.c.h.b16 %v1417
  %v1486 = vunpack.c.l.b16 %v1418
  %v1487 = vunpack.c.l.b16 %v1419
  %v1488 = vunpack.c.h.b16 %v1419
  %v1489 = vunpack.c.l.b16 %v1420
  %v1490 = vunpack.c.l.b16 %v1421
  %v1491 = vunpack.c.h.b16 %v1421
  %v1492 = vunpack.c.l.b16 %v1422
  %v1493 = vunpack.c.l.b16 %v1423
  %v1494 = vunpack.c.h.b16 %v1423
  %v1495 = vunpack.c.l.b16 %v1424
  %v1496 = vunpack.c.l.b16 %v1425
  %v1497 = vunpack.c.h.b16 %v1425
  %v1498 = vunpack.c.l.b16 %v1426
  %v1499 = vunpack.c.l.b16 %v1427
  %v1500 = vunpack.c.h.b16 %v1427
  %v1501 = vunpack.c.l.b16 %v1428
  %v1502 = vunpack.c.l.b16 %v1429
  %v1503 = vunpack.c.h.b16 %v1429
  %v1504 = vunpack.c.l.b16 %v1430
  %v1505 = vunpack.c.l.b16 %v1431
  %v1506 = vunpack.c.h.b16 %v1431
  %v1507 = vunpack.c.l.b16 %v1432
  %v1508 = vunpack.c.l.b16 %v1433
  %v1509 = vunpack.c.h.b16 %v1433
  %v1510 = vunpack.c.l.b16 %v1434
  %v1511 = vunpack.c.l.b16 %v1435
  %v1512 = vunpack.c.h.b16 %v1435
  %v1513 = vunpack.c.l.b16 %v1436
  %v1514 = vunpack.c.l.b16 %v1437
  %v1515 = vunpack.c.h.b16 %v1437
  %v1516 = vunpack.c.l.b16 %v1438
  %v1517 = vunpack.c.l.b16 %v1439
  %v1518 = vunpack.c.h.b16 %v1439
  %v1519 = vunpack.c.l.b16 %v1440
  %v1520 = vunpack.c.l.b16 %v1441
  %v1521 = vunpack.c.h.b16 %v1441
  %v1522 = vunpack.c.l.b16 %v1442
  %v1523 = vpack.c.b16 %v1478, %v1475
  %v1524 = vpack.c.b16 %v1479, %v1476
  %v1525 = vpack.c.b16 %v1480, %v1477
  %v1526 = vpack.c.b16 %v1484, %v1481
  %v1527 = vpack.c.b16 %v1485, %v1482
  %v1528 = vpack.c.b16 %v1486, %v1483
  %v1529 = vpack.c.b16 %v1490, %v1487
  %v1530 = vpack.c.b16 %v1491, %v1488
  %v1531 = vpack.c.b16 %v1492, %v1489
  %v1532 = vpack.c.b16 %v1496, %v1493
  %v1533 = vpack.c.b16 %v1497, %v1494
  %v1534 = vpack.c.b16 %v1498, %v1495
  %v1535 = vpack.c.b16 %v1502, %v1499
  %v1536 = vpack.c.b16 %v1503, %v1500
  %v1537 = vpack.c.b16 %v1504, %v1501
  %v1538 = vpack.c.b16 %v1508, %v1505
  %v1539 = vpack.c.b16 %v1509, %v1506
  %v1540 = vpack.c.b16 %v1510, %v1507
  %v1541 = vpack.c.b16 %v1514, %v1511
  %v1542 = vpack.c.b16 %v1515, %v1512
  %v1543 = vpack.c.b16 %v1516, %v1513
  %v1544 = vpack.c.b16 %v1520, %v1517
  %v1545 = vpack.c.b16 %v1521, %v1518
  %v1546 = vpack.c.b16 %v1522, %v1519
  %1571 = vmatprep.subr.bf16.mxu0 %v1524
  %1572 = vmatpush1.bf16.msra.mxu0 %v1523
  %1573 = vmatprep.subr.bf16.mxu0 %v1527
  %1574 = vmatpush1.bf16.msra.mxu0 %v1526
  %1575 = vmatprep.subr.bf16.mxu0 %v1530
  %1576 = vmatpush1.bf16.msra.mxu0 %v1529
  %1577 = vmatprep.subr.bf16.mxu0 %v1533
  %1578 = vmatpush1.bf16.msra.mxu0 %v1532
  %1579 = vmatprep.subr.bf16.mxu0 %v1536
  %1580 = vmatpush1.bf16.msra.mxu0 %v1535
  %1581 = vmatprep.subr.bf16.mxu0 %v1539
  %1582 = vmatpush1.bf16.msra.mxu0 %v1538
  %1583 = vmatprep.subr.bf16.mxu0 %v1542
  %1584 = vmatpush1.bf16.msra.mxu0 %v1541
  %1585 = vmatprep.subr.bf16.mxu0 %v1545
  %1586 = vmatpush1.bf16.msra.mxu0 %v1544
  %1587 = vmatprep.subr.bf16.mxu0 0
  %1588 = vmatpush1.bf16.msra.mxu0 0
  %1589 = vmatprep.subr.bf16.mxu0 0
  %1590 = vmatpush1.bf16.msra.mxu0 0
  %1591 = vmatprep.subr.bf16.mxu0 0
  %1592 = vmatpush1.bf16.msra.mxu0 0
  %1593 = vmatprep.subr.bf16.mxu0 0
  %1594 = vmatpush1.bf16.msra.mxu0 0
  %1595 = vmatprep.subr.bf16.mxu0 0
  %1596 = vmatpush1.bf16.msra.mxu0 0
  %1597 = vmatprep.subr.bf16.mxu0 0
  %1598 = vmatpush1.bf16.msra.mxu0 0
  %1599 = vmatprep.subr.bf16.mxu0 0
  %1600 = vmatpush1.bf16.msra.mxu0 0
  %1601 = vmatprep.subr.bf16.mxu0 0
  %1602 = vmatpush1.bf16.msra.mxu0 0
  %1603 = vmatprep.mubr.bf16.mxu0 0
  %1604 = vmatmul.mubr.bf16.gmra.mrb[0].mxu0 %v1401
  %v1605 = vpop.f32.mrb[0].mxu0
  %v1606 = vadd.f32 0.0, %v1605
  %v1607 = vpop.f32.mrb[0].mxu0
  %v1608 = vadd.f32 0.0, %v1607
  %v1609 = vpop.f32.mrb[0].mxu0
  %v1610 = vpop.f32.mrb[0].mxu0
  %1611 = vdwg.mxu0
  %1612 = vmatprep.subr.bf16.mxu0 0
  %1613 = vmatpush1.bf16.msra.mxu0 %v1525
  %1614 = vmatprep.subr.bf16.mxu0 0
  %1615 = vmatpush1.bf16.msra.mxu0 %v1528
  %1616 = vmatprep.subr.bf16.mxu0 0
  %1617 = vmatpush1.bf16.msra.mxu0 %v1531
  %1618 = vmatprep.subr.bf16.mxu0 0
  %1619 = vmatpush1.bf16.msra.mxu0 %v1534
  %1620 = vmatprep.subr.bf16.mxu0 0
  %1621 = vmatpush1.bf16.msra.mxu0 %v1537
  %1622 = vmatprep.subr.bf16.mxu0 0
  %1623 = vmatpush1.bf16.msra.mxu0 %v1540
  %1624 = vmatprep.subr.bf16.mxu0 0
  %1625 = vmatpush1.bf16.msra.mxu0 %v1543
  %1626 = vmatprep.subr.bf16.mxu0 0
  %1627 = vmatpush1.bf16.msra.mxu0 %v1546
  %1628 = vmatprep.subr.bf16.mxu0 0
  %1629 = vmatpush1.bf16.msra.mxu0 0
  %1630 = vmatprep.subr.bf16.mxu0 0
  %1631 = vmatpush1.bf16.msra.mxu0 0
  %1632 = vmatprep.subr.bf16.mxu0 0
  %1633 = vmatpush1.bf16.msra.mxu0 0
  %1634 = vmatprep.subr.bf16.mxu0 0
  %1635 = vmatpush1.bf16.msra.mxu0 0
  %1636 = vmatprep.subr.bf16.mxu0 0
  %1637 = vmatpush1.bf16.msra.mxu0 0
  %1638 = vmatprep.subr.bf16.mxu0 0
  %1639 = vmatpush1.bf16.msra.mxu0 0
  %1640 = vmatprep.subr.bf16.mxu0 0
  %1641 = vmatpush1.bf16.msra.mxu0 0
  %1642 = vmatprep.subr.bf16.mxu0 0
  %1643 = vmatpush1.bf16.msra.mxu0 0
  %1644 = vmatprep.mubr.bf16.mxu0 0
  %1645 = vmatmul.mubr.bf16.gmra.mrb[0].mxu0 %v1401
  %v1646 = vpop.f32.mrb[0].mxu0
  %v1647 = vadd.f32 0.0, %v1646
  %v1648 = vpop.f32.mrb[0].mxu0
  %v1649 = vpop.f32.mrb[0].mxu0
  %v1650 = vpop.f32.mrb[0].mxu0
  %1651 = vdwg.mxu0
  %v1652 = vadd.f32 %v1408, %v1606
  %v1653 = vxor.u32 %v1652, 2147483648
  %v1654 = vmul.f32 %v1653, 1.442695
  %v1655 = vpow.pop %v1654
  %v1656 = vadd.f32 %v1655, 1.0
  %v1657 = vrcp.pop %v1656
  %v1658 = vmul.f32 1.0, %v1657
  %v1659 = vadd.f32 %v1409, %v1608
  %v1660 = vxor.u32 %v1659, 2147483648
  %v1661 = vmul.f32 %v1660, 1.442695
  %v1662 = vpow.pop %v1661
  %v1663 = vadd.f32 %v1662, 1.0
  %v1664 = vrcp.pop %v1663
  %v1665 = vmul.f32 1.0, %v1664
  %v1666 = vadd.f32 %v1647, %v37
  %v1667 = vmul.f32 %v1658, %v1666
  %v1668 = vadd.f32 %v1410, %v1667
  %v1669 = vtanh.pop %v1668
  %v1670 = vsub.f32 1.0, %v1665
  %v1671 = vmul.f32 %v1670, %v1669
  %v1672 = vmul.f32 %v1665, %v1400
  %v1673 = vadd.f32 %v1671, %v1672
  %v1674 = vpack.c.bf16 %v1673, %v1673
  %s1675 = scalar_lea.vmem %s5, 20
  %1676 = vst [vmem:[%s1675] sm:$0xf] %v1674
  %s1677 = scalar_lea.vmem %s0, 144
  %v1678 = vld [vmem:[%s1677] sm:$0xff]
  %v1679 = vld [vmem:[%s1677 + $0x8] sm:$0xff]
  %v1680 = vld [vmem:[%s1677 + $0x10] sm:$0xff]
  %v1681 = vadd.f32 %v1678, %v29
  %v1682 = vadd.f32 %v1679, %v30
  %v1683 = vadd.f32 %v1680, %v31
  %v1684 = vld [vmem:[%s3] sm:$0xff]
  %v1685 = vld [vmem:[%s3 + $0x8] sm:$0xf]
  %v1686 = vld [vmem:[%s3 + $0xc] sm:$0xff]
  %v1687 = vld [vmem:[%s3 + $0x14] sm:$0xf]
  %v1688 = vld [vmem:[%s3 + $0x18] sm:$0xff]
  %v1689 = vld [vmem:[%s3 + $0x20] sm:$0xf]
  %v1690 = vld [vmem:[%s3 + $0x24] sm:$0xff]
  %v1691 = vld [vmem:[%s3 + $0x2c] sm:$0xf]
  %v1692 = vld [vmem:[%s3 + $0x30] sm:$0xff]
  %v1693 = vld [vmem:[%s3 + $0x38] sm:$0xf]
  %v1694 = vld [vmem:[%s3 + $0x3c] sm:$0xff]
  %v1695 = vld [vmem:[%s3 + $0x44] sm:$0xf]
  %v1696 = vld [vmem:[%s3 + $0x48] sm:$0xff]
  %v1697 = vld [vmem:[%s3 + $0x50] sm:$0xf]
  %v1698 = vld [vmem:[%s3 + $0x54] sm:$0xff]
  %v1699 = vld [vmem:[%s3 + $0x5c] sm:$0xf]
  %v1700 = vld [vmem:[%s3 + $0x60] sm:$0xff]
  %v1701 = vld [vmem:[%s3 + $0x68] sm:$0xf]
  %v1702 = vld [vmem:[%s3 + $0x6c] sm:$0xff]
  %v1703 = vld [vmem:[%s3 + $0x74] sm:$0xf]
  %v1704 = vld [vmem:[%s3 + $0x78] sm:$0xff]
  %v1705 = vld [vmem:[%s3 + $0x80] sm:$0xf]
  %v1706 = vld [vmem:[%s3 + $0x84] sm:$0xff]
  %v1707 = vld [vmem:[%s3 + $0x8c] sm:$0xf]
  %v1708 = vld [vmem:[%s3 + $0x90] sm:$0xff]
  %v1709 = vld [vmem:[%s3 + $0x98] sm:$0xf]
  %v1710 = vld [vmem:[%s3 + $0x9c] sm:$0xff]
  %v1711 = vld [vmem:[%s3 + $0xa4] sm:$0xf]
  %v1712 = vld [vmem:[%s3 + $0xa8] sm:$0xff]
  %v1713 = vld [vmem:[%s3 + $0xb0] sm:$0xf]
  %v1714 = vld [vmem:[%s3 + $0xb4] sm:$0xff]
  %v1715 = vld [vmem:[%s3 + $0xbc] sm:$0xf]
  %v1748 = vunpack.c.l.b16 %v1684
  %v1749 = vunpack.c.h.b16 %v1684
  %v1750 = vunpack.c.l.b16 %v1685
  %v1751 = vunpack.c.l.b16 %v1686
  %v1752 = vunpack.c.h.b16 %v1686
  %v1753 = vunpack.c.l.b16 %v1687
  %v1754 = vunpack.c.l.b16 %v1688
  %v1755 = vunpack.c.h.b16 %v1688
  %v1756 = vunpack.c.l.b16 %v1689
  %v1757 = vunpack.c.l.b16 %v1690
  %v1758 = vunpack.c.h.b16 %v1690
  %v1759 = vunpack.c.l.b16 %v1691
  %v1760 = vunpack.c.l.b16 %v1692
  %v1761 = vunpack.c.h.b16 %v1692
  %v1762 = vunpack.c.l.b16 %v1693
  %v1763 = vunpack.c.l.b16 %v1694
  %v1764 = vunpack.c.h.b16 %v1694
  %v1765 = vunpack.c.l.b16 %v1695
  %v1766 = vunpack.c.l.b16 %v1696
  %v1767 = vunpack.c.h.b16 %v1696
  %v1768 = vunpack.c.l.b16 %v1697
  %v1769 = vunpack.c.l.b16 %v1698
  %v1770 = vunpack.c.h.b16 %v1698
  %v1771 = vunpack.c.l.b16 %v1699
  %v1772 = vunpack.c.l.b16 %v1700
  %v1773 = vunpack.c.h.b16 %v1700
  %v1774 = vunpack.c.l.b16 %v1701
  %v1775 = vunpack.c.l.b16 %v1702
  %v1776 = vunpack.c.h.b16 %v1702
  %v1777 = vunpack.c.l.b16 %v1703
  %v1778 = vunpack.c.l.b16 %v1704
  %v1779 = vunpack.c.h.b16 %v1704
  %v1780 = vunpack.c.l.b16 %v1705
  %v1781 = vunpack.c.l.b16 %v1706
  %v1782 = vunpack.c.h.b16 %v1706
  %v1783 = vunpack.c.l.b16 %v1707
  %v1784 = vunpack.c.l.b16 %v1708
  %v1785 = vunpack.c.h.b16 %v1708
  %v1786 = vunpack.c.l.b16 %v1709
  %v1787 = vunpack.c.l.b16 %v1710
  %v1788 = vunpack.c.h.b16 %v1710
  %v1789 = vunpack.c.l.b16 %v1711
  %v1790 = vunpack.c.l.b16 %v1712
  %v1791 = vunpack.c.h.b16 %v1712
  %v1792 = vunpack.c.l.b16 %v1713
  %v1793 = vunpack.c.l.b16 %v1714
  %v1794 = vunpack.c.h.b16 %v1714
  %v1795 = vunpack.c.l.b16 %v1715
  %v1796 = vpack.c.b16 %v1751, %v1748
  %v1797 = vpack.c.b16 %v1752, %v1749
  %v1798 = vpack.c.b16 %v1753, %v1750
  %v1799 = vpack.c.b16 %v1757, %v1754
  %v1800 = vpack.c.b16 %v1758, %v1755
  %v1801 = vpack.c.b16 %v1759, %v1756
  %v1802 = vpack.c.b16 %v1763, %v1760
  %v1803 = vpack.c.b16 %v1764, %v1761
  %v1804 = vpack.c.b16 %v1765, %v1762
  %v1805 = vpack.c.b16 %v1769, %v1766
  %v1806 = vpack.c.b16 %v1770, %v1767
  %v1807 = vpack.c.b16 %v1771, %v1768
  %v1808 = vpack.c.b16 %v1775, %v1772
  %v1809 = vpack.c.b16 %v1776, %v1773
  %v1810 = vpack.c.b16 %v1777, %v1774
  %v1811 = vpack.c.b16 %v1781, %v1778
  %v1812 = vpack.c.b16 %v1782, %v1779
  %v1813 = vpack.c.b16 %v1783, %v1780
  %v1814 = vpack.c.b16 %v1787, %v1784
  %v1815 = vpack.c.b16 %v1788, %v1785
  %v1816 = vpack.c.b16 %v1789, %v1786
  %v1817 = vpack.c.b16 %v1793, %v1790
  %v1818 = vpack.c.b16 %v1794, %v1791
  %v1819 = vpack.c.b16 %v1795, %v1792
  %1844 = vmatprep.subr.bf16.mxu0 %v1797
  %1845 = vmatpush1.bf16.msra.mxu0 %v1796
  %1846 = vmatprep.subr.bf16.mxu0 %v1800
  %1847 = vmatpush1.bf16.msra.mxu0 %v1799
  %1848 = vmatprep.subr.bf16.mxu0 %v1803
  %1849 = vmatpush1.bf16.msra.mxu0 %v1802
  %1850 = vmatprep.subr.bf16.mxu0 %v1806
  %1851 = vmatpush1.bf16.msra.mxu0 %v1805
  %1852 = vmatprep.subr.bf16.mxu0 %v1809
  %1853 = vmatpush1.bf16.msra.mxu0 %v1808
  %1854 = vmatprep.subr.bf16.mxu0 %v1812
  %1855 = vmatpush1.bf16.msra.mxu0 %v1811
  %1856 = vmatprep.subr.bf16.mxu0 %v1815
  %1857 = vmatpush1.bf16.msra.mxu0 %v1814
  %1858 = vmatprep.subr.bf16.mxu0 %v1818
  %1859 = vmatpush1.bf16.msra.mxu0 %v1817
  %1860 = vmatprep.subr.bf16.mxu0 0
  %1861 = vmatpush1.bf16.msra.mxu0 0
  %1862 = vmatprep.subr.bf16.mxu0 0
  %1863 = vmatpush1.bf16.msra.mxu0 0
  %1864 = vmatprep.subr.bf16.mxu0 0
  %1865 = vmatpush1.bf16.msra.mxu0 0
  %1866 = vmatprep.subr.bf16.mxu0 0
  %1867 = vmatpush1.bf16.msra.mxu0 0
  %1868 = vmatprep.subr.bf16.mxu0 0
  %1869 = vmatpush1.bf16.msra.mxu0 0
  %1870 = vmatprep.subr.bf16.mxu0 0
  %1871 = vmatpush1.bf16.msra.mxu0 0
  %1872 = vmatprep.subr.bf16.mxu0 0
  %1873 = vmatpush1.bf16.msra.mxu0 0
  %1874 = vmatprep.subr.bf16.mxu0 0
  %1875 = vmatpush1.bf16.msra.mxu0 0
  %1876 = vmatprep.mubr.bf16.mxu0 0
  %1877 = vmatmul.mubr.bf16.gmra.mrb[0].mxu0 %v1674
  %v1878 = vpop.f32.mrb[0].mxu0
  %v1879 = vadd.f32 0.0, %v1878
  %v1880 = vpop.f32.mrb[0].mxu0
  %v1881 = vadd.f32 0.0, %v1880
  %v1882 = vpop.f32.mrb[0].mxu0
  %v1883 = vpop.f32.mrb[0].mxu0
  %1884 = vdwg.mxu0
  %1885 = vmatprep.subr.bf16.mxu0 0
  %1886 = vmatpush1.bf16.msra.mxu0 %v1798
  %1887 = vmatprep.subr.bf16.mxu0 0
  %1888 = vmatpush1.bf16.msra.mxu0 %v1801
  %1889 = vmatprep.subr.bf16.mxu0 0
  %1890 = vmatpush1.bf16.msra.mxu0 %v1804
  %1891 = vmatprep.subr.bf16.mxu0 0
  %1892 = vmatpush1.bf16.msra.mxu0 %v1807
  %1893 = vmatprep.subr.bf16.mxu0 0
  %1894 = vmatpush1.bf16.msra.mxu0 %v1810
  %1895 = vmatprep.subr.bf16.mxu0 0
  %1896 = vmatpush1.bf16.msra.mxu0 %v1813
  %1897 = vmatprep.subr.bf16.mxu0 0
  %1898 = vmatpush1.bf16.msra.mxu0 %v1816
  %1899 = vmatprep.subr.bf16.mxu0 0
  %1900 = vmatpush1.bf16.msra.mxu0 %v1819
  %1901 = vmatprep.subr.bf16.mxu0 0
  %1902 = vmatpush1.bf16.msra.mxu0 0
  %1903 = vmatprep.subr.bf16.mxu0 0
  %1904 = vmatpush1.bf16.msra.mxu0 0
  %1905 = vmatprep.subr.bf16.mxu0 0
  %1906 = vmatpush1.bf16.msra.mxu0 0
  %1907 = vmatprep.subr.bf16.mxu0 0
  %1908 = vmatpush1.bf16.msra.mxu0 0
  %1909 = vmatprep.subr.bf16.mxu0 0
  %1910 = vmatpush1.bf16.msra.mxu0 0
  %1911 = vmatprep.subr.bf16.mxu0 0
  %1912 = vmatpush1.bf16.msra.mxu0 0
  %1913 = vmatprep.subr.bf16.mxu0 0
  %1914 = vmatpush1.bf16.msra.mxu0 0
  %1915 = vmatprep.subr.bf16.mxu0 0
  %1916 = vmatpush1.bf16.msra.mxu0 0
  %1917 = vmatprep.mubr.bf16.mxu0 0
  %1918 = vmatmul.mubr.bf16.gmra.mrb[0].mxu0 %v1674
  %v1919 = vpop.f32.mrb[0].mxu0
  %v1920 = vadd.f32 0.0, %v1919
  %v1921 = vpop.f32.mrb[0].mxu0
  %v1922 = vpop.f32.mrb[0].mxu0
  %v1923 = vpop.f32.mrb[0].mxu0
  %1924 = vdwg.mxu0
  %v1925 = vadd.f32 %v1681, %v1879
  %v1926 = vxor.u32 %v1925, 2147483648
  %v1927 = vmul.f32 %v1926, 1.442695
  %v1928 = vpow.pop %v1927
  %v1929 = vadd.f32 %v1928, 1.0
  %v1930 = vrcp.pop %v1929
  %v1931 = vmul.f32 1.0, %v1930
  %v1932 = vadd.f32 %v1682, %v1881
  %v1933 = vxor.u32 %v1932, 2147483648
  %v1934 = vmul.f32 %v1933, 1.442695
  %v1935 = vpow.pop %v1934
  %v1936 = vadd.f32 %v1935, 1.0
  %v1937 = vrcp.pop %v1936
  %v1938 = vmul.f32 1.0, %v1937
  %v1939 = vadd.f32 %v1920, %v37
  %v1940 = vmul.f32 %v1931, %v1939
  %v1941 = vadd.f32 %v1683, %v1940
  %v1942 = vtanh.pop %v1941
  %v1943 = vsub.f32 1.0, %v1938
  %v1944 = vmul.f32 %v1943, %v1942
  %v1945 = vmul.f32 %v1938, %v1673
  %v1946 = vadd.f32 %v1944, %v1945
  %v1947 = vpack.c.bf16 %v1946, %v1946
  %s1948 = scalar_lea.vmem %s5, 24
  %1949 = vst [vmem:[%s1948] sm:$0xf] %v1947
  %s1950 = scalar_lea.vmem %s0, 168
  %v1951 = vld [vmem:[%s1950] sm:$0xff]
  %v1952 = vld [vmem:[%s1950 + $0x8] sm:$0xff]
  %v1953 = vld [vmem:[%s1950 + $0x10] sm:$0xff]
  %v1954 = vadd.f32 %v1951, %v29
  %v1955 = vadd.f32 %v1952, %v30
  %v1956 = vadd.f32 %v1953, %v31
  %v1957 = vld [vmem:[%s3] sm:$0xff]
  %v1958 = vld [vmem:[%s3 + $0x8] sm:$0xf]
  %v1959 = vld [vmem:[%s3 + $0xc] sm:$0xff]
  %v1960 = vld [vmem:[%s3 + $0x14] sm:$0xf]
  %v1961 = vld [vmem:[%s3 + $0x18] sm:$0xff]
  %v1962 = vld [vmem:[%s3 + $0x20] sm:$0xf]
  %v1963 = vld [vmem:[%s3 + $0x24] sm:$0xff]
  %v1964 = vld [vmem:[%s3 + $0x2c] sm:$0xf]
  %v1965 = vld [vmem:[%s3 + $0x30] sm:$0xff]
  %v1966 = vld [vmem:[%s3 + $0x38] sm:$0xf]
  %v1967 = vld [vmem:[%s3 + $0x3c] sm:$0xff]
  %v1968 = vld [vmem:[%s3 + $0x44] sm:$0xf]
  %v1969 = vld [vmem:[%s3 + $0x48] sm:$0xff]
  %v1970 = vld [vmem:[%s3 + $0x50] sm:$0xf]
  %v1971 = vld [vmem:[%s3 + $0x54] sm:$0xff]
  %v1972 = vld [vmem:[%s3 + $0x5c] sm:$0xf]
  %v1973 = vld [vmem:[%s3 + $0x60] sm:$0xff]
  %v1974 = vld [vmem:[%s3 + $0x68] sm:$0xf]
  %v1975 = vld [vmem:[%s3 + $0x6c] sm:$0xff]
  %v1976 = vld [vmem:[%s3 + $0x74] sm:$0xf]
  %v1977 = vld [vmem:[%s3 + $0x78] sm:$0xff]
  %v1978 = vld [vmem:[%s3 + $0x80] sm:$0xf]
  %v1979 = vld [vmem:[%s3 + $0x84] sm:$0xff]
  %v1980 = vld [vmem:[%s3 + $0x8c] sm:$0xf]
  %v1981 = vld [vmem:[%s3 + $0x90] sm:$0xff]
  %v1982 = vld [vmem:[%s3 + $0x98] sm:$0xf]
  %v1983 = vld [vmem:[%s3 + $0x9c] sm:$0xff]
  %v1984 = vld [vmem:[%s3 + $0xa4] sm:$0xf]
  %v1985 = vld [vmem:[%s3 + $0xa8] sm:$0xff]
  %v1986 = vld [vmem:[%s3 + $0xb0] sm:$0xf]
  %v1987 = vld [vmem:[%s3 + $0xb4] sm:$0xff]
  %v1988 = vld [vmem:[%s3 + $0xbc] sm:$0xf]
  %v2021 = vunpack.c.l.b16 %v1957
  %v2022 = vunpack.c.h.b16 %v1957
  %v2023 = vunpack.c.l.b16 %v1958
  %v2024 = vunpack.c.l.b16 %v1959
  %v2025 = vunpack.c.h.b16 %v1959
  %v2026 = vunpack.c.l.b16 %v1960
  %v2027 = vunpack.c.l.b16 %v1961
  %v2028 = vunpack.c.h.b16 %v1961
  %v2029 = vunpack.c.l.b16 %v1962
  %v2030 = vunpack.c.l.b16 %v1963
  %v2031 = vunpack.c.h.b16 %v1963
  %v2032 = vunpack.c.l.b16 %v1964
  %v2033 = vunpack.c.l.b16 %v1965
  %v2034 = vunpack.c.h.b16 %v1965
  %v2035 = vunpack.c.l.b16 %v1966
  %v2036 = vunpack.c.l.b16 %v1967
  %v2037 = vunpack.c.h.b16 %v1967
  %v2038 = vunpack.c.l.b16 %v1968
  %v2039 = vunpack.c.l.b16 %v1969
  %v2040 = vunpack.c.h.b16 %v1969
  %v2041 = vunpack.c.l.b16 %v1970
  %v2042 = vunpack.c.l.b16 %v1971
  %v2043 = vunpack.c.h.b16 %v1971
  %v2044 = vunpack.c.l.b16 %v1972
  %v2045 = vunpack.c.l.b16 %v1973
  %v2046 = vunpack.c.h.b16 %v1973
  %v2047 = vunpack.c.l.b16 %v1974
  %v2048 = vunpack.c.l.b16 %v1975
  %v2049 = vunpack.c.h.b16 %v1975
  %v2050 = vunpack.c.l.b16 %v1976
  %v2051 = vunpack.c.l.b16 %v1977
  %v2052 = vunpack.c.h.b16 %v1977
  %v2053 = vunpack.c.l.b16 %v1978
  %v2054 = vunpack.c.l.b16 %v1979
  %v2055 = vunpack.c.h.b16 %v1979
  %v2056 = vunpack.c.l.b16 %v1980
  %v2057 = vunpack.c.l.b16 %v1981
  %v2058 = vunpack.c.h.b16 %v1981
  %v2059 = vunpack.c.l.b16 %v1982
  %v2060 = vunpack.c.l.b16 %v1983
  %v2061 = vunpack.c.h.b16 %v1983
  %v2062 = vunpack.c.l.b16 %v1984
  %v2063 = vunpack.c.l.b16 %v1985
  %v2064 = vunpack.c.h.b16 %v1985
  %v2065 = vunpack.c.l.b16 %v1986
  %v2066 = vunpack.c.l.b16 %v1987
  %v2067 = vunpack.c.h.b16 %v1987
  %v2068 = vunpack.c.l.b16 %v1988
  %v2069 = vpack.c.b16 %v2024, %v2021
  %v2070 = vpack.c.b16 %v2025, %v2022
  %v2071 = vpack.c.b16 %v2026, %v2023
  %v2072 = vpack.c.b16 %v2030, %v2027
  %v2073 = vpack.c.b16 %v2031, %v2028
  %v2074 = vpack.c.b16 %v2032, %v2029
  %v2075 = vpack.c.b16 %v2036, %v2033
  %v2076 = vpack.c.b16 %v2037, %v2034
  %v2077 = vpack.c.b16 %v2038, %v2035
  %v2078 = vpack.c.b16 %v2042, %v2039
  %v2079 = vpack.c.b16 %v2043, %v2040
  %v2080 = vpack.c.b16 %v2044, %v2041
  %v2081 = vpack.c.b16 %v2048, %v2045
  %v2082 = vpack.c.b16 %v2049, %v2046
  %v2083 = vpack.c.b16 %v2050, %v2047
  %v2084 = vpack.c.b16 %v2054, %v2051
  %v2085 = vpack.c.b16 %v2055, %v2052
  %v2086 = vpack.c.b16 %v2056, %v2053
  %v2087 = vpack.c.b16 %v2060, %v2057
  %v2088 = vpack.c.b16 %v2061, %v2058
  %v2089 = vpack.c.b16 %v2062, %v2059
  %v2090 = vpack.c.b16 %v2066, %v2063
  %v2091 = vpack.c.b16 %v2067, %v2064
  %v2092 = vpack.c.b16 %v2068, %v2065
  %2117 = vmatprep.subr.bf16.mxu0 %v2070
  %2118 = vmatpush1.bf16.msra.mxu0 %v2069
  %2119 = vmatprep.subr.bf16.mxu0 %v2073
  %2120 = vmatpush1.bf16.msra.mxu0 %v2072
  %2121 = vmatprep.subr.bf16.mxu0 %v2076
  %2122 = vmatpush1.bf16.msra.mxu0 %v2075
  %2123 = vmatprep.subr.bf16.mxu0 %v2079
  %2124 = vmatpush1.bf16.msra.mxu0 %v2078
  %2125 = vmatprep.subr.bf16.mxu0 %v2082
  %2126 = vmatpush1.bf16.msra.mxu0 %v2081
  %2127 = vmatprep.subr.bf16.mxu0 %v2085
  %2128 = vmatpush1.bf16.msra.mxu0 %v2084
  %2129 = vmatprep.subr.bf16.mxu0 %v2088
  %2130 = vmatpush1.bf16.msra.mxu0 %v2087
  %2131 = vmatprep.subr.bf16.mxu0 %v2091
  %2132 = vmatpush1.bf16.msra.mxu0 %v2090
  %2133 = vmatprep.subr.bf16.mxu0 0
  %2134 = vmatpush1.bf16.msra.mxu0 0
  %2135 = vmatprep.subr.bf16.mxu0 0
  %2136 = vmatpush1.bf16.msra.mxu0 0
  %2137 = vmatprep.subr.bf16.mxu0 0
  %2138 = vmatpush1.bf16.msra.mxu0 0
  %2139 = vmatprep.subr.bf16.mxu0 0
  %2140 = vmatpush1.bf16.msra.mxu0 0
  %2141 = vmatprep.subr.bf16.mxu0 0
  %2142 = vmatpush1.bf16.msra.mxu0 0
  %2143 = vmatprep.subr.bf16.mxu0 0
  %2144 = vmatpush1.bf16.msra.mxu0 0
  %2145 = vmatprep.subr.bf16.mxu0 0
  %2146 = vmatpush1.bf16.msra.mxu0 0
  %2147 = vmatprep.subr.bf16.mxu0 0
  %2148 = vmatpush1.bf16.msra.mxu0 0
  %2149 = vmatprep.mubr.bf16.mxu0 0
  %2150 = vmatmul.mubr.bf16.gmra.mrb[0].mxu0 %v1947
  %v2151 = vpop.f32.mrb[0].mxu0
  %v2152 = vadd.f32 0.0, %v2151
  %v2153 = vpop.f32.mrb[0].mxu0
  %v2154 = vadd.f32 0.0, %v2153
  %v2155 = vpop.f32.mrb[0].mxu0
  %v2156 = vpop.f32.mrb[0].mxu0
  %2157 = vdwg.mxu0
  %2158 = vmatprep.subr.bf16.mxu0 0
  %2159 = vmatpush1.bf16.msra.mxu0 %v2071
  %2160 = vmatprep.subr.bf16.mxu0 0
  %2161 = vmatpush1.bf16.msra.mxu0 %v2074
  %2162 = vmatprep.subr.bf16.mxu0 0
  %2163 = vmatpush1.bf16.msra.mxu0 %v2077
  %2164 = vmatprep.subr.bf16.mxu0 0
  %2165 = vmatpush1.bf16.msra.mxu0 %v2080
  %2166 = vmatprep.subr.bf16.mxu0 0
  %2167 = vmatpush1.bf16.msra.mxu0 %v2083
  %2168 = vmatprep.subr.bf16.mxu0 0
  %2169 = vmatpush1.bf16.msra.mxu0 %v2086
  %2170 = vmatprep.subr.bf16.mxu0 0
  %2171 = vmatpush1.bf16.msra.mxu0 %v2089
  %2172 = vmatprep.subr.bf16.mxu0 0
  %2173 = vmatpush1.bf16.msra.mxu0 %v2092
  %2174 = vmatprep.subr.bf16.mxu0 0
  %2175 = vmatpush1.bf16.msra.mxu0 0
  %2176 = vmatprep.subr.bf16.mxu0 0
  %2177 = vmatpush1.bf16.msra.mxu0 0
  %2178 = vmatprep.subr.bf16.mxu0 0
  %2179 = vmatpush1.bf16.msra.mxu0 0
  %2180 = vmatprep.subr.bf16.mxu0 0
  %2181 = vmatpush1.bf16.msra.mxu0 0
  %2182 = vmatprep.subr.bf16.mxu0 0
  %2183 = vmatpush1.bf16.msra.mxu0 0
  %2184 = vmatprep.subr.bf16.mxu0 0
  %2185 = vmatpush1.bf16.msra.mxu0 0
  %2186 = vmatprep.subr.bf16.mxu0 0
  %2187 = vmatpush1.bf16.msra.mxu0 0
  %2188 = vmatprep.subr.bf16.mxu0 0
  %2189 = vmatpush1.bf16.msra.mxu0 0
  %2190 = vmatprep.mubr.bf16.mxu0 0
  %2191 = vmatmul.mubr.bf16.gmra.mrb[0].mxu0 %v1947
  %v2192 = vpop.f32.mrb[0].mxu0
  %v2193 = vadd.f32 0.0, %v2192
  %v2194 = vpop.f32.mrb[0].mxu0
  %v2195 = vpop.f32.mrb[0].mxu0
  %v2196 = vpop.f32.mrb[0].mxu0
  %2197 = vdwg.mxu0
  %v2198 = vadd.f32 %v1954, %v2152
  %v2199 = vxor.u32 %v2198, 2147483648
  %v2200 = vmul.f32 %v2199, 1.442695
  %v2201 = vpow.pop %v2200
  %v2202 = vadd.f32 %v2201, 1.0
  %v2203 = vrcp.pop %v2202
  %v2204 = vmul.f32 1.0, %v2203
  %v2205 = vadd.f32 %v1955, %v2154
  %v2206 = vxor.u32 %v2205, 2147483648
  %v2207 = vmul.f32 %v2206, 1.442695
  %v2208 = vpow.pop %v2207
  %v2209 = vadd.f32 %v2208, 1.0
  %v2210 = vrcp.pop %v2209
  %v2211 = vmul.f32 1.0, %v2210
  %v2212 = vadd.f32 %v2193, %v37
  %v2213 = vmul.f32 %v2204, %v2212
  %v2214 = vadd.f32 %v1956, %v2213
  %v2215 = vtanh.pop %v2214
  %v2216 = vsub.f32 1.0, %v2211
  %v2217 = vmul.f32 %v2216, %v2215
  %v2218 = vmul.f32 %v2211, %v1946
  %v2219 = vadd.f32 %v2217, %v2218
  %v2220 = vpack.c.bf16 %v2219, %v2219
  %s2221 = scalar_lea.vmem %s5, 28
  %2222 = vst [vmem:[%s2221] sm:$0xf] %v2220
  %2223 = vst [vmem:[#allocation2] sm:$0xff] %v2219
  // Predicated region
  $region26: #{seq2seq_decoder_forward.6} parent=0 // pred_check
    %p2224 = pneg %p23
  $region27: #{seq2seq_decoder_forward.6} parent=0 // pred_check_branch
    %2226 = sbr.rel (%p2224) target = $region29
  $region28: #{seq2seq_decoder_forward.6} parent=0 // pred_region
    %2227 = vst [vmem:[%s6] sm:$0xff] %v2219
  $region29: #{seq2seq_decoder_forward.6} parent=0 // pred_fallthru
    _
  // Predicated region
  $region30: #{seq2seq_decoder_forward.6} parent=0 // pred_check
    _
  $region31: #{seq2seq_decoder_forward.6} parent=0 // pred_check_branch
    %2229 = sbr.rel (0) target = $region33
  $region32: #{seq2seq_decoder_forward.6} parent=0 // pred_region
    _
  $region33: #{seq2seq_decoder_forward.6} parent=0 // pred_fallthru
    _
  // Predicated region
  $region34: #{seq2seq_decoder_forward.6} parent=0 // pred_check
    _
  $region35: #{seq2seq_decoder_forward.6} parent=0 // pred_check_branch
    %2231 = sbr.rel (0) target = $region37
  $region36: #{seq2seq_decoder_forward.6} parent=0 // pred_region
    _
  $region37: #{seq2seq_decoder_forward.6} parent=0 // pred_fallthru
    _
  // Predicated region
  $region38: #{seq2seq_decoder_forward.6} parent=0 // pred_check
    _
  $region39: #{seq2seq_decoder_forward.6} parent=0 // pred_check_branch
    %2233 = sbr.rel (0) target = $region41
  $region40: #{seq2seq_decoder_forward.6} parent=0 // pred_region
    _
  $region41: #{seq2seq_decoder_forward.6} parent=0 // pred_fallthru
    _
  // Predicated region
  $region42: #{seq2seq_decoder_forward.6} parent=0 // pred_check
    _
  $region43: #{seq2seq_decoder_forward.6} parent=0 // pred_check_branch
    %2235 = sbr.rel (0) target = $region45
  $region44: #{seq2seq_decoder_forward.6} parent=0 // pred_region
    _
  $region45: #{seq2seq_decoder_forward.6} parent=0 // pred_fallthru
    _

</llo_original>
